<compile_context>
chip_gen: v6e
topology: v6e:2x2x1
jax: 0.10.0
libtpu: 0.0.40
codegen_flags: <defaults>
</compile_context>

<pallas_src>
import functools

import jax
import jax.numpy as jnp
import numpy as np
from jax import lax
from jax.experimental import pallas as pl
from jax.experimental.pallas import tpu as pltpu


def _sigmoid(x):
    # One EUP transcendental (tanh) instead of exp + reciprocal.
    return 0.5 * (1.0 + jnp.tanh(0.5 * x))


# ---------------------------------------------------------------------------
# Fused Fenwick-tree streaming kernel.  One inner-loop iteration == one call of
# the original forward(new_state): append leaf at level 0, carry-merge up the
# trailing-ones chain, deposit at level m = ctz(step+1), then summarize the
# occupied levels (the set bits of step+1) from low to high.
#
# States are packed lane-dense as [h | c] rows of width 2D (D = 128 lanes).
# Gate order in the fused (D, 5D) weight blocks: i, o, u, f_l, f_r.
# ---------------------------------------------------------------------------
def _fenwick_stream_kernel(w_ref, b_ref, leaf_ref, out_ref, levels_ref, cur_ref,
                           *, D, L_MAX, T_BLK, T_TRUE, T_PAD):
    t_chunk = pl.program_id(1)
    TB = leaf_ref.shape[1]

    @pl.when(t_chunk == 0)
    def _():                      # fresh tree block: clear per-level states
        levels_ref[...] = jnp.zeros_like(levels_ref)

    # Hoisted bias loads + broadcasts: read once per grid step, reused by every
    # merge / summary cell call (JAX does not CSE broadcast_in_dim).
    bias_merge = jnp.broadcast_to(b_ref[0], (TB, 5 * D))
    bias_sum = jnp.broadcast_to(b_ref[1], (TB, 5 * D))

    def cell(cell_idx, hl, cl, hr, cr, bias):
        # Split-K fused 5-gate matmul (no [hl|hr] concat); bf16 MXU operands,
        # f32 accumulation; all gate math in f32.
        g = (jnp.dot(hl.astype(jnp.bfloat16), w_ref[cell_idx, 0],
                     preferred_element_type=jnp.float32)
             + jnp.dot(hr.astype(jnp.bfloat16), w_ref[cell_idx, 1],
                       preferred_element_type=jnp.float32)
             + bias)
        i_g = _sigmoid(g[:, 0 * D:1 * D])
        o_g = _sigmoid(g[:, 1 * D:2 * D])
        u_g = jnp.tanh(g[:, 2 * D:3 * D])
        fl_g = _sigmoid(g[:, 3 * D:4 * D])
        fr_g = _sigmoid(g[:, 4 * D:5 * D])
        c_new = i_g * u_g + fl_g * cl + fr_g * cr
        h_new = o_g * jnp.tanh(c_new)
        return h_new, c_new

    unroll_levels = bool(L_MAX <= 5)   # keep unrolled form only for tiny trees

    def step(s, carry):
        n = t_chunk * T_BLK + s + 1    # leaves absorbed after this step

        def do_step():
            # m = count_trailing_zeros(n): number of merges this step; also the
            # level the carry lands on, and (post-merge) lowest occupied level.
            m = jnp.int32(0)
            for i in range(1, L_MAX + 1):
                m = m + jnp.where((n & ((1 << i) - 1)) == 0, 1, 0).astype(jnp.int32)

            # New leaf enters level 0 as the carry.
            cur_ref[...] = leaf_ref[s]

            # Carry (merge) chain: levels 0..m-1 each hold exactly one state.
            # lch = existing (older) level state, rch = carry, as in the original.
            def merge_body(i, c2):
                @pl.when(i < m)
                def _():
                    lvl = levels_ref[i]
                    cur = cur_ref[...]
                    h_new, c_new = cell(0, lvl[:, :D], lvl[:, D:],
                                        cur[:, :D], cur[:, D:], bias_merge)
                    cur_ref[:, :D] = h_new
                    cur_ref[:, D:] = c_new
                return c2
            lax.fori_loop(0, L_MAX, merge_body, 0, unroll=unroll_levels)

            # Deposit the carry at level m (levels < m are now logically empty;
            # their stale contents are never read: occupancy == the bits of n).
            levels_ref[m] = cur_ref[...]

            # Summary sweep low -> high over occupied levels above m; the
            # accumulator is the left argument.  cur already holds level m.
            def sum_body(i, c2):
                @pl.when(jnp.logical_and(i > m, ((n >> i) & 1) == 1))
                def _():
                    lvl = levels_ref[i]
                    cur = cur_ref[...]
                    h_new, c_new = cell(1, cur[:, :D], cur[:, D:],
                                        lvl[:, :D], lvl[:, D:], bias_sum)
                    cur_ref[:, :D] = h_new
                    cur_ref[:, D:] = c_new
                return c2
            lax.fori_loop(0, L_MAX, sum_body, 0, unroll=unroll_levels)

            out_ref[s] = cur_ref[...]

        if T_PAD > T_TRUE:
            # Explicitly mask padded tail steps so they never touch the
            # Fenwick levels (and skip their work entirely).
            pl.when(n <= T_TRUE)(do_step)
        else:
            do_step()
        return carry

    lax.fori_loop(0, T_BLK, step, 0)


def _pick_tb(G):
    """Largest power-of-two tree-block (<=256) dividing G that still leaves
    NB = G/TB >= 2 so the parallel axis shards across both v7x TensorCores."""
    for c in (256, 128, 64, 32, 16, 8):
        if G % c == 0 and G // c >= 2:
            return c
    return G                      # small / ragged G: one (possibly padded) block


@functools.partial(jax.jit, static_argnames=("t_blk",))
def _fenwick_forward_stream(w_all, b_all, leaves, *, t_blk=64):
    """leaves: (T, G, 2D) packed [h | c] leaf states for G independent trees.
    Returns (T, G, 2D): the packed summary state after each leaf, i.e. the value
    FenwickTree.forward(new_state=leaf[t]) would return at every step."""
    T, G, twoD = leaves.shape
    D = twoD // 2
    TB = _pick_tb(G)
    NB = G // TB
    # Clamp the T chunk so the double-buffered leaf + out blocks stay a few MiB.
    t_blk = int(max(1, min(t_blk, T, 2048 // max(TB, 1))))
    NT = (T + t_blk - 1) // t_blk
    T_pad = NT * t_blk
    if T_pad != T:
        leaves = jnp.pad(leaves, ((0, T_pad - T), (0, 0), (0, 0)))
    L_MAX = max(1, int(T).bit_length())   # enough Fenwick levels for T leaves

    kernel = functools.partial(_fenwick_stream_kernel, D=D, L_MAX=L_MAX,
                               T_BLK=t_blk, T_TRUE=T, T_PAD=T_pad)
    out = pl.pallas_call(
        kernel,
        out_shape=jax.ShapeDtypeStruct((T_pad, G, 2 * D), jnp.float32),
        grid_spec=pltpu.PrefetchScalarGridSpec(
            num_scalar_prefetch=0,
            grid=(NB, NT),            # (parallel tree blocks, sequential T chunks)
            in_specs=[
                # Packed weights / biases: constant block index -> fetched once,
                # resident in VMEM across the whole grid.
                pl.BlockSpec((2, 2, D, 5 * D), lambda g, t: (0, 0, 0, 0)),
                pl.BlockSpec((2, 1, 5 * D), lambda g, t: (0, 0, 0)),
                # Leaf stream: one lane-dense (T_BLK, TB, 2D) slab per grid step.
                pl.BlockSpec((t_blk, TB, 2 * D), lambda g, t: (t, g, 0)),
            ],
            out_specs=pl.BlockSpec((t_blk, TB, 2 * D), lambda g, t: (t, g, 0)),
            scratch_shapes=[
                pltpu.VMEM((L_MAX, TB, 2 * D), jnp.float32),  # per-level states
                pltpu.VMEM((TB, 2 * D), jnp.float32),         # carry / summary acc
            ],
        ),
        compiler_params=pltpu.CompilerParams(
            dimension_semantics=("parallel", "arbitrary")),
    )(w_all, b_all, leaves)
    return out[:T]


# ---------------------------------------------------------------------------
# Module wrapper (inference path of bigg's FenwickTree).
# ---------------------------------------------------------------------------
class FenwickTree:
    """JAX/Pallas port of bigg FenwickTree streaming forward.

    Weights are stored packed and bf16 for the fused cell:
      w_all: (2, 2, D, 5D) = [merge/summary][W_l / W_r][D, 5 gates * D], bf16
      b_all: (2, 1, 5D) f32.  Gate order: i, o, u, f_l, f_r.
    This is an equivalent parameterization of the 10 per-gate (D, D) linears of
    each BinaryTreeLSTMCell.
    """

    def __init__(self, embed_dim, key):
        D = self.embed_dim = embed_dim
        k0, k1, k2, k3 = jax.random.split(key, 4)
        lim0 = (6.0 / (1 + D)) ** 0.5
        self.init_h0 = jax.random.uniform(k0, (1, D), jnp.float32, -lim0, lim0)
        self.init_c0 = jax.random.uniform(k1, (1, D), jnp.float32, -lim0, lim0)
        limw = (6.0 / (D + D)) ** 0.5     # glorot for each (D, D) gate block
        w_merge = jax.random.uniform(k2, (2, D, 5 * D), jnp.float32, -limw, limw)
        w_sum = jax.random.uniform(k3, (2, D, 5 * D), jnp.float32, -limw, limw)
        self.w_all = jnp.stack([w_merge, w_sum], axis=0).astype(jnp.bfloat16)
        self.b_all = jnp.zeros((2, 1, 5 * D), jnp.float32)
        # TODO(synk): forward_train depends on the TreeLib C++ extension
        # (PrepareRowEmbed / PrepareRowSummary), node/edge-feature paths and
        # PosEncoding -- host-side index bookkeeping with no Pallas equivalent;
        # only the streaming forward path is implemented here.

    def init_state(self):
        """forward(None) on an empty tree returns the learned initial state."""
        return self.init_h0, self.init_c0

    def forward_stream(self, leaf_h, leaf_c, t_blk=64):
        """Fused-kernel equivalent of calling forward(new_state=leaf[t]) for
        t = 0..T-1 on G independent trees; returns the per-step summary states.

        leaf_h, leaf_c: (T, G, D)  ->  (h, c) each of shape (T, G, D)."""
        leaves = jnp.concatenate([leaf_h, leaf_c], axis=-1)
        out = _fenwick_forward_stream(self.w_all, self.b_all, leaves, t_blk=t_blk)
        D = self.embed_dim
        return out[..., :D], out[..., D:]

    # ---- pure-JAX reference: the original list-based algorithm, verbatim ----
    def _cell_ref(self, cell_idx, lstate, rstate):
        D = self.embed_dim
        hl, cl = lstate
        hr, cr = rstate
        g = (jnp.dot(hl.astype(jnp.bfloat16), self.w_all[cell_idx, 0],
                     preferred_element_type=jnp.float32)
             + jnp.dot(hr.astype(jnp.bfloat16), self.w_all[cell_idx, 1],
                       preferred_element_type=jnp.float32)
             + self.b_all[cell_idx])
        i_g = _sigmoid(g[:, :D])
        o_g = _sigmoid(g[:, D:2 * D])
        u_g = jnp.tanh(g[:, 2 * D:3 * D])
        fl_g = _sigmoid(g[:, 3 * D:4 * D])
        fr_g = _sigmoid(g[:, 4 * D:5 * D])
        c = i_g * u_g + fl_g * cl + fr_g * cr
        return o_g * jnp.tanh(c), c

    def forward_reference(self, leaf_h, leaf_c):
        T = leaf_h.shape[0]
        list_states = []

        def append_state(state, level):
            while level >= len(list_states):
                list_states.append([])
            list_states[level].append(state)

        outs_h, outs_c = [], []
        for step in range(T):
            append_state((leaf_h[step], leaf_c[step]), 0)
            pos = 0
            while pos < len(list_states):
                if len(list_states[pos]) >= 2:
                    lch, rch = list_states[pos]
                    new_state = self._cell_ref(0, lch, rch)
                    list_states[pos] = []
                    append_state(new_state, pos + 1)
                pos += 1
            state = None
            for pos in range(len(list_states)):
                if len(list_states[pos]) == 0:
                    continue
                cur = list_states[pos][0]
                state = cur if state is None else self._cell_ref(1, state, cur)
            outs_h.append(state[0])
            outs_c.append(state[1])
        return jnp.stack(outs_h), jnp.stack(outs_c)


if __name__ == "__main__":
    key = jax.random.PRNGKey(0)
    D, G, T = 128, 16, 20             # embed_dim, independent trees, leaves/tree
    kparam, kh, kc = jax.random.split(key, 3)

    tree = FenwickTree(D, kparam)

    # empty-tree query -> (init_h0, init_c0)
    h0, c0 = tree.init_state()
    assert h0.shape == (1, D) and c0.shape == (1, D)

    leaf_h = jax.random.normal(kh, (T, G, D), jnp.float32)
    leaf_c = jax.random.normal(kc, (T, G, D), jnp.float32)

    # t_blk=8 -> TB=8, grid (NB=2, NT=3) with a padded tail chunk: exercises the
    # chunked-T path, the padded-step mask, and the 2-block parallel axis.
    h_all, c_all = tree.forward_stream(leaf_h, leaf_c, t_blk=8)
    jax.block_until_ready((h_all, c_all))
    assert h_all.shape == (T, G, D) and c_all.shape == (T, G, D)
    assert h_all.dtype == jnp.float32 and c_all.dtype == jnp.float32

    # Correctness: fused kernel vs. the original list-based algorithm in pure
    # JAX.  Both use identical bf16 matmul operands + f32 gate math, so the
    # comparison is tight (catches any gate-stacking / packing mistake).
    ref_h, ref_c = tree.forward_reference(leaf_h, leaf_c)
    np.testing.assert_allclose(np.asarray(h_all), np.asarray(ref_h),
                               rtol=1e-3, atol=1e-3)
    np.testing.assert_allclose(np.asarray(c_all), np.asarray(ref_c),
                               rtol=1e-3, atol=1e-3)

    print("KERNEL_OK")
</pallas_src>

<mosaic_0001>
module attributes {stable_mosaic.version = 11 : i64} {
  func.func @_fenwick_stream_kernel(%arg0: i32, %arg1: i32, %arg2: memref<2x2x128x640xbf16, #tpu.memory_space<vmem>>, %arg3: memref<2x1x640xf32, #tpu.memory_space<vmem>>, %arg4: memref<8x8x256xf32, #tpu.memory_space<vmem>>, %arg5: memref<8x8x256xf32, #tpu.memory_space<vmem>>, %arg6: memref<5x8x256xf32, #tpu.memory_space<vmem>>, %arg7: memref<8x256xf32, #tpu.memory_space<vmem>>) attributes {dimension_semantics = [#tpu.dimension_semantics<parallel>, #tpu.dimension_semantics<arbitrary>], iteration_bounds = array<i64: 2, 3>, scalar_prefetch = 0 : i64, scratch_operands = 2 : i64, tpu.core_type = #tpu.core_type<tc>, window_params = [{pipeline_mode = #tpu.pipeline_mode<synchronous>, transform_indices = @transform_0, window_bounds = array<i64: 2, 2, 128, 640>}, {pipeline_mode = #tpu.pipeline_mode<synchronous>, transform_indices = @transform_1, window_bounds = array<i64: 2, 1, 640>}, {transform_indices = @transform_2, window_bounds = array<i64: 8, 8, 256>}, {transform_indices = @transform_3, window_bounds = array<i64: 8, 8, 256>}]} {
    %c0_i32 = arith.constant 0 : i32
    %0 = arith.cmpi eq, %arg1, %c0_i32 : i32
    %1 = arith.extui %0 : i1 to i32
    %c0_i32_0 = arith.constant 0 : i32
    %2 = arith.cmpi ne, %1, %c0_i32_0 : i32
    scf.if %2 {
      %cst = arith.constant 0.000000e+00 : f32
      %12 = vector.broadcast %cst : f32 to vector<5x8x256xf32>
      %c0_7 = arith.constant 0 : index
      %c0_8 = arith.constant 0 : index
      %c0_9 = arith.constant 0 : index
      %13 = vector.load %arg6[%c0_7, %c0_8, %c0_9] : memref<5x8x256xf32, #tpu.memory_space<vmem>>, vector<5x8x256xf32>
      tpu.vector_store %arg6[%c0_7, %c0_8, %c0_9], %12 {strides = array<i32>} : memref<5x8x256xf32, #tpu.memory_space<vmem>>, vector<5x8x256xf32>,
    } else {
    }
    %c0 = arith.constant 0 : index
    %c0_1 = arith.constant 0 : index
    %c0_2 = arith.constant 0 : index
    %3 = vector.load %arg3[%c0, %c0_1, %c0_2] : memref<2x1x640xf32, #tpu.memory_space<vmem>>, vector<1x1x640xf32>
    %4 = vector.shape_cast %3 : vector<1x1x640xf32> to vector<1x640xf32>
    %5 = vector.shape_cast %4 : vector<1x640xf32> to vector<1x640xf32>
    %6 = vector.broadcast %5 : vector<1x640xf32> to vector<8x640xf32>
    %c1 = arith.constant 1 : index
    %c0_3 = arith.constant 0 : index
    %c0_4 = arith.constant 0 : index
    %7 = vector.load %arg3[%c1, %c0_3, %c0_4] : memref<2x1x640xf32, #tpu.memory_space<vmem>>, vector<1x1x640xf32>
    %8 = vector.shape_cast %7 : vector<1x1x640xf32> to vector<1x640xf32>
    %9 = vector.shape_cast %8 : vector<1x640xf32> to vector<1x640xf32>
    %10 = vector.broadcast %9 : vector<1x640xf32> to vector<8x640xf32>
    %c0_i32_5 = arith.constant 0 : i32
    %c8_i32 = arith.constant 8 : i32
    %11 = arith.addi %c0_i32_5, %c8_i32 : i32
    %c1_i32 = arith.constant 1 : i32
    scf.for %arg8 = %c0_i32_5 to %11 step %c1_i32  : i32 {
      %c8_i32_7 = arith.constant 8 : i32
      %12 = arith.muli %arg1, %c8_i32_7 : i32
      %13 = arith.addi %12, %arg8 : i32
      %c1_i32_8 = arith.constant 1 : i32
      %14 = arith.addi %13, %c1_i32_8 : i32
      %c20_i32 = arith.constant 20 : i32
      %15 = arith.cmpi sle, %14, %c20_i32 : i32
      %16 = arith.extui %15 : i1 to i32
      %c0_i32_9 = arith.constant 0 : i32
      %17 = arith.cmpi ne, %16, %c0_i32_9 : i32
      scf.if %17 {
        %c1_i32_10 = arith.constant 1 : i32
        %18 = arith.andi %14, %c1_i32_10 : i32
        %c0_i32_11 = arith.constant 0 : i32
        %19 = arith.cmpi eq, %18, %c0_i32_11 : i32
        %c1_i32_12 = arith.constant 1 : i32
        %c0_i32_13 = arith.constant 0 : i32
        %20 = arith.select %19, %c1_i32_12, %c0_i32_13 : i32
        %c0_i32_14 = arith.constant 0 : i32
        %21 = arith.addi %c0_i32_14, %20 : i32
        %c3_i32 = arith.constant 3 : i32
        %22 = arith.andi %14, %c3_i32 : i32
        %c0_i32_15 = arith.constant 0 : i32
        %23 = arith.cmpi eq, %22, %c0_i32_15 : i32
        %c1_i32_16 = arith.constant 1 : i32
        %c0_i32_17 = arith.constant 0 : i32
        %24 = arith.select %23, %c1_i32_16, %c0_i32_17 : i32
        %25 = arith.addi %21, %24 : i32
        %c7_i32 = arith.constant 7 : i32
        %26 = arith.andi %14, %c7_i32 : i32
        %c0_i32_18 = arith.constant 0 : i32
        %27 = arith.cmpi eq, %26, %c0_i32_18 : i32
        %c1_i32_19 = arith.constant 1 : i32
        %c0_i32_20 = arith.constant 0 : i32
        %28 = arith.select %27, %c1_i32_19, %c0_i32_20 : i32
        %29 = arith.addi %25, %28 : i32
        %c15_i32 = arith.constant 15 : i32
        %30 = arith.andi %14, %c15_i32 : i32
        %c0_i32_21 = arith.constant 0 : i32
        %31 = arith.cmpi eq, %30, %c0_i32_21 : i32
        %c1_i32_22 = arith.constant 1 : i32
        %c0_i32_23 = arith.constant 0 : i32
        %32 = arith.select %31, %c1_i32_22, %c0_i32_23 : i32
        %33 = arith.addi %29, %32 : i32
        %c31_i32 = arith.constant 31 : i32
        %34 = arith.andi %14, %c31_i32 : i32
        %c0_i32_24 = arith.constant 0 : i32
        %35 = arith.cmpi eq, %34, %c0_i32_24 : i32
        %c1_i32_25 = arith.constant 1 : i32
        %c0_i32_26 = arith.constant 0 : i32
        %36 = arith.select %35, %c1_i32_25, %c0_i32_26 : i32
        %37 = arith.addi %33, %36 : i32
        %38 = arith.index_cast %arg8 : i32 to index
        %c0_27 = arith.constant 0 : index
        %c0_28 = arith.constant 0 : index
        %39 = vector.load %arg4[%38, %c0_27, %c0_28] : memref<8x8x256xf32, #tpu.memory_space<vmem>>, vector<1x8x256xf32>
        %40 = vector.shape_cast %39 : vector<1x8x256xf32> to vector<8x256xf32>
        %c0_29 = arith.constant 0 : index
        %c0_30 = arith.constant 0 : index
        %41 = vector.load %arg7[%c0_29, %c0_30] : memref<8x256xf32, #tpu.memory_space<vmem>>, vector<8x256xf32>
        tpu.vector_store %arg7[%c0_29, %c0_30], %40 {strides = array<i32>} : memref<8x256xf32, #tpu.memory_space<vmem>>, vector<8x256xf32>,
        %c0_i32_31 = arith.constant 0 : i32
        %42 = arith.cmpi slt, %c0_i32_31, %37 : i32
        %43 = arith.extui %42 : i1 to i32
        %c0_i32_32 = arith.constant 0 : i32
        %44 = arith.cmpi ne, %43, %c0_i32_32 : i32
        scf.if %44 {
          %102 = arith.index_cast %c0_i32_31 : i32 to index
          %c0_68 = arith.constant 0 : index
          %c0_69 = arith.constant 0 : index
          %103 = vector.load %arg6[%102, %c0_68, %c0_69] : memref<5x8x256xf32, #tpu.memory_space<vmem>>, vector<1x8x256xf32>
          %104 = vector.shape_cast %103 : vector<1x8x256xf32> to vector<8x256xf32>
          %c0_70 = arith.constant 0 : index
          %c0_71 = arith.constant 0 : index
          %105 = vector.load %arg7[%c0_70, %c0_71] : memref<8x256xf32, #tpu.memory_space<vmem>>, vector<8x256xf32>
          %106 = vector.extract_strided_slice %104 {offsets = [0, 0], sizes = [8, 128], strides = [1, 1]} : vector<8x256xf32> to vector<8x128xf32>
          %107 = vector.extract_strided_slice %104 {offsets = [0, 128], sizes = [8, 128], strides = [1, 1]} : vector<8x256xf32> to vector<8x128xf32>
          %108 = vector.extract_strided_slice %105 {offsets = [0, 0], sizes = [8, 128], strides = [1, 1]} : vector<8x256xf32> to vector<8x128xf32>
          %109 = vector.extract_strided_slice %105 {offsets = [0, 128], sizes = [8, 128], strides = [1, 1]} : vector<8x256xf32> to vector<8x128xf32>
          %110 = arith.truncf %106 : vector<8x128xf32> to vector<8x128xbf16>
          %c0_72 = arith.constant 0 : index
          %c0_73 = arith.constant 0 : index
          %c0_74 = arith.constant 0 : index
          %c0_75 = arith.constant 0 : index
          %111 = vector.load %arg2[%c0_72, %c0_73, %c0_74, %c0_75] : memref<2x2x128x640xbf16, #tpu.memory_space<vmem>>, vector<1x1x128x640xbf16>
          %112 = vector.shape_cast %111 : vector<1x1x128x640xbf16> to vector<128x640xbf16>
          %cst = arith.constant dense<0.000000e+00> : vector<8x640xf32>
          %113 = tpu.matmul %110, %112, %cst {dimension_numbers = #tpu.dot_dimension_numbers<[1], [0], [0], [1], [0, 0, 1, 1], [], []>} : vector<8x128xbf16>, vector<128x640xbf16>, vector<8x640xf32> -> vector<8x640xf32>
          %114 = arith.truncf %108 : vector<8x128xf32> to vector<8x128xbf16>
          %c0_76 = arith.constant 0 : index
          %c1_77 = arith.constant 1 : index
          %c0_78 = arith.constant 0 : index
          %c0_79 = arith.constant 0 : index
          %115 = vector.load %arg2[%c0_76, %c1_77, %c0_78, %c0_79] : memref<2x2x128x640xbf16, #tpu.memory_space<vmem>>, vector<1x1x128x640xbf16>
          %116 = vector.shape_cast %115 : vector<1x1x128x640xbf16> to vector<128x640xbf16>
          %cst_80 = arith.constant dense<0.000000e+00> : vector<8x640xf32>
          %117 = tpu.matmul %114, %116, %cst_80 {dimension_numbers = #tpu.dot_dimension_numbers<[1], [0], [0], [1], [0, 0, 1, 1], [], []>} : vector<8x128xbf16>, vector<128x640xbf16>, vector<8x640xf32> -> vector<8x640xf32>
          %118 = arith.addf %113, %117 : vector<8x640xf32>
          %119 = arith.addf %118, %6 : vector<8x640xf32>
          %120 = vector.extract_strided_slice %119 {offsets = [0, 0], sizes = [8, 128], strides = [1, 1]} : vector<8x640xf32> to vector<8x128xf32>
          %cst_81 = arith.constant 5.000000e-01 : f32
          %121 = vector.broadcast %cst_81 : f32 to vector<8x128xf32>
          %122 = arith.mulf %121, %120 : vector<8x128xf32>
          %123 = math.tanh %122 : vector<8x128xf32>
          %cst_82 = arith.constant 1.000000e+00 : f32
          %124 = vector.broadcast %cst_82 : f32 to vector<8x128xf32>
          %125 = arith.addf %124, %123 : vector<8x128xf32>
          %cst_83 = arith.constant 5.000000e-01 : f32
          %126 = vector.broadcast %cst_83 : f32 to vector<8x128xf32>
          %127 = arith.mulf %126, %125 : vector<8x128xf32>
          %128 = vector.extract_strided_slice %119 {offsets = [0, 128], sizes = [8, 128], strides = [1, 1]} : vector<8x640xf32> to vector<8x128xf32>
          %cst_84 = arith.constant 5.000000e-01 : f32
          %129 = vector.broadcast %cst_84 : f32 to vector<8x128xf32>
          %130 = arith.mulf %129, %128 : vector<8x128xf32>
          %131 = math.tanh %130 : vector<8x128xf32>
          %cst_85 = arith.constant 1.000000e+00 : f32
          %132 = vector.broadcast %cst_85 : f32 to vector<8x128xf32>
          %133 = arith.addf %132, %131 : vector<8x128xf32>
          %cst_86 = arith.constant 5.000000e-01 : f32
          %134 = vector.broadcast %cst_86 : f32 to vector<8x128xf32>
          %135 = arith.mulf %134, %133 : vector<8x128xf32>
          %136 = vector.extract_strided_slice %119 {offsets = [0, 256], sizes = [8, 128], strides = [1, 1]} : vector<8x640xf32> to vector<8x128xf32>
          %137 = math.tanh %136 : vector<8x128xf32>
          %138 = vector.extract_strided_slice %119 {offsets = [0, 384], sizes = [8, 128], strides = [1, 1]} : vector<8x640xf32> to vector<8x128xf32>
          %cst_87 = arith.constant 5.000000e-01 : f32
          %139 = vector.broadcast %cst_87 : f32 to vector<8x128xf32>
          %140 = arith.mulf %139, %138 : vector<8x128xf32>
          %141 = math.tanh %140 : vector<8x128xf32>
          %cst_88 = arith.constant 1.000000e+00 : f32
          %142 = vector.broadcast %cst_88 : f32 to vector<8x128xf32>
          %143 = arith.addf %142, %141 : vector<8x128xf32>
          %cst_89 = arith.constant 5.000000e-01 : f32
          %144 = vector.broadcast %cst_89 : f32 to vector<8x128xf32>
          %145 = arith.mulf %144, %143 : vector<8x128xf32>
          %146 = vector.extract_strided_slice %119 {offsets = [0, 512], sizes = [8, 128], strides = [1, 1]} : vector<8x640xf32> to vector<8x128xf32>
          %cst_90 = arith.constant 5.000000e-01 : f32
          %147 = vector.broadcast %cst_90 : f32 to vector<8x128xf32>
          %148 = arith.mulf %147, %146 : vector<8x128xf32>
          %149 = math.tanh %148 : vector<8x128xf32>
          %cst_91 = arith.constant 1.000000e+00 : f32
          %150 = vector.broadcast %cst_91 : f32 to vector<8x128xf32>
          %151 = arith.addf %150, %149 : vector<8x128xf32>
          %cst_92 = arith.constant 5.000000e-01 : f32
          %152 = vector.broadcast %cst_92 : f32 to vector<8x128xf32>
          %153 = arith.mulf %152, %151 : vector<8x128xf32>
          %154 = arith.mulf %127, %137 : vector<8x128xf32>
          %155 = arith.mulf %145, %107 : vector<8x128xf32>
          %156 = arith.addf %154, %155 : vector<8x128xf32>
          %157 = arith.mulf %153, %109 : vector<8x128xf32>
          %158 = arith.addf %156, %157 : vector<8x128xf32>
          %159 = math.tanh %158 : vector<8x128xf32>
          %160 = arith.mulf %135, %159 : vector<8x128xf32>
          %c0_93 = arith.constant 0 : index
          %c0_94 = arith.constant 0 : index
          %161 = vector.load %arg7[%c0_93, %c0_94] : memref<8x256xf32, #tpu.memory_space<vmem>>, vector<8x128xf32>
          tpu.vector_store %arg7[%c0_93, %c0_94], %160 {strides = array<i32>} : memref<8x256xf32, #tpu.memory_space<vmem>>, vector<8x128xf32>,
          %c0_95 = arith.constant 0 : index
          %c128 = arith.constant 128 : index
          %162 = vector.load %arg7[%c0_95, %c128] : memref<8x256xf32, #tpu.memory_space<vmem>>, vector<8x128xf32>
          tpu.vector_store %arg7[%c0_95, %c128], %158 {strides = array<i32>} : memref<8x256xf32, #tpu.memory_space<vmem>>, vector<8x128xf32>,
        } else {
        }
        %c1_i32_33 = arith.constant 1 : i32
        %45 = arith.cmpi slt, %c1_i32_33, %37 : i32
        %46 = arith.extui %45 : i1 to i32
        %c0_i32_34 = arith.constant 0 : i32
        %47 = arith.cmpi ne, %46, %c0_i32_34 : i32
        scf.if %47 {
          %102 = arith.index_cast %c1_i32_33 : i32 to index
          %c0_68 = arith.constant 0 : index
          %c0_69 = arith.constant 0 : index
          %103 = vector.load %arg6[%102, %c0_68, %c0_69] : memref<5x8x256xf32, #tpu.memory_space<vmem>>, vector<1x8x256xf32>
          %104 = vector.shape_cast %103 : vector<1x8x256xf32> to vector<8x256xf32>
          %c0_70 = arith.constant 0 : index
          %c0_71 = arith.constant 0 : index
          %105 = vector.load %arg7[%c0_70, %c0_71] : memref<8x256xf32, #tpu.memory_space<vmem>>, vector<8x256xf32>
          %106 = vector.extract_strided_slice %104 {offsets = [0, 0], sizes = [8, 128], strides = [1, 1]} : vector<8x256xf32> to vector<8x128xf32>
          %107 = vector.extract_strided_slice %104 {offsets = [0, 128], sizes = [8, 128], strides = [1, 1]} : vector<8x256xf32> to vector<8x128xf32>
          %108 = vector.extract_strided_slice %105 {offsets = [0, 0], sizes = [8, 128], strides = [1, 1]} : vector<8x256xf32> to vector<8x128xf32>
          %109 = vector.extract_strided_slice %105 {offsets = [0, 128], sizes = [8, 128], strides = [1, 1]} : vector<8x256xf32> to vector<8x128xf32>
          %110 = arith.truncf %106 : vector<8x128xf32> to vector<8x128xbf16>
          %c0_72 = arith.constant 0 : index
          %c0_73 = arith.constant 0 : index
          %c0_74 = arith.constant 0 : index
          %c0_75 = arith.constant 0 : index
          %111 = vector.load %arg2[%c0_72, %c0_73, %c0_74, %c0_75] : memref<2x2x128x640xbf16, #tpu.memory_space<vmem>>, vector<1x1x128x640xbf16>
          %112 = vector.shape_cast %111 : vector<1x1x128x640xbf16> to vector<128x640xbf16>
          %cst = arith.constant dense<0.000000e+00> : vector<8x640xf32>
          %113 = tpu.matmul %110, %112, %cst {dimension_numbers = #tpu.dot_dimension_numbers<[1], [0], [0], [1], [0, 0, 1, 1], [], []>} : vector<8x128xbf16>, vector<128x640xbf16>, vector<8x640xf32> -> vector<8x640xf32>
          %114 = arith.truncf %108 : vector<8x128xf32> to vector<8x128xbf16>
          %c0_76 = arith.constant 0 : index
          %c1_77 = arith.constant 1 : index
          %c0_78 = arith.constant 0 : index
          %c0_79 = arith.constant 0 : index
          %115 = vector.load %arg2[%c0_76, %c1_77, %c0_78, %c0_79] : memref<2x2x128x640xbf16, #tpu.memory_space<vmem>>, vector<1x1x128x640xbf16>
          %116 = vector.shape_cast %115 : vector<1x1x128x640xbf16> to vector<128x640xbf16>
          %cst_80 = arith.constant dense<0.000000e+00> : vector<8x640xf32>
          %117 = tpu.matmul %114, %116, %cst_80 {dimension_numbers = #tpu.dot_dimension_numbers<[1], [0], [0], [1], [0, 0, 1, 1], [], []>} : vector<8x128xbf16>, vector<128x640xbf16>, vector<8x640xf32> -> vector<8x640xf32>
          %118 = arith.addf %113, %117 : vector<8x640xf32>
          %119 = arith.addf %118, %6 : vector<8x640xf32>
          %120 = vector.extract_strided_slice %119 {offsets = [0, 0], sizes = [8, 128], strides = [1, 1]} : vector<8x640xf32> to vector<8x128xf32>
          %cst_81 = arith.constant 5.000000e-01 : f32
          %121 = vector.broadcast %cst_81 : f32 to vector<8x128xf32>
          %122 = arith.mulf %121, %120 : vector<8x128xf32>
          %123 = math.tanh %122 : vector<8x128xf32>
          %cst_82 = arith.constant 1.000000e+00 : f32
          %124 = vector.broadcast %cst_82 : f32 to vector<8x128xf32>
          %125 = arith.addf %124, %123 : vector<8x128xf32>
          %cst_83 = arith.constant 5.000000e-01 : f32
          %126 = vector.broadcast %cst_83 : f32 to vector<8x128xf32>
          %127 = arith.mulf %126, %125 : vector<8x128xf32>
          %128 = vector.extract_strided_slice %119 {offsets = [0, 128], sizes = [8, 128], strides = [1, 1]} : vector<8x640xf32> to vector<8x128xf32>
          %cst_84 = arith.constant 5.000000e-01 : f32
          %129 = vector.broadcast %cst_84 : f32 to vector<8x128xf32>
          %130 = arith.mulf %129, %128 : vector<8x128xf32>
          %131 = math.tanh %130 : vector<8x128xf32>
          %cst_85 = arith.constant 1.000000e+00 : f32
          %132 = vector.broadcast %cst_85 : f32 to vector<8x128xf32>
          %133 = arith.addf %132, %131 : vector<8x128xf32>
          %cst_86 = arith.constant 5.000000e-01 : f32
          %134 = vector.broadcast %cst_86 : f32 to vector<8x128xf32>
          %135 = arith.mulf %134, %133 : vector<8x128xf32>
          %136 = vector.extract_strided_slice %119 {offsets = [0, 256], sizes = [8, 128], strides = [1, 1]} : vector<8x640xf32> to vector<8x128xf32>
          %137 = math.tanh %136 : vector<8x128xf32>
          %138 = vector.extract_strided_slice %119 {offsets = [0, 384], sizes = [8, 128], strides = [1, 1]} : vector<8x640xf32> to vector<8x128xf32>
          %cst_87 = arith.constant 5.000000e-01 : f32
          %139 = vector.broadcast %cst_87 : f32 to vector<8x128xf32>
          %140 = arith.mulf %139, %138 : vector<8x128xf32>
          %141 = math.tanh %140 : vector<8x128xf32>
          %cst_88 = arith.constant 1.000000e+00 : f32
          %142 = vector.broadcast %cst_88 : f32 to vector<8x128xf32>
          %143 = arith.addf %142, %141 : vector<8x128xf32>
          %cst_89 = arith.constant 5.000000e-01 : f32
          %144 = vector.broadcast %cst_89 : f32 to vector<8x128xf32>
          %145 = arith.mulf %144, %143 : vector<8x128xf32>
          %146 = vector.extract_strided_slice %119 {offsets = [0, 512], sizes = [8, 128], strides = [1, 1]} : vector<8x640xf32> to vector<8x128xf32>
          %cst_90 = arith.constant 5.000000e-01 : f32
          %147 = vector.broadcast %cst_90 : f32 to vector<8x128xf32>
          %148 = arith.mulf %147, %146 : vector<8x128xf32>
          %149 = math.tanh %148 : vector<8x128xf32>
          %cst_91 = arith.constant 1.000000e+00 : f32
          %150 = vector.broadcast %cst_91 : f32 to vector<8x128xf32>
          %151 = arith.addf %150, %149 : vector<8x128xf32>
          %cst_92 = arith.constant 5.000000e-01 : f32
          %152 = vector.broadcast %cst_92 : f32 to vector<8x128xf32>
          %153 = arith.mulf %152, %151 : vector<8x128xf32>
          %154 = arith.mulf %127, %137 : vector<8x128xf32>
          %155 = arith.mulf %145, %107 : vector<8x128xf32>
          %156 = arith.addf %154, %155 : vector<8x128xf32>
          %157 = arith.mulf %153, %109 : vector<8x128xf32>
          %158 = arith.addf %156, %157 : vector<8x128xf32>
          %159 = math.tanh %158 : vector<8x128xf32>
          %160 = arith.mulf %135, %159 : vector<8x128xf32>
          %c0_93 = arith.constant 0 : index
          %c0_94 = arith.constant 0 : index
          %161 = vector.load %arg7[%c0_93, %c0_94] : memref<8x256xf32, #tpu.memory_space<vmem>>, vector<8x128xf32>
          tpu.vector_store %arg7[%c0_93, %c0_94], %160 {strides = array<i32>} : memref<8x256xf32, #tpu.memory_space<vmem>>, vector<8x128xf32>,
          %c0_95 = arith.constant 0 : index
          %c128 = arith.constant 128 : index
          %162 = vector.load %arg7[%c0_95, %c128] : memref<8x256xf32, #tpu.memory_space<vmem>>, vector<8x128xf32>
          tpu.vector_store %arg7[%c0_95, %c128], %158 {strides = array<i32>} : memref<8x256xf32, #tpu.memory_space<vmem>>, vector<8x128xf32>,
        } else {
        }
        %c2_i32 = arith.constant 2 : i32
        %48 = arith.cmpi slt, %c2_i32, %37 : i32
        %49 = arith.extui %48 : i1 to i32
        %c0_i32_35 = arith.constant 0 : i32
        %50 = arith.cmpi ne, %49, %c0_i32_35 : i32
        scf.if %50 {
          %102 = arith.index_cast %c2_i32 : i32 to index
          %c0_68 = arith.constant 0 : index
          %c0_69 = arith.constant 0 : index
          %103 = vector.load %arg6[%102, %c0_68, %c0_69] : memref<5x8x256xf32, #tpu.memory_space<vmem>>, vector<1x8x256xf32>
          %104 = vector.shape_cast %103 : vector<1x8x256xf32> to vector<8x256xf32>
          %c0_70 = arith.constant 0 : index
          %c0_71 = arith.constant 0 : index
          %105 = vector.load %arg7[%c0_70, %c0_71] : memref<8x256xf32, #tpu.memory_space<vmem>>, vector<8x256xf32>
          %106 = vector.extract_strided_slice %104 {offsets = [0, 0], sizes = [8, 128], strides = [1, 1]} : vector<8x256xf32> to vector<8x128xf32>
          %107 = vector.extract_strided_slice %104 {offsets = [0, 128], sizes = [8, 128], strides = [1, 1]} : vector<8x256xf32> to vector<8x128xf32>
          %108 = vector.extract_strided_slice %105 {offsets = [0, 0], sizes = [8, 128], strides = [1, 1]} : vector<8x256xf32> to vector<8x128xf32>
          %109 = vector.extract_strided_slice %105 {offsets = [0, 128], sizes = [8, 128], strides = [1, 1]} : vector<8x256xf32> to vector<8x128xf32>
          %110 = arith.truncf %106 : vector<8x128xf32> to vector<8x128xbf16>
          %c0_72 = arith.constant 0 : index
          %c0_73 = arith.constant 0 : index
          %c0_74 = arith.constant 0 : index
          %c0_75 = arith.constant 0 : index
          %111 = vector.load %arg2[%c0_72, %c0_73, %c0_74, %c0_75] : memref<2x2x128x640xbf16, #tpu.memory_space<vmem>>, vector<1x1x128x640xbf16>
          %112 = vector.shape_cast %111 : vector<1x1x128x640xbf16> to vector<128x640xbf16>
          %cst = arith.constant dense<0.000000e+00> : vector<8x640xf32>
          %113 = tpu.matmul %110, %112, %cst {dimension_numbers = #tpu.dot_dimension_numbers<[1], [0], [0], [1], [0, 0, 1, 1], [], []>} : vector<8x128xbf16>, vector<128x640xbf16>, vector<8x640xf32> -> vector<8x640xf32>
          %114 = arith.truncf %108 : vector<8x128xf32> to vector<8x128xbf16>
          %c0_76 = arith.constant 0 : index
          %c1_77 = arith.constant 1 : index
          %c0_78 = arith.constant 0 : index
          %c0_79 = arith.constant 0 : index
          %115 = vector.load %arg2[%c0_76, %c1_77, %c0_78, %c0_79] : memref<2x2x128x640xbf16, #tpu.memory_space<vmem>>, vector<1x1x128x640xbf16>
          %116 = vector.shape_cast %115 : vector<1x1x128x640xbf16> to vector<128x640xbf16>
          %cst_80 = arith.constant dense<0.000000e+00> : vector<8x640xf32>
          %117 = tpu.matmul %114, %116, %cst_80 {dimension_numbers = #tpu.dot_dimension_numbers<[1], [0], [0], [1], [0, 0, 1, 1], [], []>} : vector<8x128xbf16>, vector<128x640xbf16>, vector<8x640xf32> -> vector<8x640xf32>
          %118 = arith.addf %113, %117 : vector<8x640xf32>
          %119 = arith.addf %118, %6 : vector<8x640xf32>
          %120 = vector.extract_strided_slice %119 {offsets = [0, 0], sizes = [8, 128], strides = [1, 1]} : vector<8x640xf32> to vector<8x128xf32>
          %cst_81 = arith.constant 5.000000e-01 : f32
          %121 = vector.broadcast %cst_81 : f32 to vector<8x128xf32>
          %122 = arith.mulf %121, %120 : vector<8x128xf32>
          %123 = math.tanh %122 : vector<8x128xf32>
          %cst_82 = arith.constant 1.000000e+00 : f32
          %124 = vector.broadcast %cst_82 : f32 to vector<8x128xf32>
          %125 = arith.addf %124, %123 : vector<8x128xf32>
          %cst_83 = arith.constant 5.000000e-01 : f32
          %126 = vector.broadcast %cst_83 : f32 to vector<8x128xf32>
          %127 = arith.mulf %126, %125 : vector<8x128xf32>
          %128 = vector.extract_strided_slice %119 {offsets = [0, 128], sizes = [8, 128], strides = [1, 1]} : vector<8x640xf32> to vector<8x128xf32>
          %cst_84 = arith.constant 5.000000e-01 : f32
          %129 = vector.broadcast %cst_84 : f32 to vector<8x128xf32>
          %130 = arith.mulf %129, %128 : vector<8x128xf32>
          %131 = math.tanh %130 : vector<8x128xf32>
          %cst_85 = arith.constant 1.000000e+00 : f32
          %132 = vector.broadcast %cst_85 : f32 to vector<8x128xf32>
          %133 = arith.addf %132, %131 : vector<8x128xf32>
          %cst_86 = arith.constant 5.000000e-01 : f32
          %134 = vector.broadcast %cst_86 : f32 to vector<8x128xf32>
          %135 = arith.mulf %134, %133 : vector<8x128xf32>
          %136 = vector.extract_strided_slice %119 {offsets = [0, 256], sizes = [8, 128], strides = [1, 1]} : vector<8x640xf32> to vector<8x128xf32>
          %137 = math.tanh %136 : vector<8x128xf32>
          %138 = vector.extract_strided_slice %119 {offsets = [0, 384], sizes = [8, 128], strides = [1, 1]} : vector<8x640xf32> to vector<8x128xf32>
          %cst_87 = arith.constant 5.000000e-01 : f32
          %139 = vector.broadcast %cst_87 : f32 to vector<8x128xf32>
          %140 = arith.mulf %139, %138 : vector<8x128xf32>
          %141 = math.tanh %140 : vector<8x128xf32>
          %cst_88 = arith.constant 1.000000e+00 : f32
          %142 = vector.broadcast %cst_88 : f32 to vector<8x128xf32>
          %143 = arith.addf %142, %141 : vector<8x128xf32>
          %cst_89 = arith.constant 5.000000e-01 : f32
          %144 = vector.broadcast %cst_89 : f32 to vector<8x128xf32>
          %145 = arith.mulf %144, %143 : vector<8x128xf32>
          %146 = vector.extract_strided_slice %119 {offsets = [0, 512], sizes = [8, 128], strides = [1, 1]} : vector<8x640xf32> to vector<8x128xf32>
          %cst_90 = arith.constant 5.000000e-01 : f32
          %147 = vector.broadcast %cst_90 : f32 to vector<8x128xf32>
          %148 = arith.mulf %147, %146 : vector<8x128xf32>
          %149 = math.tanh %148 : vector<8x128xf32>
          %cst_91 = arith.constant 1.000000e+00 : f32
          %150 = vector.broadcast %cst_91 : f32 to vector<8x128xf32>
          %151 = arith.addf %150, %149 : vector<8x128xf32>
          %cst_92 = arith.constant 5.000000e-01 : f32
          %152 = vector.broadcast %cst_92 : f32 to vector<8x128xf32>
          %153 = arith.mulf %152, %151 : vector<8x128xf32>
          %154 = arith.mulf %127, %137 : vector<8x128xf32>
          %155 = arith.mulf %145, %107 : vector<8x128xf32>
          %156 = arith.addf %154, %155 : vector<8x128xf32>
          %157 = arith.mulf %153, %109 : vector<8x128xf32>
          %158 = arith.addf %156, %157 : vector<8x128xf32>
          %159 = math.tanh %158 : vector<8x128xf32>
          %160 = arith.mulf %135, %159 : vector<8x128xf32>
          %c0_93 = arith.constant 0 : index
          %c0_94 = arith.constant 0 : index
          %161 = vector.load %arg7[%c0_93, %c0_94] : memref<8x256xf32, #tpu.memory_space<vmem>>, vector<8x128xf32>
          tpu.vector_store %arg7[%c0_93, %c0_94], %160 {strides = array<i32>} : memref<8x256xf32, #tpu.memory_space<vmem>>, vector<8x128xf32>,
          %c0_95 = arith.constant 0 : index
          %c128 = arith.constant 128 : index
          %162 = vector.load %arg7[%c0_95, %c128] : memref<8x256xf32, #tpu.memory_space<vmem>>, vector<8x128xf32>
          tpu.vector_store %arg7[%c0_95, %c128], %158 {strides = array<i32>} : memref<8x256xf32, #tpu.memory_space<vmem>>, vector<8x128xf32>,
        } else {
        }
        %c3_i32_36 = arith.constant 3 : i32
        %51 = arith.cmpi slt, %c3_i32_36, %37 : i32
        %52 = arith.extui %51 : i1 to i32
        %c0_i32_37 = arith.constant 0 : i32
        %53 = arith.cmpi ne, %52, %c0_i32_37 : i32
        scf.if %53 {
          %102 = arith.index_cast %c3_i32_36 : i32 to index
          %c0_68 = arith.constant 0 : index
          %c0_69 = arith.constant 0 : index
          %103 = vector.load %arg6[%102, %c0_68, %c0_69] : memref<5x8x256xf32, #tpu.memory_space<vmem>>, vector<1x8x256xf32>
          %104 = vector.shape_cast %103 : vector<1x8x256xf32> to vector<8x256xf32>
          %c0_70 = arith.constant 0 : index
          %c0_71 = arith.constant 0 : index
          %105 = vector.load %arg7[%c0_70, %c0_71] : memref<8x256xf32, #tpu.memory_space<vmem>>, vector<8x256xf32>
          %106 = vector.extract_strided_slice %104 {offsets = [0, 0], sizes = [8, 128], strides = [1, 1]} : vector<8x256xf32> to vector<8x128xf32>
          %107 = vector.extract_strided_slice %104 {offsets = [0, 128], sizes = [8, 128], strides = [1, 1]} : vector<8x256xf32> to vector<8x128xf32>
          %108 = vector.extract_strided_slice %105 {offsets = [0, 0], sizes = [8, 128], strides = [1, 1]} : vector<8x256xf32> to vector<8x128xf32>
          %109 = vector.extract_strided_slice %105 {offsets = [0, 128], sizes = [8, 128], strides = [1, 1]} : vector<8x256xf32> to vector<8x128xf32>
          %110 = arith.truncf %106 : vector<8x128xf32> to vector<8x128xbf16>
          %c0_72 = arith.constant 0 : index
          %c0_73 = arith.constant 0 : index
          %c0_74 = arith.constant 0 : index
          %c0_75 = arith.constant 0 : index
          %111 = vector.load %arg2[%c0_72, %c0_73, %c0_74, %c0_75] : memref<2x2x128x640xbf16, #tpu.memory_space<vmem>>, vector<1x1x128x640xbf16>
          %112 = vector.shape_cast %111 : vector<1x1x128x640xbf16> to vector<128x640xbf16>
          %cst = arith.constant dense<0.000000e+00> : vector<8x640xf32>
          %113 = tpu.matmul %110, %112, %cst {dimension_numbers = #tpu.dot_dimension_numbers<[1], [0], [0], [1], [0, 0, 1, 1], [], []>} : vector<8x128xbf16>, vector<128x640xbf16>, vector<8x640xf32> -> vector<8x640xf32>
          %114 = arith.truncf %108 : vector<8x128xf32> to vector<8x128xbf16>
          %c0_76 = arith.constant 0 : index
          %c1_77 = arith.constant 1 : index
          %c0_78 = arith.constant 0 : index
          %c0_79 = arith.constant 0 : index
          %115 = vector.load %arg2[%c0_76, %c1_77, %c0_78, %c0_79] : memref<2x2x128x640xbf16, #tpu.memory_space<vmem>>, vector<1x1x128x640xbf16>
          %116 = vector.shape_cast %115 : vector<1x1x128x640xbf16> to vector<128x640xbf16>
          %cst_80 = arith.constant dense<0.000000e+00> : vector<8x640xf32>
          %117 = tpu.matmul %114, %116, %cst_80 {dimension_numbers = #tpu.dot_dimension_numbers<[1], [0], [0], [1], [0, 0, 1, 1], [], []>} : vector<8x128xbf16>, vector<128x640xbf16>, vector<8x640xf32> -> vector<8x640xf32>
          %118 = arith.addf %113, %117 : vector<8x640xf32>
          %119 = arith.addf %118, %6 : vector<8x640xf32>
          %120 = vector.extract_strided_slice %119 {offsets = [0, 0], sizes = [8, 128], strides = [1, 1]} : vector<8x640xf32> to vector<8x128xf32>
          %cst_81 = arith.constant 5.000000e-01 : f32
          %121 = vector.broadcast %cst_81 : f32 to vector<8x128xf32>
          %122 = arith.mulf %121, %120 : vector<8x128xf32>
          %123 = math.tanh %122 : vector<8x128xf32>
          %cst_82 = arith.constant 1.000000e+00 : f32
          %124 = vector.broadcast %cst_82 : f32 to vector<8x128xf32>
          %125 = arith.addf %124, %123 : vector<8x128xf32>
          %cst_83 = arith.constant 5.000000e-01 : f32
          %126 = vector.broadcast %cst_83 : f32 to vector<8x128xf32>
          %127 = arith.mulf %126, %125 : vector<8x128xf32>
          %128 = vector.extract_strided_slice %119 {offsets = [0, 128], sizes = [8, 128], strides = [1, 1]} : vector<8x640xf32> to vector<8x128xf32>
          %cst_84 = arith.constant 5.000000e-01 : f32
          %129 = vector.broadcast %cst_84 : f32 to vector<8x128xf32>
          %130 = arith.mulf %129, %128 : vector<8x128xf32>
          %131 = math.tanh %130 : vector<8x128xf32>
          %cst_85 = arith.constant 1.000000e+00 : f32
          %132 = vector.broadcast %cst_85 : f32 to vector<8x128xf32>
          %133 = arith.addf %132, %131 : vector<8x128xf32>
          %cst_86 = arith.constant 5.000000e-01 : f32
          %134 = vector.broadcast %cst_86 : f32 to vector<8x128xf32>
          %135 = arith.mulf %134, %133 : vector<8x128xf32>
          %136 = vector.extract_strided_slice %119 {offsets = [0, 256], sizes = [8, 128], strides = [1, 1]} : vector<8x640xf32> to vector<8x128xf32>
          %137 = math.tanh %136 : vector<8x128xf32>
          %138 = vector.extract_strided_slice %119 {offsets = [0, 384], sizes = [8, 128], strides = [1, 1]} : vector<8x640xf32> to vector<8x128xf32>
          %cst_87 = arith.constant 5.000000e-01 : f32
          %139 = vector.broadcast %cst_87 : f32 to vector<8x128xf32>
          %140 = arith.mulf %139, %138 : vector<8x128xf32>
          %141 = math.tanh %140 : vector<8x128xf32>
          %cst_88 = arith.constant 1.000000e+00 : f32
          %142 = vector.broadcast %cst_88 : f32 to vector<8x128xf32>
          %143 = arith.addf %142, %141 : vector<8x128xf32>
          %cst_89 = arith.constant 5.000000e-01 : f32
          %144 = vector.broadcast %cst_89 : f32 to vector<8x128xf32>
          %145 = arith.mulf %144, %143 : vector<8x128xf32>
          %146 = vector.extract_strided_slice %119 {offsets = [0, 512], sizes = [8, 128], strides = [1, 1]} : vector<8x640xf32> to vector<8x128xf32>
          %cst_90 = arith.constant 5.000000e-01 : f32
          %147 = vector.broadcast %cst_90 : f32 to vector<8x128xf32>
          %148 = arith.mulf %147, %146 : vector<8x128xf32>
          %149 = math.tanh %148 : vector<8x128xf32>
          %cst_91 = arith.constant 1.000000e+00 : f32
          %150 = vector.broadcast %cst_91 : f32 to vector<8x128xf32>
          %151 = arith.addf %150, %149 : vector<8x128xf32>
          %cst_92 = arith.constant 5.000000e-01 : f32
          %152 = vector.broadcast %cst_92 : f32 to vector<8x128xf32>
          %153 = arith.mulf %152, %151 : vector<8x128xf32>
          %154 = arith.mulf %127, %137 : vector<8x128xf32>
          %155 = arith.mulf %145, %107 : vector<8x128xf32>
          %156 = arith.addf %154, %155 : vector<8x128xf32>
          %157 = arith.mulf %153, %109 : vector<8x128xf32>
          %158 = arith.addf %156, %157 : vector<8x128xf32>
          %159 = math.tanh %158 : vector<8x128xf32>
          %160 = arith.mulf %135, %159 : vector<8x128xf32>
          %c0_93 = arith.constant 0 : index
          %c0_94 = arith.constant 0 : index
          %161 = vector.load %arg7[%c0_93, %c0_94] : memref<8x256xf32, #tpu.memory_space<vmem>>, vector<8x128xf32>
          tpu.vector_store %arg7[%c0_93, %c0_94], %160 {strides = array<i32>} : memref<8x256xf32, #tpu.memory_space<vmem>>, vector<8x128xf32>,
          %c0_95 = arith.constant 0 : index
          %c128 = arith.constant 128 : index
          %162 = vector.load %arg7[%c0_95, %c128] : memref<8x256xf32, #tpu.memory_space<vmem>>, vector<8x128xf32>
          tpu.vector_store %arg7[%c0_95, %c128], %158 {strides = array<i32>} : memref<8x256xf32, #tpu.memory_space<vmem>>, vector<8x128xf32>,
        } else {
        }
        %c4_i32 = arith.constant 4 : i32
        %54 = arith.cmpi slt, %c4_i32, %37 : i32
        %55 = arith.extui %54 : i1 to i32
        %c0_i32_38 = arith.constant 0 : i32
        %56 = arith.cmpi ne, %55, %c0_i32_38 : i32
        scf.if %56 {
          %102 = arith.index_cast %c4_i32 : i32 to index
          %c0_68 = arith.constant 0 : index
          %c0_69 = arith.constant 0 : index
          %103 = vector.load %arg6[%102, %c0_68, %c0_69] : memref<5x8x256xf32, #tpu.memory_space<vmem>>, vector<1x8x256xf32>
          %104 = vector.shape_cast %103 : vector<1x8x256xf32> to vector<8x256xf32>
          %c0_70 = arith.constant 0 : index
          %c0_71 = arith.constant 0 : index
          %105 = vector.load %arg7[%c0_70, %c0_71] : memref<8x256xf32, #tpu.memory_space<vmem>>, vector<8x256xf32>
          %106 = vector.extract_strided_slice %104 {offsets = [0, 0], sizes = [8, 128], strides = [1, 1]} : vector<8x256xf32> to vector<8x128xf32>
          %107 = vector.extract_strided_slice %104 {offsets = [0, 128], sizes = [8, 128], strides = [1, 1]} : vector<8x256xf32> to vector<8x128xf32>
          %108 = vector.extract_strided_slice %105 {offsets = [0, 0], sizes = [8, 128], strides = [1, 1]} : vector<8x256xf32> to vector<8x128xf32>
          %109 = vector.extract_strided_slice %105 {offsets = [0, 128], sizes = [8, 128], strides = [1, 1]} : vector<8x256xf32> to vector<8x128xf32>
          %110 = arith.truncf %106 : vector<8x128xf32> to vector<8x128xbf16>
          %c0_72 = arith.constant 0 : index
          %c0_73 = arith.constant 0 : index
          %c0_74 = arith.constant 0 : index
          %c0_75 = arith.constant 0 : index
          %111 = vector.load %arg2[%c0_72, %c0_73, %c0_74, %c0_75] : memref<2x2x128x640xbf16, #tpu.memory_space<vmem>>, vector<1x1x128x640xbf16>
          %112 = vector.shape_cast %111 : vector<1x1x128x640xbf16> to vector<128x640xbf16>
          %cst = arith.constant dense<0.000000e+00> : vector<8x640xf32>
          %113 = tpu.matmul %110, %112, %cst {dimension_numbers = #tpu.dot_dimension_numbers<[1], [0], [0], [1], [0, 0, 1, 1], [], []>} : vector<8x128xbf16>, vector<128x640xbf16>, vector<8x640xf32> -> vector<8x640xf32>
          %114 = arith.truncf %108 : vector<8x128xf32> to vector<8x128xbf16>
          %c0_76 = arith.constant 0 : index
          %c1_77 = arith.constant 1 : index
          %c0_78 = arith.constant 0 : index
          %c0_79 = arith.constant 0 : index
          %115 = vector.load %arg2[%c0_76, %c1_77, %c0_78, %c0_79] : memref<2x2x128x640xbf16, #tpu.memory_space<vmem>>, vector<1x1x128x640xbf16>
          %116 = vector.shape_cast %115 : vector<1x1x128x640xbf16> to vector<128x640xbf16>
          %cst_80 = arith.constant dense<0.000000e+00> : vector<8x640xf32>
          %117 = tpu.matmul %114, %116, %cst_80 {dimension_numbers = #tpu.dot_dimension_numbers<[1], [0], [0], [1], [0, 0, 1, 1], [], []>} : vector<8x128xbf16>, vector<128x640xbf16>, vector<8x640xf32> -> vector<8x640xf32>
          %118 = arith.addf %113, %117 : vector<8x640xf32>
          %119 = arith.addf %118, %6 : vector<8x640xf32>
          %120 = vector.extract_strided_slice %119 {offsets = [0, 0], sizes = [8, 128], strides = [1, 1]} : vector<8x640xf32> to vector<8x128xf32>
          %cst_81 = arith.constant 5.000000e-01 : f32
          %121 = vector.broadcast %cst_81 : f32 to vector<8x128xf32>
          %122 = arith.mulf %121, %120 : vector<8x128xf32>
          %123 = math.tanh %122 : vector<8x128xf32>
          %cst_82 = arith.constant 1.000000e+00 : f32
          %124 = vector.broadcast %cst_82 : f32 to vector<8x128xf32>
          %125 = arith.addf %124, %123 : vector<8x128xf32>
          %cst_83 = arith.constant 5.000000e-01 : f32
          %126 = vector.broadcast %cst_83 : f32 to vector<8x128xf32>
          %127 = arith.mulf %126, %125 : vector<8x128xf32>
          %128 = vector.extract_strided_slice %119 {offsets = [0, 128], sizes = [8, 128], strides = [1, 1]} : vector<8x640xf32> to vector<8x128xf32>
          %cst_84 = arith.constant 5.000000e-01 : f32
          %129 = vector.broadcast %cst_84 : f32 to vector<8x128xf32>
          %130 = arith.mulf %129, %128 : vector<8x128xf32>
          %131 = math.tanh %130 : vector<8x128xf32>
          %cst_85 = arith.constant 1.000000e+00 : f32
          %132 = vector.broadcast %cst_85 : f32 to vector<8x128xf32>
          %133 = arith.addf %132, %131 : vector<8x128xf32>
          %cst_86 = arith.constant 5.000000e-01 : f32
          %134 = vector.broadcast %cst_86 : f32 to vector<8x128xf32>
          %135 = arith.mulf %134, %133 : vector<8x128xf32>
          %136 = vector.extract_strided_slice %119 {offsets = [0, 256], sizes = [8, 128], strides = [1, 1]} : vector<8x640xf32> to vector<8x128xf32>
          %137 = math.tanh %136 : vector<8x128xf32>
          %138 = vector.extract_strided_slice %119 {offsets = [0, 384], sizes = [8, 128], strides = [1, 1]} : vector<8x640xf32> to vector<8x128xf32>
          %cst_87 = arith.constant 5.000000e-01 : f32
          %139 = vector.broadcast %cst_87 : f32 to vector<8x128xf32>
          %140 = arith.mulf %139, %138 : vector<8x128xf32>
          %141 = math.tanh %140 : vector<8x128xf32>
          %cst_88 = arith.constant 1.000000e+00 : f32
          %142 = vector.broadcast %cst_88 : f32 to vector<8x128xf32>
          %143 = arith.addf %142, %141 : vector<8x128xf32>
          %cst_89 = arith.constant 5.000000e-01 : f32
          %144 = vector.broadcast %cst_89 : f32 to vector<8x128xf32>
          %145 = arith.mulf %144, %143 : vector<8x128xf32>
          %146 = vector.extract_strided_slice %119 {offsets = [0, 512], sizes = [8, 128], strides = [1, 1]} : vector<8x640xf32> to vector<8x128xf32>
          %cst_90 = arith.constant 5.000000e-01 : f32
          %147 = vector.broadcast %cst_90 : f32 to vector<8x128xf32>
          %148 = arith.mulf %147, %146 : vector<8x128xf32>
          %149 = math.tanh %148 : vector<8x128xf32>
          %cst_91 = arith.constant 1.000000e+00 : f32
          %150 = vector.broadcast %cst_91 : f32 to vector<8x128xf32>
          %151 = arith.addf %150, %149 : vector<8x128xf32>
          %cst_92 = arith.constant 5.000000e-01 : f32
          %152 = vector.broadcast %cst_92 : f32 to vector<8x128xf32>
          %153 = arith.mulf %152, %151 : vector<8x128xf32>
          %154 = arith.mulf %127, %137 : vector<8x128xf32>
          %155 = arith.mulf %145, %107 : vector<8x128xf32>
          %156 = arith.addf %154, %155 : vector<8x128xf32>
          %157 = arith.mulf %153, %109 : vector<8x128xf32>
          %158 = arith.addf %156, %157 : vector<8x128xf32>
          %159 = math.tanh %158 : vector<8x128xf32>
          %160 = arith.mulf %135, %159 : vector<8x128xf32>
          %c0_93 = arith.constant 0 : index
          %c0_94 = arith.constant 0 : index
          %161 = vector.load %arg7[%c0_93, %c0_94] : memref<8x256xf32, #tpu.memory_space<vmem>>, vector<8x128xf32>
          tpu.vector_store %arg7[%c0_93, %c0_94], %160 {strides = array<i32>} : memref<8x256xf32, #tpu.memory_space<vmem>>, vector<8x128xf32>,
          %c0_95 = arith.constant 0 : index
          %c128 = arith.constant 128 : index
          %162 = vector.load %arg7[%c0_95, %c128] : memref<8x256xf32, #tpu.memory_space<vmem>>, vector<8x128xf32>
          tpu.vector_store %arg7[%c0_95, %c128], %158 {strides = array<i32>} : memref<8x256xf32, #tpu.memory_space<vmem>>, vector<8x128xf32>,
        } else {
        }
        %c5_i32 = arith.constant 5 : i32
        %c0_39 = arith.constant 0 : index
        %c0_40 = arith.constant 0 : index
        %57 = vector.load %arg7[%c0_39, %c0_40] : memref<8x256xf32, #tpu.memory_space<vmem>>, vector<8x256xf32>
        %58 = arith.index_cast %37 : i32 to index
        %c0_41 = arith.constant 0 : index
        %c0_42 = arith.constant 0 : index
        %59 = vector.load %arg6[%58, %c0_41, %c0_42] : memref<5x8x256xf32, #tpu.memory_space<vmem>>, vector<1x8x256xf32>
        %60 = vector.shape_cast %59 : vector<1x8x256xf32> to vector<8x256xf32>
        %61 = vector.shape_cast %57 : vector<8x256xf32> to vector<1x8x256xf32>
        tpu.vector_store %arg6[%58, %c0_41, %c0_42], %61 {strides = array<i32>} : memref<5x8x256xf32, #tpu.memory_space<vmem>>, vector<1x8x256xf32>,
        %c0_i32_43 = arith.constant 0 : i32
        %62 = arith.cmpi sgt, %c0_i32_43, %37 : i32
        %63 = arith.shrsi %14, %c0_i32_43 : i32
        %c1_i32_44 = arith.constant 1 : i32
        %64 = arith.andi %63, %c1_i32_44 : i32
        %c1_i32_45 = arith.constant 1 : i32
        %65 = arith.cmpi eq, %64, %c1_i32_45 : i32
        %66 = arith.andi %62, %65 : i1
        %67 = arith.extui %66 : i1 to i32
        %c0_i32_46 = arith.constant 0 : i32
        %68 = arith.cmpi ne, %67, %c0_i32_46 : i32
        scf.if %68 {
          %102 = arith.index_cast %c0_i32_43 : i32 to index
          %c0_68 = arith.constant 0 : index
          %c0_69 = arith.constant 0 : index
          %103 = vector.load %arg6[%102, %c0_68, %c0_69] : memref<5x8x256xf32, #tpu.memory_space<vmem>>, vector<1x8x256xf32>
          %104 = vector.shape_cast %103 : vector<1x8x256xf32> to vector<8x256xf32>
          %c0_70 = arith.constant 0 : index
          %c0_71 = arith.constant 0 : index
          %105 = vector.load %arg7[%c0_70, %c0_71] : memref<8x256xf32, #tpu.memory_space<vmem>>, vector<8x256xf32>
          %106 = vector.extract_strided_slice %105 {offsets = [0, 0], sizes = [8, 128], strides = [1, 1]} : vector<8x256xf32> to vector<8x128xf32>
          %107 = vector.extract_strided_slice %105 {offsets = [0, 128], sizes = [8, 128], strides = [1, 1]} : vector<8x256xf32> to vector<8x128xf32>
          %108 = vector.extract_strided_slice %104 {offsets = [0, 0], sizes = [8, 128], strides = [1, 1]} : vector<8x256xf32> to vector<8x128xf32>
          %109 = vector.extract_strided_slice %104 {offsets = [0, 128], sizes = [8, 128], strides = [1, 1]} : vector<8x256xf32> to vector<8x128xf32>
          %110 = arith.truncf %106 : vector<8x128xf32> to vector<8x128xbf16>
          %c1_72 = arith.constant 1 : index
          %c0_73 = arith.constant 0 : index
          %c0_74 = arith.constant 0 : index
          %c0_75 = arith.constant 0 : index
          %111 = vector.load %arg2[%c1_72, %c0_73, %c0_74, %c0_75] : memref<2x2x128x640xbf16, #tpu.memory_space<vmem>>, vector<1x1x128x640xbf16>
          %112 = vector.shape_cast %111 : vector<1x1x128x640xbf16> to vector<128x640xbf16>
          %cst = arith.constant dense<0.000000e+00> : vector<8x640xf32>
          %113 = tpu.matmul %110, %112, %cst {dimension_numbers = #tpu.dot_dimension_numbers<[1], [0], [0], [1], [0, 0, 1, 1], [], []>} : vector<8x128xbf16>, vector<128x640xbf16>, vector<8x640xf32> -> vector<8x640xf32>
          %114 = arith.truncf %108 : vector<8x128xf32> to vector<8x128xbf16>
          %c1_76 = arith.constant 1 : index
          %c1_77 = arith.constant 1 : index
          %c0_78 = arith.constant 0 : index
          %c0_79 = arith.constant 0 : index
          %115 = vector.load %arg2[%c1_76, %c1_77, %c0_78, %c0_79] : memref<2x2x128x640xbf16, #tpu.memory_space<vmem>>, vector<1x1x128x640xbf16>
          %116 = vector.shape_cast %115 : vector<1x1x128x640xbf16> to vector<128x640xbf16>
          %cst_80 = arith.constant dense<0.000000e+00> : vector<8x640xf32>
          %117 = tpu.matmul %114, %116, %cst_80 {dimension_numbers = #tpu.dot_dimension_numbers<[1], [0], [0], [1], [0, 0, 1, 1], [], []>} : vector<8x128xbf16>, vector<128x640xbf16>, vector<8x640xf32> -> vector<8x640xf32>
          %118 = arith.addf %113, %117 : vector<8x640xf32>
          %119 = arith.addf %118, %10 : vector<8x640xf32>
          %120 = vector.extract_strided_slice %119 {offsets = [0, 0], sizes = [8, 128], strides = [1, 1]} : vector<8x640xf32> to vector<8x128xf32>
          %cst_81 = arith.constant 5.000000e-01 : f32
          %121 = vector.broadcast %cst_81 : f32 to vector<8x128xf32>
          %122 = arith.mulf %121, %120 : vector<8x128xf32>
          %123 = math.tanh %122 : vector<8x128xf32>
          %cst_82 = arith.constant 1.000000e+00 : f32
          %124 = vector.broadcast %cst_82 : f32 to vector<8x128xf32>
          %125 = arith.addf %124, %123 : vector<8x128xf32>
          %cst_83 = arith.constant 5.000000e-01 : f32
          %126 = vector.broadcast %cst_83 : f32 to vector<8x128xf32>
          %127 = arith.mulf %126, %125 : vector<8x128xf32>
          %128 = vector.extract_strided_slice %119 {offsets = [0, 128], sizes = [8, 128], strides = [1, 1]} : vector<8x640xf32> to vector<8x128xf32>
          %cst_84 = arith.constant 5.000000e-01 : f32
          %129 = vector.broadcast %cst_84 : f32 to vector<8x128xf32>
          %130 = arith.mulf %129, %128 : vector<8x128xf32>
          %131 = math.tanh %130 : vector<8x128xf32>
          %cst_85 = arith.constant 1.000000e+00 : f32
          %132 = vector.broadcast %cst_85 : f32 to vector<8x128xf32>
          %133 = arith.addf %132, %131 : vector<8x128xf32>
          %cst_86 = arith.constant 5.000000e-01 : f32
          %134 = vector.broadcast %cst_86 : f32 to vector<8x128xf32>
          %135 = arith.mulf %134, %133 : vector<8x128xf32>
          %136 = vector.extract_strided_slice %119 {offsets = [0, 256], sizes = [8, 128], strides = [1, 1]} : vector<8x640xf32> to vector<8x128xf32>
          %137 = math.tanh %136 : vector<8x128xf32>
          %138 = vector.extract_strided_slice %119 {offsets = [0, 384], sizes = [8, 128], strides = [1, 1]} : vector<8x640xf32> to vector<8x128xf32>
          %cst_87 = arith.constant 5.000000e-01 : f32
          %139 = vector.broadcast %cst_87 : f32 to vector<8x128xf32>
          %140 = arith.mulf %139, %138 : vector<8x128xf32>
          %141 = math.tanh %140 : vector<8x128xf32>
          %cst_88 = arith.constant 1.000000e+00 : f32
          %142 = vector.broadcast %cst_88 : f32 to vector<8x128xf32>
          %143 = arith.addf %142, %141 : vector<8x128xf32>
          %cst_89 = arith.constant 5.000000e-01 : f32
          %144 = vector.broadcast %cst_89 : f32 to vector<8x128xf32>
          %145 = arith.mulf %144, %143 : vector<8x128xf32>
          %146 = vector.extract_strided_slice %119 {offsets = [0, 512], sizes = [8, 128], strides = [1, 1]} : vector<8x640xf32> to vector<8x128xf32>
          %cst_90 = arith.constant 5.000000e-01 : f32
          %147 = vector.broadcast %cst_90 : f32 to vector<8x128xf32>
          %148 = arith.mulf %147, %146 : vector<8x128xf32>
          %149 = math.tanh %148 : vector<8x128xf32>
          %cst_91 = arith.constant 1.000000e+00 : f32
          %150 = vector.broadcast %cst_91 : f32 to vector<8x128xf32>
          %151 = arith.addf %150, %149 : vector<8x128xf32>
          %cst_92 = arith.constant 5.000000e-01 : f32
          %152 = vector.broadcast %cst_92 : f32 to vector<8x128xf32>
          %153 = arith.mulf %152, %151 : vector<8x128xf32>
          %154 = arith.mulf %127, %137 : vector<8x128xf32>
          %155 = arith.mulf %145, %107 : vector<8x128xf32>
          %156 = arith.addf %154, %155 : vector<8x128xf32>
          %157 = arith.mulf %153, %109 : vector<8x128xf32>
          %158 = arith.addf %156, %157 : vector<8x128xf32>
          %159 = math.tanh %158 : vector<8x128xf32>
          %160 = arith.mulf %135, %159 : vector<8x128xf32>
          %c0_93 = arith.constant 0 : index
          %c0_94 = arith.constant 0 : index
          %161 = vector.load %arg7[%c0_93, %c0_94] : memref<8x256xf32, #tpu.memory_space<vmem>>, vector<8x128xf32>
          tpu.vector_store %arg7[%c0_93, %c0_94], %160 {strides = array<i32>} : memref<8x256xf32, #tpu.memory_space<vmem>>, vector<8x128xf32>,
          %c0_95 = arith.constant 0 : index
          %c128 = arith.constant 128 : index
          %162 = vector.load %arg7[%c0_95, %c128] : memref<8x256xf32, #tpu.memory_space<vmem>>, vector<8x128xf32>
          tpu.vector_store %arg7[%c0_95, %c128], %158 {strides = array<i32>} : memref<8x256xf32, #tpu.memory_space<vmem>>, vector<8x128xf32>,
        } else {
        }
        %c1_i32_47 = arith.constant 1 : i32
        %69 = arith.cmpi sgt, %c1_i32_47, %37 : i32
        %70 = arith.shrsi %14, %c1_i32_47 : i32
        %c1_i32_48 = arith.constant 1 : i32
        %71 = arith.andi %70, %c1_i32_48 : i32
        %c1_i32_49 = arith.constant 1 : i32
        %72 = arith.cmpi eq, %71, %c1_i32_49 : i32
        %73 = arith.andi %69, %72 : i1
        %74 = arith.extui %73 : i1 to i32
        %c0_i32_50 = arith.constant 0 : i32
        %75 = arith.cmpi ne, %74, %c0_i32_50 : i32
        scf.if %75 {
          %102 = arith.index_cast %c1_i32_47 : i32 to index
          %c0_68 = arith.constant 0 : index
          %c0_69 = arith.constant 0 : index
          %103 = vector.load %arg6[%102, %c0_68, %c0_69] : memref<5x8x256xf32, #tpu.memory_space<vmem>>, vector<1x8x256xf32>
          %104 = vector.shape_cast %103 : vector<1x8x256xf32> to vector<8x256xf32>
          %c0_70 = arith.constant 0 : index
          %c0_71 = arith.constant 0 : index
          %105 = vector.load %arg7[%c0_70, %c0_71] : memref<8x256xf32, #tpu.memory_space<vmem>>, vector<8x256xf32>
          %106 = vector.extract_strided_slice %105 {offsets = [0, 0], sizes = [8, 128], strides = [1, 1]} : vector<8x256xf32> to vector<8x128xf32>
          %107 = vector.extract_strided_slice %105 {offsets = [0, 128], sizes = [8, 128], strides = [1, 1]} : vector<8x256xf32> to vector<8x128xf32>
          %108 = vector.extract_strided_slice %104 {offsets = [0, 0], sizes = [8, 128], strides = [1, 1]} : vector<8x256xf32> to vector<8x128xf32>
          %109 = vector.extract_strided_slice %104 {offsets = [0, 128], sizes = [8, 128], strides = [1, 1]} : vector<8x256xf32> to vector<8x128xf32>
          %110 = arith.truncf %106 : vector<8x128xf32> to vector<8x128xbf16>
          %c1_72 = arith.constant 1 : index
          %c0_73 = arith.constant 0 : index
          %c0_74 = arith.constant 0 : index
          %c0_75 = arith.constant 0 : index
          %111 = vector.load %arg2[%c1_72, %c0_73, %c0_74, %c0_75] : memref<2x2x128x640xbf16, #tpu.memory_space<vmem>>, vector<1x1x128x640xbf16>
          %112 = vector.shape_cast %111 : vector<1x1x128x640xbf16> to vector<128x640xbf16>
          %cst = arith.constant dense<0.000000e+00> : vector<8x640xf32>
          %113 = tpu.matmul %110, %112, %cst {dimension_numbers = #tpu.dot_dimension_numbers<[1], [0], [0], [1], [0, 0, 1, 1], [], []>} : vector<8x128xbf16>, vector<128x640xbf16>, vector<8x640xf32> -> vector<8x640xf32>
          %114 = arith.truncf %108 : vector<8x128xf32> to vector<8x128xbf16>
          %c1_76 = arith.constant 1 : index
          %c1_77 = arith.constant 1 : index
          %c0_78 = arith.constant 0 : index
          %c0_79 = arith.constant 0 : index
          %115 = vector.load %arg2[%c1_76, %c1_77, %c0_78, %c0_79] : memref<2x2x128x640xbf16, #tpu.memory_space<vmem>>, vector<1x1x128x640xbf16>
          %116 = vector.shape_cast %115 : vector<1x1x128x640xbf16> to vector<128x640xbf16>
          %cst_80 = arith.constant dense<0.000000e+00> : vector<8x640xf32>
          %117 = tpu.matmul %114, %116, %cst_80 {dimension_numbers = #tpu.dot_dimension_numbers<[1], [0], [0], [1], [0, 0, 1, 1], [], []>} : vector<8x128xbf16>, vector<128x640xbf16>, vector<8x640xf32> -> vector<8x640xf32>
          %118 = arith.addf %113, %117 : vector<8x640xf32>
          %119 = arith.addf %118, %10 : vector<8x640xf32>
          %120 = vector.extract_strided_slice %119 {offsets = [0, 0], sizes = [8, 128], strides = [1, 1]} : vector<8x640xf32> to vector<8x128xf32>
          %cst_81 = arith.constant 5.000000e-01 : f32
          %121 = vector.broadcast %cst_81 : f32 to vector<8x128xf32>
          %122 = arith.mulf %121, %120 : vector<8x128xf32>
          %123 = math.tanh %122 : vector<8x128xf32>
          %cst_82 = arith.constant 1.000000e+00 : f32
          %124 = vector.broadcast %cst_82 : f32 to vector<8x128xf32>
          %125 = arith.addf %124, %123 : vector<8x128xf32>
          %cst_83 = arith.constant 5.000000e-01 : f32
          %126 = vector.broadcast %cst_83 : f32 to vector<8x128xf32>
          %127 = arith.mulf %126, %125 : vector<8x128xf32>
          %128 = vector.extract_strided_slice %119 {offsets = [0, 128], sizes = [8, 128], strides = [1, 1]} : vector<8x640xf32> to vector<8x128xf32>
          %cst_84 = arith.constant 5.000000e-01 : f32
          %129 = vector.broadcast %cst_84 : f32 to vector<8x128xf32>
          %130 = arith.mulf %129, %128 : vector<8x128xf32>
          %131 = math.tanh %130 : vector<8x128xf32>
          %cst_85 = arith.constant 1.000000e+00 : f32
          %132 = vector.broadcast %cst_85 : f32 to vector<8x128xf32>
          %133 = arith.addf %132, %131 : vector<8x128xf32>
          %cst_86 = arith.constant 5.000000e-01 : f32
          %134 = vector.broadcast %cst_86 : f32 to vector<8x128xf32>
          %135 = arith.mulf %134, %133 : vector<8x128xf32>
          %136 = vector.extract_strided_slice %119 {offsets = [0, 256], sizes = [8, 128], strides = [1, 1]} : vector<8x640xf32> to vector<8x128xf32>
          %137 = math.tanh %136 : vector<8x128xf32>
          %138 = vector.extract_strided_slice %119 {offsets = [0, 384], sizes = [8, 128], strides = [1, 1]} : vector<8x640xf32> to vector<8x128xf32>
          %cst_87 = arith.constant 5.000000e-01 : f32
          %139 = vector.broadcast %cst_87 : f32 to vector<8x128xf32>
          %140 = arith.mulf %139, %138 : vector<8x128xf32>
          %141 = math.tanh %140 : vector<8x128xf32>
          %cst_88 = arith.constant 1.000000e+00 : f32
          %142 = vector.broadcast %cst_88 : f32 to vector<8x128xf32>
          %143 = arith.addf %142, %141 : vector<8x128xf32>
          %cst_89 = arith.constant 5.000000e-01 : f32
          %144 = vector.broadcast %cst_89 : f32 to vector<8x128xf32>
          %145 = arith.mulf %144, %143 : vector<8x128xf32>
          %146 = vector.extract_strided_slice %119 {offsets = [0, 512], sizes = [8, 128], strides = [1, 1]} : vector<8x640xf32> to vector<8x128xf32>
          %cst_90 = arith.constant 5.000000e-01 : f32
          %147 = vector.broadcast %cst_90 : f32 to vector<8x128xf32>
          %148 = arith.mulf %147, %146 : vector<8x128xf32>
          %149 = math.tanh %148 : vector<8x128xf32>
          %cst_91 = arith.constant 1.000000e+00 : f32
          %150 = vector.broadcast %cst_91 : f32 to vector<8x128xf32>
          %151 = arith.addf %150, %149 : vector<8x128xf32>
          %cst_92 = arith.constant 5.000000e-01 : f32
          %152 = vector.broadcast %cst_92 : f32 to vector<8x128xf32>
          %153 = arith.mulf %152, %151 : vector<8x128xf32>
          %154 = arith.mulf %127, %137 : vector<8x128xf32>
          %155 = arith.mulf %145, %107 : vector<8x128xf32>
          %156 = arith.addf %154, %155 : vector<8x128xf32>
          %157 = arith.mulf %153, %109 : vector<8x128xf32>
          %158 = arith.addf %156, %157 : vector<8x128xf32>
          %159 = math.tanh %158 : vector<8x128xf32>
          %160 = arith.mulf %135, %159 : vector<8x128xf32>
          %c0_93 = arith.constant 0 : index
          %c0_94 = arith.constant 0 : index
          %161 = vector.load %arg7[%c0_93, %c0_94] : memref<8x256xf32, #tpu.memory_space<vmem>>, vector<8x128xf32>
          tpu.vector_store %arg7[%c0_93, %c0_94], %160 {strides = array<i32>} : memref<8x256xf32, #tpu.memory_space<vmem>>, vector<8x128xf32>,
          %c0_95 = arith.constant 0 : index
          %c128 = arith.constant 128 : index
          %162 = vector.load %arg7[%c0_95, %c128] : memref<8x256xf32, #tpu.memory_space<vmem>>, vector<8x128xf32>
          tpu.vector_store %arg7[%c0_95, %c128], %158 {strides = array<i32>} : memref<8x256xf32, #tpu.memory_space<vmem>>, vector<8x128xf32>,
        } else {
        }
        %c2_i32_51 = arith.constant 2 : i32
        %76 = arith.cmpi sgt, %c2_i32_51, %37 : i32
        %77 = arith.shrsi %14, %c2_i32_51 : i32
        %c1_i32_52 = arith.constant 1 : i32
        %78 = arith.andi %77, %c1_i32_52 : i32
        %c1_i32_53 = arith.constant 1 : i32
        %79 = arith.cmpi eq, %78, %c1_i32_53 : i32
        %80 = arith.andi %76, %79 : i1
        %81 = arith.extui %80 : i1 to i32
        %c0_i32_54 = arith.constant 0 : i32
        %82 = arith.cmpi ne, %81, %c0_i32_54 : i32
        scf.if %82 {
          %102 = arith.index_cast %c2_i32_51 : i32 to index
          %c0_68 = arith.constant 0 : index
          %c0_69 = arith.constant 0 : index
          %103 = vector.load %arg6[%102, %c0_68, %c0_69] : memref<5x8x256xf32, #tpu.memory_space<vmem>>, vector<1x8x256xf32>
          %104 = vector.shape_cast %103 : vector<1x8x256xf32> to vector<8x256xf32>
          %c0_70 = arith.constant 0 : index
          %c0_71 = arith.constant 0 : index
          %105 = vector.load %arg7[%c0_70, %c0_71] : memref<8x256xf32, #tpu.memory_space<vmem>>, vector<8x256xf32>
          %106 = vector.extract_strided_slice %105 {offsets = [0, 0], sizes = [8, 128], strides = [1, 1]} : vector<8x256xf32> to vector<8x128xf32>
          %107 = vector.extract_strided_slice %105 {offsets = [0, 128], sizes = [8, 128], strides = [1, 1]} : vector<8x256xf32> to vector<8x128xf32>
          %108 = vector.extract_strided_slice %104 {offsets = [0, 0], sizes = [8, 128], strides = [1, 1]} : vector<8x256xf32> to vector<8x128xf32>
          %109 = vector.extract_strided_slice %104 {offsets = [0, 128], sizes = [8, 128], strides = [1, 1]} : vector<8x256xf32> to vector<8x128xf32>
          %110 = arith.truncf %106 : vector<8x128xf32> to vector<8x128xbf16>
          %c1_72 = arith.constant 1 : index
          %c0_73 = arith.constant 0 : index
          %c0_74 = arith.constant 0 : index
          %c0_75 = arith.constant 0 : index
          %111 = vector.load %arg2[%c1_72, %c0_73, %c0_74, %c0_75] : memref<2x2x128x640xbf16, #tpu.memory_space<vmem>>, vector<1x1x128x640xbf16>
          %112 = vector.shape_cast %111 : vector<1x1x128x640xbf16> to vector<128x640xbf16>
          %cst = arith.constant dense<0.000000e+00> : vector<8x640xf32>
          %113 = tpu.matmul %110, %112, %cst {dimension_numbers = #tpu.dot_dimension_numbers<[1], [0], [0], [1], [0, 0, 1, 1], [], []>} : vector<8x128xbf16>, vector<128x640xbf16>, vector<8x640xf32> -> vector<8x640xf32>
          %114 = arith.truncf %108 : vector<8x128xf32> to vector<8x128xbf16>
          %c1_76 = arith.constant 1 : index
          %c1_77 = arith.constant 1 : index
          %c0_78 = arith.constant 0 : index
          %c0_79 = arith.constant 0 : index
          %115 = vector.load %arg2[%c1_76, %c1_77, %c0_78, %c0_79] : memref<2x2x128x640xbf16, #tpu.memory_space<vmem>>, vector<1x1x128x640xbf16>
          %116 = vector.shape_cast %115 : vector<1x1x128x640xbf16> to vector<128x640xbf16>
          %cst_80 = arith.constant dense<0.000000e+00> : vector<8x640xf32>
          %117 = tpu.matmul %114, %116, %cst_80 {dimension_numbers = #tpu.dot_dimension_numbers<[1], [0], [0], [1], [0, 0, 1, 1], [], []>} : vector<8x128xbf16>, vector<128x640xbf16>, vector<8x640xf32> -> vector<8x640xf32>
          %118 = arith.addf %113, %117 : vector<8x640xf32>
          %119 = arith.addf %118, %10 : vector<8x640xf32>
          %120 = vector.extract_strided_slice %119 {offsets = [0, 0], sizes = [8, 128], strides = [1, 1]} : vector<8x640xf32> to vector<8x128xf32>
          %cst_81 = arith.constant 5.000000e-01 : f32
          %121 = vector.broadcast %cst_81 : f32 to vector<8x128xf32>
          %122 = arith.mulf %121, %120 : vector<8x128xf32>
          %123 = math.tanh %122 : vector<8x128xf32>
          %cst_82 = arith.constant 1.000000e+00 : f32
          %124 = vector.broadcast %cst_82 : f32 to vector<8x128xf32>
          %125 = arith.addf %124, %123 : vector<8x128xf32>
          %cst_83 = arith.constant 5.000000e-01 : f32
          %126 = vector.broadcast %cst_83 : f32 to vector<8x128xf32>
          %127 = arith.mulf %126, %125 : vector<8x128xf32>
          %128 = vector.extract_strided_slice %119 {offsets = [0, 128], sizes = [8, 128], strides = [1, 1]} : vector<8x640xf32> to vector<8x128xf32>
          %cst_84 = arith.constant 5.000000e-01 : f32
          %129 = vector.broadcast %cst_84 : f32 to vector<8x128xf32>
          %130 = arith.mulf %129, %128 : vector<8x128xf32>
          %131 = math.tanh %130 : vector<8x128xf32>
          %cst_85 = arith.constant 1.000000e+00 : f32
          %132 = vector.broadcast %cst_85 : f32 to vector<8x128xf32>
          %133 = arith.addf %132, %131 : vector<8x128xf32>
          %cst_86 = arith.constant 5.000000e-01 : f32
          %134 = vector.broadcast %cst_86 : f32 to vector<8x128xf32>
          %135 = arith.mulf %134, %133 : vector<8x128xf32>
          %136 = vector.extract_strided_slice %119 {offsets = [0, 256], sizes = [8, 128], strides = [1, 1]} : vector<8x640xf32> to vector<8x128xf32>
          %137 = math.tanh %136 : vector<8x128xf32>
          %138 = vector.extract_strided_slice %119 {offsets = [0, 384], sizes = [8, 128], strides = [1, 1]} : vector<8x640xf32> to vector<8x128xf32>
          %cst_87 = arith.constant 5.000000e-01 : f32
          %139 = vector.broadcast %cst_87 : f32 to vector<8x128xf32>
          %140 = arith.mulf %139, %138 : vector<8x128xf32>
          %141 = math.tanh %140 : vector<8x128xf32>
          %cst_88 = arith.constant 1.000000e+00 : f32
          %142 = vector.broadcast %cst_88 : f32 to vector<8x128xf32>
          %143 = arith.addf %142, %141 : vector<8x128xf32>
          %cst_89 = arith.constant 5.000000e-01 : f32
          %144 = vector.broadcast %cst_89 : f32 to vector<8x128xf32>
          %145 = arith.mulf %144, %143 : vector<8x128xf32>
          %146 = vector.extract_strided_slice %119 {offsets = [0, 512], sizes = [8, 128], strides = [1, 1]} : vector<8x640xf32> to vector<8x128xf32>
          %cst_90 = arith.constant 5.000000e-01 : f32
          %147 = vector.broadcast %cst_90 : f32 to vector<8x128xf32>
          %148 = arith.mulf %147, %146 : vector<8x128xf32>
          %149 = math.tanh %148 : vector<8x128xf32>
          %cst_91 = arith.constant 1.000000e+00 : f32
          %150 = vector.broadcast %cst_91 : f32 to vector<8x128xf32>
          %151 = arith.addf %150, %149 : vector<8x128xf32>
          %cst_92 = arith.constant 5.000000e-01 : f32
          %152 = vector.broadcast %cst_92 : f32 to vector<8x128xf32>
          %153 = arith.mulf %152, %151 : vector<8x128xf32>
          %154 = arith.mulf %127, %137 : vector<8x128xf32>
          %155 = arith.mulf %145, %107 : vector<8x128xf32>
          %156 = arith.addf %154, %155 : vector<8x128xf32>
          %157 = arith.mulf %153, %109 : vector<8x128xf32>
          %158 = arith.addf %156, %157 : vector<8x128xf32>
          %159 = math.tanh %158 : vector<8x128xf32>
          %160 = arith.mulf %135, %159 : vector<8x128xf32>
          %c0_93 = arith.constant 0 : index
          %c0_94 = arith.constant 0 : index
          %161 = vector.load %arg7[%c0_93, %c0_94] : memref<8x256xf32, #tpu.memory_space<vmem>>, vector<8x128xf32>
          tpu.vector_store %arg7[%c0_93, %c0_94], %160 {strides = array<i32>} : memref<8x256xf32, #tpu.memory_space<vmem>>, vector<8x128xf32>,
          %c0_95 = arith.constant 0 : index
          %c128 = arith.constant 128 : index
          %162 = vector.load %arg7[%c0_95, %c128] : memref<8x256xf32, #tpu.memory_space<vmem>>, vector<8x128xf32>
          tpu.vector_store %arg7[%c0_95, %c128], %158 {strides = array<i32>} : memref<8x256xf32, #tpu.memory_space<vmem>>, vector<8x128xf32>,
        } else {
        }
        %c3_i32_55 = arith.constant 3 : i32
        %83 = arith.cmpi sgt, %c3_i32_55, %37 : i32
        %84 = arith.shrsi %14, %c3_i32_55 : i32
        %c1_i32_56 = arith.constant 1 : i32
        %85 = arith.andi %84, %c1_i32_56 : i32
        %c1_i32_57 = arith.constant 1 : i32
        %86 = arith.cmpi eq, %85, %c1_i32_57 : i32
        %87 = arith.andi %83, %86 : i1
        %88 = arith.extui %87 : i1 to i32
        %c0_i32_58 = arith.constant 0 : i32
        %89 = arith.cmpi ne, %88, %c0_i32_58 : i32
        scf.if %89 {
          %102 = arith.index_cast %c3_i32_55 : i32 to index
          %c0_68 = arith.constant 0 : index
          %c0_69 = arith.constant 0 : index
          %103 = vector.load %arg6[%102, %c0_68, %c0_69] : memref<5x8x256xf32, #tpu.memory_space<vmem>>, vector<1x8x256xf32>
          %104 = vector.shape_cast %103 : vector<1x8x256xf32> to vector<8x256xf32>
          %c0_70 = arith.constant 0 : index
          %c0_71 = arith.constant 0 : index
          %105 = vector.load %arg7[%c0_70, %c0_71] : memref<8x256xf32, #tpu.memory_space<vmem>>, vector<8x256xf32>
          %106 = vector.extract_strided_slice %105 {offsets = [0, 0], sizes = [8, 128], strides = [1, 1]} : vector<8x256xf32> to vector<8x128xf32>
          %107 = vector.extract_strided_slice %105 {offsets = [0, 128], sizes = [8, 128], strides = [1, 1]} : vector<8x256xf32> to vector<8x128xf32>
          %108 = vector.extract_strided_slice %104 {offsets = [0, 0], sizes = [8, 128], strides = [1, 1]} : vector<8x256xf32> to vector<8x128xf32>
          %109 = vector.extract_strided_slice %104 {offsets = [0, 128], sizes = [8, 128], strides = [1, 1]} : vector<8x256xf32> to vector<8x128xf32>
          %110 = arith.truncf %106 : vector<8x128xf32> to vector<8x128xbf16>
          %c1_72 = arith.constant 1 : index
          %c0_73 = arith.constant 0 : index
          %c0_74 = arith.constant 0 : index
          %c0_75 = arith.constant 0 : index
          %111 = vector.load %arg2[%c1_72, %c0_73, %c0_74, %c0_75] : memref<2x2x128x640xbf16, #tpu.memory_space<vmem>>, vector<1x1x128x640xbf16>
          %112 = vector.shape_cast %111 : vector<1x1x128x640xbf16> to vector<128x640xbf16>
          %cst = arith.constant dense<0.000000e+00> : vector<8x640xf32>
          %113 = tpu.matmul %110, %112, %cst {dimension_numbers = #tpu.dot_dimension_numbers<[1], [0], [0], [1], [0, 0, 1, 1], [], []>} : vector<8x128xbf16>, vector<128x640xbf16>, vector<8x640xf32> -> vector<8x640xf32>
          %114 = arith.truncf %108 : vector<8x128xf32> to vector<8x128xbf16>
          %c1_76 = arith.constant 1 : index
          %c1_77 = arith.constant 1 : index
          %c0_78 = arith.constant 0 : index
          %c0_79 = arith.constant 0 : index
          %115 = vector.load %arg2[%c1_76, %c1_77, %c0_78, %c0_79] : memref<2x2x128x640xbf16, #tpu.memory_space<vmem>>, vector<1x1x128x640xbf16>
          %116 = vector.shape_cast %115 : vector<1x1x128x640xbf16> to vector<128x640xbf16>
          %cst_80 = arith.constant dense<0.000000e+00> : vector<8x640xf32>
          %117 = tpu.matmul %114, %116, %cst_80 {dimension_numbers = #tpu.dot_dimension_numbers<[1], [0], [0], [1], [0, 0, 1, 1], [], []>} : vector<8x128xbf16>, vector<128x640xbf16>, vector<8x640xf32> -> vector<8x640xf32>
          %118 = arith.addf %113, %117 : vector<8x640xf32>
          %119 = arith.addf %118, %10 : vector<8x640xf32>
          %120 = vector.extract_strided_slice %119 {offsets = [0, 0], sizes = [8, 128], strides = [1, 1]} : vector<8x640xf32> to vector<8x128xf32>
          %cst_81 = arith.constant 5.000000e-01 : f32
          %121 = vector.broadcast %cst_81 : f32 to vector<8x128xf32>
          %122 = arith.mulf %121, %120 : vector<8x128xf32>
          %123 = math.tanh %122 : vector<8x128xf32>
          %cst_82 = arith.constant 1.000000e+00 : f32
          %124 = vector.broadcast %cst_82 : f32 to vector<8x128xf32>
          %125 = arith.addf %124, %123 : vector<8x128xf32>
          %cst_83 = arith.constant 5.000000e-01 : f32
          %126 = vector.broadcast %cst_83 : f32 to vector<8x128xf32>
          %127 = arith.mulf %126, %125 : vector<8x128xf32>
          %128 = vector.extract_strided_slice %119 {offsets = [0, 128], sizes = [8, 128], strides = [1, 1]} : vector<8x640xf32> to vector<8x128xf32>
          %cst_84 = arith.constant 5.000000e-01 : f32
          %129 = vector.broadcast %cst_84 : f32 to vector<8x128xf32>
          %130 = arith.mulf %129, %128 : vector<8x128xf32>
          %131 = math.tanh %130 : vector<8x128xf32>
          %cst_85 = arith.constant 1.000000e+00 : f32
          %132 = vector.broadcast %cst_85 : f32 to vector<8x128xf32>
          %133 = arith.addf %132, %131 : vector<8x128xf32>
          %cst_86 = arith.constant 5.000000e-01 : f32
          %134 = vector.broadcast %cst_86 : f32 to vector<8x128xf32>
          %135 = arith.mulf %134, %133 : vector<8x128xf32>
          %136 = vector.extract_strided_slice %119 {offsets = [0, 256], sizes = [8, 128], strides = [1, 1]} : vector<8x640xf32> to vector<8x128xf32>
          %137 = math.tanh %136 : vector<8x128xf32>
          %138 = vector.extract_strided_slice %119 {offsets = [0, 384], sizes = [8, 128], strides = [1, 1]} : vector<8x640xf32> to vector<8x128xf32>
          %cst_87 = arith.constant 5.000000e-01 : f32
          %139 = vector.broadcast %cst_87 : f32 to vector<8x128xf32>
          %140 = arith.mulf %139, %138 : vector<8x128xf32>
          %141 = math.tanh %140 : vector<8x128xf32>
          %cst_88 = arith.constant 1.000000e+00 : f32
          %142 = vector.broadcast %cst_88 : f32 to vector<8x128xf32>
          %143 = arith.addf %142, %141 : vector<8x128xf32>
          %cst_89 = arith.constant 5.000000e-01 : f32
          %144 = vector.broadcast %cst_89 : f32 to vector<8x128xf32>
          %145 = arith.mulf %144, %143 : vector<8x128xf32>
          %146 = vector.extract_strided_slice %119 {offsets = [0, 512], sizes = [8, 128], strides = [1, 1]} : vector<8x640xf32> to vector<8x128xf32>
          %cst_90 = arith.constant 5.000000e-01 : f32
          %147 = vector.broadcast %cst_90 : f32 to vector<8x128xf32>
          %148 = arith.mulf %147, %146 : vector<8x128xf32>
          %149 = math.tanh %148 : vector<8x128xf32>
          %cst_91 = arith.constant 1.000000e+00 : f32
          %150 = vector.broadcast %cst_91 : f32 to vector<8x128xf32>
          %151 = arith.addf %150, %149 : vector<8x128xf32>
          %cst_92 = arith.constant 5.000000e-01 : f32
          %152 = vector.broadcast %cst_92 : f32 to vector<8x128xf32>
          %153 = arith.mulf %152, %151 : vector<8x128xf32>
          %154 = arith.mulf %127, %137 : vector<8x128xf32>
          %155 = arith.mulf %145, %107 : vector<8x128xf32>
          %156 = arith.addf %154, %155 : vector<8x128xf32>
          %157 = arith.mulf %153, %109 : vector<8x128xf32>
          %158 = arith.addf %156, %157 : vector<8x128xf32>
          %159 = math.tanh %158 : vector<8x128xf32>
          %160 = arith.mulf %135, %159 : vector<8x128xf32>
          %c0_93 = arith.constant 0 : index
          %c0_94 = arith.constant 0 : index
          %161 = vector.load %arg7[%c0_93, %c0_94] : memref<8x256xf32, #tpu.memory_space<vmem>>, vector<8x128xf32>
          tpu.vector_store %arg7[%c0_93, %c0_94], %160 {strides = array<i32>} : memref<8x256xf32, #tpu.memory_space<vmem>>, vector<8x128xf32>,
          %c0_95 = arith.constant 0 : index
          %c128 = arith.constant 128 : index
          %162 = vector.load %arg7[%c0_95, %c128] : memref<8x256xf32, #tpu.memory_space<vmem>>, vector<8x128xf32>
          tpu.vector_store %arg7[%c0_95, %c128], %158 {strides = array<i32>} : memref<8x256xf32, #tpu.memory_space<vmem>>, vector<8x128xf32>,
        } else {
        }
        %c4_i32_59 = arith.constant 4 : i32
        %90 = arith.cmpi sgt, %c4_i32_59, %37 : i32
        %91 = arith.shrsi %14, %c4_i32_59 : i32
        %c1_i32_60 = arith.constant 1 : i32
        %92 = arith.andi %91, %c1_i32_60 : i32
        %c1_i32_61 = arith.constant 1 : i32
        %93 = arith.cmpi eq, %92, %c1_i32_61 : i32
        %94 = arith.andi %90, %93 : i1
        %95 = arith.extui %94 : i1 to i32
        %c0_i32_62 = arith.constant 0 : i32
        %96 = arith.cmpi ne, %95, %c0_i32_62 : i32
        scf.if %96 {
          %102 = arith.index_cast %c4_i32_59 : i32 to index
          %c0_68 = arith.constant 0 : index
          %c0_69 = arith.constant 0 : index
          %103 = vector.load %arg6[%102, %c0_68, %c0_69] : memref<5x8x256xf32, #tpu.memory_space<vmem>>, vector<1x8x256xf32>
          %104 = vector.shape_cast %103 : vector<1x8x256xf32> to vector<8x256xf32>
          %c0_70 = arith.constant 0 : index
          %c0_71 = arith.constant 0 : index
          %105 = vector.load %arg7[%c0_70, %c0_71] : memref<8x256xf32, #tpu.memory_space<vmem>>, vector<8x256xf32>
          %106 = vector.extract_strided_slice %105 {offsets = [0, 0], sizes = [8, 128], strides = [1, 1]} : vector<8x256xf32> to vector<8x128xf32>
          %107 = vector.extract_strided_slice %105 {offsets = [0, 128], sizes = [8, 128], strides = [1, 1]} : vector<8x256xf32> to vector<8x128xf32>
          %108 = vector.extract_strided_slice %104 {offsets = [0, 0], sizes = [8, 128], strides = [1, 1]} : vector<8x256xf32> to vector<8x128xf32>
          %109 = vector.extract_strided_slice %104 {offsets = [0, 128], sizes = [8, 128], strides = [1, 1]} : vector<8x256xf32> to vector<8x128xf32>
          %110 = arith.truncf %106 : vector<8x128xf32> to vector<8x128xbf16>
          %c1_72 = arith.constant 1 : index
          %c0_73 = arith.constant 0 : index
          %c0_74 = arith.constant 0 : index
          %c0_75 = arith.constant 0 : index
          %111 = vector.load %arg2[%c1_72, %c0_73, %c0_74, %c0_75] : memref<2x2x128x640xbf16, #tpu.memory_space<vmem>>, vector<1x1x128x640xbf16>
          %112 = vector.shape_cast %111 : vector<1x1x128x640xbf16> to vector<128x640xbf16>
          %cst = arith.constant dense<0.000000e+00> : vector<8x640xf32>
          %113 = tpu.matmul %110, %112, %cst {dimension_numbers = #tpu.dot_dimension_numbers<[1], [0], [0], [1], [0, 0, 1, 1], [], []>} : vector<8x128xbf16>, vector<128x640xbf16>, vector<8x640xf32> -> vector<8x640xf32>
          %114 = arith.truncf %108 : vector<8x128xf32> to vector<8x128xbf16>
          %c1_76 = arith.constant 1 : index
          %c1_77 = arith.constant 1 : index
          %c0_78 = arith.constant 0 : index
          %c0_79 = arith.constant 0 : index
          %115 = vector.load %arg2[%c1_76, %c1_77, %c0_78, %c0_79] : memref<2x2x128x640xbf16, #tpu.memory_space<vmem>>, vector<1x1x128x640xbf16>
          %116 = vector.shape_cast %115 : vector<1x1x128x640xbf16> to vector<128x640xbf16>
          %cst_80 = arith.constant dense<0.000000e+00> : vector<8x640xf32>
          %117 = tpu.matmul %114, %116, %cst_80 {dimension_numbers = #tpu.dot_dimension_numbers<[1], [0], [0], [1], [0, 0, 1, 1], [], []>} : vector<8x128xbf16>, vector<128x640xbf16>, vector<8x640xf32> -> vector<8x640xf32>
          %118 = arith.addf %113, %117 : vector<8x640xf32>
          %119 = arith.addf %118, %10 : vector<8x640xf32>
          %120 = vector.extract_strided_slice %119 {offsets = [0, 0], sizes = [8, 128], strides = [1, 1]} : vector<8x640xf32> to vector<8x128xf32>
          %cst_81 = arith.constant 5.000000e-01 : f32
          %121 = vector.broadcast %cst_81 : f32 to vector<8x128xf32>
          %122 = arith.mulf %121, %120 : vector<8x128xf32>
          %123 = math.tanh %122 : vector<8x128xf32>
          %cst_82 = arith.constant 1.000000e+00 : f32
          %124 = vector.broadcast %cst_82 : f32 to vector<8x128xf32>
          %125 = arith.addf %124, %123 : vector<8x128xf32>
          %cst_83 = arith.constant 5.000000e-01 : f32
          %126 = vector.broadcast %cst_83 : f32 to vector<8x128xf32>
          %127 = arith.mulf %126, %125 : vector<8x128xf32>
          %128 = vector.extract_strided_slice %119 {offsets = [0, 128], sizes = [8, 128], strides = [1, 1]} : vector<8x640xf32> to vector<8x128xf32>
          %cst_84 = arith.constant 5.000000e-01 : f32
          %129 = vector.broadcast %cst_84 : f32 to vector<8x128xf32>
          %130 = arith.mulf %129, %128 : vector<8x128xf32>
          %131 = math.tanh %130 : vector<8x128xf32>
          %cst_85 = arith.constant 1.000000e+00 : f32
          %132 = vector.broadcast %cst_85 : f32 to vector<8x128xf32>
          %133 = arith.addf %132, %131 : vector<8x128xf32>
          %cst_86 = arith.constant 5.000000e-01 : f32
          %134 = vector.broadcast %cst_86 : f32 to vector<8x128xf32>
          %135 = arith.mulf %134, %133 : vector<8x128xf32>
          %136 = vector.extract_strided_slice %119 {offsets = [0, 256], sizes = [8, 128], strides = [1, 1]} : vector<8x640xf32> to vector<8x128xf32>
          %137 = math.tanh %136 : vector<8x128xf32>
          %138 = vector.extract_strided_slice %119 {offsets = [0, 384], sizes = [8, 128], strides = [1, 1]} : vector<8x640xf32> to vector<8x128xf32>
          %cst_87 = arith.constant 5.000000e-01 : f32
          %139 = vector.broadcast %cst_87 : f32 to vector<8x128xf32>
          %140 = arith.mulf %139, %138 : vector<8x128xf32>
          %141 = math.tanh %140 : vector<8x128xf32>
          %cst_88 = arith.constant 1.000000e+00 : f32
          %142 = vector.broadcast %cst_88 : f32 to vector<8x128xf32>
          %143 = arith.addf %142, %141 : vector<8x128xf32>
          %cst_89 = arith.constant 5.000000e-01 : f32
          %144 = vector.broadcast %cst_89 : f32 to vector<8x128xf32>
          %145 = arith.mulf %144, %143 : vector<8x128xf32>
          %146 = vector.extract_strided_slice %119 {offsets = [0, 512], sizes = [8, 128], strides = [1, 1]} : vector<8x640xf32> to vector<8x128xf32>
          %cst_90 = arith.constant 5.000000e-01 : f32
          %147 = vector.broadcast %cst_90 : f32 to vector<8x128xf32>
          %148 = arith.mulf %147, %146 : vector<8x128xf32>
          %149 = math.tanh %148 : vector<8x128xf32>
          %cst_91 = arith.constant 1.000000e+00 : f32
          %150 = vector.broadcast %cst_91 : f32 to vector<8x128xf32>
          %151 = arith.addf %150, %149 : vector<8x128xf32>
          %cst_92 = arith.constant 5.000000e-01 : f32
          %152 = vector.broadcast %cst_92 : f32 to vector<8x128xf32>
          %153 = arith.mulf %152, %151 : vector<8x128xf32>
          %154 = arith.mulf %127, %137 : vector<8x128xf32>
          %155 = arith.mulf %145, %107 : vector<8x128xf32>
          %156 = arith.addf %154, %155 : vector<8x128xf32>
          %157 = arith.mulf %153, %109 : vector<8x128xf32>
          %158 = arith.addf %156, %157 : vector<8x128xf32>
          %159 = math.tanh %158 : vector<8x128xf32>
          %160 = arith.mulf %135, %159 : vector<8x128xf32>
          %c0_93 = arith.constant 0 : index
          %c0_94 = arith.constant 0 : index
          %161 = vector.load %arg7[%c0_93, %c0_94] : memref<8x256xf32, #tpu.memory_space<vmem>>, vector<8x128xf32>
          tpu.vector_store %arg7[%c0_93, %c0_94], %160 {strides = array<i32>} : memref<8x256xf32, #tpu.memory_space<vmem>>, vector<8x128xf32>,
          %c0_95 = arith.constant 0 : index
          %c128 = arith.constant 128 : index
          %162 = vector.load %arg7[%c0_95, %c128] : memref<8x256xf32, #tpu.memory_space<vmem>>, vector<8x128xf32>
          tpu.vector_store %arg7[%c0_95, %c128], %158 {strides = array<i32>} : memref<8x256xf32, #tpu.memory_space<vmem>>, vector<8x128xf32>,
        } else {
        }
        %c5_i32_63 = arith.constant 5 : i32
        %c0_64 = arith.constant 0 : index
        %c0_65 = arith.constant 0 : index
        %97 = vector.load %arg7[%c0_64, %c0_65] : memref<8x256xf32, #tpu.memory_space<vmem>>, vector<8x256xf32>
        %98 = arith.index_cast %arg8 : i32 to index
        %c0_66 = arith.constant 0 : index
        %c0_67 = arith.constant 0 : index
        %99 = vector.load %arg5[%98, %c0_66, %c0_67] : memref<8x8x256xf32, #tpu.memory_space<vmem>>, vector<1x8x256xf32>
        %100 = vector.shape_cast %99 : vector<1x8x256xf32> to vector<8x256xf32>
        %101 = vector.shape_cast %97 : vector<8x256xf32> to vector<1x8x256xf32>
        tpu.vector_store %arg5[%98, %c0_66, %c0_67], %101 {strides = array<i32>} : memref<8x8x256xf32, #tpu.memory_space<vmem>>, vector<1x8x256xf32>,
      } else {
      }
    }
    %c8_i32_6 = arith.constant 8 : i32
    return
  }
  func.func @transform_0(%arg0: i32, %arg1: i32) -> (i32, i32, i32, i32) {
    %c0_i32 = arith.constant 0 : i32
    %c0_i32_0 = arith.constant 0 : i32
    %c0_i32_1 = arith.constant 0 : i32
    %c0_i32_2 = arith.constant 0 : i32
    %c0_i32_3 = arith.constant 0 : i32
    return %c0_i32, %c0_i32_0, %c0_i32_1, %c0_i32_2 : i32, i32, i32, i32
  }
  func.func @transform_1(%arg0: i32, %arg1: i32) -> (i32, i32, i32) {
    %c0_i32 = arith.constant 0 : i32
    %c0_i32_0 = arith.constant 0 : i32
    %c0_i32_1 = arith.constant 0 : i32
    %c0_i32_2 = arith.constant 0 : i32
    return %c0_i32, %c0_i32_0, %c0_i32_1 : i32, i32, i32
  }
  func.func @transform_2(%arg0: i32, %arg1: i32) -> (i32, i32, i32) {
    %c0_i32 = arith.constant 0 : i32
    %c0_i32_0 = arith.constant 0 : i32
    return %arg1, %arg0, %c0_i32 : i32, i32, i32
  }
  func.func @transform_3(%arg0: i32, %arg1: i32) -> (i32, i32, i32) {
    %c0_i32 = arith.constant 0 : i32
    %c0_i32_0 = arith.constant 0 : i32
    return %arg1, %arg0, %c0_i32 : i32, i32, i32
  }
}

</mosaic_0001>

<llo_original>
// kernel: _fenwick_forward_stream.1
$region0: #{_fenwick_forward_stream.1}
  #allocation0 [shape = 'u32[]', space=smem, size = 0x4, offset = 0x4, fixed_abs, tag = 'smem constant byte address 0x4 - core index']
  #allocation1 [shape = 'u32[144,128]{1,0:T(1,128)}', space=vmem, size = 0x12000, scoped, tag = 'internal scratch']
  #allocation2 [shape = 'f32[5,8,256]{2,1,0:T(8,128)}', space=vmem, size = 0xa000, scoped, tag = 'scratch operand']
  #allocation3 [shape = 'f32[8,256]{1,0:T(8,128)}', space=vmem, size = 0x2000, scoped, tag = 'scratch operand']
  %s0 = inlined_call_operand.vmem [shape: bf16[2,2,128,640], index: 0, kind: input, shape index: {}]
  %s1 = inlined_call_operand.vmem [shape: f32[2,1,640], index: 1, kind: input, shape index: {}]
  %s2 = inlined_call_operand.vmem [shape: f32[24,16,256], index: 2, kind: input, shape index: {}]
  %s3 = inlined_call_operand.vmem [shape: f32[24,16,256], index: 3, kind: output, shape index: {}]
  %s4 = sld [smem:[#allocation0]]
  $region142: #{_fenwick_forward_stream.1} parent=0
    _
  %s6 = ssub.s32 1, %s4
  %s7 = scalar_select 0, %s6, %s4
  $region1: #{_fenwick_forward_stream.1} parent=0
    #allocation4 [shape = 'u8[131072]{0}', space=vmem, size = 0x20000, scoped, tag = 'input window, operand 2']
    #allocation5 [shape = 'u8[131072]{0}', space=vmem, size = 0x20000, scoped, tag = 'output window, operand 0']
    loop: start=0, step=1, limit=8
    $region2: #{_fenwick_forward_stream.1} parent=1 // loop_pre_header
      _
    $region3: #{_fenwick_forward_stream.1} parent=1 // loop_header
      %s9 = sphi 0, %s13
      %p10 = scmp.ge.s32.totalorder %s9, 8
      %s16 = sphi 0, %s28
      %s17 = sphi 0, %s24
      %s18 = sphi 0, %s16
      %s19 = sphi 0, %s17
      %s20 = sphi 0, %s18
      %s21 = sphi 0, %s19
      %s29 = sphi 0, %s29
      %s31 = sphi 0, %s29
      %s32 = sphi 0, %s31
      %s46 = sphi 0, %s32
      %s50 = sphi 0, %s50
      %s52 = sphi 0, %s50
      %s53 = sphi 0, %s52
      %s67 = sphi 0, %s53
      %s75 = sphi 0, %s77
      %s78 = sphi 0, %s75
      %s79 = sphi 0, %s78
      %s95 = sphi 0, %s79
      %s103 = sphi 0, %s105
      %s106 = sphi 0, %s103
      %s107 = sphi 0, %s106
      %s123 = sphi 0, %s107
    $region4: #{_fenwick_forward_stream.1} parent=1 // loop_header_branch
      %12 = sbr.rel (%p10) target = $region8
    $region5: #{_fenwick_forward_stream.1} parent=1 // loop_body
      %s14 = ssub.s32 %s9, 1
      %s15 = ssub.s32 %s9, 2
      %s22 = sadd.s32 1, %s17
      %p23 = scmp.ge.s32.totalorder %s22, 3
      %s24 = scalar_select %p23, 0, %s22
      %s25 = sadd.s32 1, %s16
      %s26 = scalar_select %p23, %s25, %s16
      %p27 = scmp.ge.s32.totalorder %s26, 2
      %s28 = scalar_select %p27, 0, %s26
      %s30 = sadd.s32 %s29, 1
      %p33 = scmp.eq.s32.totalorder %s9, 5
      %p34 = scmp.ne.s32.totalorder %s29, %s31
      %p35 = scmp.eq.s32.totalorder %s9, 0
      %p36 = por %p34, %p35
      %p37 = scmp.ne.s32.totalorder %s29, %s31
      %p38 = scmp.eq.s32.totalorder %s14, 5
      %p39 = por %p37, %p38
      %p40 = scmp.ne.s32.totalorder %s31, %s32
      %p41 = scmp.eq.s32.totalorder %s14, 0
      %p42 = por %p40, %p41
      %p43 = scmp.ne.s32.totalorder %s31, %s32
      %p44 = scmp.eq.s32.totalorder %s15, 5
      %p45 = por %p43, %p44
      %p47 = scmp.ne.s32.totalorder %s32, %s46
      %p48 = scmp.eq.s32.totalorder %s15, 0
      %p49 = por %p47, %p48
      %s51 = sadd.s32 %s50, 1
      %p54 = scmp.eq.s32.totalorder %s9, 5
      %p55 = scmp.ne.s32.totalorder %s50, %s52
      %p56 = scmp.eq.s32.totalorder %s9, 0
      %p57 = por %p55, %p56
      %p58 = scmp.ne.s32.totalorder %s50, %s52
      %p59 = scmp.eq.s32.totalorder %s14, 5
      %p60 = por %p58, %p59
      %p61 = scmp.ne.s32.totalorder %s52, %s53
      %p62 = scmp.eq.s32.totalorder %s14, 0
      %p63 = por %p61, %p62
      %p64 = scmp.ne.s32.totalorder %s52, %s53
      %p65 = scmp.eq.s32.totalorder %s15, 5
      %p66 = por %p64, %p65
      %p68 = scmp.ne.s32.totalorder %s53, %s67
      %p69 = scmp.eq.s32.totalorder %s15, 0
      %p70 = por %p68, %p69
      %s71 = ssub.s32 %s17, %s24
      %s72 = ssub.s32 %s16, %s28
      %s73 = sor.u32 %s71, %s72
      %p74 = scmp.eq.s32.totalorder %s73, 0
      %s76 = sadd.s32 %s75, 1
      %s77 = scalar_select %p74, %s75, %s76
      %p80 = pneg %p74
      %p81 = scmp.eq.s32.totalorder %s9, 5
      %p82 = por %p80, %p81
      %p83 = scmp.ne.s32.totalorder %s75, %s78
      %p84 = scmp.eq.s32.totalorder %s9, 0
      %p85 = por %p83, %p84
      %p86 = scmp.ne.s32.totalorder %s75, %s78
      %p87 = scmp.eq.s32.totalorder %s14, 5
      %p88 = por %p86, %p87
      %p89 = scmp.ne.s32.totalorder %s78, %s79
      %p90 = scmp.eq.s32.totalorder %s14, 0
      %p91 = por %p89, %p90
      %p92 = scmp.ne.s32.totalorder %s78, %s79
      %p93 = scmp.eq.s32.totalorder %s15, 5
      %p94 = por %p92, %p93
      %p96 = scmp.ne.s32.totalorder %s79, %s95
      %p97 = scmp.eq.s32.totalorder %s15, 0
      %p98 = por %p96, %p97
      %s99 = ssub.s32 %s17, %s24
      %s100 = ssub.s32 %s16, %s28
      %s101 = sor.u32 %s99, %s100
      %p102 = scmp.eq.s32.totalorder %s101, 0
      %s104 = sadd.s32 %s103, 1
      %s105 = scalar_select %p102, %s103, %s104
      %p108 = pneg %p102
      %p109 = scmp.eq.s32.totalorder %s9, 5
      %p110 = por %p108, %p109
      %p111 = scmp.ne.s32.totalorder %s103, %s106
      %p112 = scmp.eq.s32.totalorder %s9, 0
      %p113 = por %p111, %p112
      %p114 = scmp.ne.s32.totalorder %s103, %s106
      %p115 = scmp.eq.s32.totalorder %s14, 5
      %p116 = por %p114, %p115
      %p117 = scmp.ne.s32.totalorder %s106, %s107
      %p118 = scmp.eq.s32.totalorder %s14, 0
      %p119 = por %p117, %p118
      %p120 = scmp.ne.s32.totalorder %s106, %s107
      %p121 = scmp.eq.s32.totalorder %s15, 5
      %p122 = por %p120, %p121
      %p124 = scmp.ne.s32.totalorder %s107, %s123
      %p125 = scmp.eq.s32.totalorder %s15, 0
      %p126 = por %p124, %p125
      %p127 = scmp.le.s32.totalorder 1, %s9
      %p128 = scmp.lt.s32.totalorder %s9, 7
      %p129 = pnand %p127, %p128
      %p130 = pneg %p129
      // Predicated region
      $region9: #{_fenwick_forward_stream.1} parent=5 // pred_check
        _
      $region10: #{_fenwick_forward_stream.1} parent=5 // pred_check_branch
        %132 = sbr.rel (%p129) target = $region12
      $region11: #{_fenwick_forward_stream.1} parent=5 // pred_region
        %s133 = ssub.s32 %s9, 1
        // Predicated region
        $region13: #{_fenwick_forward_stream.1} parent=11 // pred_check
          %p134 = pneg %p42
        $region14: #{_fenwick_forward_stream.1} parent=11 // pred_check_branch
          %136 = sbr.rel (%p134) target = $region16
        $region15: #{_fenwick_forward_stream.1} parent=11 // pred_region
          _
        $region16: #{_fenwick_forward_stream.1} parent=11 // pred_fallthru
          _
        // Predicated region
        $region17: #{_fenwick_forward_stream.1} parent=11 // pred_check
          %p137 = pneg %p63
        $region18: #{_fenwick_forward_stream.1} parent=11 // pred_check_branch
          %139 = sbr.rel (%p137) target = $region20
        $region19: #{_fenwick_forward_stream.1} parent=11 // pred_region
          _
        $region20: #{_fenwick_forward_stream.1} parent=11 // pred_fallthru
          _
      $region12: #{_fenwick_forward_stream.1} parent=5 // pred_fallthru
        _
      %p140 = scmp.lt.s32.totalorder %s9, 6
      // Predicated region
      $region21: #{_fenwick_forward_stream.1} parent=5 // pred_check
        %p141 = pneg %p140
      $region22: #{_fenwick_forward_stream.1} parent=5 // pred_check_branch
        %143 = sbr.rel (%p141) target = $region24
      $region23: #{_fenwick_forward_stream.1} parent=5 // pred_region
        // Predicated region
        $region25: #{_fenwick_forward_stream.1} parent=23 // pred_check
          %p144 = pneg %p85
        $region26: #{_fenwick_forward_stream.1} parent=23 // pred_check_branch
          %146 = sbr.rel (%p144) target = $region28
        $region27: #{_fenwick_forward_stream.1} parent=23 // pred_region
          %s147 = sand.u32 %s75, 1
          %s148 = sand.u32 %s75, 1
          %s149 = smul.addr %s148, 128
          %s150 = scalar_lea.vmem [#allocation4], %s149
          %s151 = smul.u32 8, %s17
          %s152 = smul.addr %s16, 2
          %s153 = smul.addr %s151, 4
          %s154 = sadd.s32 %s152, %s153
          %s155 = smul.addr %s154, 8
          %s156 = scalar_lea.vmem %s2, %s155
          // Predicated region
          $region29: #{_fenwick_forward_stream.1} parent=27 // pred_check
            _
          $region30: #{_fenwick_forward_stream.1} parent=27 // pred_check_branch
            %158 = sbr.rel (0) target = $region32
          $region31: #{_fenwick_forward_stream.1} parent=27 // pred_region
            // Predicated region
            $region33: #{_fenwick_forward_stream.1} parent=31 // pred_check
              _
            $region34: #{_fenwick_forward_stream.1} parent=31 // pred_check_branch
              %160 = sbr.rel (0) target = $region36
            $region35: #{_fenwick_forward_stream.1} parent=31 // pred_region
              loop: start=0, step=1, limit=1
              $region37: #{_fenwick_forward_stream.1} parent=35 // loop_pre_header
                _
              $region38: #{_fenwick_forward_stream.1} parent=35 // loop_header
                %s162 = sphi 0, %s166
                %p163 = scmp.ge.s32.totalorder %s162, 1
                %s167 = sphi %s156, %s156
                %s168 = sphi %s150, %s150
              $region39: #{_fenwick_forward_stream.1} parent=35 // loop_header_branch
                %165 = sbr.rel (%p163) target = $region43
              $region40: #{_fenwick_forward_stream.1} parent=35 // loop_body
                %v169 = vld [vmem:[%s167] sm:$0xff]
                %170 = vst [vmem:[%s168] sm:$0xff] %v169
                %v171 = vld [vmem:[%s167 + $0x8] sm:$0xff]
                %172 = vst [vmem:[%s168 + $0x8] sm:$0xff] %v171
                %v173 = vld [vmem:[%s167 + $0x20] sm:$0xff]
                %174 = vst [vmem:[%s168 + $0x10] sm:$0xff] %v173
                %v175 = vld [vmem:[%s167 + $0x28] sm:$0xff]
                %176 = vst [vmem:[%s168 + $0x18] sm:$0xff] %v175
                %v177 = vld [vmem:[%s167 + $0x40] sm:$0xff]
                %178 = vst [vmem:[%s168 + $0x20] sm:$0xff] %v177
                %v179 = vld [vmem:[%s167 + $0x48] sm:$0xff]
                %180 = vst [vmem:[%s168 + $0x28] sm:$0xff] %v179
                %v181 = vld [vmem:[%s167 + $0x60] sm:$0xff]
                %182 = vst [vmem:[%s168 + $0x30] sm:$0xff] %v181
                %v183 = vld [vmem:[%s167 + $0x68] sm:$0xff]
                %184 = vst [vmem:[%s168 + $0x38] sm:$0xff] %v183
                %v185 = vld [vmem:[%s167 + $0x80] sm:$0xff]
                %186 = vst [vmem:[%s168 + $0x40] sm:$0xff] %v185
                %v187 = vld [vmem:[%s167 + $0x88] sm:$0xff]
                %188 = vst [vmem:[%s168 + $0x48] sm:$0xff] %v187
                %v189 = vld [vmem:[%s167 + $0xa0] sm:$0xff]
                %190 = vst [vmem:[%s168 + $0x50] sm:$0xff] %v189
                %v191 = vld [vmem:[%s167 + $0xa8] sm:$0xff]
                %192 = vst [vmem:[%s168 + $0x58] sm:$0xff] %v191
                %v193 = vld [vmem:[%s167 + $0xc0] sm:$0xff]
                %194 = vst [vmem:[%s168 + $0x60] sm:$0xff] %v193
                %v195 = vld [vmem:[%s167 + $0xc8] sm:$0xff]
                %196 = vst [vmem:[%s168 + $0x68] sm:$0xff] %v195
                %v197 = vld [vmem:[%s167 + $0xe0] sm:$0xff]
                %198 = vst [vmem:[%s168 + $0x70] sm:$0xff] %v197
                %v199 = vld [vmem:[%s167 + $0xe8] sm:$0xff]
                %200 = vst [vmem:[%s168 + $0x78] sm:$0xff] %v199
              $region41: #{_fenwick_forward_stream.1} parent=35 // loop_footer
                %s166 = sadd.s32 1, %s162
              $region42: #{_fenwick_forward_stream.1} parent=35 // loop_footer_branch
                %161 = sbr.rel target = $region38
              $region43: #{_fenwick_forward_stream.1} parent=35 // loop_exit
                _
            $region36: #{_fenwick_forward_stream.1} parent=31 // pred_fallthru
              _
            // Predicated region
            $region44: #{_fenwick_forward_stream.1} parent=31 // pred_check
              _
            $region45: #{_fenwick_forward_stream.1} parent=31 // pred_check_branch
              %202 = sbr.rel target = $region47
            $region46: #{_fenwick_forward_stream.1} parent=31 // pred_region
              _
            $region47: #{_fenwick_forward_stream.1} parent=31 // pred_fallthru
              _
          $region32: #{_fenwick_forward_stream.1} parent=27 // pred_fallthru
            _
          %203 = vnop
        $region28: #{_fenwick_forward_stream.1} parent=23 // pred_fallthru
          _
      $region24: #{_fenwick_forward_stream.1} parent=5 // pred_fallthru
        _
      %p204 = scmp.le.s32.totalorder 1, %s9
      %p205 = scmp.lt.s32.totalorder %s9, 7
      %p206 = pnand %p204, %p205
      %p207 = pneg %p206
      // Predicated region
      $region48: #{_fenwick_forward_stream.1} parent=5 // pred_check
        _
      $region49: #{_fenwick_forward_stream.1} parent=5 // pred_check_branch
        %209 = sbr.rel (%p206) target = $region51
      $region50: #{_fenwick_forward_stream.1} parent=5 // pred_region
        %s210 = ssub.s32 %s9, 1
        %s211 = sand.u32 %s78, 1
        %s212 = sand.u32 %s78, 1
        %s213 = smul.addr %s212, 128
        %s214 = scalar_lea.vmem [#allocation4], %s213
        // Predicated region
        $region52: #{_fenwick_forward_stream.1} parent=50 // pred_check
          %p215 = pneg %p91
        $region53: #{_fenwick_forward_stream.1} parent=50 // pred_check_branch
          %217 = sbr.rel (%p215) target = $region55
        $region54: #{_fenwick_forward_stream.1} parent=50 // pred_region
          _
        $region55: #{_fenwick_forward_stream.1} parent=50 // pred_fallthru
          _
        %p218 = pneg %p42
        %p219 = pneg %p39
        %p220 = pneg %p63
        %p221 = pneg %p60
        %s222 = sand.u32 %s78, 1
        %s223 = sand.u32 %s78, 1
        %s224 = smul.addr %s223, 128
        %s225 = scalar_lea.vmem [#allocation4], %s224
        %p226 = pneg %p91
        %p227 = pneg %p88
        %p228 = pneg %p119
        %p229 = pneg %p116
        %s230 = sand.u32 %s106, 1
        %s231 = sand.u32 %s106, 1
        %s232 = smul.addr %s231, 128
        %s233 = scalar_lea.vmem [#allocation5], %s232
        %s234 = smul.u32 8, %s19
        %s235 = smul.u32 8, %s19
        %p237 = scmp.eq.s32.totalorder %s19, 0
        // Predicated region
        $region56: #{_fenwick_forward_stream.1} parent=50 // pred_check
          %p238 = pneg %p237
        $region57: #{_fenwick_forward_stream.1} parent=50 // pred_check_branch
          %240 = sbr.rel (%p238) target = $region59
        $region58: #{_fenwick_forward_stream.1} parent=50 // pred_region
          %241 = vst [vmem:[#allocation2] sm:$0xff] 0.0
          %242 = vst [vmem:[#allocation2 + $0x8] sm:$0xff] 0.0
          %243 = vst [vmem:[#allocation2 + $0x10] sm:$0xff] 0.0
          %244 = vst [vmem:[#allocation2 + $0x18] sm:$0xff] 0.0
          %245 = vst [vmem:[#allocation2 + $0x20] sm:$0xff] 0.0
          %246 = vst [vmem:[#allocation2 + $0x28] sm:$0xff] 0.0
          %247 = vst [vmem:[#allocation2 + $0x30] sm:$0xff] 0.0
          %248 = vst [vmem:[#allocation2 + $0x38] sm:$0xff] 0.0
          %249 = vst [vmem:[#allocation2 + $0x40] sm:$0xff] 0.0
          %250 = vst [vmem:[#allocation2 + $0x48] sm:$0xff] 0.0
        $region59: #{_fenwick_forward_stream.1} parent=50 // pred_fallthru
          _
        %v251 = vld [vmem:[%s1] sm:$0x1f]
        %v253 = vlaneseq
        %v254 = vshrl.u32 %v253, 7
        %v255 = vsub.s32 0, %v254
        %v256 = vrot.slane %v251, %v255
        %v257 = vlaneseq
        %v258 = vshrl.u32 %v257, 7
        %v259 = vsub.s32 1, %v258
        %v260 = vrot.slane %v251, %v259
        %v261 = vlaneseq
        %v262 = vshrl.u32 %v261, 7
        %v263 = vsub.s32 2, %v262
        %v264 = vrot.slane %v251, %v263
        %v265 = vlaneseq
        %v266 = vshrl.u32 %v265, 7
        %v267 = vsub.s32 3, %v266
        %v268 = vrot.slane %v251, %v267
        %v269 = vlaneseq
        %v270 = vshrl.u32 %v269, 7
        %v271 = vsub.s32 4, %v270
        %v272 = vrot.slane %v251, %v271
        %s278 = scalar_lea.vmem %s1, 5
        %v279 = vld [vmem:[%s278] sm:$0x1f]
        %v281 = vlaneseq
        %v282 = vshrl.u32 %v281, 7
        %v283 = vsub.s32 0, %v282
        %v284 = vrot.slane %v279, %v283
        %v285 = vlaneseq
        %v286 = vshrl.u32 %v285, 7
        %v287 = vsub.s32 1, %v286
        %v288 = vrot.slane %v279, %v287
        %v289 = vlaneseq
        %v290 = vshrl.u32 %v289, 7
        %v291 = vsub.s32 2, %v290
        %v292 = vrot.slane %v279, %v291
        %v293 = vlaneseq
        %v294 = vshrl.u32 %v293, 7
        %v295 = vsub.s32 3, %v294
        %v296 = vrot.slane %v279, %v295
        %v297 = vlaneseq
        %v298 = vshrl.u32 %v297, 7
        %v299 = vsub.s32 4, %v298
        %v300 = vrot.slane %v279, %v299
        loop: start=0, step=1, limit=8
        $region60: #{_fenwick_forward_stream.1} parent=50 // loop_pre_header
          _
        $region61: #{_fenwick_forward_stream.1} parent=50 // loop_header
          %s307 = sphi 0, %s311
          %p308 = scmp.ge.s32.totalorder %s307, 8
        $region62: #{_fenwick_forward_stream.1} parent=50 // loop_header_branch
          %310 = sbr.rel (%p308) target = $region66
        $region63: #{_fenwick_forward_stream.1} parent=50 // loop_body
          %s312 = smul.u32 %s19, 8
          %s313 = sadd.s32 %s312, %s307
          %s314 = sadd.s32 %s313, 1
          %p315 = scmp.le.s32.totalorder %s314, 20
          // Predicated region
          $region67: #{_fenwick_forward_stream.1} parent=63 // pred_check
            %p316 = pneg %p315
          $region68: #{_fenwick_forward_stream.1} parent=63 // pred_check_branch
            %318 = sbr.rel (%p316) target = $region70
          $region69: #{_fenwick_forward_stream.1} parent=63 // pred_region
            %s319 = sand.u32 %s314, 1
            %p320 = scmp.eq.s32.totalorder %s319, 0
            %s321 = scalar_select %p320, 1, 0
            %s322 = sand.u32 %s314, 3
            %p323 = scmp.eq.s32.totalorder %s322, 0
            %s324 = scalar_select %p323, 1, 0
            %s325 = sadd.s32 %s321, %s324
            %s326 = sand.u32 %s314, 7
            %p327 = scmp.eq.s32.totalorder %s326, 0
            %s328 = scalar_select %p327, 1, 0
            %s329 = sadd.s32 %s325, %s328
            %s330 = sand.u32 %s314, 15
            %p331 = scmp.eq.s32.totalorder %s330, 0
            %s332 = scalar_select %p331, 1, 0
            %s333 = sadd.s32 %s329, %s332
            %s334 = sand.u32 %s314, 31
            %p335 = scmp.eq.s32.totalorder %s334, 0
            %s336 = scalar_select %p335, 1, 0
            %s337 = sadd.s32 %s333, %s336
            %s338 = smul.u32 %s307, 2
            %s339 = smul.addr %s338, 8
            %s340 = scalar_lea.vmem %s214, %s339 [#allocation4]
            %v341 = vld [vmem:[%s340] sm:$0xff]
            %v342 = vld [vmem:[%s340 + $0x8] sm:$0xff]
            %343 = vst [vmem:[#allocation3] sm:$0xff] %v341
            %344 = vst [vmem:[#allocation3 + $0x8] sm:$0xff] %v342
            %p345 = scmp.gt.s32.totalorder %s337, 0
            // Predicated region
            $region71: #{_fenwick_forward_stream.1} parent=69 // pred_check
              %p346 = pneg %p345
            $region72: #{_fenwick_forward_stream.1} parent=69 // pred_check_branch
              %348 = sbr.rel (%p346) target = $region74
            $region73: #{_fenwick_forward_stream.1} parent=69 // pred_region
              %v349 = vld [vmem:[#allocation2] sm:$0xff]
              %v350 = vld [vmem:[#allocation2 + $0x8] sm:$0xff]
              %v351 = vld [vmem:[#allocation3] sm:$0xff]
              %v352 = vld [vmem:[#allocation3 + $0x8] sm:$0xff]
              %v353 = vpack.c.bf16 %v349, %v349
              %v354 = vld [vmem:[%s0] sm:$0xff]
              %v355 = vld [vmem:[%s0 + $0x8] sm:$0xff]
              %v356 = vld [vmem:[%s0 + $0x10] sm:$0xf]
              %v357 = vld [vmem:[%s0 + $0x14] sm:$0xff]
              %v358 = vld [vmem:[%s0 + $0x1c] sm:$0xff]
              %v359 = vld [vmem:[%s0 + $0x24] sm:$0xf]
              %v360 = vld [vmem:[%s0 + $0x28] sm:$0xff]
              %v361 = vld [vmem:[%s0 + $0x30] sm:$0xff]
              %v362 = vld [vmem:[%s0 + $0x38] sm:$0xf]
              %v363 = vld [vmem:[%s0 + $0x3c] sm:$0xff]
              %v364 = vld [vmem:[%s0 + $0x44] sm:$0xff]
              %v365 = vld [vmem:[%s0 + $0x4c] sm:$0xf]
              %v366 = vld [vmem:[%s0 + $0x50] sm:$0xff]
              %v367 = vld [vmem:[%s0 + $0x58] sm:$0xff]
              %v368 = vld [vmem:[%s0 + $0x60] sm:$0xf]
              %v369 = vld [vmem:[%s0 + $0x64] sm:$0xff]
              %v370 = vld [vmem:[%s0 + $0x6c] sm:$0xff]
              %v371 = vld [vmem:[%s0 + $0x74] sm:$0xf]
              %v372 = vld [vmem:[%s0 + $0x78] sm:$0xff]
              %v373 = vld [vmem:[%s0 + $0x80] sm:$0xff]
              %v374 = vld [vmem:[%s0 + $0x88] sm:$0xf]
              %v375 = vld [vmem:[%s0 + $0x8c] sm:$0xff]
              %v376 = vld [vmem:[%s0 + $0x94] sm:$0xff]
              %v377 = vld [vmem:[%s0 + $0x9c] sm:$0xf]
              %v378 = vld [vmem:[%s0 + $0xa0] sm:$0xff]
              %v379 = vld [vmem:[%s0 + $0xa8] sm:$0xff]
              %v380 = vld [vmem:[%s0 + $0xb0] sm:$0xf]
              %v381 = vld [vmem:[%s0 + $0xb4] sm:$0xff]
              %v382 = vld [vmem:[%s0 + $0xbc] sm:$0xff]
              %v383 = vld [vmem:[%s0 + $0xc4] sm:$0xf]
              %v384 = vld [vmem:[%s0 + $0xc8] sm:$0xff]
              %v385 = vld [vmem:[%s0 + $0xd0] sm:$0xff]
              %v386 = vld [vmem:[%s0 + $0xd8] sm:$0xf]
              %v387 = vld [vmem:[%s0 + $0xdc] sm:$0xff]
              %v388 = vld [vmem:[%s0 + $0xe4] sm:$0xff]
              %v389 = vld [vmem:[%s0 + $0xec] sm:$0xf]
              %v390 = vld [vmem:[%s0 + $0xf0] sm:$0xff]
              %v391 = vld [vmem:[%s0 + $0xf8] sm:$0xff]
              %v392 = vld [vmem:[%s0 + $0x100] sm:$0xf]
              %v393 = vld [vmem:[%s0 + $0x104] sm:$0xff]
              %v394 = vld [vmem:[%s0 + $0x10c] sm:$0xff]
              %v395 = vld [vmem:[%s0 + $0x114] sm:$0xf]
              %v396 = vld [vmem:[%s0 + $0x118] sm:$0xff]
              %v397 = vld [vmem:[%s0 + $0x120] sm:$0xff]
              %v398 = vld [vmem:[%s0 + $0x128] sm:$0xf]
              %v399 = vld [vmem:[%s0 + $0x12c] sm:$0xff]
              %v400 = vld [vmem:[%s0 + $0x134] sm:$0xff]
              %v401 = vld [vmem:[%s0 + $0x13c] sm:$0xf]
              %v402 = vpack.c.bf16 %v351, %v351
              %s403 = scalar_lea.vmem %s0, 320
              %v404 = vld [vmem:[%s403] sm:$0xff]
              %v405 = vld [vmem:[%s403 + $0x8] sm:$0xff]
              %v406 = vld [vmem:[%s403 + $0x10] sm:$0xf]
              %v407 = vld [vmem:[%s403 + $0x14] sm:$0xff]
              %v408 = vld [vmem:[%s403 + $0x1c] sm:$0xff]
              %v409 = vld [vmem:[%s403 + $0x24] sm:$0xf]
              %v410 = vld [vmem:[%s403 + $0x28] sm:$0xff]
              %v411 = vld [vmem:[%s403 + $0x30] sm:$0xff]
              %v412 = vld [vmem:[%s403 + $0x38] sm:$0xf]
              %v413 = vld [vmem:[%s403 + $0x3c] sm:$0xff]
              %v414 = vld [vmem:[%s403 + $0x44] sm:$0xff]
              %v415 = vld [vmem:[%s403 + $0x4c] sm:$0xf]
              %v416 = vld [vmem:[%s403 + $0x50] sm:$0xff]
              %v417 = vld [vmem:[%s403 + $0x58] sm:$0xff]
              %v418 = vld [vmem:[%s403 + $0x60] sm:$0xf]
              %v419 = vld [vmem:[%s403 + $0x64] sm:$0xff]
              %v420 = vld [vmem:[%s403 + $0x6c] sm:$0xff]
              %v421 = vld [vmem:[%s403 + $0x74] sm:$0xf]
              %v422 = vld [vmem:[%s403 + $0x78] sm:$0xff]
              %v423 = vld [vmem:[%s403 + $0x80] sm:$0xff]
              %v424 = vld [vmem:[%s403 + $0x88] sm:$0xf]
              %v425 = vld [vmem:[%s403 + $0x8c] sm:$0xff]
              %v426 = vld [vmem:[%s403 + $0x94] sm:$0xff]
              %v427 = vld [vmem:[%s403 + $0x9c] sm:$0xf]
              %v428 = vld [vmem:[%s403 + $0xa0] sm:$0xff]
              %v429 = vld [vmem:[%s403 + $0xa8] sm:$0xff]
              %v430 = vld [vmem:[%s403 + $0xb0] sm:$0xf]
              %v431 = vld [vmem:[%s403 + $0xb4] sm:$0xff]
              %v432 = vld [vmem:[%s403 + $0xbc] sm:$0xff]
              %v433 = vld [vmem:[%s403 + $0xc4] sm:$0xf]
              %v434 = vld [vmem:[%s403 + $0xc8] sm:$0xff]
              %v435 = vld [vmem:[%s403 + $0xd0] sm:$0xff]
              %v436 = vld [vmem:[%s403 + $0xd8] sm:$0xf]
              %v437 = vld [vmem:[%s403 + $0xdc] sm:$0xff]
              %v438 = vld [vmem:[%s403 + $0xe4] sm:$0xff]
              %v439 = vld [vmem:[%s403 + $0xec] sm:$0xf]
              %v440 = vld [vmem:[%s403 + $0xf0] sm:$0xff]
              %v441 = vld [vmem:[%s403 + $0xf8] sm:$0xff]
              %v442 = vld [vmem:[%s403 + $0x100] sm:$0xf]
              %v443 = vld [vmem:[%s403 + $0x104] sm:$0xff]
              %v444 = vld [vmem:[%s403 + $0x10c] sm:$0xff]
              %v445 = vld [vmem:[%s403 + $0x114] sm:$0xf]
              %v446 = vld [vmem:[%s403 + $0x118] sm:$0xff]
              %v447 = vld [vmem:[%s403 + $0x120] sm:$0xff]
              %v448 = vld [vmem:[%s403 + $0x128] sm:$0xf]
              %v449 = vld [vmem:[%s403 + $0x12c] sm:$0xff]
              %v450 = vld [vmem:[%s403 + $0x134] sm:$0xff]
              %v451 = vld [vmem:[%s403 + $0x13c] sm:$0xf]
              %v500 = vunpack.c.l.b16 %v404
              %v501 = vunpack.c.h.b16 %v404
              %v502 = vunpack.c.l.b16 %v405
              %v503 = vunpack.c.h.b16 %v405
              %v504 = vunpack.c.l.b16 %v406
              %v505 = vunpack.c.l.b16 %v407
              %v506 = vunpack.c.h.b16 %v407
              %v507 = vunpack.c.l.b16 %v408
              %v508 = vunpack.c.h.b16 %v408
              %v509 = vunpack.c.l.b16 %v409
              %v510 = vunpack.c.l.b16 %v410
              %v511 = vunpack.c.h.b16 %v410
              %v512 = vunpack.c.l.b16 %v411
              %v513 = vunpack.c.h.b16 %v411
              %v514 = vunpack.c.l.b16 %v412
              %v515 = vunpack.c.l.b16 %v413
              %v516 = vunpack.c.h.b16 %v413
              %v517 = vunpack.c.l.b16 %v414
              %v518 = vunpack.c.h.b16 %v414
              %v519 = vunpack.c.l.b16 %v415
              %v520 = vunpack.c.l.b16 %v416
              %v521 = vunpack.c.h.b16 %v416
              %v522 = vunpack.c.l.b16 %v417
              %v523 = vunpack.c.h.b16 %v417
              %v524 = vunpack.c.l.b16 %v418
              %v525 = vunpack.c.l.b16 %v419
              %v526 = vunpack.c.h.b16 %v419
              %v527 = vunpack.c.l.b16 %v420
              %v528 = vunpack.c.h.b16 %v420
              %v529 = vunpack.c.l.b16 %v421
              %v530 = vunpack.c.l.b16 %v422
              %v531 = vunpack.c.h.b16 %v422
              %v532 = vunpack.c.l.b16 %v423
              %v533 = vunpack.c.h.b16 %v423
              %v534 = vunpack.c.l.b16 %v424
              %v535 = vunpack.c.l.b16 %v425
              %v536 = vunpack.c.h.b16 %v425
              %v537 = vunpack.c.l.b16 %v426
              %v538 = vunpack.c.h.b16 %v426
              %v539 = vunpack.c.l.b16 %v427
              %v540 = vunpack.c.l.b16 %v428
              %v541 = vunpack.c.h.b16 %v428
              %v542 = vunpack.c.l.b16 %v429
              %v543 = vunpack.c.h.b16 %v429
              %v544 = vunpack.c.l.b16 %v430
              %v545 = vunpack.c.l.b16 %v431
              %v546 = vunpack.c.h.b16 %v431
              %v547 = vunpack.c.l.b16 %v432
              %v548 = vunpack.c.h.b16 %v432
              %v549 = vunpack.c.l.b16 %v433
              %v550 = vunpack.c.l.b16 %v434
              %v551 = vunpack.c.h.b16 %v434
              %v552 = vunpack.c.l.b16 %v435
              %v553 = vunpack.c.h.b16 %v435
              %v554 = vunpack.c.l.b16 %v436
              %v555 = vunpack.c.l.b16 %v437
              %v556 = vunpack.c.h.b16 %v437
              %v557 = vunpack.c.l.b16 %v438
              %v558 = vunpack.c.h.b16 %v438
              %v559 = vunpack.c.l.b16 %v439
              %v560 = vunpack.c.l.b16 %v440
              %v561 = vunpack.c.h.b16 %v440
              %v562 = vunpack.c.l.b16 %v441
              %v563 = vunpack.c.h.b16 %v441
              %v564 = vunpack.c.l.b16 %v442
              %v565 = vunpack.c.l.b16 %v443
              %v566 = vunpack.c.h.b16 %v443
              %v567 = vunpack.c.l.b16 %v444
              %v568 = vunpack.c.h.b16 %v444
              %v569 = vunpack.c.l.b16 %v445
              %v570 = vunpack.c.l.b16 %v446
              %v571 = vunpack.c.h.b16 %v446
              %v572 = vunpack.c.l.b16 %v447
              %v573 = vunpack.c.h.b16 %v447
              %v574 = vunpack.c.l.b16 %v448
              %v575 = vunpack.c.l.b16 %v449
              %v576 = vunpack.c.h.b16 %v449
              %v577 = vunpack.c.l.b16 %v450
              %v578 = vunpack.c.h.b16 %v450
              %v579 = vunpack.c.l.b16 %v451
              %v580 = vpack.c.b16 %v505, %v500
              %v581 = vpack.c.b16 %v506, %v501
              %v582 = vpack.c.b16 %v507, %v502
              %v583 = vpack.c.b16 %v508, %v503
              %v584 = vpack.c.b16 %v509, %v504
              %v585 = vpack.c.b16 %v515, %v510
              %v586 = vpack.c.b16 %v516, %v511
              %v587 = vpack.c.b16 %v517, %v512
              %v588 = vpack.c.b16 %v518, %v513
              %v589 = vpack.c.b16 %v519, %v514
              %v590 = vpack.c.b16 %v525, %v520
              %v591 = vpack.c.b16 %v526, %v521
              %v592 = vpack.c.b16 %v527, %v522
              %v593 = vpack.c.b16 %v528, %v523
              %v594 = vpack.c.b16 %v529, %v524
              %v595 = vpack.c.b16 %v535, %v530
              %v596 = vpack.c.b16 %v536, %v531
              %v597 = vpack.c.b16 %v537, %v532
              %v598 = vpack.c.b16 %v538, %v533
              %v599 = vpack.c.b16 %v539, %v534
              %v600 = vpack.c.b16 %v545, %v540
              %v601 = vpack.c.b16 %v546, %v541
              %v602 = vpack.c.b16 %v547, %v542
              %v603 = vpack.c.b16 %v548, %v543
              %v604 = vpack.c.b16 %v549, %v544
              %v605 = vpack.c.b16 %v555, %v550
              %v606 = vpack.c.b16 %v556, %v551
              %v607 = vpack.c.b16 %v557, %v552
              %v608 = vpack.c.b16 %v558, %v553
              %v609 = vpack.c.b16 %v559, %v554
              %v610 = vpack.c.b16 %v565, %v560
              %v611 = vpack.c.b16 %v566, %v561
              %v612 = vpack.c.b16 %v567, %v562
              %v613 = vpack.c.b16 %v568, %v563
              %v614 = vpack.c.b16 %v569, %v564
              %v615 = vpack.c.b16 %v575, %v570
              %v616 = vpack.c.b16 %v576, %v571
              %v617 = vpack.c.b16 %v577, %v572
              %v618 = vpack.c.b16 %v578, %v573
              %v619 = vpack.c.b16 %v579, %v574
              %660 = vmatprep.subr.bf16.mxu0 %v616
              %661 = vmatpush1.bf16.msra.mxu0 %v615
              %662 = vmatprep.subr.bf16.mxu0 %v611
              %663 = vmatpush1.bf16.msra.mxu0 %v610
              %664 = vmatprep.subr.bf16.mxu0 %v606
              %665 = vmatpush1.bf16.msra.mxu0 %v605
              %666 = vmatprep.subr.bf16.mxu0 %v601
              %667 = vmatpush1.bf16.msra.mxu0 %v600
              %668 = vmatprep.subr.bf16.mxu0 %v596
              %669 = vmatpush1.bf16.msra.mxu0 %v595
              %670 = vmatprep.subr.bf16.mxu0 %v591
              %671 = vmatpush1.bf16.msra.mxu0 %v590
              %672 = vmatprep.subr.bf16.mxu0 %v586
              %673 = vmatpush1.bf16.msra.mxu0 %v585
              %674 = vmatprep.subr.bf16.mxu0 %v581
              %675 = vmatpush1.bf16.msra.mxu0 %v580
              %676 = vmatprep.subr.bf16.mxu0 0
              %677 = vmatpush2.bf16.msra.mxu0 0
              %678 = vmatprep.subr.bf16.mxu0 0
              %679 = vmatpush2.bf16.msra.mxu0 0
              %680 = vmatprep.subr.bf16.mxu0 0
              %681 = vmatpush2.bf16.msra.mxu0 0
              %682 = vmatprep.subr.bf16.mxu0 0
              %683 = vmatpush2.bf16.msra.mxu0 0
              %684 = vmatprep.subr.bf16.mxu0 0
              %685 = vmatpush2.bf16.msra.mxu0 0
              %686 = vmatprep.subr.bf16.mxu0 0
              %687 = vmatpush2.bf16.msra.mxu0 0
              %688 = vmatprep.subr.bf16.mxu0 0
              %689 = vmatpush2.bf16.msra.mxu0 0
              %690 = vmatprep.subr.bf16.mxu0 0
              %691 = vmatpush2.bf16.msra.mxu0 0
              %692 = vmatprep.mubr.bf16.mxu0 0
              %693 = vmatmul.mubr.bf16.gmra.mxu0 %v402
              %v694 = vpop.f32.mrf.mxu0
              %v695 = vadd.f32 0.0, %v694
              %v696 = vpop.f32.mrf.mxu0
              %v697 = vadd.f32 0.0, %v696
              %v698 = vpop.f32.mrf.mxu0
              %v699 = vpop.f32.mrf.mxu0
              %700 = vdwg.mxu0
              %701 = vmatprep.subr.bf16.mxu0 %v618
              %702 = vmatpush1.bf16.msra.mxu0 %v617
              %703 = vmatprep.subr.bf16.mxu0 %v613
              %704 = vmatpush1.bf16.msra.mxu0 %v612
              %705 = vmatprep.subr.bf16.mxu0 %v608
              %706 = vmatpush1.bf16.msra.mxu0 %v607
              %707 = vmatprep.subr.bf16.mxu0 %v603
              %708 = vmatpush1.bf16.msra.mxu0 %v602
              %709 = vmatprep.subr.bf16.mxu0 %v598
              %710 = vmatpush1.bf16.msra.mxu0 %v597
              %711 = vmatprep.subr.bf16.mxu0 %v593
              %712 = vmatpush1.bf16.msra.mxu0 %v592
              %713 = vmatprep.subr.bf16.mxu0 %v588
              %714 = vmatpush1.bf16.msra.mxu0 %v587
              %715 = vmatprep.subr.bf16.mxu0 %v583
              %716 = vmatpush1.bf16.msra.mxu0 %v582
              %717 = vmatprep.subr.bf16.mxu0 0
              %718 = vmatpush2.bf16.msra.mxu0 0
              %719 = vmatprep.subr.bf16.mxu0 0
              %720 = vmatpush2.bf16.msra.mxu0 0
              %721 = vmatprep.subr.bf16.mxu0 0
              %722 = vmatpush2.bf16.msra.mxu0 0
              %723 = vmatprep.subr.bf16.mxu0 0
              %724 = vmatpush2.bf16.msra.mxu0 0
              %725 = vmatprep.subr.bf16.mxu0 0
              %726 = vmatpush2.bf16.msra.mxu0 0
              %727 = vmatprep.subr.bf16.mxu0 0
              %728 = vmatpush2.bf16.msra.mxu0 0
              %729 = vmatprep.subr.bf16.mxu0 0
              %730 = vmatpush2.bf16.msra.mxu0 0
              %731 = vmatprep.subr.bf16.mxu0 0
              %732 = vmatpush2.bf16.msra.mxu0 0
              %733 = vmatprep.mubr.bf16.mxu0 0
              %734 = vmatmul.mubr.bf16.gmra.mxu0 %v402
              %v735 = vpop.f32.mrf.mxu0
              %v736 = vadd.f32 0.0, %v735
              %v737 = vpop.f32.mrf.mxu0
              %v738 = vadd.f32 0.0, %v737
              %v739 = vpop.f32.mrf.mxu0
              %v740 = vpop.f32.mrf.mxu0
              %741 = vdwg.mxu0
              %742 = vmatprep.subr.bf16.mxu0 0
              %743 = vmatpush1.bf16.msra.mxu0 %v619
              %744 = vmatprep.subr.bf16.mxu0 0
              %745 = vmatpush1.bf16.msra.mxu0 %v614
              %746 = vmatprep.subr.bf16.mxu0 0
              %747 = vmatpush1.bf16.msra.mxu0 %v609
              %748 = vmatprep.subr.bf16.mxu0 0
              %749 = vmatpush1.bf16.msra.mxu0 %v604
              %750 = vmatprep.subr.bf16.mxu0 0
              %751 = vmatpush1.bf16.msra.mxu0 %v599
              %752 = vmatprep.subr.bf16.mxu0 0
              %753 = vmatpush1.bf16.msra.mxu0 %v594
              %754 = vmatprep.subr.bf16.mxu0 0
              %755 = vmatpush1.bf16.msra.mxu0 %v589
              %756 = vmatprep.subr.bf16.mxu0 0
              %757 = vmatpush1.bf16.msra.mxu0 %v584
              %758 = vmatprep.subr.bf16.mxu0 0
              %759 = vmatpush2.bf16.msra.mxu0 0
              %760 = vmatprep.subr.bf16.mxu0 0
              %761 = vmatpush2.bf16.msra.mxu0 0
              %762 = vmatprep.subr.bf16.mxu0 0
              %763 = vmatpush2.bf16.msra.mxu0 0
              %764 = vmatprep.subr.bf16.mxu0 0
              %765 = vmatpush2.bf16.msra.mxu0 0
              %766 = vmatprep.subr.bf16.mxu0 0
              %767 = vmatpush2.bf16.msra.mxu0 0
              %768 = vmatprep.subr.bf16.mxu0 0
              %769 = vmatpush2.bf16.msra.mxu0 0
              %770 = vmatprep.subr.bf16.mxu0 0
              %771 = vmatpush2.bf16.msra.mxu0 0
              %772 = vmatprep.subr.bf16.mxu0 0
              %773 = vmatpush2.bf16.msra.mxu0 0
              %774 = vmatprep.mubr.bf16.mxu0 0
              %775 = vmatmul.mubr.bf16.gmra.mxu0 %v402
              %v776 = vpop.f32.mrf.mxu0
              %v777 = vadd.f32 0.0, %v776
              %v778 = vpop.f32.mrf.mxu0
              %v779 = vpop.f32.mrf.mxu0
              %v780 = vpop.f32.mrf.mxu0
              %781 = vdwg.mxu0
              %v830 = vunpack.c.l.b16 %v354
              %v831 = vunpack.c.h.b16 %v354
              %v832 = vunpack.c.l.b16 %v355
              %v833 = vunpack.c.h.b16 %v355
              %v834 = vunpack.c.l.b16 %v356
              %v835 = vunpack.c.l.b16 %v357
              %v836 = vunpack.c.h.b16 %v357
              %v837 = vunpack.c.l.b16 %v358
              %v838 = vunpack.c.h.b16 %v358
              %v839 = vunpack.c.l.b16 %v359
              %v840 = vunpack.c.l.b16 %v360
              %v841 = vunpack.c.h.b16 %v360
              %v842 = vunpack.c.l.b16 %v361
              %v843 = vunpack.c.h.b16 %v361
              %v844 = vunpack.c.l.b16 %v362
              %v845 = vunpack.c.l.b16 %v363
              %v846 = vunpack.c.h.b16 %v363
              %v847 = vunpack.c.l.b16 %v364
              %v848 = vunpack.c.h.b16 %v364
              %v849 = vunpack.c.l.b16 %v365
              %v850 = vunpack.c.l.b16 %v366
              %v851 = vunpack.c.h.b16 %v366
              %v852 = vunpack.c.l.b16 %v367
              %v853 = vunpack.c.h.b16 %v367
              %v854 = vunpack.c.l.b16 %v368
              %v855 = vunpack.c.l.b16 %v369
              %v856 = vunpack.c.h.b16 %v369
              %v857 = vunpack.c.l.b16 %v370
              %v858 = vunpack.c.h.b16 %v370
              %v859 = vunpack.c.l.b16 %v371
              %v860 = vunpack.c.l.b16 %v372
              %v861 = vunpack.c.h.b16 %v372
              %v862 = vunpack.c.l.b16 %v373
              %v863 = vunpack.c.h.b16 %v373
              %v864 = vunpack.c.l.b16 %v374
              %v865 = vunpack.c.l.b16 %v375
              %v866 = vunpack.c.h.b16 %v375
              %v867 = vunpack.c.l.b16 %v376
              %v868 = vunpack.c.h.b16 %v376
              %v869 = vunpack.c.l.b16 %v377
              %v870 = vunpack.c.l.b16 %v378
              %v871 = vunpack.c.h.b16 %v378
              %v872 = vunpack.c.l.b16 %v379
              %v873 = vunpack.c.h.b16 %v379
              %v874 = vunpack.c.l.b16 %v380
              %v875 = vunpack.c.l.b16 %v381
              %v876 = vunpack.c.h.b16 %v381
              %v877 = vunpack.c.l.b16 %v382
              %v878 = vunpack.c.h.b16 %v382
              %v879 = vunpack.c.l.b16 %v383
              %v880 = vunpack.c.l.b16 %v384
              %v881 = vunpack.c.h.b16 %v384
              %v882 = vunpack.c.l.b16 %v385
              %v883 = vunpack.c.h.b16 %v385
              %v884 = vunpack.c.l.b16 %v386
              %v885 = vunpack.c.l.b16 %v387
              %v886 = vunpack.c.h.b16 %v387
              %v887 = vunpack.c.l.b16 %v388
              %v888 = vunpack.c.h.b16 %v388
              %v889 = vunpack.c.l.b16 %v389
              %v890 = vunpack.c.l.b16 %v390
              %v891 = vunpack.c.h.b16 %v390
              %v892 = vunpack.c.l.b16 %v391
              %v893 = vunpack.c.h.b16 %v391
              %v894 = vunpack.c.l.b16 %v392
              %v895 = vunpack.c.l.b16 %v393
              %v896 = vunpack.c.h.b16 %v393
              %v897 = vunpack.c.l.b16 %v394
              %v898 = vunpack.c.h.b16 %v394
              %v899 = vunpack.c.l.b16 %v395
              %v900 = vunpack.c.l.b16 %v396
              %v901 = vunpack.c.h.b16 %v396
              %v902 = vunpack.c.l.b16 %v397
              %v903 = vunpack.c.h.b16 %v397
              %v904 = vunpack.c.l.b16 %v398
              %v905 = vunpack.c.l.b16 %v399
              %v906 = vunpack.c.h.b16 %v399
              %v907 = vunpack.c.l.b16 %v400
              %v908 = vunpack.c.h.b16 %v400
              %v909 = vunpack.c.l.b16 %v401
              %v910 = vpack.c.b16 %v835, %v830
              %v911 = vpack.c.b16 %v836, %v831
              %v912 = vpack.c.b16 %v837, %v832
              %v913 = vpack.c.b16 %v838, %v833
              %v914 = vpack.c.b16 %v839, %v834
              %v915 = vpack.c.b16 %v845, %v840
              %v916 = vpack.c.b16 %v846, %v841
              %v917 = vpack.c.b16 %v847, %v842
              %v918 = vpack.c.b16 %v848, %v843
              %v919 = vpack.c.b16 %v849, %v844
              %v920 = vpack.c.b16 %v855, %v850
              %v921 = vpack.c.b16 %v856, %v851
              %v922 = vpack.c.b16 %v857, %v852
              %v923 = vpack.c.b16 %v858, %v853
              %v924 = vpack.c.b16 %v859, %v854
              %v925 = vpack.c.b16 %v865, %v860
              %v926 = vpack.c.b16 %v866, %v861
              %v927 = vpack.c.b16 %v867, %v862
              %v928 = vpack.c.b16 %v868, %v863
              %v929 = vpack.c.b16 %v869, %v864
              %v930 = vpack.c.b16 %v875, %v870
              %v931 = vpack.c.b16 %v876, %v871
              %v932 = vpack.c.b16 %v877, %v872
              %v933 = vpack.c.b16 %v878, %v873
              %v934 = vpack.c.b16 %v879, %v874
              %v935 = vpack.c.b16 %v885, %v880
              %v936 = vpack.c.b16 %v886, %v881
              %v937 = vpack.c.b16 %v887, %v882
              %v938 = vpack.c.b16 %v888, %v883
              %v939 = vpack.c.b16 %v889, %v884
              %v940 = vpack.c.b16 %v895, %v890
              %v941 = vpack.c.b16 %v896, %v891
              %v942 = vpack.c.b16 %v897, %v892
              %v943 = vpack.c.b16 %v898, %v893
              %v944 = vpack.c.b16 %v899, %v894
              %v945 = vpack.c.b16 %v905, %v900
              %v946 = vpack.c.b16 %v906, %v901
              %v947 = vpack.c.b16 %v907, %v902
              %v948 = vpack.c.b16 %v908, %v903
              %v949 = vpack.c.b16 %v909, %v904
              %990 = vmatprep.subr.bf16.mxu0 %v946
              %991 = vmatpush1.bf16.msra.mxu0 %v945
              %992 = vmatprep.subr.bf16.mxu0 %v941
              %993 = vmatpush1.bf16.msra.mxu0 %v940
              %994 = vmatprep.subr.bf16.mxu0 %v936
              %995 = vmatpush1.bf16.msra.mxu0 %v935
              %996 = vmatprep.subr.bf16.mxu0 %v931
              %997 = vmatpush1.bf16.msra.mxu0 %v930
              %998 = vmatprep.subr.bf16.mxu0 %v926
              %999 = vmatpush1.bf16.msra.mxu0 %v925
              %1000 = vmatprep.subr.bf16.mxu0 %v921
              %1001 = vmatpush1.bf16.msra.mxu0 %v920
              %1002 = vmatprep.subr.bf16.mxu0 %v916
              %1003 = vmatpush1.bf16.msra.mxu0 %v915
              %1004 = vmatprep.subr.bf16.mxu0 %v911
              %1005 = vmatpush1.bf16.msra.mxu0 %v910
              %1006 = vmatprep.subr.bf16.mxu0 0
              %1007 = vmatpush2.bf16.msra.mxu0 0
              %1008 = vmatprep.subr.bf16.mxu0 0
              %1009 = vmatpush2.bf16.msra.mxu0 0
              %1010 = vmatprep.subr.bf16.mxu0 0
              %1011 = vmatpush2.bf16.msra.mxu0 0
              %1012 = vmatprep.subr.bf16.mxu0 0
              %1013 = vmatpush2.bf16.msra.mxu0 0
              %1014 = vmatprep.subr.bf16.mxu0 0
              %1015 = vmatpush2.bf16.msra.mxu0 0
              %1016 = vmatprep.subr.bf16.mxu0 0
              %1017 = vmatpush2.bf16.msra.mxu0 0
              %1018 = vmatprep.subr.bf16.mxu0 0
              %1019 = vmatpush2.bf16.msra.mxu0 0
              %1020 = vmatprep.subr.bf16.mxu0 0
              %1021 = vmatpush2.bf16.msra.mxu0 0
              %1022 = vmatprep.mubr.bf16.mxu0 0
              %1023 = vmatmul.mubr.bf16.gmra.mxu0 %v353
              %v1024 = vpop.f32.mrf.mxu0
              %v1025 = vadd.f32 %v695, %v1024
              %v1026 = vpop.f32.mrf.mxu0
              %v1027 = vadd.f32 %v697, %v1026
              %v1028 = vpop.f32.mrf.mxu0
              %v1029 = vpop.f32.mrf.mxu0
              %1030 = vdwg.mxu0
              %1031 = vmatprep.subr.bf16.mxu0 %v948
              %1032 = vmatpush1.bf16.msra.mxu0 %v947
              %1033 = vmatprep.subr.bf16.mxu0 %v943
              %1034 = vmatpush1.bf16.msra.mxu0 %v942
              %1035 = vmatprep.subr.bf16.mxu0 %v938
              %1036 = vmatpush1.bf16.msra.mxu0 %v937
              %1037 = vmatprep.subr.bf16.mxu0 %v933
              %1038 = vmatpush1.bf16.msra.mxu0 %v932
              %1039 = vmatprep.subr.bf16.mxu0 %v928
              %1040 = vmatpush1.bf16.msra.mxu0 %v927
              %1041 = vmatprep.subr.bf16.mxu0 %v923
              %1042 = vmatpush1.bf16.msra.mxu0 %v922
              %1043 = vmatprep.subr.bf16.mxu0 %v918
              %1044 = vmatpush1.bf16.msra.mxu0 %v917
              %1045 = vmatprep.subr.bf16.mxu0 %v913
              %1046 = vmatpush1.bf16.msra.mxu0 %v912
              %1047 = vmatprep.subr.bf16.mxu0 0
              %1048 = vmatpush2.bf16.msra.mxu0 0
              %1049 = vmatprep.subr.bf16.mxu0 0
              %1050 = vmatpush2.bf16.msra.mxu0 0
              %1051 = vmatprep.subr.bf16.mxu0 0
              %1052 = vmatpush2.bf16.msra.mxu0 0
              %1053 = vmatprep.subr.bf16.mxu0 0
              %1054 = vmatpush2.bf16.msra.mxu0 0
              %1055 = vmatprep.subr.bf16.mxu0 0
              %1056 = vmatpush2.bf16.msra.mxu0 0
              %1057 = vmatprep.subr.bf16.mxu0 0
              %1058 = vmatpush2.bf16.msra.mxu0 0
              %1059 = vmatprep.subr.bf16.mxu0 0
              %1060 = vmatpush2.bf16.msra.mxu0 0
              %1061 = vmatprep.subr.bf16.mxu0 0
              %1062 = vmatpush2.bf16.msra.mxu0 0
              %1063 = vmatprep.mubr.bf16.mxu0 0
              %1064 = vmatmul.mubr.bf16.gmra.mxu0 %v353
              %v1065 = vpop.f32.mrf.mxu0
              %v1066 = vadd.f32 %v736, %v1065
              %v1067 = vpop.f32.mrf.mxu0
              %v1068 = vadd.f32 %v738, %v1067
              %v1069 = vpop.f32.mrf.mxu0
              %v1070 = vpop.f32.mrf.mxu0
              %1071 = vdwg.mxu0
              %1072 = vmatprep.subr.bf16.mxu0 0
              %1073 = vmatpush1.bf16.msra.mxu0 %v949
              %1074 = vmatprep.subr.bf16.mxu0 0
              %1075 = vmatpush1.bf16.msra.mxu0 %v944
              %1076 = vmatprep.subr.bf16.mxu0 0
              %1077 = vmatpush1.bf16.msra.mxu0 %v939
              %1078 = vmatprep.subr.bf16.mxu0 0
              %1079 = vmatpush1.bf16.msra.mxu0 %v934
              %1080 = vmatprep.subr.bf16.mxu0 0
              %1081 = vmatpush1.bf16.msra.mxu0 %v929
              %1082 = vmatprep.subr.bf16.mxu0 0
              %1083 = vmatpush1.bf16.msra.mxu0 %v924
              %1084 = vmatprep.subr.bf16.mxu0 0
              %1085 = vmatpush1.bf16.msra.mxu0 %v919
              %1086 = vmatprep.subr.bf16.mxu0 0
              %1087 = vmatpush1.bf16.msra.mxu0 %v914
              %1088 = vmatprep.subr.bf16.mxu0 0
              %1089 = vmatpush2.bf16.msra.mxu0 0
              %1090 = vmatprep.subr.bf16.mxu0 0
              %1091 = vmatpush2.bf16.msra.mxu0 0
              %1092 = vmatprep.subr.bf16.mxu0 0
              %1093 = vmatpush2.bf16.msra.mxu0 0
              %1094 = vmatprep.subr.bf16.mxu0 0
              %1095 = vmatpush2.bf16.msra.mxu0 0
              %1096 = vmatprep.subr.bf16.mxu0 0
              %1097 = vmatpush2.bf16.msra.mxu0 0
              %1098 = vmatprep.subr.bf16.mxu0 0
              %1099 = vmatpush2.bf16.msra.mxu0 0
              %1100 = vmatprep.subr.bf16.mxu0 0
              %1101 = vmatpush2.bf16.msra.mxu0 0
              %1102 = vmatprep.subr.bf16.mxu0 0
              %1103 = vmatpush2.bf16.msra.mxu0 0
              %1104 = vmatprep.mubr.bf16.mxu0 0
              %1105 = vmatmul.mubr.bf16.gmra.mxu0 %v353
              %v1106 = vpop.f32.mrf.mxu0
              %v1107 = vadd.f32 %v777, %v1106
              %v1108 = vpop.f32.mrf.mxu0
              %v1109 = vpop.f32.mrf.mxu0
              %v1110 = vpop.f32.mrf.mxu0
              %1111 = vdwg.mxu0
              %v1112 = vadd.f32 %v1025, %v256
              %v1113 = vadd.f32 %v1027, %v260
              %v1114 = vadd.f32 %v1066, %v264
              %v1115 = vadd.f32 %v1068, %v268
              %v1116 = vadd.f32 %v1107, %v272
              %v1117 = vmul.f32 %v1112, 0.5
              %v1118 = vtanh.pop %v1117
              %v1119 = vadd.f32 %v1118, 1.0
              %v1120 = vmul.f32 %v1119, 0.5
              %v1121 = vmul.f32 %v1113, 0.5
              %v1122 = vtanh.pop %v1121
              %v1123 = vadd.f32 %v1122, 1.0
              %v1124 = vmul.f32 %v1123, 0.5
              %v1125 = vtanh.pop %v1114
              %v1126 = vmul.f32 %v1115, 0.5
              %v1127 = vtanh.pop %v1126
              %v1128 = vadd.f32 %v1127, 1.0
              %v1129 = vmul.f32 %v1128, 0.5
              %v1130 = vmul.f32 %v1116, 0.5
              %v1131 = vtanh.pop %v1130
              %v1132 = vadd.f32 %v1131, 1.0
              %v1133 = vmul.f32 %v1132, 0.5
              %v1134 = vmul.f32 %v1120, %v1125
              %v1135 = vmul.f32 %v1129, %v350
              %v1136 = vadd.f32 %v1134, %v1135
              %v1137 = vmul.f32 %v1133, %v352
              %v1138 = vadd.f32 %v1136, %v1137
              %v1139 = vtanh.pop %v1138
              %v1140 = vmul.f32 %v1124, %v1139
              %1141 = vst [vmem:[#allocation3] sm:$0xff] %v1140
              %1142 = vst [vmem:[#allocation3 + $0x8] sm:$0xff] %v1138
            $region74: #{_fenwick_forward_stream.1} parent=69 // pred_fallthru
              _
            %p1143 = scmp.gt.s32.totalorder %s337, 1
            // Predicated region
            $region75: #{_fenwick_forward_stream.1} parent=69 // pred_check
              %p1144 = pneg %p1143
            $region76: #{_fenwick_forward_stream.1} parent=69 // pred_check_branch
              %1146 = sbr.rel (%p1144) target = $region78
            $region77: #{_fenwick_forward_stream.1} parent=69 // pred_region
              %s1147 = scalar_lea.vmem [#allocation2], 16
              %v1148 = vld [vmem:[%s1147] sm:$0xff]
              %v1149 = vld [vmem:[%s1147 + $0x8] sm:$0xff]
              %v1150 = vld [vmem:[#allocation3] sm:$0xff]
              %v1151 = vld [vmem:[#allocation3 + $0x8] sm:$0xff]
              %v1152 = vpack.c.bf16 %v1148, %v1148
              %v1153 = vld [vmem:[%s0] sm:$0xff]
              %v1154 = vld [vmem:[%s0 + $0x8] sm:$0xff]
              %v1155 = vld [vmem:[%s0 + $0x10] sm:$0xf]
              %v1156 = vld [vmem:[%s0 + $0x14] sm:$0xff]
              %v1157 = vld [vmem:[%s0 + $0x1c] sm:$0xff]
              %v1158 = vld [vmem:[%s0 + $0x24] sm:$0xf]
              %v1159 = vld [vmem:[%s0 + $0x28] sm:$0xff]
              %v1160 = vld [vmem:[%s0 + $0x30] sm:$0xff]
              %v1161 = vld [vmem:[%s0 + $0x38] sm:$0xf]
              %v1162 = vld [vmem:[%s0 + $0x3c] sm:$0xff]
              %v1163 = vld [vmem:[%s0 + $0x44] sm:$0xff]
              %v1164 = vld [vmem:[%s0 + $0x4c] sm:$0xf]
              %v1165 = vld [vmem:[%s0 + $0x50] sm:$0xff]
              %v1166 = vld [vmem:[%s0 + $0x58] sm:$0xff]
              %v1167 = vld [vmem:[%s0 + $0x60] sm:$0xf]
              %v1168 = vld [vmem:[%s0 + $0x64] sm:$0xff]
              %v1169 = vld [vmem:[%s0 + $0x6c] sm:$0xff]
              %v1170 = vld [vmem:[%s0 + $0x74] sm:$0xf]
              %v1171 = vld [vmem:[%s0 + $0x78] sm:$0xff]
              %v1172 = vld [vmem:[%s0 + $0x80] sm:$0xff]
              %v1173 = vld [vmem:[%s0 + $0x88] sm:$0xf]
              %v1174 = vld [vmem:[%s0 + $0x8c] sm:$0xff]
              %v1175 = vld [vmem:[%s0 + $0x94] sm:$0xff]
              %v1176 = vld [vmem:[%s0 + $0x9c] sm:$0xf]
              %v1177 = vld [vmem:[%s0 + $0xa0] sm:$0xff]
              %v1178 = vld [vmem:[%s0 + $0xa8] sm:$0xff]
              %v1179 = vld [vmem:[%s0 + $0xb0] sm:$0xf]
              %v1180 = vld [vmem:[%s0 + $0xb4] sm:$0xff]
              %v1181 = vld [vmem:[%s0 + $0xbc] sm:$0xff]
              %v1182 = vld [vmem:[%s0 + $0xc4] sm:$0xf]
              %v1183 = vld [vmem:[%s0 + $0xc8] sm:$0xff]
              %v1184 = vld [vmem:[%s0 + $0xd0] sm:$0xff]
              %v1185 = vld [vmem:[%s0 + $0xd8] sm:$0xf]
              %v1186 = vld [vmem:[%s0 + $0xdc] sm:$0xff]
              %v1187 = vld [vmem:[%s0 + $0xe4] sm:$0xff]
              %v1188 = vld [vmem:[%s0 + $0xec] sm:$0xf]
              %v1189 = vld [vmem:[%s0 + $0xf0] sm:$0xff]
              %v1190 = vld [vmem:[%s0 + $0xf8] sm:$0xff]
              %v1191 = vld [vmem:[%s0 + $0x100] sm:$0xf]
              %v1192 = vld [vmem:[%s0 + $0x104] sm:$0xff]
              %v1193 = vld [vmem:[%s0 + $0x10c] sm:$0xff]
              %v1194 = vld [vmem:[%s0 + $0x114] sm:$0xf]
              %v1195 = vld [vmem:[%s0 + $0x118] sm:$0xff]
              %v1196 = vld [vmem:[%s0 + $0x120] sm:$0xff]
              %v1197 = vld [vmem:[%s0 + $0x128] sm:$0xf]
              %v1198 = vld [vmem:[%s0 + $0x12c] sm:$0xff]
              %v1199 = vld [vmem:[%s0 + $0x134] sm:$0xff]
              %v1200 = vld [vmem:[%s0 + $0x13c] sm:$0xf]
              %v1201 = vpack.c.bf16 %v1150, %v1150
              %s1202 = scalar_lea.vmem %s0, 320
              %v1203 = vld [vmem:[%s1202] sm:$0xff]
              %v1204 = vld [vmem:[%s1202 + $0x8] sm:$0xff]
              %v1205 = vld [vmem:[%s1202 + $0x10] sm:$0xf]
              %v1206 = vld [vmem:[%s1202 + $0x14] sm:$0xff]
              %v1207 = vld [vmem:[%s1202 + $0x1c] sm:$0xff]
              %v1208 = vld [vmem:[%s1202 + $0x24] sm:$0xf]
              %v1209 = vld [vmem:[%s1202 + $0x28] sm:$0xff]
              %v1210 = vld [vmem:[%s1202 + $0x30] sm:$0xff]
              %v1211 = vld [vmem:[%s1202 + $0x38] sm:$0xf]
              %v1212 = vld [vmem:[%s1202 + $0x3c] sm:$0xff]
              %v1213 = vld [vmem:[%s1202 + $0x44] sm:$0xff]
              %v1214 = vld [vmem:[%s1202 + $0x4c] sm:$0xf]
              %v1215 = vld [vmem:[%s1202 + $0x50] sm:$0xff]
              %v1216 = vld [vmem:[%s1202 + $0x58] sm:$0xff]
              %v1217 = vld [vmem:[%s1202 + $0x60] sm:$0xf]
              %v1218 = vld [vmem:[%s1202 + $0x64] sm:$0xff]
              %v1219 = vld [vmem:[%s1202 + $0x6c] sm:$0xff]
              %v1220 = vld [vmem:[%s1202 + $0x74] sm:$0xf]
              %v1221 = vld [vmem:[%s1202 + $0x78] sm:$0xff]
              %v1222 = vld [vmem:[%s1202 + $0x80] sm:$0xff]
              %v1223 = vld [vmem:[%s1202 + $0x88] sm:$0xf]
              %v1224 = vld [vmem:[%s1202 + $0x8c] sm:$0xff]
              %v1225 = vld [vmem:[%s1202 + $0x94] sm:$0xff]
              %v1226 = vld [vmem:[%s1202 + $0x9c] sm:$0xf]
              %v1227 = vld [vmem:[%s1202 + $0xa0] sm:$0xff]
              %v1228 = vld [vmem:[%s1202 + $0xa8] sm:$0xff]
              %v1229 = vld [vmem:[%s1202 + $0xb0] sm:$0xf]
              %v1230 = vld [vmem:[%s1202 + $0xb4] sm:$0xff]
              %v1231 = vld [vmem:[%s1202 + $0xbc] sm:$0xff]
              %v1232 = vld [vmem:[%s1202 + $0xc4] sm:$0xf]
              %v1233 = vld [vmem:[%s1202 + $0xc8] sm:$0xff]
              %v1234 = vld [vmem:[%s1202 + $0xd0] sm:$0xff]
              %v1235 = vld [vmem:[%s1202 + $0xd8] sm:$0xf]
              %v1236 = vld [vmem:[%s1202 + $0xdc] sm:$0xff]
              %v1237 = vld [vmem:[%s1202 + $0xe4] sm:$0xff]
              %v1238 = vld [vmem:[%s1202 + $0xec] sm:$0xf]
              %v1239 = vld [vmem:[%s1202 + $0xf0] sm:$0xff]
              %v1240 = vld [vmem:[%s1202 + $0xf8] sm:$0xff]
              %v1241 = vld [vmem:[%s1202 + $0x100] sm:$0xf]
              %v1242 = vld [vmem:[%s1202 + $0x104] sm:$0xff]
              %v1243 = vld [vmem:[%s1202 + $0x10c] sm:$0xff]
              %v1244 = vld [vmem:[%s1202 + $0x114] sm:$0xf]
              %v1245 = vld [vmem:[%s1202 + $0x118] sm:$0xff]
              %v1246 = vld [vmem:[%s1202 + $0x120] sm:$0xff]
              %v1247 = vld [vmem:[%s1202 + $0x128] sm:$0xf]
              %v1248 = vld [vmem:[%s1202 + $0x12c] sm:$0xff]
              %v1249 = vld [vmem:[%s1202 + $0x134] sm:$0xff]
              %v1250 = vld [vmem:[%s1202 + $0x13c] sm:$0xf]
              %v1299 = vunpack.c.l.b16 %v1203
              %v1300 = vunpack.c.h.b16 %v1203
              %v1301 = vunpack.c.l.b16 %v1204
              %v1302 = vunpack.c.h.b16 %v1204
              %v1303 = vunpack.c.l.b16 %v1205
              %v1304 = vunpack.c.l.b16 %v1206
              %v1305 = vunpack.c.h.b16 %v1206
              %v1306 = vunpack.c.l.b16 %v1207
              %v1307 = vunpack.c.h.b16 %v1207
              %v1308 = vunpack.c.l.b16 %v1208
              %v1309 = vunpack.c.l.b16 %v1209
              %v1310 = vunpack.c.h.b16 %v1209
              %v1311 = vunpack.c.l.b16 %v1210
              %v1312 = vunpack.c.h.b16 %v1210
              %v1313 = vunpack.c.l.b16 %v1211
              %v1314 = vunpack.c.l.b16 %v1212
              %v1315 = vunpack.c.h.b16 %v1212
              %v1316 = vunpack.c.l.b16 %v1213
              %v1317 = vunpack.c.h.b16 %v1213
              %v1318 = vunpack.c.l.b16 %v1214
              %v1319 = vunpack.c.l.b16 %v1215
              %v1320 = vunpack.c.h.b16 %v1215
              %v1321 = vunpack.c.l.b16 %v1216
              %v1322 = vunpack.c.h.b16 %v1216
              %v1323 = vunpack.c.l.b16 %v1217
              %v1324 = vunpack.c.l.b16 %v1218
              %v1325 = vunpack.c.h.b16 %v1218
              %v1326 = vunpack.c.l.b16 %v1219
              %v1327 = vunpack.c.h.b16 %v1219
              %v1328 = vunpack.c.l.b16 %v1220
              %v1329 = vunpack.c.l.b16 %v1221
              %v1330 = vunpack.c.h.b16 %v1221
              %v1331 = vunpack.c.l.b16 %v1222
              %v1332 = vunpack.c.h.b16 %v1222
              %v1333 = vunpack.c.l.b16 %v1223
              %v1334 = vunpack.c.l.b16 %v1224
              %v1335 = vunpack.c.h.b16 %v1224
              %v1336 = vunpack.c.l.b16 %v1225
              %v1337 = vunpack.c.h.b16 %v1225
              %v1338 = vunpack.c.l.b16 %v1226
              %v1339 = vunpack.c.l.b16 %v1227
              %v1340 = vunpack.c.h.b16 %v1227
              %v1341 = vunpack.c.l.b16 %v1228
              %v1342 = vunpack.c.h.b16 %v1228
              %v1343 = vunpack.c.l.b16 %v1229
              %v1344 = vunpack.c.l.b16 %v1230
              %v1345 = vunpack.c.h.b16 %v1230
              %v1346 = vunpack.c.l.b16 %v1231
              %v1347 = vunpack.c.h.b16 %v1231
              %v1348 = vunpack.c.l.b16 %v1232
              %v1349 = vunpack.c.l.b16 %v1233
              %v1350 = vunpack.c.h.b16 %v1233
              %v1351 = vunpack.c.l.b16 %v1234
              %v1352 = vunpack.c.h.b16 %v1234
              %v1353 = vunpack.c.l.b16 %v1235
              %v1354 = vunpack.c.l.b16 %v1236
              %v1355 = vunpack.c.h.b16 %v1236
              %v1356 = vunpack.c.l.b16 %v1237
              %v1357 = vunpack.c.h.b16 %v1237
              %v1358 = vunpack.c.l.b16 %v1238
              %v1359 = vunpack.c.l.b16 %v1239
              %v1360 = vunpack.c.h.b16 %v1239
              %v1361 = vunpack.c.l.b16 %v1240
              %v1362 = vunpack.c.h.b16 %v1240
              %v1363 = vunpack.c.l.b16 %v1241
              %v1364 = vunpack.c.l.b16 %v1242
              %v1365 = vunpack.c.h.b16 %v1242
              %v1366 = vunpack.c.l.b16 %v1243
              %v1367 = vunpack.c.h.b16 %v1243
              %v1368 = vunpack.c.l.b16 %v1244
              %v1369 = vunpack.c.l.b16 %v1245
              %v1370 = vunpack.c.h.b16 %v1245
              %v1371 = vunpack.c.l.b16 %v1246
              %v1372 = vunpack.c.h.b16 %v1246
              %v1373 = vunpack.c.l.b16 %v1247
              %v1374 = vunpack.c.l.b16 %v1248
              %v1375 = vunpack.c.h.b16 %v1248
              %v1376 = vunpack.c.l.b16 %v1249
              %v1377 = vunpack.c.h.b16 %v1249
              %v1378 = vunpack.c.l.b16 %v1250
              %v1379 = vpack.c.b16 %v1304, %v1299
              %v1380 = vpack.c.b16 %v1305, %v1300
              %v1381 = vpack.c.b16 %v1306, %v1301
              %v1382 = vpack.c.b16 %v1307, %v1302
              %v1383 = vpack.c.b16 %v1308, %v1303
              %v1384 = vpack.c.b16 %v1314, %v1309
              %v1385 = vpack.c.b16 %v1315, %v1310
              %v1386 = vpack.c.b16 %v1316, %v1311
              %v1387 = vpack.c.b16 %v1317, %v1312
              %v1388 = vpack.c.b16 %v1318, %v1313
              %v1389 = vpack.c.b16 %v1324, %v1319
              %v1390 = vpack.c.b16 %v1325, %v1320
              %v1391 = vpack.c.b16 %v1326, %v1321
              %v1392 = vpack.c.b16 %v1327, %v1322
              %v1393 = vpack.c.b16 %v1328, %v1323
              %v1394 = vpack.c.b16 %v1334, %v1329
              %v1395 = vpack.c.b16 %v1335, %v1330
              %v1396 = vpack.c.b16 %v1336, %v1331
              %v1397 = vpack.c.b16 %v1337, %v1332
              %v1398 = vpack.c.b16 %v1338, %v1333
              %v1399 = vpack.c.b16 %v1344, %v1339
              %v1400 = vpack.c.b16 %v1345, %v1340
              %v1401 = vpack.c.b16 %v1346, %v1341
              %v1402 = vpack.c.b16 %v1347, %v1342
              %v1403 = vpack.c.b16 %v1348, %v1343
              %v1404 = vpack.c.b16 %v1354, %v1349
              %v1405 = vpack.c.b16 %v1355, %v1350
              %v1406 = vpack.c.b16 %v1356, %v1351
              %v1407 = vpack.c.b16 %v1357, %v1352
              %v1408 = vpack.c.b16 %v1358, %v1353
              %v1409 = vpack.c.b16 %v1364, %v1359
              %v1410 = vpack.c.b16 %v1365, %v1360
              %v1411 = vpack.c.b16 %v1366, %v1361
              %v1412 = vpack.c.b16 %v1367, %v1362
              %v1413 = vpack.c.b16 %v1368, %v1363
              %v1414 = vpack.c.b16 %v1374, %v1369
              %v1415 = vpack.c.b16 %v1375, %v1370
              %v1416 = vpack.c.b16 %v1376, %v1371
              %v1417 = vpack.c.b16 %v1377, %v1372
              %v1418 = vpack.c.b16 %v1378, %v1373
              %1459 = vmatprep.subr.bf16.mxu0 %v1415
              %1460 = vmatpush1.bf16.msra.mxu0 %v1414
              %1461 = vmatprep.subr.bf16.mxu0 %v1410
              %1462 = vmatpush1.bf16.msra.mxu0 %v1409
              %1463 = vmatprep.subr.bf16.mxu0 %v1405
              %1464 = vmatpush1.bf16.msra.mxu0 %v1404
              %1465 = vmatprep.subr.bf16.mxu0 %v1400
              %1466 = vmatpush1.bf16.msra.mxu0 %v1399
              %1467 = vmatprep.subr.bf16.mxu0 %v1395
              %1468 = vmatpush1.bf16.msra.mxu0 %v1394
              %1469 = vmatprep.subr.bf16.mxu0 %v1390
              %1470 = vmatpush1.bf16.msra.mxu0 %v1389
              %1471 = vmatprep.subr.bf16.mxu0 %v1385
              %1472 = vmatpush1.bf16.msra.mxu0 %v1384
              %1473 = vmatprep.subr.bf16.mxu0 %v1380
              %1474 = vmatpush1.bf16.msra.mxu0 %v1379
              %1475 = vmatprep.subr.bf16.mxu0 0
              %1476 = vmatpush2.bf16.msra.mxu0 0
              %1477 = vmatprep.subr.bf16.mxu0 0
              %1478 = vmatpush2.bf16.msra.mxu0 0
              %1479 = vmatprep.subr.bf16.mxu0 0
              %1480 = vmatpush2.bf16.msra.mxu0 0
              %1481 = vmatprep.subr.bf16.mxu0 0
              %1482 = vmatpush2.bf16.msra.mxu0 0
              %1483 = vmatprep.subr.bf16.mxu0 0
              %1484 = vmatpush2.bf16.msra.mxu0 0
              %1485 = vmatprep.subr.bf16.mxu0 0
              %1486 = vmatpush2.bf16.msra.mxu0 0
              %1487 = vmatprep.subr.bf16.mxu0 0
              %1488 = vmatpush2.bf16.msra.mxu0 0
              %1489 = vmatprep.subr.bf16.mxu0 0
              %1490 = vmatpush2.bf16.msra.mxu0 0
              %1491 = vmatprep.mubr.bf16.mxu0 0
              %1492 = vmatmul.mubr.bf16.gmra.mxu0 %v1201
              %v1493 = vpop.f32.mrf.mxu0
              %v1494 = vadd.f32 0.0, %v1493
              %v1495 = vpop.f32.mrf.mxu0
              %v1496 = vadd.f32 0.0, %v1495
              %v1497 = vpop.f32.mrf.mxu0
              %v1498 = vpop.f32.mrf.mxu0
              %1499 = vdwg.mxu0
              %1500 = vmatprep.subr.bf16.mxu0 %v1417
              %1501 = vmatpush1.bf16.msra.mxu0 %v1416
              %1502 = vmatprep.subr.bf16.mxu0 %v1412
              %1503 = vmatpush1.bf16.msra.mxu0 %v1411
              %1504 = vmatprep.subr.bf16.mxu0 %v1407
              %1505 = vmatpush1.bf16.msra.mxu0 %v1406
              %1506 = vmatprep.subr.bf16.mxu0 %v1402
              %1507 = vmatpush1.bf16.msra.mxu0 %v1401
              %1508 = vmatprep.subr.bf16.mxu0 %v1397
              %1509 = vmatpush1.bf16.msra.mxu0 %v1396
              %1510 = vmatprep.subr.bf16.mxu0 %v1392
              %1511 = vmatpush1.bf16.msra.mxu0 %v1391
              %1512 = vmatprep.subr.bf16.mxu0 %v1387
              %1513 = vmatpush1.bf16.msra.mxu0 %v1386
              %1514 = vmatprep.subr.bf16.mxu0 %v1382
              %1515 = vmatpush1.bf16.msra.mxu0 %v1381
              %1516 = vmatprep.subr.bf16.mxu0 0
              %1517 = vmatpush2.bf16.msra.mxu0 0
              %1518 = vmatprep.subr.bf16.mxu0 0
              %1519 = vmatpush2.bf16.msra.mxu0 0
              %1520 = vmatprep.subr.bf16.mxu0 0
              %1521 = vmatpush2.bf16.msra.mxu0 0
              %1522 = vmatprep.subr.bf16.mxu0 0
              %1523 = vmatpush2.bf16.msra.mxu0 0
              %1524 = vmatprep.subr.bf16.mxu0 0
              %1525 = vmatpush2.bf16.msra.mxu0 0
              %1526 = vmatprep.subr.bf16.mxu0 0
              %1527 = vmatpush2.bf16.msra.mxu0 0
              %1528 = vmatprep.subr.bf16.mxu0 0
              %1529 = vmatpush2.bf16.msra.mxu0 0
              %1530 = vmatprep.subr.bf16.mxu0 0
              %1531 = vmatpush2.bf16.msra.mxu0 0
              %1532 = vmatprep.mubr.bf16.mxu0 0
              %1533 = vmatmul.mubr.bf16.gmra.mxu0 %v1201
              %v1534 = vpop.f32.mrf.mxu0
              %v1535 = vadd.f32 0.0, %v1534
              %v1536 = vpop.f32.mrf.mxu0
              %v1537 = vadd.f32 0.0, %v1536
              %v1538 = vpop.f32.mrf.mxu0
              %v1539 = vpop.f32.mrf.mxu0
              %1540 = vdwg.mxu0
              %1541 = vmatprep.subr.bf16.mxu0 0
              %1542 = vmatpush1.bf16.msra.mxu0 %v1418
              %1543 = vmatprep.subr.bf16.mxu0 0
              %1544 = vmatpush1.bf16.msra.mxu0 %v1413
              %1545 = vmatprep.subr.bf16.mxu0 0
              %1546 = vmatpush1.bf16.msra.mxu0 %v1408
              %1547 = vmatprep.subr.bf16.mxu0 0
              %1548 = vmatpush1.bf16.msra.mxu0 %v1403
              %1549 = vmatprep.subr.bf16.mxu0 0
              %1550 = vmatpush1.bf16.msra.mxu0 %v1398
              %1551 = vmatprep.subr.bf16.mxu0 0
              %1552 = vmatpush1.bf16.msra.mxu0 %v1393
              %1553 = vmatprep.subr.bf16.mxu0 0
              %1554 = vmatpush1.bf16.msra.mxu0 %v1388
              %1555 = vmatprep.subr.bf16.mxu0 0
              %1556 = vmatpush1.bf16.msra.mxu0 %v1383
              %1557 = vmatprep.subr.bf16.mxu0 0
              %1558 = vmatpush2.bf16.msra.mxu0 0
              %1559 = vmatprep.subr.bf16.mxu0 0
              %1560 = vmatpush2.bf16.msra.mxu0 0
              %1561 = vmatprep.subr.bf16.mxu0 0
              %1562 = vmatpush2.bf16.msra.mxu0 0
              %1563 = vmatprep.subr.bf16.mxu0 0
              %1564 = vmatpush2.bf16.msra.mxu0 0
              %1565 = vmatprep.subr.bf16.mxu0 0
              %1566 = vmatpush2.bf16.msra.mxu0 0
              %1567 = vmatprep.subr.bf16.mxu0 0
              %1568 = vmatpush2.bf16.msra.mxu0 0
              %1569 = vmatprep.subr.bf16.mxu0 0
              %1570 = vmatpush2.bf16.msra.mxu0 0
              %1571 = vmatprep.subr.bf16.mxu0 0
              %1572 = vmatpush2.bf16.msra.mxu0 0
              %1573 = vmatprep.mubr.bf16.mxu0 0
              %1574 = vmatmul.mubr.bf16.gmra.mxu0 %v1201
              %v1575 = vpop.f32.mrf.mxu0
              %v1576 = vadd.f32 0.0, %v1575
              %v1577 = vpop.f32.mrf.mxu0
              %v1578 = vpop.f32.mrf.mxu0
              %v1579 = vpop.f32.mrf.mxu0
              %1580 = vdwg.mxu0
              %v1629 = vunpack.c.l.b16 %v1153
              %v1630 = vunpack.c.h.b16 %v1153
              %v1631 = vunpack.c.l.b16 %v1154
              %v1632 = vunpack.c.h.b16 %v1154
              %v1633 = vunpack.c.l.b16 %v1155
              %v1634 = vunpack.c.l.b16 %v1156
              %v1635 = vunpack.c.h.b16 %v1156
              %v1636 = vunpack.c.l.b16 %v1157
              %v1637 = vunpack.c.h.b16 %v1157
              %v1638 = vunpack.c.l.b16 %v1158
              %v1639 = vunpack.c.l.b16 %v1159
              %v1640 = vunpack.c.h.b16 %v1159
              %v1641 = vunpack.c.l.b16 %v1160
              %v1642 = vunpack.c.h.b16 %v1160
              %v1643 = vunpack.c.l.b16 %v1161
              %v1644 = vunpack.c.l.b16 %v1162
              %v1645 = vunpack.c.h.b16 %v1162
              %v1646 = vunpack.c.l.b16 %v1163
              %v1647 = vunpack.c.h.b16 %v1163
              %v1648 = vunpack.c.l.b16 %v1164
              %v1649 = vunpack.c.l.b16 %v1165
              %v1650 = vunpack.c.h.b16 %v1165
              %v1651 = vunpack.c.l.b16 %v1166
              %v1652 = vunpack.c.h.b16 %v1166
              %v1653 = vunpack.c.l.b16 %v1167
              %v1654 = vunpack.c.l.b16 %v1168
              %v1655 = vunpack.c.h.b16 %v1168
              %v1656 = vunpack.c.l.b16 %v1169
              %v1657 = vunpack.c.h.b16 %v1169
              %v1658 = vunpack.c.l.b16 %v1170
              %v1659 = vunpack.c.l.b16 %v1171
              %v1660 = vunpack.c.h.b16 %v1171
              %v1661 = vunpack.c.l.b16 %v1172
              %v1662 = vunpack.c.h.b16 %v1172
              %v1663 = vunpack.c.l.b16 %v1173
              %v1664 = vunpack.c.l.b16 %v1174
              %v1665 = vunpack.c.h.b16 %v1174
              %v1666 = vunpack.c.l.b16 %v1175
              %v1667 = vunpack.c.h.b16 %v1175
              %v1668 = vunpack.c.l.b16 %v1176
              %v1669 = vunpack.c.l.b16 %v1177
              %v1670 = vunpack.c.h.b16 %v1177
              %v1671 = vunpack.c.l.b16 %v1178
              %v1672 = vunpack.c.h.b16 %v1178
              %v1673 = vunpack.c.l.b16 %v1179
              %v1674 = vunpack.c.l.b16 %v1180
              %v1675 = vunpack.c.h.b16 %v1180
              %v1676 = vunpack.c.l.b16 %v1181
              %v1677 = vunpack.c.h.b16 %v1181
              %v1678 = vunpack.c.l.b16 %v1182
              %v1679 = vunpack.c.l.b16 %v1183
              %v1680 = vunpack.c.h.b16 %v1183
              %v1681 = vunpack.c.l.b16 %v1184
              %v1682 = vunpack.c.h.b16 %v1184
              %v1683 = vunpack.c.l.b16 %v1185
              %v1684 = vunpack.c.l.b16 %v1186
              %v1685 = vunpack.c.h.b16 %v1186
              %v1686 = vunpack.c.l.b16 %v1187
              %v1687 = vunpack.c.h.b16 %v1187
              %v1688 = vunpack.c.l.b16 %v1188
              %v1689 = vunpack.c.l.b16 %v1189
              %v1690 = vunpack.c.h.b16 %v1189
              %v1691 = vunpack.c.l.b16 %v1190
              %v1692 = vunpack.c.h.b16 %v1190
              %v1693 = vunpack.c.l.b16 %v1191
              %v1694 = vunpack.c.l.b16 %v1192
              %v1695 = vunpack.c.h.b16 %v1192
              %v1696 = vunpack.c.l.b16 %v1193
              %v1697 = vunpack.c.h.b16 %v1193
              %v1698 = vunpack.c.l.b16 %v1194
              %v1699 = vunpack.c.l.b16 %v1195
              %v1700 = vunpack.c.h.b16 %v1195
              %v1701 = vunpack.c.l.b16 %v1196
              %v1702 = vunpack.c.h.b16 %v1196
              %v1703 = vunpack.c.l.b16 %v1197
              %v1704 = vunpack.c.l.b16 %v1198
              %v1705 = vunpack.c.h.b16 %v1198
              %v1706 = vunpack.c.l.b16 %v1199
              %v1707 = vunpack.c.h.b16 %v1199
              %v1708 = vunpack.c.l.b16 %v1200
              %v1709 = vpack.c.b16 %v1634, %v1629
              %v1710 = vpack.c.b16 %v1635, %v1630
              %v1711 = vpack.c.b16 %v1636, %v1631
              %v1712 = vpack.c.b16 %v1637, %v1632
              %v1713 = vpack.c.b16 %v1638, %v1633
              %v1714 = vpack.c.b16 %v1644, %v1639
              %v1715 = vpack.c.b16 %v1645, %v1640
              %v1716 = vpack.c.b16 %v1646, %v1641
              %v1717 = vpack.c.b16 %v1647, %v1642
              %v1718 = vpack.c.b16 %v1648, %v1643
              %v1719 = vpack.c.b16 %v1654, %v1649
              %v1720 = vpack.c.b16 %v1655, %v1650
              %v1721 = vpack.c.b16 %v1656, %v1651
              %v1722 = vpack.c.b16 %v1657, %v1652
              %v1723 = vpack.c.b16 %v1658, %v1653
              %v1724 = vpack.c.b16 %v1664, %v1659
              %v1725 = vpack.c.b16 %v1665, %v1660
              %v1726 = vpack.c.b16 %v1666, %v1661
              %v1727 = vpack.c.b16 %v1667, %v1662
              %v1728 = vpack.c.b16 %v1668, %v1663
              %v1729 = vpack.c.b16 %v1674, %v1669
              %v1730 = vpack.c.b16 %v1675, %v1670
              %v1731 = vpack.c.b16 %v1676, %v1671
              %v1732 = vpack.c.b16 %v1677, %v1672
              %v1733 = vpack.c.b16 %v1678, %v1673
              %v1734 = vpack.c.b16 %v1684, %v1679
              %v1735 = vpack.c.b16 %v1685, %v1680
              %v1736 = vpack.c.b16 %v1686, %v1681
              %v1737 = vpack.c.b16 %v1687, %v1682
              %v1738 = vpack.c.b16 %v1688, %v1683
              %v1739 = vpack.c.b16 %v1694, %v1689
              %v1740 = vpack.c.b16 %v1695, %v1690
              %v1741 = vpack.c.b16 %v1696, %v1691
              %v1742 = vpack.c.b16 %v1697, %v1692
              %v1743 = vpack.c.b16 %v1698, %v1693
              %v1744 = vpack.c.b16 %v1704, %v1699
              %v1745 = vpack.c.b16 %v1705, %v1700
              %v1746 = vpack.c.b16 %v1706, %v1701
              %v1747 = vpack.c.b16 %v1707, %v1702
              %v1748 = vpack.c.b16 %v1708, %v1703
              %1789 = vmatprep.subr.bf16.mxu0 %v1745
              %1790 = vmatpush1.bf16.msra.mxu0 %v1744
              %1791 = vmatprep.subr.bf16.mxu0 %v1740
              %1792 = vmatpush1.bf16.msra.mxu0 %v1739
              %1793 = vmatprep.subr.bf16.mxu0 %v1735
              %1794 = vmatpush1.bf16.msra.mxu0 %v1734
              %1795 = vmatprep.subr.bf16.mxu0 %v1730
              %1796 = vmatpush1.bf16.msra.mxu0 %v1729
              %1797 = vmatprep.subr.bf16.mxu0 %v1725
              %1798 = vmatpush1.bf16.msra.mxu0 %v1724
              %1799 = vmatprep.subr.bf16.mxu0 %v1720
              %1800 = vmatpush1.bf16.msra.mxu0 %v1719
              %1801 = vmatprep.subr.bf16.mxu0 %v1715
              %1802 = vmatpush1.bf16.msra.mxu0 %v1714
              %1803 = vmatprep.subr.bf16.mxu0 %v1710
              %1804 = vmatpush1.bf16.msra.mxu0 %v1709
              %1805 = vmatprep.subr.bf16.mxu0 0
              %1806 = vmatpush2.bf16.msra.mxu0 0
              %1807 = vmatprep.subr.bf16.mxu0 0
              %1808 = vmatpush2.bf16.msra.mxu0 0
              %1809 = vmatprep.subr.bf16.mxu0 0
              %1810 = vmatpush2.bf16.msra.mxu0 0
              %1811 = vmatprep.subr.bf16.mxu0 0
              %1812 = vmatpush2.bf16.msra.mxu0 0
              %1813 = vmatprep.subr.bf16.mxu0 0
              %1814 = vmatpush2.bf16.msra.mxu0 0
              %1815 = vmatprep.subr.bf16.mxu0 0
              %1816 = vmatpush2.bf16.msra.mxu0 0
              %1817 = vmatprep.subr.bf16.mxu0 0
              %1818 = vmatpush2.bf16.msra.mxu0 0
              %1819 = vmatprep.subr.bf16.mxu0 0
              %1820 = vmatpush2.bf16.msra.mxu0 0
              %1821 = vmatprep.mubr.bf16.mxu0 0
              %1822 = vmatmul.mubr.bf16.gmra.mxu0 %v1152
              %v1823 = vpop.f32.mrf.mxu0
              %v1824 = vadd.f32 %v1494, %v1823
              %v1825 = vpop.f32.mrf.mxu0
              %v1826 = vadd.f32 %v1496, %v1825
              %v1827 = vpop.f32.mrf.mxu0
              %v1828 = vpop.f32.mrf.mxu0
              %1829 = vdwg.mxu0
              %1830 = vmatprep.subr.bf16.mxu0 %v1747
              %1831 = vmatpush1.bf16.msra.mxu0 %v1746
              %1832 = vmatprep.subr.bf16.mxu0 %v1742
              %1833 = vmatpush1.bf16.msra.mxu0 %v1741
              %1834 = vmatprep.subr.bf16.mxu0 %v1737
              %1835 = vmatpush1.bf16.msra.mxu0 %v1736
              %1836 = vmatprep.subr.bf16.mxu0 %v1732
              %1837 = vmatpush1.bf16.msra.mxu0 %v1731
              %1838 = vmatprep.subr.bf16.mxu0 %v1727
              %1839 = vmatpush1.bf16.msra.mxu0 %v1726
              %1840 = vmatprep.subr.bf16.mxu0 %v1722
              %1841 = vmatpush1.bf16.msra.mxu0 %v1721
              %1842 = vmatprep.subr.bf16.mxu0 %v1717
              %1843 = vmatpush1.bf16.msra.mxu0 %v1716
              %1844 = vmatprep.subr.bf16.mxu0 %v1712
              %1845 = vmatpush1.bf16.msra.mxu0 %v1711
              %1846 = vmatprep.subr.bf16.mxu0 0
              %1847 = vmatpush2.bf16.msra.mxu0 0
              %1848 = vmatprep.subr.bf16.mxu0 0
              %1849 = vmatpush2.bf16.msra.mxu0 0
              %1850 = vmatprep.subr.bf16.mxu0 0
              %1851 = vmatpush2.bf16.msra.mxu0 0
              %1852 = vmatprep.subr.bf16.mxu0 0
              %1853 = vmatpush2.bf16.msra.mxu0 0
              %1854 = vmatprep.subr.bf16.mxu0 0
              %1855 = vmatpush2.bf16.msra.mxu0 0
              %1856 = vmatprep.subr.bf16.mxu0 0
              %1857 = vmatpush2.bf16.msra.mxu0 0
              %1858 = vmatprep.subr.bf16.mxu0 0
              %1859 = vmatpush2.bf16.msra.mxu0 0
              %1860 = vmatprep.subr.bf16.mxu0 0
              %1861 = vmatpush2.bf16.msra.mxu0 0
              %1862 = vmatprep.mubr.bf16.mxu0 0
              %1863 = vmatmul.mubr.bf16.gmra.mxu0 %v1152
              %v1864 = vpop.f32.mrf.mxu0
              %v1865 = vadd.f32 %v1535, %v1864
              %v1866 = vpop.f32.mrf.mxu0
              %v1867 = vadd.f32 %v1537, %v1866
              %v1868 = vpop.f32.mrf.mxu0
              %v1869 = vpop.f32.mrf.mxu0
              %1870 = vdwg.mxu0
              %1871 = vmatprep.subr.bf16.mxu0 0
              %1872 = vmatpush1.bf16.msra.mxu0 %v1748
              %1873 = vmatprep.subr.bf16.mxu0 0
              %1874 = vmatpush1.bf16.msra.mxu0 %v1743
              %1875 = vmatprep.subr.bf16.mxu0 0
              %1876 = vmatpush1.bf16.msra.mxu0 %v1738
              %1877 = vmatprep.subr.bf16.mxu0 0
              %1878 = vmatpush1.bf16.msra.mxu0 %v1733
              %1879 = vmatprep.subr.bf16.mxu0 0
              %1880 = vmatpush1.bf16.msra.mxu0 %v1728
              %1881 = vmatprep.subr.bf16.mxu0 0
              %1882 = vmatpush1.bf16.msra.mxu0 %v1723
              %1883 = vmatprep.subr.bf16.mxu0 0
              %1884 = vmatpush1.bf16.msra.mxu0 %v1718
              %1885 = vmatprep.subr.bf16.mxu0 0
              %1886 = vmatpush1.bf16.msra.mxu0 %v1713
              %1887 = vmatprep.subr.bf16.mxu0 0
              %1888 = vmatpush2.bf16.msra.mxu0 0
              %1889 = vmatprep.subr.bf16.mxu0 0
              %1890 = vmatpush2.bf16.msra.mxu0 0
              %1891 = vmatprep.subr.bf16.mxu0 0
              %1892 = vmatpush2.bf16.msra.mxu0 0
              %1893 = vmatprep.subr.bf16.mxu0 0
              %1894 = vmatpush2.bf16.msra.mxu0 0
              %1895 = vmatprep.subr.bf16.mxu0 0
              %1896 = vmatpush2.bf16.msra.mxu0 0
              %1897 = vmatprep.subr.bf16.mxu0 0
              %1898 = vmatpush2.bf16.msra.mxu0 0
              %1899 = vmatprep.subr.bf16.mxu0 0
              %1900 = vmatpush2.bf16.msra.mxu0 0
              %1901 = vmatprep.subr.bf16.mxu0 0
              %1902 = vmatpush2.bf16.msra.mxu0 0
              %1903 = vmatprep.mubr.bf16.mxu0 0
              %1904 = vmatmul.mubr.bf16.gmra.mxu0 %v1152
              %v1905 = vpop.f32.mrf.mxu0
              %v1906 = vadd.f32 %v1576, %v1905
              %v1907 = vpop.f32.mrf.mxu0
              %v1908 = vpop.f32.mrf.mxu0
              %v1909 = vpop.f32.mrf.mxu0
              %1910 = vdwg.mxu0
              %v1911 = vadd.f32 %v1824, %v256
              %v1912 = vadd.f32 %v1826, %v260
              %v1913 = vadd.f32 %v1865, %v264
              %v1914 = vadd.f32 %v1867, %v268
              %v1915 = vadd.f32 %v1906, %v272
              %v1916 = vmul.f32 %v1911, 0.5
              %v1917 = vtanh.pop %v1916
              %v1918 = vadd.f32 %v1917, 1.0
              %v1919 = vmul.f32 %v1918, 0.5
              %v1920 = vmul.f32 %v1912, 0.5
              %v1921 = vtanh.pop %v1920
              %v1922 = vadd.f32 %v1921, 1.0
              %v1923 = vmul.f32 %v1922, 0.5
              %v1924 = vtanh.pop %v1913
              %v1925 = vmul.f32 %v1914, 0.5
              %v1926 = vtanh.pop %v1925
              %v1927 = vadd.f32 %v1926, 1.0
              %v1928 = vmul.f32 %v1927, 0.5
              %v1929 = vmul.f32 %v1915, 0.5
              %v1930 = vtanh.pop %v1929
              %v1931 = vadd.f32 %v1930, 1.0
              %v1932 = vmul.f32 %v1931, 0.5
              %v1933 = vmul.f32 %v1919, %v1924
              %v1934 = vmul.f32 %v1928, %v1149
              %v1935 = vadd.f32 %v1933, %v1934
              %v1936 = vmul.f32 %v1932, %v1151
              %v1937 = vadd.f32 %v1935, %v1936
              %v1938 = vtanh.pop %v1937
              %v1939 = vmul.f32 %v1923, %v1938
              %1940 = vst [vmem:[#allocation3] sm:$0xff] %v1939
              %1941 = vst [vmem:[#allocation3 + $0x8] sm:$0xff] %v1937
            $region78: #{_fenwick_forward_stream.1} parent=69 // pred_fallthru
              _
            %p1942 = scmp.gt.s32.totalorder %s337, 2
            // Predicated region
            $region79: #{_fenwick_forward_stream.1} parent=69 // pred_check
              %p1943 = pneg %p1942
            $region80: #{_fenwick_forward_stream.1} parent=69 // pred_check_branch
              %1945 = sbr.rel (%p1943) target = $region82
            $region81: #{_fenwick_forward_stream.1} parent=69 // pred_region
              %s1946 = scalar_lea.vmem [#allocation2], 32
              %v1947 = vld [vmem:[%s1946] sm:$0xff]
              %v1948 = vld [vmem:[%s1946 + $0x8] sm:$0xff]
              %v1949 = vld [vmem:[#allocation3] sm:$0xff]
              %v1950 = vld [vmem:[#allocation3 + $0x8] sm:$0xff]
              %v1951 = vpack.c.bf16 %v1947, %v1947
              %v1952 = vld [vmem:[%s0] sm:$0xff]
              %v1953 = vld [vmem:[%s0 + $0x8] sm:$0xff]
              %v1954 = vld [vmem:[%s0 + $0x10] sm:$0xf]
              %v1955 = vld [vmem:[%s0 + $0x14] sm:$0xff]
              %v1956 = vld [vmem:[%s0 + $0x1c] sm:$0xff]
              %v1957 = vld [vmem:[%s0 + $0x24] sm:$0xf]
              %v1958 = vld [vmem:[%s0 + $0x28] sm:$0xff]
              %v1959 = vld [vmem:[%s0 + $0x30] sm:$0xff]
              %v1960 = vld [vmem:[%s0 + $0x38] sm:$0xf]
              %v1961 = vld [vmem:[%s0 + $0x3c] sm:$0xff]
              %v1962 = vld [vmem:[%s0 + $0x44] sm:$0xff]
              %v1963 = vld [vmem:[%s0 + $0x4c] sm:$0xf]
              %v1964 = vld [vmem:[%s0 + $0x50] sm:$0xff]
              %v1965 = vld [vmem:[%s0 + $0x58] sm:$0xff]
              %v1966 = vld [vmem:[%s0 + $0x60] sm:$0xf]
              %v1967 = vld [vmem:[%s0 + $0x64] sm:$0xff]
              %v1968 = vld [vmem:[%s0 + $0x6c] sm:$0xff]
              %v1969 = vld [vmem:[%s0 + $0x74] sm:$0xf]
              %v1970 = vld [vmem:[%s0 + $0x78] sm:$0xff]
              %v1971 = vld [vmem:[%s0 + $0x80] sm:$0xff]
              %v1972 = vld [vmem:[%s0 + $0x88] sm:$0xf]
              %v1973 = vld [vmem:[%s0 + $0x8c] sm:$0xff]
              %v1974 = vld [vmem:[%s0 + $0x94] sm:$0xff]
              %v1975 = vld [vmem:[%s0 + $0x9c] sm:$0xf]
              %v1976 = vld [vmem:[%s0 + $0xa0] sm:$0xff]
              %v1977 = vld [vmem:[%s0 + $0xa8] sm:$0xff]
              %v1978 = vld [vmem:[%s0 + $0xb0] sm:$0xf]
              %v1979 = vld [vmem:[%s0 + $0xb4] sm:$0xff]
              %v1980 = vld [vmem:[%s0 + $0xbc] sm:$0xff]
              %v1981 = vld [vmem:[%s0 + $0xc4] sm:$0xf]
              %v1982 = vld [vmem:[%s0 + $0xc8] sm:$0xff]
              %v1983 = vld [vmem:[%s0 + $0xd0] sm:$0xff]
              %v1984 = vld [vmem:[%s0 + $0xd8] sm:$0xf]
              %v1985 = vld [vmem:[%s0 + $0xdc] sm:$0xff]
              %v1986 = vld [vmem:[%s0 + $0xe4] sm:$0xff]
              %v1987 = vld [vmem:[%s0 + $0xec] sm:$0xf]
              %v1988 = vld [vmem:[%s0 + $0xf0] sm:$0xff]
              %v1989 = vld [vmem:[%s0 + $0xf8] sm:$0xff]
              %v1990 = vld [vmem:[%s0 + $0x100] sm:$0xf]
              %v1991 = vld [vmem:[%s0 + $0x104] sm:$0xff]
              %v1992 = vld [vmem:[%s0 + $0x10c] sm:$0xff]
              %v1993 = vld [vmem:[%s0 + $0x114] sm:$0xf]
              %v1994 = vld [vmem:[%s0 + $0x118] sm:$0xff]
              %v1995 = vld [vmem:[%s0 + $0x120] sm:$0xff]
              %v1996 = vld [vmem:[%s0 + $0x128] sm:$0xf]
              %v1997 = vld [vmem:[%s0 + $0x12c] sm:$0xff]
              %v1998 = vld [vmem:[%s0 + $0x134] sm:$0xff]
              %v1999 = vld [vmem:[%s0 + $0x13c] sm:$0xf]
              %v2000 = vpack.c.bf16 %v1949, %v1949
              %s2001 = scalar_lea.vmem %s0, 320
              %v2002 = vld [vmem:[%s2001] sm:$0xff]
              %v2003 = vld [vmem:[%s2001 + $0x8] sm:$0xff]
              %v2004 = vld [vmem:[%s2001 + $0x10] sm:$0xf]
              %v2005 = vld [vmem:[%s2001 + $0x14] sm:$0xff]
              %v2006 = vld [vmem:[%s2001 + $0x1c] sm:$0xff]
              %v2007 = vld [vmem:[%s2001 + $0x24] sm:$0xf]
              %v2008 = vld [vmem:[%s2001 + $0x28] sm:$0xff]
              %v2009 = vld [vmem:[%s2001 + $0x30] sm:$0xff]
              %v2010 = vld [vmem:[%s2001 + $0x38] sm:$0xf]
              %v2011 = vld [vmem:[%s2001 + $0x3c] sm:$0xff]
              %v2012 = vld [vmem:[%s2001 + $0x44] sm:$0xff]
              %v2013 = vld [vmem:[%s2001 + $0x4c] sm:$0xf]
              %v2014 = vld [vmem:[%s2001 + $0x50] sm:$0xff]
              %v2015 = vld [vmem:[%s2001 + $0x58] sm:$0xff]
              %v2016 = vld [vmem:[%s2001 + $0x60] sm:$0xf]
              %v2017 = vld [vmem:[%s2001 + $0x64] sm:$0xff]
              %v2018 = vld [vmem:[%s2001 + $0x6c] sm:$0xff]
              %v2019 = vld [vmem:[%s2001 + $0x74] sm:$0xf]
              %v2020 = vld [vmem:[%s2001 + $0x78] sm:$0xff]
              %v2021 = vld [vmem:[%s2001 + $0x80] sm:$0xff]
              %v2022 = vld [vmem:[%s2001 + $0x88] sm:$0xf]
              %v2023 = vld [vmem:[%s2001 + $0x8c] sm:$0xff]
              %v2024 = vld [vmem:[%s2001 + $0x94] sm:$0xff]
              %v2025 = vld [vmem:[%s2001 + $0x9c] sm:$0xf]
              %v2026 = vld [vmem:[%s2001 + $0xa0] sm:$0xff]
              %v2027 = vld [vmem:[%s2001 + $0xa8] sm:$0xff]
              %v2028 = vld [vmem:[%s2001 + $0xb0] sm:$0xf]
              %v2029 = vld [vmem:[%s2001 + $0xb4] sm:$0xff]
              %v2030 = vld [vmem:[%s2001 + $0xbc] sm:$0xff]
              %v2031 = vld [vmem:[%s2001 + $0xc4] sm:$0xf]
              %v2032 = vld [vmem:[%s2001 + $0xc8] sm:$0xff]
              %v2033 = vld [vmem:[%s2001 + $0xd0] sm:$0xff]
              %v2034 = vld [vmem:[%s2001 + $0xd8] sm:$0xf]
              %v2035 = vld [vmem:[%s2001 + $0xdc] sm:$0xff]
              %v2036 = vld [vmem:[%s2001 + $0xe4] sm:$0xff]
              %v2037 = vld [vmem:[%s2001 + $0xec] sm:$0xf]
              %v2038 = vld [vmem:[%s2001 + $0xf0] sm:$0xff]
              %v2039 = vld [vmem:[%s2001 + $0xf8] sm:$0xff]
              %v2040 = vld [vmem:[%s2001 + $0x100] sm:$0xf]
              %v2041 = vld [vmem:[%s2001 + $0x104] sm:$0xff]
              %v2042 = vld [vmem:[%s2001 + $0x10c] sm:$0xff]
              %v2043 = vld [vmem:[%s2001 + $0x114] sm:$0xf]
              %v2044 = vld [vmem:[%s2001 + $0x118] sm:$0xff]
              %v2045 = vld [vmem:[%s2001 + $0x120] sm:$0xff]
              %v2046 = vld [vmem:[%s2001 + $0x128] sm:$0xf]
              %v2047 = vld [vmem:[%s2001 + $0x12c] sm:$0xff]
              %v2048 = vld [vmem:[%s2001 + $0x134] sm:$0xff]
              %v2049 = vld [vmem:[%s2001 + $0x13c] sm:$0xf]
              %v2098 = vunpack.c.l.b16 %v2002
              %v2099 = vunpack.c.h.b16 %v2002
              %v2100 = vunpack.c.l.b16 %v2003
              %v2101 = vunpack.c.h.b16 %v2003
              %v2102 = vunpack.c.l.b16 %v2004
              %v2103 = vunpack.c.l.b16 %v2005
              %v2104 = vunpack.c.h.b16 %v2005
              %v2105 = vunpack.c.l.b16 %v2006
              %v2106 = vunpack.c.h.b16 %v2006
              %v2107 = vunpack.c.l.b16 %v2007
              %v2108 = vunpack.c.l.b16 %v2008
              %v2109 = vunpack.c.h.b16 %v2008
              %v2110 = vunpack.c.l.b16 %v2009
              %v2111 = vunpack.c.h.b16 %v2009
              %v2112 = vunpack.c.l.b16 %v2010
              %v2113 = vunpack.c.l.b16 %v2011
              %v2114 = vunpack.c.h.b16 %v2011
              %v2115 = vunpack.c.l.b16 %v2012
              %v2116 = vunpack.c.h.b16 %v2012
              %v2117 = vunpack.c.l.b16 %v2013
              %v2118 = vunpack.c.l.b16 %v2014
              %v2119 = vunpack.c.h.b16 %v2014
              %v2120 = vunpack.c.l.b16 %v2015
              %v2121 = vunpack.c.h.b16 %v2015
              %v2122 = vunpack.c.l.b16 %v2016
              %v2123 = vunpack.c.l.b16 %v2017
              %v2124 = vunpack.c.h.b16 %v2017
              %v2125 = vunpack.c.l.b16 %v2018
              %v2126 = vunpack.c.h.b16 %v2018
              %v2127 = vunpack.c.l.b16 %v2019
              %v2128 = vunpack.c.l.b16 %v2020
              %v2129 = vunpack.c.h.b16 %v2020
              %v2130 = vunpack.c.l.b16 %v2021
              %v2131 = vunpack.c.h.b16 %v2021
              %v2132 = vunpack.c.l.b16 %v2022
              %v2133 = vunpack.c.l.b16 %v2023
              %v2134 = vunpack.c.h.b16 %v2023
              %v2135 = vunpack.c.l.b16 %v2024
              %v2136 = vunpack.c.h.b16 %v2024
              %v2137 = vunpack.c.l.b16 %v2025
              %v2138 = vunpack.c.l.b16 %v2026
              %v2139 = vunpack.c.h.b16 %v2026
              %v2140 = vunpack.c.l.b16 %v2027
              %v2141 = vunpack.c.h.b16 %v2027
              %v2142 = vunpack.c.l.b16 %v2028
              %v2143 = vunpack.c.l.b16 %v2029
              %v2144 = vunpack.c.h.b16 %v2029
              %v2145 = vunpack.c.l.b16 %v2030
              %v2146 = vunpack.c.h.b16 %v2030
              %v2147 = vunpack.c.l.b16 %v2031
              %v2148 = vunpack.c.l.b16 %v2032
              %v2149 = vunpack.c.h.b16 %v2032
              %v2150 = vunpack.c.l.b16 %v2033
              %v2151 = vunpack.c.h.b16 %v2033
              %v2152 = vunpack.c.l.b16 %v2034
              %v2153 = vunpack.c.l.b16 %v2035
              %v2154 = vunpack.c.h.b16 %v2035
              %v2155 = vunpack.c.l.b16 %v2036
              %v2156 = vunpack.c.h.b16 %v2036
              %v2157 = vunpack.c.l.b16 %v2037
              %v2158 = vunpack.c.l.b16 %v2038
              %v2159 = vunpack.c.h.b16 %v2038
              %v2160 = vunpack.c.l.b16 %v2039
              %v2161 = vunpack.c.h.b16 %v2039
              %v2162 = vunpack.c.l.b16 %v2040
              %v2163 = vunpack.c.l.b16 %v2041
              %v2164 = vunpack.c.h.b16 %v2041
              %v2165 = vunpack.c.l.b16 %v2042
              %v2166 = vunpack.c.h.b16 %v2042
              %v2167 = vunpack.c.l.b16 %v2043
              %v2168 = vunpack.c.l.b16 %v2044
              %v2169 = vunpack.c.h.b16 %v2044
              %v2170 = vunpack.c.l.b16 %v2045
              %v2171 = vunpack.c.h.b16 %v2045
              %v2172 = vunpack.c.l.b16 %v2046
              %v2173 = vunpack.c.l.b16 %v2047
              %v2174 = vunpack.c.h.b16 %v2047
              %v2175 = vunpack.c.l.b16 %v2048
              %v2176 = vunpack.c.h.b16 %v2048
              %v2177 = vunpack.c.l.b16 %v2049
              %v2178 = vpack.c.b16 %v2103, %v2098
              %v2179 = vpack.c.b16 %v2104, %v2099
              %v2180 = vpack.c.b16 %v2105, %v2100
              %v2181 = vpack.c.b16 %v2106, %v2101
              %v2182 = vpack.c.b16 %v2107, %v2102
              %v2183 = vpack.c.b16 %v2113, %v2108
              %v2184 = vpack.c.b16 %v2114, %v2109
              %v2185 = vpack.c.b16 %v2115, %v2110
              %v2186 = vpack.c.b16 %v2116, %v2111
              %v2187 = vpack.c.b16 %v2117, %v2112
              %v2188 = vpack.c.b16 %v2123, %v2118
              %v2189 = vpack.c.b16 %v2124, %v2119
              %v2190 = vpack.c.b16 %v2125, %v2120
              %v2191 = vpack.c.b16 %v2126, %v2121
              %v2192 = vpack.c.b16 %v2127, %v2122
              %v2193 = vpack.c.b16 %v2133, %v2128
              %v2194 = vpack.c.b16 %v2134, %v2129
              %v2195 = vpack.c.b16 %v2135, %v2130
              %v2196 = vpack.c.b16 %v2136, %v2131
              %v2197 = vpack.c.b16 %v2137, %v2132
              %v2198 = vpack.c.b16 %v2143, %v2138
              %v2199 = vpack.c.b16 %v2144, %v2139
              %v2200 = vpack.c.b16 %v2145, %v2140
              %v2201 = vpack.c.b16 %v2146, %v2141
              %v2202 = vpack.c.b16 %v2147, %v2142
              %v2203 = vpack.c.b16 %v2153, %v2148
              %v2204 = vpack.c.b16 %v2154, %v2149
              %v2205 = vpack.c.b16 %v2155, %v2150
              %v2206 = vpack.c.b16 %v2156, %v2151
              %v2207 = vpack.c.b16 %v2157, %v2152
              %v2208 = vpack.c.b16 %v2163, %v2158
              %v2209 = vpack.c.b16 %v2164, %v2159
              %v2210 = vpack.c.b16 %v2165, %v2160
              %v2211 = vpack.c.b16 %v2166, %v2161
              %v2212 = vpack.c.b16 %v2167, %v2162
              %v2213 = vpack.c.b16 %v2173, %v2168
              %v2214 = vpack.c.b16 %v2174, %v2169
              %v2215 = vpack.c.b16 %v2175, %v2170
              %v2216 = vpack.c.b16 %v2176, %v2171
              %v2217 = vpack.c.b16 %v2177, %v2172
              %2258 = vmatprep.subr.bf16.mxu0 %v2214
              %2259 = vmatpush1.bf16.msra.mxu0 %v2213
              %2260 = vmatprep.subr.bf16.mxu0 %v2209
              %2261 = vmatpush1.bf16.msra.mxu0 %v2208
              %2262 = vmatprep.subr.bf16.mxu0 %v2204
              %2263 = vmatpush1.bf16.msra.mxu0 %v2203
              %2264 = vmatprep.subr.bf16.mxu0 %v2199
              %2265 = vmatpush1.bf16.msra.mxu0 %v2198
              %2266 = vmatprep.subr.bf16.mxu0 %v2194
              %2267 = vmatpush1.bf16.msra.mxu0 %v2193
              %2268 = vmatprep.subr.bf16.mxu0 %v2189
              %2269 = vmatpush1.bf16.msra.mxu0 %v2188
              %2270 = vmatprep.subr.bf16.mxu0 %v2184
              %2271 = vmatpush1.bf16.msra.mxu0 %v2183
              %2272 = vmatprep.subr.bf16.mxu0 %v2179
              %2273 = vmatpush1.bf16.msra.mxu0 %v2178
              %2274 = vmatprep.subr.bf16.mxu0 0
              %2275 = vmatpush2.bf16.msra.mxu0 0
              %2276 = vmatprep.subr.bf16.mxu0 0
              %2277 = vmatpush2.bf16.msra.mxu0 0
              %2278 = vmatprep.subr.bf16.mxu0 0
              %2279 = vmatpush2.bf16.msra.mxu0 0
              %2280 = vmatprep.subr.bf16.mxu0 0
              %2281 = vmatpush2.bf16.msra.mxu0 0
              %2282 = vmatprep.subr.bf16.mxu0 0
              %2283 = vmatpush2.bf16.msra.mxu0 0
              %2284 = vmatprep.subr.bf16.mxu0 0
              %2285 = vmatpush2.bf16.msra.mxu0 0
              %2286 = vmatprep.subr.bf16.mxu0 0
              %2287 = vmatpush2.bf16.msra.mxu0 0
              %2288 = vmatprep.subr.bf16.mxu0 0
              %2289 = vmatpush2.bf16.msra.mxu0 0
              %2290 = vmatprep.mubr.bf16.mxu0 0
              %2291 = vmatmul.mubr.bf16.gmra.mxu0 %v2000
              %v2292 = vpop.f32.mrf.mxu0
              %v2293 = vadd.f32 0.0, %v2292
              %v2294 = vpop.f32.mrf.mxu0
              %v2295 = vadd.f32 0.0, %v2294
              %v2296 = vpop.f32.mrf.mxu0
              %v2297 = vpop.f32.mrf.mxu0
              %2298 = vdwg.mxu0
              %2299 = vmatprep.subr.bf16.mxu0 %v2216
              %2300 = vmatpush1.bf16.msra.mxu0 %v2215
              %2301 = vmatprep.subr.bf16.mxu0 %v2211
              %2302 = vmatpush1.bf16.msra.mxu0 %v2210
              %2303 = vmatprep.subr.bf16.mxu0 %v2206
              %2304 = vmatpush1.bf16.msra.mxu0 %v2205
              %2305 = vmatprep.subr.bf16.mxu0 %v2201
              %2306 = vmatpush1.bf16.msra.mxu0 %v2200
              %2307 = vmatprep.subr.bf16.mxu0 %v2196
              %2308 = vmatpush1.bf16.msra.mxu0 %v2195
              %2309 = vmatprep.subr.bf16.mxu0 %v2191
              %2310 = vmatpush1.bf16.msra.mxu0 %v2190
              %2311 = vmatprep.subr.bf16.mxu0 %v2186
              %2312 = vmatpush1.bf16.msra.mxu0 %v2185
              %2313 = vmatprep.subr.bf16.mxu0 %v2181
              %2314 = vmatpush1.bf16.msra.mxu0 %v2180
              %2315 = vmatprep.subr.bf16.mxu0 0
              %2316 = vmatpush2.bf16.msra.mxu0 0
              %2317 = vmatprep.subr.bf16.mxu0 0
              %2318 = vmatpush2.bf16.msra.mxu0 0
              %2319 = vmatprep.subr.bf16.mxu0 0
              %2320 = vmatpush2.bf16.msra.mxu0 0
              %2321 = vmatprep.subr.bf16.mxu0 0
              %2322 = vmatpush2.bf16.msra.mxu0 0
              %2323 = vmatprep.subr.bf16.mxu0 0
              %2324 = vmatpush2.bf16.msra.mxu0 0
              %2325 = vmatprep.subr.bf16.mxu0 0
              %2326 = vmatpush2.bf16.msra.mxu0 0
              %2327 = vmatprep.subr.bf16.mxu0 0
              %2328 = vmatpush2.bf16.msra.mxu0 0
              %2329 = vmatprep.subr.bf16.mxu0 0
              %2330 = vmatpush2.bf16.msra.mxu0 0
              %2331 = vmatprep.mubr.bf16.mxu0 0
              %2332 = vmatmul.mubr.bf16.gmra.mxu0 %v2000
              %v2333 = vpop.f32.mrf.mxu0
              %v2334 = vadd.f32 0.0, %v2333
              %v2335 = vpop.f32.mrf.mxu0
              %v2336 = vadd.f32 0.0, %v2335
              %v2337 = vpop.f32.mrf.mxu0
              %v2338 = vpop.f32.mrf.mxu0
              %2339 = vdwg.mxu0
              %2340 = vmatprep.subr.bf16.mxu0 0
              %2341 = vmatpush1.bf16.msra.mxu0 %v2217
              %2342 = vmatprep.subr.bf16.mxu0 0
              %2343 = vmatpush1.bf16.msra.mxu0 %v2212
              %2344 = vmatprep.subr.bf16.mxu0 0
              %2345 = vmatpush1.bf16.msra.mxu0 %v2207
              %2346 = vmatprep.subr.bf16.mxu0 0
              %2347 = vmatpush1.bf16.msra.mxu0 %v2202
              %2348 = vmatprep.subr.bf16.mxu0 0
              %2349 = vmatpush1.bf16.msra.mxu0 %v2197
              %2350 = vmatprep.subr.bf16.mxu0 0
              %2351 = vmatpush1.bf16.msra.mxu0 %v2192
              %2352 = vmatprep.subr.bf16.mxu0 0
              %2353 = vmatpush1.bf16.msra.mxu0 %v2187
              %2354 = vmatprep.subr.bf16.mxu0 0
              %2355 = vmatpush1.bf16.msra.mxu0 %v2182
              %2356 = vmatprep.subr.bf16.mxu0 0
              %2357 = vmatpush2.bf16.msra.mxu0 0
              %2358 = vmatprep.subr.bf16.mxu0 0
              %2359 = vmatpush2.bf16.msra.mxu0 0
              %2360 = vmatprep.subr.bf16.mxu0 0
              %2361 = vmatpush2.bf16.msra.mxu0 0
              %2362 = vmatprep.subr.bf16.mxu0 0
              %2363 = vmatpush2.bf16.msra.mxu0 0
              %2364 = vmatprep.subr.bf16.mxu0 0
              %2365 = vmatpush2.bf16.msra.mxu0 0
              %2366 = vmatprep.subr.bf16.mxu0 0
              %2367 = vmatpush2.bf16.msra.mxu0 0
              %2368 = vmatprep.subr.bf16.mxu0 0
              %2369 = vmatpush2.bf16.msra.mxu0 0
              %2370 = vmatprep.subr.bf16.mxu0 0
              %2371 = vmatpush2.bf16.msra.mxu0 0
              %2372 = vmatprep.mubr.bf16.mxu0 0
              %2373 = vmatmul.mubr.bf16.gmra.mxu0 %v2000
              %v2374 = vpop.f32.mrf.mxu0
              %v2375 = vadd.f32 0.0, %v2374
              %v2376 = vpop.f32.mrf.mxu0
              %v2377 = vpop.f32.mrf.mxu0
              %v2378 = vpop.f32.mrf.mxu0
              %2379 = vdwg.mxu0
              %v2428 = vunpack.c.l.b16 %v1952
              %v2429 = vunpack.c.h.b16 %v1952
              %v2430 = vunpack.c.l.b16 %v1953
              %v2431 = vunpack.c.h.b16 %v1953
              %v2432 = vunpack.c.l.b16 %v1954
              %v2433 = vunpack.c.l.b16 %v1955
              %v2434 = vunpack.c.h.b16 %v1955
              %v2435 = vunpack.c.l.b16 %v1956
              %v2436 = vunpack.c.h.b16 %v1956
              %v2437 = vunpack.c.l.b16 %v1957
              %v2438 = vunpack.c.l.b16 %v1958
              %v2439 = vunpack.c.h.b16 %v1958
              %v2440 = vunpack.c.l.b16 %v1959
              %v2441 = vunpack.c.h.b16 %v1959
              %v2442 = vunpack.c.l.b16 %v1960
              %v2443 = vunpack.c.l.b16 %v1961
              %v2444 = vunpack.c.h.b16 %v1961
              %v2445 = vunpack.c.l.b16 %v1962
              %v2446 = vunpack.c.h.b16 %v1962
              %v2447 = vunpack.c.l.b16 %v1963
              %v2448 = vunpack.c.l.b16 %v1964
              %v2449 = vunpack.c.h.b16 %v1964
              %v2450 = vunpack.c.l.b16 %v1965
              %v2451 = vunpack.c.h.b16 %v1965
              %v2452 = vunpack.c.l.b16 %v1966
              %v2453 = vunpack.c.l.b16 %v1967
              %v2454 = vunpack.c.h.b16 %v1967
              %v2455 = vunpack.c.l.b16 %v1968
              %v2456 = vunpack.c.h.b16 %v1968
              %v2457 = vunpack.c.l.b16 %v1969
              %v2458 = vunpack.c.l.b16 %v1970
              %v2459 = vunpack.c.h.b16 %v1970
              %v2460 = vunpack.c.l.b16 %v1971
              %v2461 = vunpack.c.h.b16 %v1971
              %v2462 = vunpack.c.l.b16 %v1972
              %v2463 = vunpack.c.l.b16 %v1973
              %v2464 = vunpack.c.h.b16 %v1973
              %v2465 = vunpack.c.l.b16 %v1974
              %v2466 = vunpack.c.h.b16 %v1974
              %v2467 = vunpack.c.l.b16 %v1975
              %v2468 = vunpack.c.l.b16 %v1976
              %v2469 = vunpack.c.h.b16 %v1976
              %v2470 = vunpack.c.l.b16 %v1977
              %v2471 = vunpack.c.h.b16 %v1977
              %v2472 = vunpack.c.l.b16 %v1978
              %v2473 = vunpack.c.l.b16 %v1979
              %v2474 = vunpack.c.h.b16 %v1979
              %v2475 = vunpack.c.l.b16 %v1980
              %v2476 = vunpack.c.h.b16 %v1980
              %v2477 = vunpack.c.l.b16 %v1981
              %v2478 = vunpack.c.l.b16 %v1982
              %v2479 = vunpack.c.h.b16 %v1982
              %v2480 = vunpack.c.l.b16 %v1983
              %v2481 = vunpack.c.h.b16 %v1983
              %v2482 = vunpack.c.l.b16 %v1984
              %v2483 = vunpack.c.l.b16 %v1985
              %v2484 = vunpack.c.h.b16 %v1985
              %v2485 = vunpack.c.l.b16 %v1986
              %v2486 = vunpack.c.h.b16 %v1986
              %v2487 = vunpack.c.l.b16 %v1987
              %v2488 = vunpack.c.l.b16 %v1988
              %v2489 = vunpack.c.h.b16 %v1988
              %v2490 = vunpack.c.l.b16 %v1989
              %v2491 = vunpack.c.h.b16 %v1989
              %v2492 = vunpack.c.l.b16 %v1990
              %v2493 = vunpack.c.l.b16 %v1991
              %v2494 = vunpack.c.h.b16 %v1991
              %v2495 = vunpack.c.l.b16 %v1992
              %v2496 = vunpack.c.h.b16 %v1992
              %v2497 = vunpack.c.l.b16 %v1993
              %v2498 = vunpack.c.l.b16 %v1994
              %v2499 = vunpack.c.h.b16 %v1994
              %v2500 = vunpack.c.l.b16 %v1995
              %v2501 = vunpack.c.h.b16 %v1995
              %v2502 = vunpack.c.l.b16 %v1996
              %v2503 = vunpack.c.l.b16 %v1997
              %v2504 = vunpack.c.h.b16 %v1997
              %v2505 = vunpack.c.l.b16 %v1998
              %v2506 = vunpack.c.h.b16 %v1998
              %v2507 = vunpack.c.l.b16 %v1999
              %v2508 = vpack.c.b16 %v2433, %v2428
              %v2509 = vpack.c.b16 %v2434, %v2429
              %v2510 = vpack.c.b16 %v2435, %v2430
              %v2511 = vpack.c.b16 %v2436, %v2431
              %v2512 = vpack.c.b16 %v2437, %v2432
              %v2513 = vpack.c.b16 %v2443, %v2438
              %v2514 = vpack.c.b16 %v2444, %v2439
              %v2515 = vpack.c.b16 %v2445, %v2440
              %v2516 = vpack.c.b16 %v2446, %v2441
              %v2517 = vpack.c.b16 %v2447, %v2442
              %v2518 = vpack.c.b16 %v2453, %v2448
              %v2519 = vpack.c.b16 %v2454, %v2449
              %v2520 = vpack.c.b16 %v2455, %v2450
              %v2521 = vpack.c.b16 %v2456, %v2451
              %v2522 = vpack.c.b16 %v2457, %v2452
              %v2523 = vpack.c.b16 %v2463, %v2458
              %v2524 = vpack.c.b16 %v2464, %v2459
              %v2525 = vpack.c.b16 %v2465, %v2460
              %v2526 = vpack.c.b16 %v2466, %v2461
              %v2527 = vpack.c.b16 %v2467, %v2462
              %v2528 = vpack.c.b16 %v2473, %v2468
              %v2529 = vpack.c.b16 %v2474, %v2469
              %v2530 = vpack.c.b16 %v2475, %v2470
              %v2531 = vpack.c.b16 %v2476, %v2471
              %v2532 = vpack.c.b16 %v2477, %v2472
              %v2533 = vpack.c.b16 %v2483, %v2478
              %v2534 = vpack.c.b16 %v2484, %v2479
              %v2535 = vpack.c.b16 %v2485, %v2480
              %v2536 = vpack.c.b16 %v2486, %v2481
              %v2537 = vpack.c.b16 %v2487, %v2482
              %v2538 = vpack.c.b16 %v2493, %v2488
              %v2539 = vpack.c.b16 %v2494, %v2489
              %v2540 = vpack.c.b16 %v2495, %v2490
              %v2541 = vpack.c.b16 %v2496, %v2491
              %v2542 = vpack.c.b16 %v2497, %v2492
              %v2543 = vpack.c.b16 %v2503, %v2498
              %v2544 = vpack.c.b16 %v2504, %v2499
              %v2545 = vpack.c.b16 %v2505, %v2500
              %v2546 = vpack.c.b16 %v2506, %v2501
              %v2547 = vpack.c.b16 %v2507, %v2502
              %2588 = vmatprep.subr.bf16.mxu0 %v2544
              %2589 = vmatpush1.bf16.msra.mxu0 %v2543
              %2590 = vmatprep.subr.bf16.mxu0 %v2539
              %2591 = vmatpush1.bf16.msra.mxu0 %v2538
              %2592 = vmatprep.subr.bf16.mxu0 %v2534
              %2593 = vmatpush1.bf16.msra.mxu0 %v2533
              %2594 = vmatprep.subr.bf16.mxu0 %v2529
              %2595 = vmatpush1.bf16.msra.mxu0 %v2528
              %2596 = vmatprep.subr.bf16.mxu0 %v2524
              %2597 = vmatpush1.bf16.msra.mxu0 %v2523
              %2598 = vmatprep.subr.bf16.mxu0 %v2519
              %2599 = vmatpush1.bf16.msra.mxu0 %v2518
              %2600 = vmatprep.subr.bf16.mxu0 %v2514
              %2601 = vmatpush1.bf16.msra.mxu0 %v2513
              %2602 = vmatprep.subr.bf16.mxu0 %v2509
              %2603 = vmatpush1.bf16.msra.mxu0 %v2508
              %2604 = vmatprep.subr.bf16.mxu0 0
              %2605 = vmatpush2.bf16.msra.mxu0 0
              %2606 = vmatprep.subr.bf16.mxu0 0
              %2607 = vmatpush2.bf16.msra.mxu0 0
              %2608 = vmatprep.subr.bf16.mxu0 0
              %2609 = vmatpush2.bf16.msra.mxu0 0
              %2610 = vmatprep.subr.bf16.mxu0 0
              %2611 = vmatpush2.bf16.msra.mxu0 0
              %2612 = vmatprep.subr.bf16.mxu0 0
              %2613 = vmatpush2.bf16.msra.mxu0 0
              %2614 = vmatprep.subr.bf16.mxu0 0
              %2615 = vmatpush2.bf16.msra.mxu0 0
              %2616 = vmatprep.subr.bf16.mxu0 0
              %2617 = vmatpush2.bf16.msra.mxu0 0
              %2618 = vmatprep.subr.bf16.mxu0 0
              %2619 = vmatpush2.bf16.msra.mxu0 0
              %2620 = vmatprep.mubr.bf16.mxu0 0
              %2621 = vmatmul.mubr.bf16.gmra.mxu0 %v1951
              %v2622 = vpop.f32.mrf.mxu0
              %v2623 = vadd.f32 %v2293, %v2622
              %v2624 = vpop.f32.mrf.mxu0
              %v2625 = vadd.f32 %v2295, %v2624
              %v2626 = vpop.f32.mrf.mxu0
              %v2627 = vpop.f32.mrf.mxu0
              %2628 = vdwg.mxu0
              %2629 = vmatprep.subr.bf16.mxu0 %v2546
              %2630 = vmatpush1.bf16.msra.mxu0 %v2545
              %2631 = vmatprep.subr.bf16.mxu0 %v2541
              %2632 = vmatpush1.bf16.msra.mxu0 %v2540
              %2633 = vmatprep.subr.bf16.mxu0 %v2536
              %2634 = vmatpush1.bf16.msra.mxu0 %v2535
              %2635 = vmatprep.subr.bf16.mxu0 %v2531
              %2636 = vmatpush1.bf16.msra.mxu0 %v2530
              %2637 = vmatprep.subr.bf16.mxu0 %v2526
              %2638 = vmatpush1.bf16.msra.mxu0 %v2525
              %2639 = vmatprep.subr.bf16.mxu0 %v2521
              %2640 = vmatpush1.bf16.msra.mxu0 %v2520
              %2641 = vmatprep.subr.bf16.mxu0 %v2516
              %2642 = vmatpush1.bf16.msra.mxu0 %v2515
              %2643 = vmatprep.subr.bf16.mxu0 %v2511
              %2644 = vmatpush1.bf16.msra.mxu0 %v2510
              %2645 = vmatprep.subr.bf16.mxu0 0
              %2646 = vmatpush2.bf16.msra.mxu0 0
              %2647 = vmatprep.subr.bf16.mxu0 0
              %2648 = vmatpush2.bf16.msra.mxu0 0
              %2649 = vmatprep.subr.bf16.mxu0 0
              %2650 = vmatpush2.bf16.msra.mxu0 0
              %2651 = vmatprep.subr.bf16.mxu0 0
              %2652 = vmatpush2.bf16.msra.mxu0 0
              %2653 = vmatprep.subr.bf16.mxu0 0
              %2654 = vmatpush2.bf16.msra.mxu0 0
              %2655 = vmatprep.subr.bf16.mxu0 0
              %2656 = vmatpush2.bf16.msra.mxu0 0
              %2657 = vmatprep.subr.bf16.mxu0 0
              %2658 = vmatpush2.bf16.msra.mxu0 0
              %2659 = vmatprep.subr.bf16.mxu0 0
              %2660 = vmatpush2.bf16.msra.mxu0 0
              %2661 = vmatprep.mubr.bf16.mxu0 0
              %2662 = vmatmul.mubr.bf16.gmra.mxu0 %v1951
              %v2663 = vpop.f32.mrf.mxu0
              %v2664 = vadd.f32 %v2334, %v2663
              %v2665 = vpop.f32.mrf.mxu0
              %v2666 = vadd.f32 %v2336, %v2665
              %v2667 = vpop.f32.mrf.mxu0
              %v2668 = vpop.f32.mrf.mxu0
              %2669 = vdwg.mxu0
              %2670 = vmatprep.subr.bf16.mxu0 0
              %2671 = vmatpush1.bf16.msra.mxu0 %v2547
              %2672 = vmatprep.subr.bf16.mxu0 0
              %2673 = vmatpush1.bf16.msra.mxu0 %v2542
              %2674 = vmatprep.subr.bf16.mxu0 0
              %2675 = vmatpush1.bf16.msra.mxu0 %v2537
              %2676 = vmatprep.subr.bf16.mxu0 0
              %2677 = vmatpush1.bf16.msra.mxu0 %v2532
              %2678 = vmatprep.subr.bf16.mxu0 0
              %2679 = vmatpush1.bf16.msra.mxu0 %v2527
              %2680 = vmatprep.subr.bf16.mxu0 0
              %2681 = vmatpush1.bf16.msra.mxu0 %v2522
              %2682 = vmatprep.subr.bf16.mxu0 0
              %2683 = vmatpush1.bf16.msra.mxu0 %v2517
              %2684 = vmatprep.subr.bf16.mxu0 0
              %2685 = vmatpush1.bf16.msra.mxu0 %v2512
              %2686 = vmatprep.subr.bf16.mxu0 0
              %2687 = vmatpush2.bf16.msra.mxu0 0
              %2688 = vmatprep.subr.bf16.mxu0 0
              %2689 = vmatpush2.bf16.msra.mxu0 0
              %2690 = vmatprep.subr.bf16.mxu0 0
              %2691 = vmatpush2.bf16.msra.mxu0 0
              %2692 = vmatprep.subr.bf16.mxu0 0
              %2693 = vmatpush2.bf16.msra.mxu0 0
              %2694 = vmatprep.subr.bf16.mxu0 0
              %2695 = vmatpush2.bf16.msra.mxu0 0
              %2696 = vmatprep.subr.bf16.mxu0 0
              %2697 = vmatpush2.bf16.msra.mxu0 0
              %2698 = vmatprep.subr.bf16.mxu0 0
              %2699 = vmatpush2.bf16.msra.mxu0 0
              %2700 = vmatprep.subr.bf16.mxu0 0
              %2701 = vmatpush2.bf16.msra.mxu0 0
              %2702 = vmatprep.mubr.bf16.mxu0 0
              %2703 = vmatmul.mubr.bf16.gmra.mxu0 %v1951
              %v2704 = vpop.f32.mrf.mxu0
              %v2705 = vadd.f32 %v2375, %v2704
              %v2706 = vpop.f32.mrf.mxu0
              %v2707 = vpop.f32.mrf.mxu0
              %v2708 = vpop.f32.mrf.mxu0
              %2709 = vdwg.mxu0
              %v2710 = vadd.f32 %v2623, %v256
              %v2711 = vadd.f32 %v2625, %v260
              %v2712 = vadd.f32 %v2664, %v264
              %v2713 = vadd.f32 %v2666, %v268
              %v2714 = vadd.f32 %v2705, %v272
              %v2715 = vmul.f32 %v2710, 0.5
              %v2716 = vtanh.pop %v2715
              %v2717 = vadd.f32 %v2716, 1.0
              %v2718 = vmul.f32 %v2717, 0.5
              %v2719 = vmul.f32 %v2711, 0.5
              %v2720 = vtanh.pop %v2719
              %v2721 = vadd.f32 %v2720, 1.0
              %v2722 = vmul.f32 %v2721, 0.5
              %v2723 = vtanh.pop %v2712
              %v2724 = vmul.f32 %v2713, 0.5
              %v2725 = vtanh.pop %v2724
              %v2726 = vadd.f32 %v2725, 1.0
              %v2727 = vmul.f32 %v2726, 0.5
              %v2728 = vmul.f32 %v2714, 0.5
              %v2729 = vtanh.pop %v2728
              %v2730 = vadd.f32 %v2729, 1.0
              %v2731 = vmul.f32 %v2730, 0.5
              %v2732 = vmul.f32 %v2718, %v2723
              %v2733 = vmul.f32 %v2727, %v1948
              %v2734 = vadd.f32 %v2732, %v2733
              %v2735 = vmul.f32 %v2731, %v1950
              %v2736 = vadd.f32 %v2734, %v2735
              %v2737 = vtanh.pop %v2736
              %v2738 = vmul.f32 %v2722, %v2737
              %2739 = vst [vmem:[#allocation3] sm:$0xff] %v2738
              %2740 = vst [vmem:[#allocation3 + $0x8] sm:$0xff] %v2736
            $region82: #{_fenwick_forward_stream.1} parent=69 // pred_fallthru
              _
            %p2741 = scmp.gt.s32.totalorder %s337, 3
            // Predicated region
            $region83: #{_fenwick_forward_stream.1} parent=69 // pred_check
              %p2742 = pneg %p2741
            $region84: #{_fenwick_forward_stream.1} parent=69 // pred_check_branch
              %2744 = sbr.rel (%p2742) target = $region86
            $region85: #{_fenwick_forward_stream.1} parent=69 // pred_region
              %s2745 = scalar_lea.vmem [#allocation2], 48
              %v2746 = vld [vmem:[%s2745] sm:$0xff]
              %v2747 = vld [vmem:[%s2745 + $0x8] sm:$0xff]
              %v2748 = vld [vmem:[#allocation3] sm:$0xff]
              %v2749 = vld [vmem:[#allocation3 + $0x8] sm:$0xff]
              %v2750 = vpack.c.bf16 %v2746, %v2746
              %v2751 = vld [vmem:[%s0] sm:$0xff]
              %v2752 = vld [vmem:[%s0 + $0x8] sm:$0xff]
              %v2753 = vld [vmem:[%s0 + $0x10] sm:$0xf]
              %v2754 = vld [vmem:[%s0 + $0x14] sm:$0xff]
              %v2755 = vld [vmem:[%s0 + $0x1c] sm:$0xff]
              %v2756 = vld [vmem:[%s0 + $0x24] sm:$0xf]
              %v2757 = vld [vmem:[%s0 + $0x28] sm:$0xff]
              %v2758 = vld [vmem:[%s0 + $0x30] sm:$0xff]
              %v2759 = vld [vmem:[%s0 + $0x38] sm:$0xf]
              %v2760 = vld [vmem:[%s0 + $0x3c] sm:$0xff]
              %v2761 = vld [vmem:[%s0 + $0x44] sm:$0xff]
              %v2762 = vld [vmem:[%s0 + $0x4c] sm:$0xf]
              %v2763 = vld [vmem:[%s0 + $0x50] sm:$0xff]
              %v2764 = vld [vmem:[%s0 + $0x58] sm:$0xff]
              %v2765 = vld [vmem:[%s0 + $0x60] sm:$0xf]
              %v2766 = vld [vmem:[%s0 + $0x64] sm:$0xff]
              %v2767 = vld [vmem:[%s0 + $0x6c] sm:$0xff]
              %v2768 = vld [vmem:[%s0 + $0x74] sm:$0xf]
              %v2769 = vld [vmem:[%s0 + $0x78] sm:$0xff]
              %v2770 = vld [vmem:[%s0 + $0x80] sm:$0xff]
              %v2771 = vld [vmem:[%s0 + $0x88] sm:$0xf]
              %v2772 = vld [vmem:[%s0 + $0x8c] sm:$0xff]
              %v2773 = vld [vmem:[%s0 + $0x94] sm:$0xff]
              %v2774 = vld [vmem:[%s0 + $0x9c] sm:$0xf]
              %v2775 = vld [vmem:[%s0 + $0xa0] sm:$0xff]
              %v2776 = vld [vmem:[%s0 + $0xa8] sm:$0xff]
              %v2777 = vld [vmem:[%s0 + $0xb0] sm:$0xf]
              %v2778 = vld [vmem:[%s0 + $0xb4] sm:$0xff]
              %v2779 = vld [vmem:[%s0 + $0xbc] sm:$0xff]
              %v2780 = vld [vmem:[%s0 + $0xc4] sm:$0xf]
              %v2781 = vld [vmem:[%s0 + $0xc8] sm:$0xff]
              %v2782 = vld [vmem:[%s0 + $0xd0] sm:$0xff]
              %v2783 = vld [vmem:[%s0 + $0xd8] sm:$0xf]
              %v2784 = vld [vmem:[%s0 + $0xdc] sm:$0xff]
              %v2785 = vld [vmem:[%s0 + $0xe4] sm:$0xff]
              %v2786 = vld [vmem:[%s0 + $0xec] sm:$0xf]
              %v2787 = vld [vmem:[%s0 + $0xf0] sm:$0xff]
              %v2788 = vld [vmem:[%s0 + $0xf8] sm:$0xff]
              %v2789 = vld [vmem:[%s0 + $0x100] sm:$0xf]
              %v2790 = vld [vmem:[%s0 + $0x104] sm:$0xff]
              %v2791 = vld [vmem:[%s0 + $0x10c] sm:$0xff]
              %v2792 = vld [vmem:[%s0 + $0x114] sm:$0xf]
              %v2793 = vld [vmem:[%s0 + $0x118] sm:$0xff]
              %v2794 = vld [vmem:[%s0 + $0x120] sm:$0xff]
              %v2795 = vld [vmem:[%s0 + $0x128] sm:$0xf]
              %v2796 = vld [vmem:[%s0 + $0x12c] sm:$0xff]
              %v2797 = vld [vmem:[%s0 + $0x134] sm:$0xff]
              %v2798 = vld [vmem:[%s0 + $0x13c] sm:$0xf]
              %v2799 = vpack.c.bf16 %v2748, %v2748
              %s2800 = scalar_lea.vmem %s0, 320
              %v2801 = vld [vmem:[%s2800] sm:$0xff]
              %v2802 = vld [vmem:[%s2800 + $0x8] sm:$0xff]
              %v2803 = vld [vmem:[%s2800 + $0x10] sm:$0xf]
              %v2804 = vld [vmem:[%s2800 + $0x14] sm:$0xff]
              %v2805 = vld [vmem:[%s2800 + $0x1c] sm:$0xff]
              %v2806 = vld [vmem:[%s2800 + $0x24] sm:$0xf]
              %v2807 = vld [vmem:[%s2800 + $0x28] sm:$0xff]
              %v2808 = vld [vmem:[%s2800 + $0x30] sm:$0xff]
              %v2809 = vld [vmem:[%s2800 + $0x38] sm:$0xf]
              %v2810 = vld [vmem:[%s2800 + $0x3c] sm:$0xff]
              %v2811 = vld [vmem:[%s2800 + $0x44] sm:$0xff]
              %v2812 = vld [vmem:[%s2800 + $0x4c] sm:$0xf]
              %v2813 = vld [vmem:[%s2800 + $0x50] sm:$0xff]
              %v2814 = vld [vmem:[%s2800 + $0x58] sm:$0xff]
              %v2815 = vld [vmem:[%s2800 + $0x60] sm:$0xf]
              %v2816 = vld [vmem:[%s2800 + $0x64] sm:$0xff]
              %v2817 = vld [vmem:[%s2800 + $0x6c] sm:$0xff]
              %v2818 = vld [vmem:[%s2800 + $0x74] sm:$0xf]
              %v2819 = vld [vmem:[%s2800 + $0x78] sm:$0xff]
              %v2820 = vld [vmem:[%s2800 + $0x80] sm:$0xff]
              %v2821 = vld [vmem:[%s2800 + $0x88] sm:$0xf]
              %v2822 = vld [vmem:[%s2800 + $0x8c] sm:$0xff]
              %v2823 = vld [vmem:[%s2800 + $0x94] sm:$0xff]
              %v2824 = vld [vmem:[%s2800 + $0x9c] sm:$0xf]
              %v2825 = vld [vmem:[%s2800 + $0xa0] sm:$0xff]
              %v2826 = vld [vmem:[%s2800 + $0xa8] sm:$0xff]
              %v2827 = vld [vmem:[%s2800 + $0xb0] sm:$0xf]
              %v2828 = vld [vmem:[%s2800 + $0xb4] sm:$0xff]
              %v2829 = vld [vmem:[%s2800 + $0xbc] sm:$0xff]
              %v2830 = vld [vmem:[%s2800 + $0xc4] sm:$0xf]
              %v2831 = vld [vmem:[%s2800 + $0xc8] sm:$0xff]
              %v2832 = vld [vmem:[%s2800 + $0xd0] sm:$0xff]
              %v2833 = vld [vmem:[%s2800 + $0xd8] sm:$0xf]
              %v2834 = vld [vmem:[%s2800 + $0xdc] sm:$0xff]
              %v2835 = vld [vmem:[%s2800 + $0xe4] sm:$0xff]
              %v2836 = vld [vmem:[%s2800 + $0xec] sm:$0xf]
              %v2837 = vld [vmem:[%s2800 + $0xf0] sm:$0xff]
              %v2838 = vld [vmem:[%s2800 + $0xf8] sm:$0xff]
              %v2839 = vld [vmem:[%s2800 + $0x100] sm:$0xf]
              %v2840 = vld [vmem:[%s2800 + $0x104] sm:$0xff]
              %v2841 = vld [vmem:[%s2800 + $0x10c] sm:$0xff]
              %v2842 = vld [vmem:[%s2800 + $0x114] sm:$0xf]
              %v2843 = vld [vmem:[%s2800 + $0x118] sm:$0xff]
              %v2844 = vld [vmem:[%s2800 + $0x120] sm:$0xff]
              %v2845 = vld [vmem:[%s2800 + $0x128] sm:$0xf]
              %v2846 = vld [vmem:[%s2800 + $0x12c] sm:$0xff]
              %v2847 = vld [vmem:[%s2800 + $0x134] sm:$0xff]
              %v2848 = vld [vmem:[%s2800 + $0x13c] sm:$0xf]
              %v2897 = vunpack.c.l.b16 %v2801
              %v2898 = vunpack.c.h.b16 %v2801
              %v2899 = vunpack.c.l.b16 %v2802
              %v2900 = vunpack.c.h.b16 %v2802
              %v2901 = vunpack.c.l.b16 %v2803
              %v2902 = vunpack.c.l.b16 %v2804
              %v2903 = vunpack.c.h.b16 %v2804
              %v2904 = vunpack.c.l.b16 %v2805
              %v2905 = vunpack.c.h.b16 %v2805
              %v2906 = vunpack.c.l.b16 %v2806
              %v2907 = vunpack.c.l.b16 %v2807
              %v2908 = vunpack.c.h.b16 %v2807
              %v2909 = vunpack.c.l.b16 %v2808
              %v2910 = vunpack.c.h.b16 %v2808
              %v2911 = vunpack.c.l.b16 %v2809
              %v2912 = vunpack.c.l.b16 %v2810
              %v2913 = vunpack.c.h.b16 %v2810
              %v2914 = vunpack.c.l.b16 %v2811
              %v2915 = vunpack.c.h.b16 %v2811
              %v2916 = vunpack.c.l.b16 %v2812
              %v2917 = vunpack.c.l.b16 %v2813
              %v2918 = vunpack.c.h.b16 %v2813
              %v2919 = vunpack.c.l.b16 %v2814
              %v2920 = vunpack.c.h.b16 %v2814
              %v2921 = vunpack.c.l.b16 %v2815
              %v2922 = vunpack.c.l.b16 %v2816
              %v2923 = vunpack.c.h.b16 %v2816
              %v2924 = vunpack.c.l.b16 %v2817
              %v2925 = vunpack.c.h.b16 %v2817
              %v2926 = vunpack.c.l.b16 %v2818
              %v2927 = vunpack.c.l.b16 %v2819
              %v2928 = vunpack.c.h.b16 %v2819
              %v2929 = vunpack.c.l.b16 %v2820
              %v2930 = vunpack.c.h.b16 %v2820
              %v2931 = vunpack.c.l.b16 %v2821
              %v2932 = vunpack.c.l.b16 %v2822
              %v2933 = vunpack.c.h.b16 %v2822
              %v2934 = vunpack.c.l.b16 %v2823
              %v2935 = vunpack.c.h.b16 %v2823
              %v2936 = vunpack.c.l.b16 %v2824
              %v2937 = vunpack.c.l.b16 %v2825
              %v2938 = vunpack.c.h.b16 %v2825
              %v2939 = vunpack.c.l.b16 %v2826
              %v2940 = vunpack.c.h.b16 %v2826
              %v2941 = vunpack.c.l.b16 %v2827
              %v2942 = vunpack.c.l.b16 %v2828
              %v2943 = vunpack.c.h.b16 %v2828
              %v2944 = vunpack.c.l.b16 %v2829
              %v2945 = vunpack.c.h.b16 %v2829
              %v2946 = vunpack.c.l.b16 %v2830
              %v2947 = vunpack.c.l.b16 %v2831
              %v2948 = vunpack.c.h.b16 %v2831
              %v2949 = vunpack.c.l.b16 %v2832
              %v2950 = vunpack.c.h.b16 %v2832
              %v2951 = vunpack.c.l.b16 %v2833
              %v2952 = vunpack.c.l.b16 %v2834
              %v2953 = vunpack.c.h.b16 %v2834
              %v2954 = vunpack.c.l.b16 %v2835
              %v2955 = vunpack.c.h.b16 %v2835
              %v2956 = vunpack.c.l.b16 %v2836
              %v2957 = vunpack.c.l.b16 %v2837
              %v2958 = vunpack.c.h.b16 %v2837
              %v2959 = vunpack.c.l.b16 %v2838
              %v2960 = vunpack.c.h.b16 %v2838
              %v2961 = vunpack.c.l.b16 %v2839
              %v2962 = vunpack.c.l.b16 %v2840
              %v2963 = vunpack.c.h.b16 %v2840
              %v2964 = vunpack.c.l.b16 %v2841
              %v2965 = vunpack.c.h.b16 %v2841
              %v2966 = vunpack.c.l.b16 %v2842
              %v2967 = vunpack.c.l.b16 %v2843
              %v2968 = vunpack.c.h.b16 %v2843
              %v2969 = vunpack.c.l.b16 %v2844
              %v2970 = vunpack.c.h.b16 %v2844
              %v2971 = vunpack.c.l.b16 %v2845
              %v2972 = vunpack.c.l.b16 %v2846
              %v2973 = vunpack.c.h.b16 %v2846
              %v2974 = vunpack.c.l.b16 %v2847
              %v2975 = vunpack.c.h.b16 %v2847
              %v2976 = vunpack.c.l.b16 %v2848
              %v2977 = vpack.c.b16 %v2902, %v2897
              %v2978 = vpack.c.b16 %v2903, %v2898
              %v2979 = vpack.c.b16 %v2904, %v2899
              %v2980 = vpack.c.b16 %v2905, %v2900
              %v2981 = vpack.c.b16 %v2906, %v2901
              %v2982 = vpack.c.b16 %v2912, %v2907
              %v2983 = vpack.c.b16 %v2913, %v2908
              %v2984 = vpack.c.b16 %v2914, %v2909
              %v2985 = vpack.c.b16 %v2915, %v2910
              %v2986 = vpack.c.b16 %v2916, %v2911
              %v2987 = vpack.c.b16 %v2922, %v2917
              %v2988 = vpack.c.b16 %v2923, %v2918
              %v2989 = vpack.c.b16 %v2924, %v2919
              %v2990 = vpack.c.b16 %v2925, %v2920
              %v2991 = vpack.c.b16 %v2926, %v2921
              %v2992 = vpack.c.b16 %v2932, %v2927
              %v2993 = vpack.c.b16 %v2933, %v2928
              %v2994 = vpack.c.b16 %v2934, %v2929
              %v2995 = vpack.c.b16 %v2935, %v2930
              %v2996 = vpack.c.b16 %v2936, %v2931
              %v2997 = vpack.c.b16 %v2942, %v2937
              %v2998 = vpack.c.b16 %v2943, %v2938
              %v2999 = vpack.c.b16 %v2944, %v2939
              %v3000 = vpack.c.b16 %v2945, %v2940
              %v3001 = vpack.c.b16 %v2946, %v2941
              %v3002 = vpack.c.b16 %v2952, %v2947
              %v3003 = vpack.c.b16 %v2953, %v2948
              %v3004 = vpack.c.b16 %v2954, %v2949
              %v3005 = vpack.c.b16 %v2955, %v2950
              %v3006 = vpack.c.b16 %v2956, %v2951
              %v3007 = vpack.c.b16 %v2962, %v2957
              %v3008 = vpack.c.b16 %v2963, %v2958
              %v3009 = vpack.c.b16 %v2964, %v2959
              %v3010 = vpack.c.b16 %v2965, %v2960
              %v3011 = vpack.c.b16 %v2966, %v2961
              %v3012 = vpack.c.b16 %v2972, %v2967
              %v3013 = vpack.c.b16 %v2973, %v2968
              %v3014 = vpack.c.b16 %v2974, %v2969
              %v3015 = vpack.c.b16 %v2975, %v2970
              %v3016 = vpack.c.b16 %v2976, %v2971
              %3057 = vmatprep.subr.bf16.mxu0 %v3013
              %3058 = vmatpush1.bf16.msra.mxu0 %v3012
              %3059 = vmatprep.subr.bf16.mxu0 %v3008
              %3060 = vmatpush1.bf16.msra.mxu0 %v3007
              %3061 = vmatprep.subr.bf16.mxu0 %v3003
              %3062 = vmatpush1.bf16.msra.mxu0 %v3002
              %3063 = vmatprep.subr.bf16.mxu0 %v2998
              %3064 = vmatpush1.bf16.msra.mxu0 %v2997
              %3065 = vmatprep.subr.bf16.mxu0 %v2993
              %3066 = vmatpush1.bf16.msra.mxu0 %v2992
              %3067 = vmatprep.subr.bf16.mxu0 %v2988
              %3068 = vmatpush1.bf16.msra.mxu0 %v2987
              %3069 = vmatprep.subr.bf16.mxu0 %v2983
              %3070 = vmatpush1.bf16.msra.mxu0 %v2982
              %3071 = vmatprep.subr.bf16.mxu0 %v2978
              %3072 = vmatpush1.bf16.msra.mxu0 %v2977
              %3073 = vmatprep.subr.bf16.mxu0 0
              %3074 = vmatpush2.bf16.msra.mxu0 0
              %3075 = vmatprep.subr.bf16.mxu0 0
              %3076 = vmatpush2.bf16.msra.mxu0 0
              %3077 = vmatprep.subr.bf16.mxu0 0
              %3078 = vmatpush2.bf16.msra.mxu0 0
              %3079 = vmatprep.subr.bf16.mxu0 0
              %3080 = vmatpush2.bf16.msra.mxu0 0
              %3081 = vmatprep.subr.bf16.mxu0 0
              %3082 = vmatpush2.bf16.msra.mxu0 0
              %3083 = vmatprep.subr.bf16.mxu0 0
              %3084 = vmatpush2.bf16.msra.mxu0 0
              %3085 = vmatprep.subr.bf16.mxu0 0
              %3086 = vmatpush2.bf16.msra.mxu0 0
              %3087 = vmatprep.subr.bf16.mxu0 0
              %3088 = vmatpush2.bf16.msra.mxu0 0
              %3089 = vmatprep.mubr.bf16.mxu0 0
              %3090 = vmatmul.mubr.bf16.gmra.mxu0 %v2799
              %v3091 = vpop.f32.mrf.mxu0
              %v3092 = vadd.f32 0.0, %v3091
              %v3093 = vpop.f32.mrf.mxu0
              %v3094 = vadd.f32 0.0, %v3093
              %v3095 = vpop.f32.mrf.mxu0
              %v3096 = vpop.f32.mrf.mxu0
              %3097 = vdwg.mxu0
              %3098 = vmatprep.subr.bf16.mxu0 %v3015
              %3099 = vmatpush1.bf16.msra.mxu0 %v3014
              %3100 = vmatprep.subr.bf16.mxu0 %v3010
              %3101 = vmatpush1.bf16.msra.mxu0 %v3009
              %3102 = vmatprep.subr.bf16.mxu0 %v3005
              %3103 = vmatpush1.bf16.msra.mxu0 %v3004
              %3104 = vmatprep.subr.bf16.mxu0 %v3000
              %3105 = vmatpush1.bf16.msra.mxu0 %v2999
              %3106 = vmatprep.subr.bf16.mxu0 %v2995
              %3107 = vmatpush1.bf16.msra.mxu0 %v2994
              %3108 = vmatprep.subr.bf16.mxu0 %v2990
              %3109 = vmatpush1.bf16.msra.mxu0 %v2989
              %3110 = vmatprep.subr.bf16.mxu0 %v2985
              %3111 = vmatpush1.bf16.msra.mxu0 %v2984
              %3112 = vmatprep.subr.bf16.mxu0 %v2980
              %3113 = vmatpush1.bf16.msra.mxu0 %v2979
              %3114 = vmatprep.subr.bf16.mxu0 0
              %3115 = vmatpush2.bf16.msra.mxu0 0
              %3116 = vmatprep.subr.bf16.mxu0 0
              %3117 = vmatpush2.bf16.msra.mxu0 0
              %3118 = vmatprep.subr.bf16.mxu0 0
              %3119 = vmatpush2.bf16.msra.mxu0 0
              %3120 = vmatprep.subr.bf16.mxu0 0
              %3121 = vmatpush2.bf16.msra.mxu0 0
              %3122 = vmatprep.subr.bf16.mxu0 0
              %3123 = vmatpush2.bf16.msra.mxu0 0
              %3124 = vmatprep.subr.bf16.mxu0 0
              %3125 = vmatpush2.bf16.msra.mxu0 0
              %3126 = vmatprep.subr.bf16.mxu0 0
              %3127 = vmatpush2.bf16.msra.mxu0 0
              %3128 = vmatprep.subr.bf16.mxu0 0
              %3129 = vmatpush2.bf16.msra.mxu0 0
              %3130 = vmatprep.mubr.bf16.mxu0 0
              %3131 = vmatmul.mubr.bf16.gmra.mxu0 %v2799
              %v3132 = vpop.f32.mrf.mxu0
              %v3133 = vadd.f32 0.0, %v3132
              %v3134 = vpop.f32.mrf.mxu0
              %v3135 = vadd.f32 0.0, %v3134
              %v3136 = vpop.f32.mrf.mxu0
              %v3137 = vpop.f32.mrf.mxu0
              %3138 = vdwg.mxu0
              %3139 = vmatprep.subr.bf16.mxu0 0
              %3140 = vmatpush1.bf16.msra.mxu0 %v3016
              %3141 = vmatprep.subr.bf16.mxu0 0
              %3142 = vmatpush1.bf16.msra.mxu0 %v3011
              %3143 = vmatprep.subr.bf16.mxu0 0
              %3144 = vmatpush1.bf16.msra.mxu0 %v3006
              %3145 = vmatprep.subr.bf16.mxu0 0
              %3146 = vmatpush1.bf16.msra.mxu0 %v3001
              %3147 = vmatprep.subr.bf16.mxu0 0
              %3148 = vmatpush1.bf16.msra.mxu0 %v2996
              %3149 = vmatprep.subr.bf16.mxu0 0
              %3150 = vmatpush1.bf16.msra.mxu0 %v2991
              %3151 = vmatprep.subr.bf16.mxu0 0
              %3152 = vmatpush1.bf16.msra.mxu0 %v2986
              %3153 = vmatprep.subr.bf16.mxu0 0
              %3154 = vmatpush1.bf16.msra.mxu0 %v2981
              %3155 = vmatprep.subr.bf16.mxu0 0
              %3156 = vmatpush2.bf16.msra.mxu0 0
              %3157 = vmatprep.subr.bf16.mxu0 0
              %3158 = vmatpush2.bf16.msra.mxu0 0
              %3159 = vmatprep.subr.bf16.mxu0 0
              %3160 = vmatpush2.bf16.msra.mxu0 0
              %3161 = vmatprep.subr.bf16.mxu0 0
              %3162 = vmatpush2.bf16.msra.mxu0 0
              %3163 = vmatprep.subr.bf16.mxu0 0
              %3164 = vmatpush2.bf16.msra.mxu0 0
              %3165 = vmatprep.subr.bf16.mxu0 0
              %3166 = vmatpush2.bf16.msra.mxu0 0
              %3167 = vmatprep.subr.bf16.mxu0 0
              %3168 = vmatpush2.bf16.msra.mxu0 0
              %3169 = vmatprep.subr.bf16.mxu0 0
              %3170 = vmatpush2.bf16.msra.mxu0 0
              %3171 = vmatprep.mubr.bf16.mxu0 0
              %3172 = vmatmul.mubr.bf16.gmra.mxu0 %v2799
              %v3173 = vpop.f32.mrf.mxu0
              %v3174 = vadd.f32 0.0, %v3173
              %v3175 = vpop.f32.mrf.mxu0
              %v3176 = vpop.f32.mrf.mxu0
              %v3177 = vpop.f32.mrf.mxu0
              %3178 = vdwg.mxu0
              %v3227 = vunpack.c.l.b16 %v2751
              %v3228 = vunpack.c.h.b16 %v2751
              %v3229 = vunpack.c.l.b16 %v2752
              %v3230 = vunpack.c.h.b16 %v2752
              %v3231 = vunpack.c.l.b16 %v2753
              %v3232 = vunpack.c.l.b16 %v2754
              %v3233 = vunpack.c.h.b16 %v2754
              %v3234 = vunpack.c.l.b16 %v2755
              %v3235 = vunpack.c.h.b16 %v2755
              %v3236 = vunpack.c.l.b16 %v2756
              %v3237 = vunpack.c.l.b16 %v2757
              %v3238 = vunpack.c.h.b16 %v2757
              %v3239 = vunpack.c.l.b16 %v2758
              %v3240 = vunpack.c.h.b16 %v2758
              %v3241 = vunpack.c.l.b16 %v2759
              %v3242 = vunpack.c.l.b16 %v2760
              %v3243 = vunpack.c.h.b16 %v2760
              %v3244 = vunpack.c.l.b16 %v2761
              %v3245 = vunpack.c.h.b16 %v2761
              %v3246 = vunpack.c.l.b16 %v2762
              %v3247 = vunpack.c.l.b16 %v2763
              %v3248 = vunpack.c.h.b16 %v2763
              %v3249 = vunpack.c.l.b16 %v2764
              %v3250 = vunpack.c.h.b16 %v2764
              %v3251 = vunpack.c.l.b16 %v2765
              %v3252 = vunpack.c.l.b16 %v2766
              %v3253 = vunpack.c.h.b16 %v2766
              %v3254 = vunpack.c.l.b16 %v2767
              %v3255 = vunpack.c.h.b16 %v2767
              %v3256 = vunpack.c.l.b16 %v2768
              %v3257 = vunpack.c.l.b16 %v2769
              %v3258 = vunpack.c.h.b16 %v2769
              %v3259 = vunpack.c.l.b16 %v2770
              %v3260 = vunpack.c.h.b16 %v2770
              %v3261 = vunpack.c.l.b16 %v2771
              %v3262 = vunpack.c.l.b16 %v2772
              %v3263 = vunpack.c.h.b16 %v2772
              %v3264 = vunpack.c.l.b16 %v2773
              %v3265 = vunpack.c.h.b16 %v2773
              %v3266 = vunpack.c.l.b16 %v2774
              %v3267 = vunpack.c.l.b16 %v2775
              %v3268 = vunpack.c.h.b16 %v2775
              %v3269 = vunpack.c.l.b16 %v2776
              %v3270 = vunpack.c.h.b16 %v2776
              %v3271 = vunpack.c.l.b16 %v2777
              %v3272 = vunpack.c.l.b16 %v2778
              %v3273 = vunpack.c.h.b16 %v2778
              %v3274 = vunpack.c.l.b16 %v2779
              %v3275 = vunpack.c.h.b16 %v2779
              %v3276 = vunpack.c.l.b16 %v2780
              %v3277 = vunpack.c.l.b16 %v2781
              %v3278 = vunpack.c.h.b16 %v2781
              %v3279 = vunpack.c.l.b16 %v2782
              %v3280 = vunpack.c.h.b16 %v2782
              %v3281 = vunpack.c.l.b16 %v2783
              %v3282 = vunpack.c.l.b16 %v2784
              %v3283 = vunpack.c.h.b16 %v2784
              %v3284 = vunpack.c.l.b16 %v2785
              %v3285 = vunpack.c.h.b16 %v2785
              %v3286 = vunpack.c.l.b16 %v2786
              %v3287 = vunpack.c.l.b16 %v2787
              %v3288 = vunpack.c.h.b16 %v2787
              %v3289 = vunpack.c.l.b16 %v2788
              %v3290 = vunpack.c.h.b16 %v2788
              %v3291 = vunpack.c.l.b16 %v2789
              %v3292 = vunpack.c.l.b16 %v2790
              %v3293 = vunpack.c.h.b16 %v2790
              %v3294 = vunpack.c.l.b16 %v2791
              %v3295 = vunpack.c.h.b16 %v2791
              %v3296 = vunpack.c.l.b16 %v2792
              %v3297 = vunpack.c.l.b16 %v2793
              %v3298 = vunpack.c.h.b16 %v2793
              %v3299 = vunpack.c.l.b16 %v2794
              %v3300 = vunpack.c.h.b16 %v2794
              %v3301 = vunpack.c.l.b16 %v2795
              %v3302 = vunpack.c.l.b16 %v2796
              %v3303 = vunpack.c.h.b16 %v2796
              %v3304 = vunpack.c.l.b16 %v2797
              %v3305 = vunpack.c.h.b16 %v2797
              %v3306 = vunpack.c.l.b16 %v2798
              %v3307 = vpack.c.b16 %v3232, %v3227
              %v3308 = vpack.c.b16 %v3233, %v3228
              %v3309 = vpack.c.b16 %v3234, %v3229
              %v3310 = vpack.c.b16 %v3235, %v3230
              %v3311 = vpack.c.b16 %v3236, %v3231
              %v3312 = vpack.c.b16 %v3242, %v3237
              %v3313 = vpack.c.b16 %v3243, %v3238
              %v3314 = vpack.c.b16 %v3244, %v3239
              %v3315 = vpack.c.b16 %v3245, %v3240
              %v3316 = vpack.c.b16 %v3246, %v3241
              %v3317 = vpack.c.b16 %v3252, %v3247
              %v3318 = vpack.c.b16 %v3253, %v3248
              %v3319 = vpack.c.b16 %v3254, %v3249
              %v3320 = vpack.c.b16 %v3255, %v3250
              %v3321 = vpack.c.b16 %v3256, %v3251
              %v3322 = vpack.c.b16 %v3262, %v3257
              %v3323 = vpack.c.b16 %v3263, %v3258
              %v3324 = vpack.c.b16 %v3264, %v3259
              %v3325 = vpack.c.b16 %v3265, %v3260
              %v3326 = vpack.c.b16 %v3266, %v3261
              %v3327 = vpack.c.b16 %v3272, %v3267
              %v3328 = vpack.c.b16 %v3273, %v3268
              %v3329 = vpack.c.b16 %v3274, %v3269
              %v3330 = vpack.c.b16 %v3275, %v3270
              %v3331 = vpack.c.b16 %v3276, %v3271
              %v3332 = vpack.c.b16 %v3282, %v3277
              %v3333 = vpack.c.b16 %v3283, %v3278
              %v3334 = vpack.c.b16 %v3284, %v3279
              %v3335 = vpack.c.b16 %v3285, %v3280
              %v3336 = vpack.c.b16 %v3286, %v3281
              %v3337 = vpack.c.b16 %v3292, %v3287
              %v3338 = vpack.c.b16 %v3293, %v3288
              %v3339 = vpack.c.b16 %v3294, %v3289
              %v3340 = vpack.c.b16 %v3295, %v3290
              %v3341 = vpack.c.b16 %v3296, %v3291
              %v3342 = vpack.c.b16 %v3302, %v3297
              %v3343 = vpack.c.b16 %v3303, %v3298
              %v3344 = vpack.c.b16 %v3304, %v3299
              %v3345 = vpack.c.b16 %v3305, %v3300
              %v3346 = vpack.c.b16 %v3306, %v3301
              %3387 = vmatprep.subr.bf16.mxu0 %v3343
              %3388 = vmatpush1.bf16.msra.mxu0 %v3342
              %3389 = vmatprep.subr.bf16.mxu0 %v3338
              %3390 = vmatpush1.bf16.msra.mxu0 %v3337
              %3391 = vmatprep.subr.bf16.mxu0 %v3333
              %3392 = vmatpush1.bf16.msra.mxu0 %v3332
              %3393 = vmatprep.subr.bf16.mxu0 %v3328
              %3394 = vmatpush1.bf16.msra.mxu0 %v3327
              %3395 = vmatprep.subr.bf16.mxu0 %v3323
              %3396 = vmatpush1.bf16.msra.mxu0 %v3322
              %3397 = vmatprep.subr.bf16.mxu0 %v3318
              %3398 = vmatpush1.bf16.msra.mxu0 %v3317
              %3399 = vmatprep.subr.bf16.mxu0 %v3313
              %3400 = vmatpush1.bf16.msra.mxu0 %v3312
              %3401 = vmatprep.subr.bf16.mxu0 %v3308
              %3402 = vmatpush1.bf16.msra.mxu0 %v3307
              %3403 = vmatprep.subr.bf16.mxu0 0
              %3404 = vmatpush2.bf16.msra.mxu0 0
              %3405 = vmatprep.subr.bf16.mxu0 0
              %3406 = vmatpush2.bf16.msra.mxu0 0
              %3407 = vmatprep.subr.bf16.mxu0 0
              %3408 = vmatpush2.bf16.msra.mxu0 0
              %3409 = vmatprep.subr.bf16.mxu0 0
              %3410 = vmatpush2.bf16.msra.mxu0 0
              %3411 = vmatprep.subr.bf16.mxu0 0
              %3412 = vmatpush2.bf16.msra.mxu0 0
              %3413 = vmatprep.subr.bf16.mxu0 0
              %3414 = vmatpush2.bf16.msra.mxu0 0
              %3415 = vmatprep.subr.bf16.mxu0 0
              %3416 = vmatpush2.bf16.msra.mxu0 0
              %3417 = vmatprep.subr.bf16.mxu0 0
              %3418 = vmatpush2.bf16.msra.mxu0 0
              %3419 = vmatprep.mubr.bf16.mxu0 0
              %3420 = vmatmul.mubr.bf16.gmra.mxu0 %v2750
              %v3421 = vpop.f32.mrf.mxu0
              %v3422 = vadd.f32 %v3092, %v3421
              %v3423 = vpop.f32.mrf.mxu0
              %v3424 = vadd.f32 %v3094, %v3423
              %v3425 = vpop.f32.mrf.mxu0
              %v3426 = vpop.f32.mrf.mxu0
              %3427 = vdwg.mxu0
              %3428 = vmatprep.subr.bf16.mxu0 %v3345
              %3429 = vmatpush1.bf16.msra.mxu0 %v3344
              %3430 = vmatprep.subr.bf16.mxu0 %v3340
              %3431 = vmatpush1.bf16.msra.mxu0 %v3339
              %3432 = vmatprep.subr.bf16.mxu0 %v3335
              %3433 = vmatpush1.bf16.msra.mxu0 %v3334
              %3434 = vmatprep.subr.bf16.mxu0 %v3330
              %3435 = vmatpush1.bf16.msra.mxu0 %v3329
              %3436 = vmatprep.subr.bf16.mxu0 %v3325
              %3437 = vmatpush1.bf16.msra.mxu0 %v3324
              %3438 = vmatprep.subr.bf16.mxu0 %v3320
              %3439 = vmatpush1.bf16.msra.mxu0 %v3319
              %3440 = vmatprep.subr.bf16.mxu0 %v3315
              %3441 = vmatpush1.bf16.msra.mxu0 %v3314
              %3442 = vmatprep.subr.bf16.mxu0 %v3310
              %3443 = vmatpush1.bf16.msra.mxu0 %v3309
              %3444 = vmatprep.subr.bf16.mxu0 0
              %3445 = vmatpush2.bf16.msra.mxu0 0
              %3446 = vmatprep.subr.bf16.mxu0 0
              %3447 = vmatpush2.bf16.msra.mxu0 0
              %3448 = vmatprep.subr.bf16.mxu0 0
              %3449 = vmatpush2.bf16.msra.mxu0 0
              %3450 = vmatprep.subr.bf16.mxu0 0
              %3451 = vmatpush2.bf16.msra.mxu0 0
              %3452 = vmatprep.subr.bf16.mxu0 0
              %3453 = vmatpush2.bf16.msra.mxu0 0
              %3454 = vmatprep.subr.bf16.mxu0 0
              %3455 = vmatpush2.bf16.msra.mxu0 0
              %3456 = vmatprep.subr.bf16.mxu0 0
              %3457 = vmatpush2.bf16.msra.mxu0 0
              %3458 = vmatprep.subr.bf16.mxu0 0
              %3459 = vmatpush2.bf16.msra.mxu0 0
              %3460 = vmatprep.mubr.bf16.mxu0 0
              %3461 = vmatmul.mubr.bf16.gmra.mxu0 %v2750
              %v3462 = vpop.f32.mrf.mxu0
              %v3463 = vadd.f32 %v3133, %v3462
              %v3464 = vpop.f32.mrf.mxu0
              %v3465 = vadd.f32 %v3135, %v3464
              %v3466 = vpop.f32.mrf.mxu0
              %v3467 = vpop.f32.mrf.mxu0
              %3468 = vdwg.mxu0
              %3469 = vmatprep.subr.bf16.mxu0 0
              %3470 = vmatpush1.bf16.msra.mxu0 %v3346
              %3471 = vmatprep.subr.bf16.mxu0 0
              %3472 = vmatpush1.bf16.msra.mxu0 %v3341
              %3473 = vmatprep.subr.bf16.mxu0 0
              %3474 = vmatpush1.bf16.msra.mxu0 %v3336
              %3475 = vmatprep.subr.bf16.mxu0 0
              %3476 = vmatpush1.bf16.msra.mxu0 %v3331
              %3477 = vmatprep.subr.bf16.mxu0 0
              %3478 = vmatpush1.bf16.msra.mxu0 %v3326
              %3479 = vmatprep.subr.bf16.mxu0 0
              %3480 = vmatpush1.bf16.msra.mxu0 %v3321
              %3481 = vmatprep.subr.bf16.mxu0 0
              %3482 = vmatpush1.bf16.msra.mxu0 %v3316
              %3483 = vmatprep.subr.bf16.mxu0 0
              %3484 = vmatpush1.bf16.msra.mxu0 %v3311
              %3485 = vmatprep.subr.bf16.mxu0 0
              %3486 = vmatpush2.bf16.msra.mxu0 0
              %3487 = vmatprep.subr.bf16.mxu0 0
              %3488 = vmatpush2.bf16.msra.mxu0 0
              %3489 = vmatprep.subr.bf16.mxu0 0
              %3490 = vmatpush2.bf16.msra.mxu0 0
              %3491 = vmatprep.subr.bf16.mxu0 0
              %3492 = vmatpush2.bf16.msra.mxu0 0
              %3493 = vmatprep.subr.bf16.mxu0 0
              %3494 = vmatpush2.bf16.msra.mxu0 0
              %3495 = vmatprep.subr.bf16.mxu0 0
              %3496 = vmatpush2.bf16.msra.mxu0 0
              %3497 = vmatprep.subr.bf16.mxu0 0
              %3498 = vmatpush2.bf16.msra.mxu0 0
              %3499 = vmatprep.subr.bf16.mxu0 0
              %3500 = vmatpush2.bf16.msra.mxu0 0
              %3501 = vmatprep.mubr.bf16.mxu0 0
              %3502 = vmatmul.mubr.bf16.gmra.mxu0 %v2750
              %v3503 = vpop.f32.mrf.mxu0
              %v3504 = vadd.f32 %v3174, %v3503
              %v3505 = vpop.f32.mrf.mxu0
              %v3506 = vpop.f32.mrf.mxu0
              %v3507 = vpop.f32.mrf.mxu0
              %3508 = vdwg.mxu0
              %v3509 = vadd.f32 %v3422, %v256
              %v3510 = vadd.f32 %v3424, %v260
              %v3511 = vadd.f32 %v3463, %v264
              %v3512 = vadd.f32 %v3465, %v268
              %v3513 = vadd.f32 %v3504, %v272
              %v3514 = vmul.f32 %v3509, 0.5
              %v3515 = vtanh.pop %v3514
              %v3516 = vadd.f32 %v3515, 1.0
              %v3517 = vmul.f32 %v3516, 0.5
              %v3518 = vmul.f32 %v3510, 0.5
              %v3519 = vtanh.pop %v3518
              %v3520 = vadd.f32 %v3519, 1.0
              %v3521 = vmul.f32 %v3520, 0.5
              %v3522 = vtanh.pop %v3511
              %v3523 = vmul.f32 %v3512, 0.5
              %v3524 = vtanh.pop %v3523
              %v3525 = vadd.f32 %v3524, 1.0
              %v3526 = vmul.f32 %v3525, 0.5
              %v3527 = vmul.f32 %v3513, 0.5
              %v3528 = vtanh.pop %v3527
              %v3529 = vadd.f32 %v3528, 1.0
              %v3530 = vmul.f32 %v3529, 0.5
              %v3531 = vmul.f32 %v3517, %v3522
              %v3532 = vmul.f32 %v3526, %v2747
              %v3533 = vadd.f32 %v3531, %v3532
              %v3534 = vmul.f32 %v3530, %v2749
              %v3535 = vadd.f32 %v3533, %v3534
              %v3536 = vtanh.pop %v3535
              %v3537 = vmul.f32 %v3521, %v3536
              %3538 = vst [vmem:[#allocation3] sm:$0xff] %v3537
              %3539 = vst [vmem:[#allocation3 + $0x8] sm:$0xff] %v3535
            $region86: #{_fenwick_forward_stream.1} parent=69 // pred_fallthru
              _
            %p3540 = scmp.gt.s32.totalorder %s337, 4
            // Predicated region
            $region87: #{_fenwick_forward_stream.1} parent=69 // pred_check
              %p3541 = pneg %p3540
            $region88: #{_fenwick_forward_stream.1} parent=69 // pred_check_branch
              %3543 = sbr.rel (%p3541) target = $region90
            $region89: #{_fenwick_forward_stream.1} parent=69 // pred_region
              %s3544 = scalar_lea.vmem [#allocation2], 64
              %v3545 = vld [vmem:[%s3544] sm:$0xff]
              %v3546 = vld [vmem:[%s3544 + $0x8] sm:$0xff]
              %v3547 = vld [vmem:[#allocation3] sm:$0xff]
              %v3548 = vld [vmem:[#allocation3 + $0x8] sm:$0xff]
              %v3549 = vpack.c.bf16 %v3545, %v3545
              %v3550 = vld [vmem:[%s0] sm:$0xff]
              %v3551 = vld [vmem:[%s0 + $0x8] sm:$0xff]
              %v3552 = vld [vmem:[%s0 + $0x10] sm:$0xf]
              %v3553 = vld [vmem:[%s0 + $0x14] sm:$0xff]
              %v3554 = vld [vmem:[%s0 + $0x1c] sm:$0xff]
              %v3555 = vld [vmem:[%s0 + $0x24] sm:$0xf]
              %v3556 = vld [vmem:[%s0 + $0x28] sm:$0xff]
              %v3557 = vld [vmem:[%s0 + $0x30] sm:$0xff]
              %v3558 = vld [vmem:[%s0 + $0x38] sm:$0xf]
              %v3559 = vld [vmem:[%s0 + $0x3c] sm:$0xff]
              %v3560 = vld [vmem:[%s0 + $0x44] sm:$0xff]
              %v3561 = vld [vmem:[%s0 + $0x4c] sm:$0xf]
              %v3562 = vld [vmem:[%s0 + $0x50] sm:$0xff]
              %v3563 = vld [vmem:[%s0 + $0x58] sm:$0xff]
              %v3564 = vld [vmem:[%s0 + $0x60] sm:$0xf]
              %v3565 = vld [vmem:[%s0 + $0x64] sm:$0xff]
              %v3566 = vld [vmem:[%s0 + $0x6c] sm:$0xff]
              %v3567 = vld [vmem:[%s0 + $0x74] sm:$0xf]
              %v3568 = vld [vmem:[%s0 + $0x78] sm:$0xff]
              %v3569 = vld [vmem:[%s0 + $0x80] sm:$0xff]
              %v3570 = vld [vmem:[%s0 + $0x88] sm:$0xf]
              %v3571 = vld [vmem:[%s0 + $0x8c] sm:$0xff]
              %v3572 = vld [vmem:[%s0 + $0x94] sm:$0xff]
              %v3573 = vld [vmem:[%s0 + $0x9c] sm:$0xf]
              %v3574 = vld [vmem:[%s0 + $0xa0] sm:$0xff]
              %v3575 = vld [vmem:[%s0 + $0xa8] sm:$0xff]
              %v3576 = vld [vmem:[%s0 + $0xb0] sm:$0xf]
              %v3577 = vld [vmem:[%s0 + $0xb4] sm:$0xff]
              %v3578 = vld [vmem:[%s0 + $0xbc] sm:$0xff]
              %v3579 = vld [vmem:[%s0 + $0xc4] sm:$0xf]
              %v3580 = vld [vmem:[%s0 + $0xc8] sm:$0xff]
              %v3581 = vld [vmem:[%s0 + $0xd0] sm:$0xff]
              %v3582 = vld [vmem:[%s0 + $0xd8] sm:$0xf]
              %v3583 = vld [vmem:[%s0 + $0xdc] sm:$0xff]
              %v3584 = vld [vmem:[%s0 + $0xe4] sm:$0xff]
              %v3585 = vld [vmem:[%s0 + $0xec] sm:$0xf]
              %v3586 = vld [vmem:[%s0 + $0xf0] sm:$0xff]
              %v3587 = vld [vmem:[%s0 + $0xf8] sm:$0xff]
              %v3588 = vld [vmem:[%s0 + $0x100] sm:$0xf]
              %v3589 = vld [vmem:[%s0 + $0x104] sm:$0xff]
              %v3590 = vld [vmem:[%s0 + $0x10c] sm:$0xff]
              %v3591 = vld [vmem:[%s0 + $0x114] sm:$0xf]
              %v3592 = vld [vmem:[%s0 + $0x118] sm:$0xff]
              %v3593 = vld [vmem:[%s0 + $0x120] sm:$0xff]
              %v3594 = vld [vmem:[%s0 + $0x128] sm:$0xf]
              %v3595 = vld [vmem:[%s0 + $0x12c] sm:$0xff]
              %v3596 = vld [vmem:[%s0 + $0x134] sm:$0xff]
              %v3597 = vld [vmem:[%s0 + $0x13c] sm:$0xf]
              %v3598 = vpack.c.bf16 %v3547, %v3547
              %s3599 = scalar_lea.vmem %s0, 320
              %v3600 = vld [vmem:[%s3599] sm:$0xff]
              %v3601 = vld [vmem:[%s3599 + $0x8] sm:$0xff]
              %v3602 = vld [vmem:[%s3599 + $0x10] sm:$0xf]
              %v3603 = vld [vmem:[%s3599 + $0x14] sm:$0xff]
              %v3604 = vld [vmem:[%s3599 + $0x1c] sm:$0xff]
              %v3605 = vld [vmem:[%s3599 + $0x24] sm:$0xf]
              %v3606 = vld [vmem:[%s3599 + $0x28] sm:$0xff]
              %v3607 = vld [vmem:[%s3599 + $0x30] sm:$0xff]
              %v3608 = vld [vmem:[%s3599 + $0x38] sm:$0xf]
              %v3609 = vld [vmem:[%s3599 + $0x3c] sm:$0xff]
              %v3610 = vld [vmem:[%s3599 + $0x44] sm:$0xff]
              %v3611 = vld [vmem:[%s3599 + $0x4c] sm:$0xf]
              %v3612 = vld [vmem:[%s3599 + $0x50] sm:$0xff]
              %v3613 = vld [vmem:[%s3599 + $0x58] sm:$0xff]
              %v3614 = vld [vmem:[%s3599 + $0x60] sm:$0xf]
              %v3615 = vld [vmem:[%s3599 + $0x64] sm:$0xff]
              %v3616 = vld [vmem:[%s3599 + $0x6c] sm:$0xff]
              %v3617 = vld [vmem:[%s3599 + $0x74] sm:$0xf]
              %v3618 = vld [vmem:[%s3599 + $0x78] sm:$0xff]
              %v3619 = vld [vmem:[%s3599 + $0x80] sm:$0xff]
              %v3620 = vld [vmem:[%s3599 + $0x88] sm:$0xf]
              %v3621 = vld [vmem:[%s3599 + $0x8c] sm:$0xff]
              %v3622 = vld [vmem:[%s3599 + $0x94] sm:$0xff]
              %v3623 = vld [vmem:[%s3599 + $0x9c] sm:$0xf]
              %v3624 = vld [vmem:[%s3599 + $0xa0] sm:$0xff]
              %v3625 = vld [vmem:[%s3599 + $0xa8] sm:$0xff]
              %v3626 = vld [vmem:[%s3599 + $0xb0] sm:$0xf]
              %v3627 = vld [vmem:[%s3599 + $0xb4] sm:$0xff]
              %v3628 = vld [vmem:[%s3599 + $0xbc] sm:$0xff]
              %v3629 = vld [vmem:[%s3599 + $0xc4] sm:$0xf]
              %v3630 = vld [vmem:[%s3599 + $0xc8] sm:$0xff]
              %v3631 = vld [vmem:[%s3599 + $0xd0] sm:$0xff]
              %v3632 = vld [vmem:[%s3599 + $0xd8] sm:$0xf]
              %v3633 = vld [vmem:[%s3599 + $0xdc] sm:$0xff]
              %v3634 = vld [vmem:[%s3599 + $0xe4] sm:$0xff]
              %v3635 = vld [vmem:[%s3599 + $0xec] sm:$0xf]
              %v3636 = vld [vmem:[%s3599 + $0xf0] sm:$0xff]
              %v3637 = vld [vmem:[%s3599 + $0xf8] sm:$0xff]
              %v3638 = vld [vmem:[%s3599 + $0x100] sm:$0xf]
              %v3639 = vld [vmem:[%s3599 + $0x104] sm:$0xff]
              %v3640 = vld [vmem:[%s3599 + $0x10c] sm:$0xff]
              %v3641 = vld [vmem:[%s3599 + $0x114] sm:$0xf]
              %v3642 = vld [vmem:[%s3599 + $0x118] sm:$0xff]
              %v3643 = vld [vmem:[%s3599 + $0x120] sm:$0xff]
              %v3644 = vld [vmem:[%s3599 + $0x128] sm:$0xf]
              %v3645 = vld [vmem:[%s3599 + $0x12c] sm:$0xff]
              %v3646 = vld [vmem:[%s3599 + $0x134] sm:$0xff]
              %v3647 = vld [vmem:[%s3599 + $0x13c] sm:$0xf]
              %v3696 = vunpack.c.l.b16 %v3600
              %v3697 = vunpack.c.h.b16 %v3600
              %v3698 = vunpack.c.l.b16 %v3601
              %v3699 = vunpack.c.h.b16 %v3601
              %v3700 = vunpack.c.l.b16 %v3602
              %v3701 = vunpack.c.l.b16 %v3603
              %v3702 = vunpack.c.h.b16 %v3603
              %v3703 = vunpack.c.l.b16 %v3604
              %v3704 = vunpack.c.h.b16 %v3604
              %v3705 = vunpack.c.l.b16 %v3605
              %v3706 = vunpack.c.l.b16 %v3606
              %v3707 = vunpack.c.h.b16 %v3606
              %v3708 = vunpack.c.l.b16 %v3607
              %v3709 = vunpack.c.h.b16 %v3607
              %v3710 = vunpack.c.l.b16 %v3608
              %v3711 = vunpack.c.l.b16 %v3609
              %v3712 = vunpack.c.h.b16 %v3609
              %v3713 = vunpack.c.l.b16 %v3610
              %v3714 = vunpack.c.h.b16 %v3610
              %v3715 = vunpack.c.l.b16 %v3611
              %v3716 = vunpack.c.l.b16 %v3612
              %v3717 = vunpack.c.h.b16 %v3612
              %v3718 = vunpack.c.l.b16 %v3613
              %v3719 = vunpack.c.h.b16 %v3613
              %v3720 = vunpack.c.l.b16 %v3614
              %v3721 = vunpack.c.l.b16 %v3615
              %v3722 = vunpack.c.h.b16 %v3615
              %v3723 = vunpack.c.l.b16 %v3616
              %v3724 = vunpack.c.h.b16 %v3616
              %v3725 = vunpack.c.l.b16 %v3617
              %v3726 = vunpack.c.l.b16 %v3618
              %v3727 = vunpack.c.h.b16 %v3618
              %v3728 = vunpack.c.l.b16 %v3619
              %v3729 = vunpack.c.h.b16 %v3619
              %v3730 = vunpack.c.l.b16 %v3620
              %v3731 = vunpack.c.l.b16 %v3621
              %v3732 = vunpack.c.h.b16 %v3621
              %v3733 = vunpack.c.l.b16 %v3622
              %v3734 = vunpack.c.h.b16 %v3622
              %v3735 = vunpack.c.l.b16 %v3623
              %v3736 = vunpack.c.l.b16 %v3624
              %v3737 = vunpack.c.h.b16 %v3624
              %v3738 = vunpack.c.l.b16 %v3625
              %v3739 = vunpack.c.h.b16 %v3625
              %v3740 = vunpack.c.l.b16 %v3626
              %v3741 = vunpack.c.l.b16 %v3627
              %v3742 = vunpack.c.h.b16 %v3627
              %v3743 = vunpack.c.l.b16 %v3628
              %v3744 = vunpack.c.h.b16 %v3628
              %v3745 = vunpack.c.l.b16 %v3629
              %v3746 = vunpack.c.l.b16 %v3630
              %v3747 = vunpack.c.h.b16 %v3630
              %v3748 = vunpack.c.l.b16 %v3631
              %v3749 = vunpack.c.h.b16 %v3631
              %v3750 = vunpack.c.l.b16 %v3632
              %v3751 = vunpack.c.l.b16 %v3633
              %v3752 = vunpack.c.h.b16 %v3633
              %v3753 = vunpack.c.l.b16 %v3634
              %v3754 = vunpack.c.h.b16 %v3634
              %v3755 = vunpack.c.l.b16 %v3635
              %v3756 = vunpack.c.l.b16 %v3636
              %v3757 = vunpack.c.h.b16 %v3636
              %v3758 = vunpack.c.l.b16 %v3637
              %v3759 = vunpack.c.h.b16 %v3637
              %v3760 = vunpack.c.l.b16 %v3638
              %v3761 = vunpack.c.l.b16 %v3639
              %v3762 = vunpack.c.h.b16 %v3639
              %v3763 = vunpack.c.l.b16 %v3640
              %v3764 = vunpack.c.h.b16 %v3640
              %v3765 = vunpack.c.l.b16 %v3641
              %v3766 = vunpack.c.l.b16 %v3642
              %v3767 = vunpack.c.h.b16 %v3642
              %v3768 = vunpack.c.l.b16 %v3643
              %v3769 = vunpack.c.h.b16 %v3643
              %v3770 = vunpack.c.l.b16 %v3644
              %v3771 = vunpack.c.l.b16 %v3645
              %v3772 = vunpack.c.h.b16 %v3645
              %v3773 = vunpack.c.l.b16 %v3646
              %v3774 = vunpack.c.h.b16 %v3646
              %v3775 = vunpack.c.l.b16 %v3647
              %v3776 = vpack.c.b16 %v3701, %v3696
              %v3777 = vpack.c.b16 %v3702, %v3697
              %v3778 = vpack.c.b16 %v3703, %v3698
              %v3779 = vpack.c.b16 %v3704, %v3699
              %v3780 = vpack.c.b16 %v3705, %v3700
              %v3781 = vpack.c.b16 %v3711, %v3706
              %v3782 = vpack.c.b16 %v3712, %v3707
              %v3783 = vpack.c.b16 %v3713, %v3708
              %v3784 = vpack.c.b16 %v3714, %v3709
              %v3785 = vpack.c.b16 %v3715, %v3710
              %v3786 = vpack.c.b16 %v3721, %v3716
              %v3787 = vpack.c.b16 %v3722, %v3717
              %v3788 = vpack.c.b16 %v3723, %v3718
              %v3789 = vpack.c.b16 %v3724, %v3719
              %v3790 = vpack.c.b16 %v3725, %v3720
              %v3791 = vpack.c.b16 %v3731, %v3726
              %v3792 = vpack.c.b16 %v3732, %v3727
              %v3793 = vpack.c.b16 %v3733, %v3728
              %v3794 = vpack.c.b16 %v3734, %v3729
              %v3795 = vpack.c.b16 %v3735, %v3730
              %v3796 = vpack.c.b16 %v3741, %v3736
              %v3797 = vpack.c.b16 %v3742, %v3737
              %v3798 = vpack.c.b16 %v3743, %v3738
              %v3799 = vpack.c.b16 %v3744, %v3739
              %v3800 = vpack.c.b16 %v3745, %v3740
              %v3801 = vpack.c.b16 %v3751, %v3746
              %v3802 = vpack.c.b16 %v3752, %v3747
              %v3803 = vpack.c.b16 %v3753, %v3748
              %v3804 = vpack.c.b16 %v3754, %v3749
              %v3805 = vpack.c.b16 %v3755, %v3750
              %v3806 = vpack.c.b16 %v3761, %v3756
              %v3807 = vpack.c.b16 %v3762, %v3757
              %v3808 = vpack.c.b16 %v3763, %v3758
              %v3809 = vpack.c.b16 %v3764, %v3759
              %v3810 = vpack.c.b16 %v3765, %v3760
              %v3811 = vpack.c.b16 %v3771, %v3766
              %v3812 = vpack.c.b16 %v3772, %v3767
              %v3813 = vpack.c.b16 %v3773, %v3768
              %v3814 = vpack.c.b16 %v3774, %v3769
              %v3815 = vpack.c.b16 %v3775, %v3770
              %3856 = vmatprep.subr.bf16.mxu0 %v3812
              %3857 = vmatpush1.bf16.msra.mxu0 %v3811
              %3858 = vmatprep.subr.bf16.mxu0 %v3807
              %3859 = vmatpush1.bf16.msra.mxu0 %v3806
              %3860 = vmatprep.subr.bf16.mxu0 %v3802
              %3861 = vmatpush1.bf16.msra.mxu0 %v3801
              %3862 = vmatprep.subr.bf16.mxu0 %v3797
              %3863 = vmatpush1.bf16.msra.mxu0 %v3796
              %3864 = vmatprep.subr.bf16.mxu0 %v3792
              %3865 = vmatpush1.bf16.msra.mxu0 %v3791
              %3866 = vmatprep.subr.bf16.mxu0 %v3787
              %3867 = vmatpush1.bf16.msra.mxu0 %v3786
              %3868 = vmatprep.subr.bf16.mxu0 %v3782
              %3869 = vmatpush1.bf16.msra.mxu0 %v3781
              %3870 = vmatprep.subr.bf16.mxu0 %v3777
              %3871 = vmatpush1.bf16.msra.mxu0 %v3776
              %3872 = vmatprep.subr.bf16.mxu0 0
              %3873 = vmatpush2.bf16.msra.mxu0 0
              %3874 = vmatprep.subr.bf16.mxu0 0
              %3875 = vmatpush2.bf16.msra.mxu0 0
              %3876 = vmatprep.subr.bf16.mxu0 0
              %3877 = vmatpush2.bf16.msra.mxu0 0
              %3878 = vmatprep.subr.bf16.mxu0 0
              %3879 = vmatpush2.bf16.msra.mxu0 0
              %3880 = vmatprep.subr.bf16.mxu0 0
              %3881 = vmatpush2.bf16.msra.mxu0 0
              %3882 = vmatprep.subr.bf16.mxu0 0
              %3883 = vmatpush2.bf16.msra.mxu0 0
              %3884 = vmatprep.subr.bf16.mxu0 0
              %3885 = vmatpush2.bf16.msra.mxu0 0
              %3886 = vmatprep.subr.bf16.mxu0 0
              %3887 = vmatpush2.bf16.msra.mxu0 0
              %3888 = vmatprep.mubr.bf16.mxu0 0
              %3889 = vmatmul.mubr.bf16.gmra.mxu0 %v3598
              %v3890 = vpop.f32.mrf.mxu0
              %v3891 = vadd.f32 0.0, %v3890
              %v3892 = vpop.f32.mrf.mxu0
              %v3893 = vadd.f32 0.0, %v3892
              %v3894 = vpop.f32.mrf.mxu0
              %v3895 = vpop.f32.mrf.mxu0
              %3896 = vdwg.mxu0
              %3897 = vmatprep.subr.bf16.mxu0 %v3814
              %3898 = vmatpush1.bf16.msra.mxu0 %v3813
              %3899 = vmatprep.subr.bf16.mxu0 %v3809
              %3900 = vmatpush1.bf16.msra.mxu0 %v3808
              %3901 = vmatprep.subr.bf16.mxu0 %v3804
              %3902 = vmatpush1.bf16.msra.mxu0 %v3803
              %3903 = vmatprep.subr.bf16.mxu0 %v3799
              %3904 = vmatpush1.bf16.msra.mxu0 %v3798
              %3905 = vmatprep.subr.bf16.mxu0 %v3794
              %3906 = vmatpush1.bf16.msra.mxu0 %v3793
              %3907 = vmatprep.subr.bf16.mxu0 %v3789
              %3908 = vmatpush1.bf16.msra.mxu0 %v3788
              %3909 = vmatprep.subr.bf16.mxu0 %v3784
              %3910 = vmatpush1.bf16.msra.mxu0 %v3783
              %3911 = vmatprep.subr.bf16.mxu0 %v3779
              %3912 = vmatpush1.bf16.msra.mxu0 %v3778
              %3913 = vmatprep.subr.bf16.mxu0 0
              %3914 = vmatpush2.bf16.msra.mxu0 0
              %3915 = vmatprep.subr.bf16.mxu0 0
              %3916 = vmatpush2.bf16.msra.mxu0 0
              %3917 = vmatprep.subr.bf16.mxu0 0
              %3918 = vmatpush2.bf16.msra.mxu0 0
              %3919 = vmatprep.subr.bf16.mxu0 0
              %3920 = vmatpush2.bf16.msra.mxu0 0
              %3921 = vmatprep.subr.bf16.mxu0 0
              %3922 = vmatpush2.bf16.msra.mxu0 0
              %3923 = vmatprep.subr.bf16.mxu0 0
              %3924 = vmatpush2.bf16.msra.mxu0 0
              %3925 = vmatprep.subr.bf16.mxu0 0
              %3926 = vmatpush2.bf16.msra.mxu0 0
              %3927 = vmatprep.subr.bf16.mxu0 0
              %3928 = vmatpush2.bf16.msra.mxu0 0
              %3929 = vmatprep.mubr.bf16.mxu0 0
              %3930 = vmatmul.mubr.bf16.gmra.mxu0 %v3598
              %v3931 = vpop.f32.mrf.mxu0
              %v3932 = vadd.f32 0.0, %v3931
              %v3933 = vpop.f32.mrf.mxu0
              %v3934 = vadd.f32 0.0, %v3933
              %v3935 = vpop.f32.mrf.mxu0
              %v3936 = vpop.f32.mrf.mxu0
              %3937 = vdwg.mxu0
              %3938 = vmatprep.subr.bf16.mxu0 0
              %3939 = vmatpush1.bf16.msra.mxu0 %v3815
              %3940 = vmatprep.subr.bf16.mxu0 0
              %3941 = vmatpush1.bf16.msra.mxu0 %v3810
              %3942 = vmatprep.subr.bf16.mxu0 0
              %3943 = vmatpush1.bf16.msra.mxu0 %v3805
              %3944 = vmatprep.subr.bf16.mxu0 0
              %3945 = vmatpush1.bf16.msra.mxu0 %v3800
              %3946 = vmatprep.subr.bf16.mxu0 0
              %3947 = vmatpush1.bf16.msra.mxu0 %v3795
              %3948 = vmatprep.subr.bf16.mxu0 0
              %3949 = vmatpush1.bf16.msra.mxu0 %v3790
              %3950 = vmatprep.subr.bf16.mxu0 0
              %3951 = vmatpush1.bf16.msra.mxu0 %v3785
              %3952 = vmatprep.subr.bf16.mxu0 0
              %3953 = vmatpush1.bf16.msra.mxu0 %v3780
              %3954 = vmatprep.subr.bf16.mxu0 0
              %3955 = vmatpush2.bf16.msra.mxu0 0
              %3956 = vmatprep.subr.bf16.mxu0 0
              %3957 = vmatpush2.bf16.msra.mxu0 0
              %3958 = vmatprep.subr.bf16.mxu0 0
              %3959 = vmatpush2.bf16.msra.mxu0 0
              %3960 = vmatprep.subr.bf16.mxu0 0
              %3961 = vmatpush2.bf16.msra.mxu0 0
              %3962 = vmatprep.subr.bf16.mxu0 0
              %3963 = vmatpush2.bf16.msra.mxu0 0
              %3964 = vmatprep.subr.bf16.mxu0 0
              %3965 = vmatpush2.bf16.msra.mxu0 0
              %3966 = vmatprep.subr.bf16.mxu0 0
              %3967 = vmatpush2.bf16.msra.mxu0 0
              %3968 = vmatprep.subr.bf16.mxu0 0
              %3969 = vmatpush2.bf16.msra.mxu0 0
              %3970 = vmatprep.mubr.bf16.mxu0 0
              %3971 = vmatmul.mubr.bf16.gmra.mxu0 %v3598
              %v3972 = vpop.f32.mrf.mxu0
              %v3973 = vadd.f32 0.0, %v3972
              %v3974 = vpop.f32.mrf.mxu0
              %v3975 = vpop.f32.mrf.mxu0
              %v3976 = vpop.f32.mrf.mxu0
              %3977 = vdwg.mxu0
              %v4026 = vunpack.c.l.b16 %v3550
              %v4027 = vunpack.c.h.b16 %v3550
              %v4028 = vunpack.c.l.b16 %v3551
              %v4029 = vunpack.c.h.b16 %v3551
              %v4030 = vunpack.c.l.b16 %v3552
              %v4031 = vunpack.c.l.b16 %v3553
              %v4032 = vunpack.c.h.b16 %v3553
              %v4033 = vunpack.c.l.b16 %v3554
              %v4034 = vunpack.c.h.b16 %v3554
              %v4035 = vunpack.c.l.b16 %v3555
              %v4036 = vunpack.c.l.b16 %v3556
              %v4037 = vunpack.c.h.b16 %v3556
              %v4038 = vunpack.c.l.b16 %v3557
              %v4039 = vunpack.c.h.b16 %v3557
              %v4040 = vunpack.c.l.b16 %v3558
              %v4041 = vunpack.c.l.b16 %v3559
              %v4042 = vunpack.c.h.b16 %v3559
              %v4043 = vunpack.c.l.b16 %v3560
              %v4044 = vunpack.c.h.b16 %v3560
              %v4045 = vunpack.c.l.b16 %v3561
              %v4046 = vunpack.c.l.b16 %v3562
              %v4047 = vunpack.c.h.b16 %v3562
              %v4048 = vunpack.c.l.b16 %v3563
              %v4049 = vunpack.c.h.b16 %v3563
              %v4050 = vunpack.c.l.b16 %v3564
              %v4051 = vunpack.c.l.b16 %v3565
              %v4052 = vunpack.c.h.b16 %v3565
              %v4053 = vunpack.c.l.b16 %v3566
              %v4054 = vunpack.c.h.b16 %v3566
              %v4055 = vunpack.c.l.b16 %v3567
              %v4056 = vunpack.c.l.b16 %v3568
              %v4057 = vunpack.c.h.b16 %v3568
              %v4058 = vunpack.c.l.b16 %v3569
              %v4059 = vunpack.c.h.b16 %v3569
              %v4060 = vunpack.c.l.b16 %v3570
              %v4061 = vunpack.c.l.b16 %v3571
              %v4062 = vunpack.c.h.b16 %v3571
              %v4063 = vunpack.c.l.b16 %v3572
              %v4064 = vunpack.c.h.b16 %v3572
              %v4065 = vunpack.c.l.b16 %v3573
              %v4066 = vunpack.c.l.b16 %v3574
              %v4067 = vunpack.c.h.b16 %v3574
              %v4068 = vunpack.c.l.b16 %v3575
              %v4069 = vunpack.c.h.b16 %v3575
              %v4070 = vunpack.c.l.b16 %v3576
              %v4071 = vunpack.c.l.b16 %v3577
              %v4072 = vunpack.c.h.b16 %v3577
              %v4073 = vunpack.c.l.b16 %v3578
              %v4074 = vunpack.c.h.b16 %v3578
              %v4075 = vunpack.c.l.b16 %v3579
              %v4076 = vunpack.c.l.b16 %v3580
              %v4077 = vunpack.c.h.b16 %v3580
              %v4078 = vunpack.c.l.b16 %v3581
              %v4079 = vunpack.c.h.b16 %v3581
              %v4080 = vunpack.c.l.b16 %v3582
              %v4081 = vunpack.c.l.b16 %v3583
              %v4082 = vunpack.c.h.b16 %v3583
              %v4083 = vunpack.c.l.b16 %v3584
              %v4084 = vunpack.c.h.b16 %v3584
              %v4085 = vunpack.c.l.b16 %v3585
              %v4086 = vunpack.c.l.b16 %v3586
              %v4087 = vunpack.c.h.b16 %v3586
              %v4088 = vunpack.c.l.b16 %v3587
              %v4089 = vunpack.c.h.b16 %v3587
              %v4090 = vunpack.c.l.b16 %v3588
              %v4091 = vunpack.c.l.b16 %v3589
              %v4092 = vunpack.c.h.b16 %v3589
              %v4093 = vunpack.c.l.b16 %v3590
              %v4094 = vunpack.c.h.b16 %v3590
              %v4095 = vunpack.c.l.b16 %v3591
              %v4096 = vunpack.c.l.b16 %v3592
              %v4097 = vunpack.c.h.b16 %v3592
              %v4098 = vunpack.c.l.b16 %v3593
              %v4099 = vunpack.c.h.b16 %v3593
              %v4100 = vunpack.c.l.b16 %v3594
              %v4101 = vunpack.c.l.b16 %v3595
              %v4102 = vunpack.c.h.b16 %v3595
              %v4103 = vunpack.c.l.b16 %v3596
              %v4104 = vunpack.c.h.b16 %v3596
              %v4105 = vunpack.c.l.b16 %v3597
              %v4106 = vpack.c.b16 %v4031, %v4026
              %v4107 = vpack.c.b16 %v4032, %v4027
              %v4108 = vpack.c.b16 %v4033, %v4028
              %v4109 = vpack.c.b16 %v4034, %v4029
              %v4110 = vpack.c.b16 %v4035, %v4030
              %v4111 = vpack.c.b16 %v4041, %v4036
              %v4112 = vpack.c.b16 %v4042, %v4037
              %v4113 = vpack.c.b16 %v4043, %v4038
              %v4114 = vpack.c.b16 %v4044, %v4039
              %v4115 = vpack.c.b16 %v4045, %v4040
              %v4116 = vpack.c.b16 %v4051, %v4046
              %v4117 = vpack.c.b16 %v4052, %v4047
              %v4118 = vpack.c.b16 %v4053, %v4048
              %v4119 = vpack.c.b16 %v4054, %v4049
              %v4120 = vpack.c.b16 %v4055, %v4050
              %v4121 = vpack.c.b16 %v4061, %v4056
              %v4122 = vpack.c.b16 %v4062, %v4057
              %v4123 = vpack.c.b16 %v4063, %v4058
              %v4124 = vpack.c.b16 %v4064, %v4059
              %v4125 = vpack.c.b16 %v4065, %v4060
              %v4126 = vpack.c.b16 %v4071, %v4066
              %v4127 = vpack.c.b16 %v4072, %v4067
              %v4128 = vpack.c.b16 %v4073, %v4068
              %v4129 = vpack.c.b16 %v4074, %v4069
              %v4130 = vpack.c.b16 %v4075, %v4070
              %v4131 = vpack.c.b16 %v4081, %v4076
              %v4132 = vpack.c.b16 %v4082, %v4077
              %v4133 = vpack.c.b16 %v4083, %v4078
              %v4134 = vpack.c.b16 %v4084, %v4079
              %v4135 = vpack.c.b16 %v4085, %v4080
              %v4136 = vpack.c.b16 %v4091, %v4086
              %v4137 = vpack.c.b16 %v4092, %v4087
              %v4138 = vpack.c.b16 %v4093, %v4088
              %v4139 = vpack.c.b16 %v4094, %v4089
              %v4140 = vpack.c.b16 %v4095, %v4090
              %v4141 = vpack.c.b16 %v4101, %v4096
              %v4142 = vpack.c.b16 %v4102, %v4097
              %v4143 = vpack.c.b16 %v4103, %v4098
              %v4144 = vpack.c.b16 %v4104, %v4099
              %v4145 = vpack.c.b16 %v4105, %v4100
              %4186 = vmatprep.subr.bf16.mxu0 %v4142
              %4187 = vmatpush1.bf16.msra.mxu0 %v4141
              %4188 = vmatprep.subr.bf16.mxu0 %v4137
              %4189 = vmatpush1.bf16.msra.mxu0 %v4136
              %4190 = vmatprep.subr.bf16.mxu0 %v4132
              %4191 = vmatpush1.bf16.msra.mxu0 %v4131
              %4192 = vmatprep.subr.bf16.mxu0 %v4127
              %4193 = vmatpush1.bf16.msra.mxu0 %v4126
              %4194 = vmatprep.subr.bf16.mxu0 %v4122
              %4195 = vmatpush1.bf16.msra.mxu0 %v4121
              %4196 = vmatprep.subr.bf16.mxu0 %v4117
              %4197 = vmatpush1.bf16.msra.mxu0 %v4116
              %4198 = vmatprep.subr.bf16.mxu0 %v4112
              %4199 = vmatpush1.bf16.msra.mxu0 %v4111
              %4200 = vmatprep.subr.bf16.mxu0 %v4107
              %4201 = vmatpush1.bf16.msra.mxu0 %v4106
              %4202 = vmatprep.subr.bf16.mxu0 0
              %4203 = vmatpush2.bf16.msra.mxu0 0
              %4204 = vmatprep.subr.bf16.mxu0 0
              %4205 = vmatpush2.bf16.msra.mxu0 0
              %4206 = vmatprep.subr.bf16.mxu0 0
              %4207 = vmatpush2.bf16.msra.mxu0 0
              %4208 = vmatprep.subr.bf16.mxu0 0
              %4209 = vmatpush2.bf16.msra.mxu0 0
              %4210 = vmatprep.subr.bf16.mxu0 0
              %4211 = vmatpush2.bf16.msra.mxu0 0
              %4212 = vmatprep.subr.bf16.mxu0 0
              %4213 = vmatpush2.bf16.msra.mxu0 0
              %4214 = vmatprep.subr.bf16.mxu0 0
              %4215 = vmatpush2.bf16.msra.mxu0 0
              %4216 = vmatprep.subr.bf16.mxu0 0
              %4217 = vmatpush2.bf16.msra.mxu0 0
              %4218 = vmatprep.mubr.bf16.mxu0 0
              %4219 = vmatmul.mubr.bf16.gmra.mxu0 %v3549
              %v4220 = vpop.f32.mrf.mxu0
              %v4221 = vadd.f32 %v3891, %v4220
              %v4222 = vpop.f32.mrf.mxu0
              %v4223 = vadd.f32 %v3893, %v4222
              %v4224 = vpop.f32.mrf.mxu0
              %v4225 = vpop.f32.mrf.mxu0
              %4226 = vdwg.mxu0
              %4227 = vmatprep.subr.bf16.mxu0 %v4144
              %4228 = vmatpush1.bf16.msra.mxu0 %v4143
              %4229 = vmatprep.subr.bf16.mxu0 %v4139
              %4230 = vmatpush1.bf16.msra.mxu0 %v4138
              %4231 = vmatprep.subr.bf16.mxu0 %v4134
              %4232 = vmatpush1.bf16.msra.mxu0 %v4133
              %4233 = vmatprep.subr.bf16.mxu0 %v4129
              %4234 = vmatpush1.bf16.msra.mxu0 %v4128
              %4235 = vmatprep.subr.bf16.mxu0 %v4124
              %4236 = vmatpush1.bf16.msra.mxu0 %v4123
              %4237 = vmatprep.subr.bf16.mxu0 %v4119
              %4238 = vmatpush1.bf16.msra.mxu0 %v4118
              %4239 = vmatprep.subr.bf16.mxu0 %v4114
              %4240 = vmatpush1.bf16.msra.mxu0 %v4113
              %4241 = vmatprep.subr.bf16.mxu0 %v4109
              %4242 = vmatpush1.bf16.msra.mxu0 %v4108
              %4243 = vmatprep.subr.bf16.mxu0 0
              %4244 = vmatpush2.bf16.msra.mxu0 0
              %4245 = vmatprep.subr.bf16.mxu0 0
              %4246 = vmatpush2.bf16.msra.mxu0 0
              %4247 = vmatprep.subr.bf16.mxu0 0
              %4248 = vmatpush2.bf16.msra.mxu0 0
              %4249 = vmatprep.subr.bf16.mxu0 0
              %4250 = vmatpush2.bf16.msra.mxu0 0
              %4251 = vmatprep.subr.bf16.mxu0 0
              %4252 = vmatpush2.bf16.msra.mxu0 0
              %4253 = vmatprep.subr.bf16.mxu0 0
              %4254 = vmatpush2.bf16.msra.mxu0 0
              %4255 = vmatprep.subr.bf16.mxu0 0
              %4256 = vmatpush2.bf16.msra.mxu0 0
              %4257 = vmatprep.subr.bf16.mxu0 0
              %4258 = vmatpush2.bf16.msra.mxu0 0
              %4259 = vmatprep.mubr.bf16.mxu0 0
              %4260 = vmatmul.mubr.bf16.gmra.mxu0 %v3549
              %v4261 = vpop.f32.mrf.mxu0
              %v4262 = vadd.f32 %v3932, %v4261
              %v4263 = vpop.f32.mrf.mxu0
              %v4264 = vadd.f32 %v3934, %v4263
              %v4265 = vpop.f32.mrf.mxu0
              %v4266 = vpop.f32.mrf.mxu0
              %4267 = vdwg.mxu0
              %4268 = vmatprep.subr.bf16.mxu0 0
              %4269 = vmatpush1.bf16.msra.mxu0 %v4145
              %4270 = vmatprep.subr.bf16.mxu0 0
              %4271 = vmatpush1.bf16.msra.mxu0 %v4140
              %4272 = vmatprep.subr.bf16.mxu0 0
              %4273 = vmatpush1.bf16.msra.mxu0 %v4135
              %4274 = vmatprep.subr.bf16.mxu0 0
              %4275 = vmatpush1.bf16.msra.mxu0 %v4130
              %4276 = vmatprep.subr.bf16.mxu0 0
              %4277 = vmatpush1.bf16.msra.mxu0 %v4125
              %4278 = vmatprep.subr.bf16.mxu0 0
              %4279 = vmatpush1.bf16.msra.mxu0 %v4120
              %4280 = vmatprep.subr.bf16.mxu0 0
              %4281 = vmatpush1.bf16.msra.mxu0 %v4115
              %4282 = vmatprep.subr.bf16.mxu0 0
              %4283 = vmatpush1.bf16.msra.mxu0 %v4110
              %4284 = vmatprep.subr.bf16.mxu0 0
              %4285 = vmatpush2.bf16.msra.mxu0 0
              %4286 = vmatprep.subr.bf16.mxu0 0
              %4287 = vmatpush2.bf16.msra.mxu0 0
              %4288 = vmatprep.subr.bf16.mxu0 0
              %4289 = vmatpush2.bf16.msra.mxu0 0
              %4290 = vmatprep.subr.bf16.mxu0 0
              %4291 = vmatpush2.bf16.msra.mxu0 0
              %4292 = vmatprep.subr.bf16.mxu0 0
              %4293 = vmatpush2.bf16.msra.mxu0 0
              %4294 = vmatprep.subr.bf16.mxu0 0
              %4295 = vmatpush2.bf16.msra.mxu0 0
              %4296 = vmatprep.subr.bf16.mxu0 0
              %4297 = vmatpush2.bf16.msra.mxu0 0
              %4298 = vmatprep.subr.bf16.mxu0 0
              %4299 = vmatpush2.bf16.msra.mxu0 0
              %4300 = vmatprep.mubr.bf16.mxu0 0
              %4301 = vmatmul.mubr.bf16.gmra.mxu0 %v3549
              %v4302 = vpop.f32.mrf.mxu0
              %v4303 = vadd.f32 %v3973, %v4302
              %v4304 = vpop.f32.mrf.mxu0
              %v4305 = vpop.f32.mrf.mxu0
              %v4306 = vpop.f32.mrf.mxu0
              %4307 = vdwg.mxu0
              %v4308 = vadd.f32 %v4221, %v256
              %v4309 = vadd.f32 %v4223, %v260
              %v4310 = vadd.f32 %v4262, %v264
              %v4311 = vadd.f32 %v4264, %v268
              %v4312 = vadd.f32 %v4303, %v272
              %v4313 = vmul.f32 %v4308, 0.5
              %v4314 = vtanh.pop %v4313
              %v4315 = vadd.f32 %v4314, 1.0
              %v4316 = vmul.f32 %v4315, 0.5
              %v4317 = vmul.f32 %v4309, 0.5
              %v4318 = vtanh.pop %v4317
              %v4319 = vadd.f32 %v4318, 1.0
              %v4320 = vmul.f32 %v4319, 0.5
              %v4321 = vtanh.pop %v4310
              %v4322 = vmul.f32 %v4311, 0.5
              %v4323 = vtanh.pop %v4322
              %v4324 = vadd.f32 %v4323, 1.0
              %v4325 = vmul.f32 %v4324, 0.5
              %v4326 = vmul.f32 %v4312, 0.5
              %v4327 = vtanh.pop %v4326
              %v4328 = vadd.f32 %v4327, 1.0
              %v4329 = vmul.f32 %v4328, 0.5
              %v4330 = vmul.f32 %v4316, %v4321
              %v4331 = vmul.f32 %v4325, %v3546
              %v4332 = vadd.f32 %v4330, %v4331
              %v4333 = vmul.f32 %v4329, %v3548
              %v4334 = vadd.f32 %v4332, %v4333
              %v4335 = vtanh.pop %v4334
              %v4336 = vmul.f32 %v4320, %v4335
              %4337 = vst [vmem:[#allocation3] sm:$0xff] %v4336
              %4338 = vst [vmem:[#allocation3 + $0x8] sm:$0xff] %v4334
            $region90: #{_fenwick_forward_stream.1} parent=69 // pred_fallthru
              _
            %v4339 = vld [vmem:[#allocation3] sm:$0xff]
            %v4340 = vld [vmem:[#allocation3 + $0x8] sm:$0xff]
            %s4341 = smul.u32 %s337, 2
            %s4342 = smul.addr %s4341, 8
            %s4343 = scalar_lea.vmem [#allocation2], %s4342
            %4344 = vst [vmem:[%s4343] sm:$0xff] %v4339
            %4345 = vst [vmem:[%s4343 + $0x8] sm:$0xff] %v4340
            %p4346 = scmp.lt.s32.totalorder %s337, 0
            %p4347 = scmp.eq.s32.totalorder %s319, 1
            %p4348 = pnand %p4346, %p4347
            %p4349 = pneg %p4348
            // Predicated region
            $region91: #{_fenwick_forward_stream.1} parent=69 // pred_check
              _
            $region92: #{_fenwick_forward_stream.1} parent=69 // pred_check_branch
              %4351 = sbr.rel (%p4348) target = $region94
            $region93: #{_fenwick_forward_stream.1} parent=69 // pred_region
              %v4352 = vld [vmem:[#allocation2] sm:$0xff]
              %v4353 = vld [vmem:[#allocation2 + $0x8] sm:$0xff]
              %v4354 = vld [vmem:[#allocation3] sm:$0xff]
              %v4355 = vld [vmem:[#allocation3 + $0x8] sm:$0xff]
              %v4356 = vpack.c.bf16 %v4354, %v4354
              %s4357 = scalar_lea.vmem %s0, 640
              %v4358 = vld [vmem:[%s4357] sm:$0xff]
              %v4359 = vld [vmem:[%s4357 + $0x8] sm:$0xff]
              %v4360 = vld [vmem:[%s4357 + $0x10] sm:$0xf]
              %v4361 = vld [vmem:[%s4357 + $0x14] sm:$0xff]
              %v4362 = vld [vmem:[%s4357 + $0x1c] sm:$0xff]
              %v4363 = vld [vmem:[%s4357 + $0x24] sm:$0xf]
              %v4364 = vld [vmem:[%s4357 + $0x28] sm:$0xff]
              %v4365 = vld [vmem:[%s4357 + $0x30] sm:$0xff]
              %v4366 = vld [vmem:[%s4357 + $0x38] sm:$0xf]
              %v4367 = vld [vmem:[%s4357 + $0x3c] sm:$0xff]
              %v4368 = vld [vmem:[%s4357 + $0x44] sm:$0xff]
              %v4369 = vld [vmem:[%s4357 + $0x4c] sm:$0xf]
              %v4370 = vld [vmem:[%s4357 + $0x50] sm:$0xff]
              %v4371 = vld [vmem:[%s4357 + $0x58] sm:$0xff]
              %v4372 = vld [vmem:[%s4357 + $0x60] sm:$0xf]
              %v4373 = vld [vmem:[%s4357 + $0x64] sm:$0xff]
              %v4374 = vld [vmem:[%s4357 + $0x6c] sm:$0xff]
              %v4375 = vld [vmem:[%s4357 + $0x74] sm:$0xf]
              %v4376 = vld [vmem:[%s4357 + $0x78] sm:$0xff]
              %v4377 = vld [vmem:[%s4357 + $0x80] sm:$0xff]
              %v4378 = vld [vmem:[%s4357 + $0x88] sm:$0xf]
              %v4379 = vld [vmem:[%s4357 + $0x8c] sm:$0xff]
              %v4380 = vld [vmem:[%s4357 + $0x94] sm:$0xff]
              %v4381 = vld [vmem:[%s4357 + $0x9c] sm:$0xf]
              %v4382 = vld [vmem:[%s4357 + $0xa0] sm:$0xff]
              %v4383 = vld [vmem:[%s4357 + $0xa8] sm:$0xff]
              %v4384 = vld [vmem:[%s4357 + $0xb0] sm:$0xf]
              %v4385 = vld [vmem:[%s4357 + $0xb4] sm:$0xff]
              %v4386 = vld [vmem:[%s4357 + $0xbc] sm:$0xff]
              %v4387 = vld [vmem:[%s4357 + $0xc4] sm:$0xf]
              %v4388 = vld [vmem:[%s4357 + $0xc8] sm:$0xff]
              %v4389 = vld [vmem:[%s4357 + $0xd0] sm:$0xff]
              %v4390 = vld [vmem:[%s4357 + $0xd8] sm:$0xf]
              %v4391 = vld [vmem:[%s4357 + $0xdc] sm:$0xff]
              %v4392 = vld [vmem:[%s4357 + $0xe4] sm:$0xff]
              %v4393 = vld [vmem:[%s4357 + $0xec] sm:$0xf]
              %v4394 = vld [vmem:[%s4357 + $0xf0] sm:$0xff]
              %v4395 = vld [vmem:[%s4357 + $0xf8] sm:$0xff]
              %v4396 = vld [vmem:[%s4357 + $0x100] sm:$0xf]
              %v4397 = vld [vmem:[%s4357 + $0x104] sm:$0xff]
              %v4398 = vld [vmem:[%s4357 + $0x10c] sm:$0xff]
              %v4399 = vld [vmem:[%s4357 + $0x114] sm:$0xf]
              %v4400 = vld [vmem:[%s4357 + $0x118] sm:$0xff]
              %v4401 = vld [vmem:[%s4357 + $0x120] sm:$0xff]
              %v4402 = vld [vmem:[%s4357 + $0x128] sm:$0xf]
              %v4403 = vld [vmem:[%s4357 + $0x12c] sm:$0xff]
              %v4404 = vld [vmem:[%s4357 + $0x134] sm:$0xff]
              %v4405 = vld [vmem:[%s4357 + $0x13c] sm:$0xf]
              %v4406 = vpack.c.bf16 %v4352, %v4352
              %s4407 = scalar_lea.vmem %s0, 960
              %v4408 = vld [vmem:[%s4407] sm:$0xff]
              %v4409 = vld [vmem:[%s4407 + $0x8] sm:$0xff]
              %v4410 = vld [vmem:[%s4407 + $0x10] sm:$0xf]
              %v4411 = vld [vmem:[%s4407 + $0x14] sm:$0xff]
              %v4412 = vld [vmem:[%s4407 + $0x1c] sm:$0xff]
              %v4413 = vld [vmem:[%s4407 + $0x24] sm:$0xf]
              %v4414 = vld [vmem:[%s4407 + $0x28] sm:$0xff]
              %v4415 = vld [vmem:[%s4407 + $0x30] sm:$0xff]
              %v4416 = vld [vmem:[%s4407 + $0x38] sm:$0xf]
              %v4417 = vld [vmem:[%s4407 + $0x3c] sm:$0xff]
              %v4418 = vld [vmem:[%s4407 + $0x44] sm:$0xff]
              %v4419 = vld [vmem:[%s4407 + $0x4c] sm:$0xf]
              %v4420 = vld [vmem:[%s4407 + $0x50] sm:$0xff]
              %v4421 = vld [vmem:[%s4407 + $0x58] sm:$0xff]
              %v4422 = vld [vmem:[%s4407 + $0x60] sm:$0xf]
              %v4423 = vld [vmem:[%s4407 + $0x64] sm:$0xff]
              %v4424 = vld [vmem:[%s4407 + $0x6c] sm:$0xff]
              %v4425 = vld [vmem:[%s4407 + $0x74] sm:$0xf]
              %v4426 = vld [vmem:[%s4407 + $0x78] sm:$0xff]
              %v4427 = vld [vmem:[%s4407 + $0x80] sm:$0xff]
              %v4428 = vld [vmem:[%s4407 + $0x88] sm:$0xf]
              %v4429 = vld [vmem:[%s4407 + $0x8c] sm:$0xff]
              %v4430 = vld [vmem:[%s4407 + $0x94] sm:$0xff]
              %v4431 = vld [vmem:[%s4407 + $0x9c] sm:$0xf]
              %v4432 = vld [vmem:[%s4407 + $0xa0] sm:$0xff]
              %v4433 = vld [vmem:[%s4407 + $0xa8] sm:$0xff]
              %v4434 = vld [vmem:[%s4407 + $0xb0] sm:$0xf]
              %v4435 = vld [vmem:[%s4407 + $0xb4] sm:$0xff]
              %v4436 = vld [vmem:[%s4407 + $0xbc] sm:$0xff]
              %v4437 = vld [vmem:[%s4407 + $0xc4] sm:$0xf]
              %v4438 = vld [vmem:[%s4407 + $0xc8] sm:$0xff]
              %v4439 = vld [vmem:[%s4407 + $0xd0] sm:$0xff]
              %v4440 = vld [vmem:[%s4407 + $0xd8] sm:$0xf]
              %v4441 = vld [vmem:[%s4407 + $0xdc] sm:$0xff]
              %v4442 = vld [vmem:[%s4407 + $0xe4] sm:$0xff]
              %v4443 = vld [vmem:[%s4407 + $0xec] sm:$0xf]
              %v4444 = vld [vmem:[%s4407 + $0xf0] sm:$0xff]
              %v4445 = vld [vmem:[%s4407 + $0xf8] sm:$0xff]
              %v4446 = vld [vmem:[%s4407 + $0x100] sm:$0xf]
              %v4447 = vld [vmem:[%s4407 + $0x104] sm:$0xff]
              %v4448 = vld [vmem:[%s4407 + $0x10c] sm:$0xff]
              %v4449 = vld [vmem:[%s4407 + $0x114] sm:$0xf]
              %v4450 = vld [vmem:[%s4407 + $0x118] sm:$0xff]
              %v4451 = vld [vmem:[%s4407 + $0x120] sm:$0xff]
              %v4452 = vld [vmem:[%s4407 + $0x128] sm:$0xf]
              %v4453 = vld [vmem:[%s4407 + $0x12c] sm:$0xff]
              %v4454 = vld [vmem:[%s4407 + $0x134] sm:$0xff]
              %v4455 = vld [vmem:[%s4407 + $0x13c] sm:$0xf]
              %v4504 = vunpack.c.l.b16 %v4408
              %v4505 = vunpack.c.h.b16 %v4408
              %v4506 = vunpack.c.l.b16 %v4409
              %v4507 = vunpack.c.h.b16 %v4409
              %v4508 = vunpack.c.l.b16 %v4410
              %v4509 = vunpack.c.l.b16 %v4411
              %v4510 = vunpack.c.h.b16 %v4411
              %v4511 = vunpack.c.l.b16 %v4412
              %v4512 = vunpack.c.h.b16 %v4412
              %v4513 = vunpack.c.l.b16 %v4413
              %v4514 = vunpack.c.l.b16 %v4414
              %v4515 = vunpack.c.h.b16 %v4414
              %v4516 = vunpack.c.l.b16 %v4415
              %v4517 = vunpack.c.h.b16 %v4415
              %v4518 = vunpack.c.l.b16 %v4416
              %v4519 = vunpack.c.l.b16 %v4417
              %v4520 = vunpack.c.h.b16 %v4417
              %v4521 = vunpack.c.l.b16 %v4418
              %v4522 = vunpack.c.h.b16 %v4418
              %v4523 = vunpack.c.l.b16 %v4419
              %v4524 = vunpack.c.l.b16 %v4420
              %v4525 = vunpack.c.h.b16 %v4420
              %v4526 = vunpack.c.l.b16 %v4421
              %v4527 = vunpack.c.h.b16 %v4421
              %v4528 = vunpack.c.l.b16 %v4422
              %v4529 = vunpack.c.l.b16 %v4423
              %v4530 = vunpack.c.h.b16 %v4423
              %v4531 = vunpack.c.l.b16 %v4424
              %v4532 = vunpack.c.h.b16 %v4424
              %v4533 = vunpack.c.l.b16 %v4425
              %v4534 = vunpack.c.l.b16 %v4426
              %v4535 = vunpack.c.h.b16 %v4426
              %v4536 = vunpack.c.l.b16 %v4427
              %v4537 = vunpack.c.h.b16 %v4427
              %v4538 = vunpack.c.l.b16 %v4428
              %v4539 = vunpack.c.l.b16 %v4429
              %v4540 = vunpack.c.h.b16 %v4429
              %v4541 = vunpack.c.l.b16 %v4430
              %v4542 = vunpack.c.h.b16 %v4430
              %v4543 = vunpack.c.l.b16 %v4431
              %v4544 = vunpack.c.l.b16 %v4432
              %v4545 = vunpack.c.h.b16 %v4432
              %v4546 = vunpack.c.l.b16 %v4433
              %v4547 = vunpack.c.h.b16 %v4433
              %v4548 = vunpack.c.l.b16 %v4434
              %v4549 = vunpack.c.l.b16 %v4435
              %v4550 = vunpack.c.h.b16 %v4435
              %v4551 = vunpack.c.l.b16 %v4436
              %v4552 = vunpack.c.h.b16 %v4436
              %v4553 = vunpack.c.l.b16 %v4437
              %v4554 = vunpack.c.l.b16 %v4438
              %v4555 = vunpack.c.h.b16 %v4438
              %v4556 = vunpack.c.l.b16 %v4439
              %v4557 = vunpack.c.h.b16 %v4439
              %v4558 = vunpack.c.l.b16 %v4440
              %v4559 = vunpack.c.l.b16 %v4441
              %v4560 = vunpack.c.h.b16 %v4441
              %v4561 = vunpack.c.l.b16 %v4442
              %v4562 = vunpack.c.h.b16 %v4442
              %v4563 = vunpack.c.l.b16 %v4443
              %v4564 = vunpack.c.l.b16 %v4444
              %v4565 = vunpack.c.h.b16 %v4444
              %v4566 = vunpack.c.l.b16 %v4445
              %v4567 = vunpack.c.h.b16 %v4445
              %v4568 = vunpack.c.l.b16 %v4446
              %v4569 = vunpack.c.l.b16 %v4447
              %v4570 = vunpack.c.h.b16 %v4447
              %v4571 = vunpack.c.l.b16 %v4448
              %v4572 = vunpack.c.h.b16 %v4448
              %v4573 = vunpack.c.l.b16 %v4449
              %v4574 = vunpack.c.l.b16 %v4450
              %v4575 = vunpack.c.h.b16 %v4450
              %v4576 = vunpack.c.l.b16 %v4451
              %v4577 = vunpack.c.h.b16 %v4451
              %v4578 = vunpack.c.l.b16 %v4452
              %v4579 = vunpack.c.l.b16 %v4453
              %v4580 = vunpack.c.h.b16 %v4453
              %v4581 = vunpack.c.l.b16 %v4454
              %v4582 = vunpack.c.h.b16 %v4454
              %v4583 = vunpack.c.l.b16 %v4455
              %v4584 = vpack.c.b16 %v4509, %v4504
              %v4585 = vpack.c.b16 %v4510, %v4505
              %v4586 = vpack.c.b16 %v4511, %v4506
              %v4587 = vpack.c.b16 %v4512, %v4507
              %v4588 = vpack.c.b16 %v4513, %v4508
              %v4589 = vpack.c.b16 %v4519, %v4514
              %v4590 = vpack.c.b16 %v4520, %v4515
              %v4591 = vpack.c.b16 %v4521, %v4516
              %v4592 = vpack.c.b16 %v4522, %v4517
              %v4593 = vpack.c.b16 %v4523, %v4518
              %v4594 = vpack.c.b16 %v4529, %v4524
              %v4595 = vpack.c.b16 %v4530, %v4525
              %v4596 = vpack.c.b16 %v4531, %v4526
              %v4597 = vpack.c.b16 %v4532, %v4527
              %v4598 = vpack.c.b16 %v4533, %v4528
              %v4599 = vpack.c.b16 %v4539, %v4534
              %v4600 = vpack.c.b16 %v4540, %v4535
              %v4601 = vpack.c.b16 %v4541, %v4536
              %v4602 = vpack.c.b16 %v4542, %v4537
              %v4603 = vpack.c.b16 %v4543, %v4538
              %v4604 = vpack.c.b16 %v4549, %v4544
              %v4605 = vpack.c.b16 %v4550, %v4545
              %v4606 = vpack.c.b16 %v4551, %v4546
              %v4607 = vpack.c.b16 %v4552, %v4547
              %v4608 = vpack.c.b16 %v4553, %v4548
              %v4609 = vpack.c.b16 %v4559, %v4554
              %v4610 = vpack.c.b16 %v4560, %v4555
              %v4611 = vpack.c.b16 %v4561, %v4556
              %v4612 = vpack.c.b16 %v4562, %v4557
              %v4613 = vpack.c.b16 %v4563, %v4558
              %v4614 = vpack.c.b16 %v4569, %v4564
              %v4615 = vpack.c.b16 %v4570, %v4565
              %v4616 = vpack.c.b16 %v4571, %v4566
              %v4617 = vpack.c.b16 %v4572, %v4567
              %v4618 = vpack.c.b16 %v4573, %v4568
              %v4619 = vpack.c.b16 %v4579, %v4574
              %v4620 = vpack.c.b16 %v4580, %v4575
              %v4621 = vpack.c.b16 %v4581, %v4576
              %v4622 = vpack.c.b16 %v4582, %v4577
              %v4623 = vpack.c.b16 %v4583, %v4578
              %4664 = vmatprep.subr.bf16.mxu0 %v4620
              %4665 = vmatpush1.bf16.msra.mxu0 %v4619
              %4666 = vmatprep.subr.bf16.mxu0 %v4615
              %4667 = vmatpush1.bf16.msra.mxu0 %v4614
              %4668 = vmatprep.subr.bf16.mxu0 %v4610
              %4669 = vmatpush1.bf16.msra.mxu0 %v4609
              %4670 = vmatprep.subr.bf16.mxu0 %v4605
              %4671 = vmatpush1.bf16.msra.mxu0 %v4604
              %4672 = vmatprep.subr.bf16.mxu0 %v4600
              %4673 = vmatpush1.bf16.msra.mxu0 %v4599
              %4674 = vmatprep.subr.bf16.mxu0 %v4595
              %4675 = vmatpush1.bf16.msra.mxu0 %v4594
              %4676 = vmatprep.subr.bf16.mxu0 %v4590
              %4677 = vmatpush1.bf16.msra.mxu0 %v4589
              %4678 = vmatprep.subr.bf16.mxu0 %v4585
              %4679 = vmatpush1.bf16.msra.mxu0 %v4584
              %4680 = vmatprep.subr.bf16.mxu0 0
              %4681 = vmatpush2.bf16.msra.mxu0 0
              %4682 = vmatprep.subr.bf16.mxu0 0
              %4683 = vmatpush2.bf16.msra.mxu0 0
              %4684 = vmatprep.subr.bf16.mxu0 0
              %4685 = vmatpush2.bf16.msra.mxu0 0
              %4686 = vmatprep.subr.bf16.mxu0 0
              %4687 = vmatpush2.bf16.msra.mxu0 0
              %4688 = vmatprep.subr.bf16.mxu0 0
              %4689 = vmatpush2.bf16.msra.mxu0 0
              %4690 = vmatprep.subr.bf16.mxu0 0
              %4691 = vmatpush2.bf16.msra.mxu0 0
              %4692 = vmatprep.subr.bf16.mxu0 0
              %4693 = vmatpush2.bf16.msra.mxu0 0
              %4694 = vmatprep.subr.bf16.mxu0 0
              %4695 = vmatpush2.bf16.msra.mxu0 0
              %4696 = vmatprep.mubr.bf16.mxu0 0
              %4697 = vmatmul.mubr.bf16.gmra.mxu0 %v4406
              %v4698 = vpop.f32.mrf.mxu0
              %v4699 = vadd.f32 0.0, %v4698
              %v4700 = vpop.f32.mrf.mxu0
              %v4701 = vadd.f32 0.0, %v4700
              %v4702 = vpop.f32.mrf.mxu0
              %v4703 = vpop.f32.mrf.mxu0
              %4704 = vdwg.mxu0
              %4705 = vmatprep.subr.bf16.mxu0 %v4622
              %4706 = vmatpush1.bf16.msra.mxu0 %v4621
              %4707 = vmatprep.subr.bf16.mxu0 %v4617
              %4708 = vmatpush1.bf16.msra.mxu0 %v4616
              %4709 = vmatprep.subr.bf16.mxu0 %v4612
              %4710 = vmatpush1.bf16.msra.mxu0 %v4611
              %4711 = vmatprep.subr.bf16.mxu0 %v4607
              %4712 = vmatpush1.bf16.msra.mxu0 %v4606
              %4713 = vmatprep.subr.bf16.mxu0 %v4602
              %4714 = vmatpush1.bf16.msra.mxu0 %v4601
              %4715 = vmatprep.subr.bf16.mxu0 %v4597
              %4716 = vmatpush1.bf16.msra.mxu0 %v4596
              %4717 = vmatprep.subr.bf16.mxu0 %v4592
              %4718 = vmatpush1.bf16.msra.mxu0 %v4591
              %4719 = vmatprep.subr.bf16.mxu0 %v4587
              %4720 = vmatpush1.bf16.msra.mxu0 %v4586
              %4721 = vmatprep.subr.bf16.mxu0 0
              %4722 = vmatpush2.bf16.msra.mxu0 0
              %4723 = vmatprep.subr.bf16.mxu0 0
              %4724 = vmatpush2.bf16.msra.mxu0 0
              %4725 = vmatprep.subr.bf16.mxu0 0
              %4726 = vmatpush2.bf16.msra.mxu0 0
              %4727 = vmatprep.subr.bf16.mxu0 0
              %4728 = vmatpush2.bf16.msra.mxu0 0
              %4729 = vmatprep.subr.bf16.mxu0 0
              %4730 = vmatpush2.bf16.msra.mxu0 0
              %4731 = vmatprep.subr.bf16.mxu0 0
              %4732 = vmatpush2.bf16.msra.mxu0 0
              %4733 = vmatprep.subr.bf16.mxu0 0
              %4734 = vmatpush2.bf16.msra.mxu0 0
              %4735 = vmatprep.subr.bf16.mxu0 0
              %4736 = vmatpush2.bf16.msra.mxu0 0
              %4737 = vmatprep.mubr.bf16.mxu0 0
              %4738 = vmatmul.mubr.bf16.gmra.mxu0 %v4406
              %v4739 = vpop.f32.mrf.mxu0
              %v4740 = vadd.f32 0.0, %v4739
              %v4741 = vpop.f32.mrf.mxu0
              %v4742 = vadd.f32 0.0, %v4741
              %v4743 = vpop.f32.mrf.mxu0
              %v4744 = vpop.f32.mrf.mxu0
              %4745 = vdwg.mxu0
              %4746 = vmatprep.subr.bf16.mxu0 0
              %4747 = vmatpush1.bf16.msra.mxu0 %v4623
              %4748 = vmatprep.subr.bf16.mxu0 0
              %4749 = vmatpush1.bf16.msra.mxu0 %v4618
              %4750 = vmatprep.subr.bf16.mxu0 0
              %4751 = vmatpush1.bf16.msra.mxu0 %v4613
              %4752 = vmatprep.subr.bf16.mxu0 0
              %4753 = vmatpush1.bf16.msra.mxu0 %v4608
              %4754 = vmatprep.subr.bf16.mxu0 0
              %4755 = vmatpush1.bf16.msra.mxu0 %v4603
              %4756 = vmatprep.subr.bf16.mxu0 0
              %4757 = vmatpush1.bf16.msra.mxu0 %v4598
              %4758 = vmatprep.subr.bf16.mxu0 0
              %4759 = vmatpush1.bf16.msra.mxu0 %v4593
              %4760 = vmatprep.subr.bf16.mxu0 0
              %4761 = vmatpush1.bf16.msra.mxu0 %v4588
              %4762 = vmatprep.subr.bf16.mxu0 0
              %4763 = vmatpush2.bf16.msra.mxu0 0
              %4764 = vmatprep.subr.bf16.mxu0 0
              %4765 = vmatpush2.bf16.msra.mxu0 0
              %4766 = vmatprep.subr.bf16.mxu0 0
              %4767 = vmatpush2.bf16.msra.mxu0 0
              %4768 = vmatprep.subr.bf16.mxu0 0
              %4769 = vmatpush2.bf16.msra.mxu0 0
              %4770 = vmatprep.subr.bf16.mxu0 0
              %4771 = vmatpush2.bf16.msra.mxu0 0
              %4772 = vmatprep.subr.bf16.mxu0 0
              %4773 = vmatpush2.bf16.msra.mxu0 0
              %4774 = vmatprep.subr.bf16.mxu0 0
              %4775 = vmatpush2.bf16.msra.mxu0 0
              %4776 = vmatprep.subr.bf16.mxu0 0
              %4777 = vmatpush2.bf16.msra.mxu0 0
              %4778 = vmatprep.mubr.bf16.mxu0 0
              %4779 = vmatmul.mubr.bf16.gmra.mxu0 %v4406
              %v4780 = vpop.f32.mrf.mxu0
              %v4781 = vadd.f32 0.0, %v4780
              %v4782 = vpop.f32.mrf.mxu0
              %v4783 = vpop.f32.mrf.mxu0
              %v4784 = vpop.f32.mrf.mxu0
              %4785 = vdwg.mxu0
              %v4834 = vunpack.c.l.b16 %v4358
              %v4835 = vunpack.c.h.b16 %v4358
              %v4836 = vunpack.c.l.b16 %v4359
              %v4837 = vunpack.c.h.b16 %v4359
              %v4838 = vunpack.c.l.b16 %v4360
              %v4839 = vunpack.c.l.b16 %v4361
              %v4840 = vunpack.c.h.b16 %v4361
              %v4841 = vunpack.c.l.b16 %v4362
              %v4842 = vunpack.c.h.b16 %v4362
              %v4843 = vunpack.c.l.b16 %v4363
              %v4844 = vunpack.c.l.b16 %v4364
              %v4845 = vunpack.c.h.b16 %v4364
              %v4846 = vunpack.c.l.b16 %v4365
              %v4847 = vunpack.c.h.b16 %v4365
              %v4848 = vunpack.c.l.b16 %v4366
              %v4849 = vunpack.c.l.b16 %v4367
              %v4850 = vunpack.c.h.b16 %v4367
              %v4851 = vunpack.c.l.b16 %v4368
              %v4852 = vunpack.c.h.b16 %v4368
              %v4853 = vunpack.c.l.b16 %v4369
              %v4854 = vunpack.c.l.b16 %v4370
              %v4855 = vunpack.c.h.b16 %v4370
              %v4856 = vunpack.c.l.b16 %v4371
              %v4857 = vunpack.c.h.b16 %v4371
              %v4858 = vunpack.c.l.b16 %v4372
              %v4859 = vunpack.c.l.b16 %v4373
              %v4860 = vunpack.c.h.b16 %v4373
              %v4861 = vunpack.c.l.b16 %v4374
              %v4862 = vunpack.c.h.b16 %v4374
              %v4863 = vunpack.c.l.b16 %v4375
              %v4864 = vunpack.c.l.b16 %v4376
              %v4865 = vunpack.c.h.b16 %v4376
              %v4866 = vunpack.c.l.b16 %v4377
              %v4867 = vunpack.c.h.b16 %v4377
              %v4868 = vunpack.c.l.b16 %v4378
              %v4869 = vunpack.c.l.b16 %v4379
              %v4870 = vunpack.c.h.b16 %v4379
              %v4871 = vunpack.c.l.b16 %v4380
              %v4872 = vunpack.c.h.b16 %v4380
              %v4873 = vunpack.c.l.b16 %v4381
              %v4874 = vunpack.c.l.b16 %v4382
              %v4875 = vunpack.c.h.b16 %v4382
              %v4876 = vunpack.c.l.b16 %v4383
              %v4877 = vunpack.c.h.b16 %v4383
              %v4878 = vunpack.c.l.b16 %v4384
              %v4879 = vunpack.c.l.b16 %v4385
              %v4880 = vunpack.c.h.b16 %v4385
              %v4881 = vunpack.c.l.b16 %v4386
              %v4882 = vunpack.c.h.b16 %v4386
              %v4883 = vunpack.c.l.b16 %v4387
              %v4884 = vunpack.c.l.b16 %v4388
              %v4885 = vunpack.c.h.b16 %v4388
              %v4886 = vunpack.c.l.b16 %v4389
              %v4887 = vunpack.c.h.b16 %v4389
              %v4888 = vunpack.c.l.b16 %v4390
              %v4889 = vunpack.c.l.b16 %v4391
              %v4890 = vunpack.c.h.b16 %v4391
              %v4891 = vunpack.c.l.b16 %v4392
              %v4892 = vunpack.c.h.b16 %v4392
              %v4893 = vunpack.c.l.b16 %v4393
              %v4894 = vunpack.c.l.b16 %v4394
              %v4895 = vunpack.c.h.b16 %v4394
              %v4896 = vunpack.c.l.b16 %v4395
              %v4897 = vunpack.c.h.b16 %v4395
              %v4898 = vunpack.c.l.b16 %v4396
              %v4899 = vunpack.c.l.b16 %v4397
              %v4900 = vunpack.c.h.b16 %v4397
              %v4901 = vunpack.c.l.b16 %v4398
              %v4902 = vunpack.c.h.b16 %v4398
              %v4903 = vunpack.c.l.b16 %v4399
              %v4904 = vunpack.c.l.b16 %v4400
              %v4905 = vunpack.c.h.b16 %v4400
              %v4906 = vunpack.c.l.b16 %v4401
              %v4907 = vunpack.c.h.b16 %v4401
              %v4908 = vunpack.c.l.b16 %v4402
              %v4909 = vunpack.c.l.b16 %v4403
              %v4910 = vunpack.c.h.b16 %v4403
              %v4911 = vunpack.c.l.b16 %v4404
              %v4912 = vunpack.c.h.b16 %v4404
              %v4913 = vunpack.c.l.b16 %v4405
              %v4914 = vpack.c.b16 %v4839, %v4834
              %v4915 = vpack.c.b16 %v4840, %v4835
              %v4916 = vpack.c.b16 %v4841, %v4836
              %v4917 = vpack.c.b16 %v4842, %v4837
              %v4918 = vpack.c.b16 %v4843, %v4838
              %v4919 = vpack.c.b16 %v4849, %v4844
              %v4920 = vpack.c.b16 %v4850, %v4845
              %v4921 = vpack.c.b16 %v4851, %v4846
              %v4922 = vpack.c.b16 %v4852, %v4847
              %v4923 = vpack.c.b16 %v4853, %v4848
              %v4924 = vpack.c.b16 %v4859, %v4854
              %v4925 = vpack.c.b16 %v4860, %v4855
              %v4926 = vpack.c.b16 %v4861, %v4856
              %v4927 = vpack.c.b16 %v4862, %v4857
              %v4928 = vpack.c.b16 %v4863, %v4858
              %v4929 = vpack.c.b16 %v4869, %v4864
              %v4930 = vpack.c.b16 %v4870, %v4865
              %v4931 = vpack.c.b16 %v4871, %v4866
              %v4932 = vpack.c.b16 %v4872, %v4867
              %v4933 = vpack.c.b16 %v4873, %v4868
              %v4934 = vpack.c.b16 %v4879, %v4874
              %v4935 = vpack.c.b16 %v4880, %v4875
              %v4936 = vpack.c.b16 %v4881, %v4876
              %v4937 = vpack.c.b16 %v4882, %v4877
              %v4938 = vpack.c.b16 %v4883, %v4878
              %v4939 = vpack.c.b16 %v4889, %v4884
              %v4940 = vpack.c.b16 %v4890, %v4885
              %v4941 = vpack.c.b16 %v4891, %v4886
              %v4942 = vpack.c.b16 %v4892, %v4887
              %v4943 = vpack.c.b16 %v4893, %v4888
              %v4944 = vpack.c.b16 %v4899, %v4894
              %v4945 = vpack.c.b16 %v4900, %v4895
              %v4946 = vpack.c.b16 %v4901, %v4896
              %v4947 = vpack.c.b16 %v4902, %v4897
              %v4948 = vpack.c.b16 %v4903, %v4898
              %v4949 = vpack.c.b16 %v4909, %v4904
              %v4950 = vpack.c.b16 %v4910, %v4905
              %v4951 = vpack.c.b16 %v4911, %v4906
              %v4952 = vpack.c.b16 %v4912, %v4907
              %v4953 = vpack.c.b16 %v4913, %v4908
              %4994 = vmatprep.subr.bf16.mxu0 %v4950
              %4995 = vmatpush1.bf16.msra.mxu0 %v4949
              %4996 = vmatprep.subr.bf16.mxu0 %v4945
              %4997 = vmatpush1.bf16.msra.mxu0 %v4944
              %4998 = vmatprep.subr.bf16.mxu0 %v4940
              %4999 = vmatpush1.bf16.msra.mxu0 %v4939
              %5000 = vmatprep.subr.bf16.mxu0 %v4935
              %5001 = vmatpush1.bf16.msra.mxu0 %v4934
              %5002 = vmatprep.subr.bf16.mxu0 %v4930
              %5003 = vmatpush1.bf16.msra.mxu0 %v4929
              %5004 = vmatprep.subr.bf16.mxu0 %v4925
              %5005 = vmatpush1.bf16.msra.mxu0 %v4924
              %5006 = vmatprep.subr.bf16.mxu0 %v4920
              %5007 = vmatpush1.bf16.msra.mxu0 %v4919
              %5008 = vmatprep.subr.bf16.mxu0 %v4915
              %5009 = vmatpush1.bf16.msra.mxu0 %v4914
              %5010 = vmatprep.subr.bf16.mxu0 0
              %5011 = vmatpush2.bf16.msra.mxu0 0
              %5012 = vmatprep.subr.bf16.mxu0 0
              %5013 = vmatpush2.bf16.msra.mxu0 0
              %5014 = vmatprep.subr.bf16.mxu0 0
              %5015 = vmatpush2.bf16.msra.mxu0 0
              %5016 = vmatprep.subr.bf16.mxu0 0
              %5017 = vmatpush2.bf16.msra.mxu0 0
              %5018 = vmatprep.subr.bf16.mxu0 0
              %5019 = vmatpush2.bf16.msra.mxu0 0
              %5020 = vmatprep.subr.bf16.mxu0 0
              %5021 = vmatpush2.bf16.msra.mxu0 0
              %5022 = vmatprep.subr.bf16.mxu0 0
              %5023 = vmatpush2.bf16.msra.mxu0 0
              %5024 = vmatprep.subr.bf16.mxu0 0
              %5025 = vmatpush2.bf16.msra.mxu0 0
              %5026 = vmatprep.mubr.bf16.mxu0 0
              %5027 = vmatmul.mubr.bf16.gmra.mxu0 %v4356
              %v5028 = vpop.f32.mrf.mxu0
              %v5029 = vadd.f32 %v4699, %v5028
              %v5030 = vpop.f32.mrf.mxu0
              %v5031 = vadd.f32 %v4701, %v5030
              %v5032 = vpop.f32.mrf.mxu0
              %v5033 = vpop.f32.mrf.mxu0
              %5034 = vdwg.mxu0
              %5035 = vmatprep.subr.bf16.mxu0 %v4952
              %5036 = vmatpush1.bf16.msra.mxu0 %v4951
              %5037 = vmatprep.subr.bf16.mxu0 %v4947
              %5038 = vmatpush1.bf16.msra.mxu0 %v4946
              %5039 = vmatprep.subr.bf16.mxu0 %v4942
              %5040 = vmatpush1.bf16.msra.mxu0 %v4941
              %5041 = vmatprep.subr.bf16.mxu0 %v4937
              %5042 = vmatpush1.bf16.msra.mxu0 %v4936
              %5043 = vmatprep.subr.bf16.mxu0 %v4932
              %5044 = vmatpush1.bf16.msra.mxu0 %v4931
              %5045 = vmatprep.subr.bf16.mxu0 %v4927
              %5046 = vmatpush1.bf16.msra.mxu0 %v4926
              %5047 = vmatprep.subr.bf16.mxu0 %v4922
              %5048 = vmatpush1.bf16.msra.mxu0 %v4921
              %5049 = vmatprep.subr.bf16.mxu0 %v4917
              %5050 = vmatpush1.bf16.msra.mxu0 %v4916
              %5051 = vmatprep.subr.bf16.mxu0 0
              %5052 = vmatpush2.bf16.msra.mxu0 0
              %5053 = vmatprep.subr.bf16.mxu0 0
              %5054 = vmatpush2.bf16.msra.mxu0 0
              %5055 = vmatprep.subr.bf16.mxu0 0
              %5056 = vmatpush2.bf16.msra.mxu0 0
              %5057 = vmatprep.subr.bf16.mxu0 0
              %5058 = vmatpush2.bf16.msra.mxu0 0
              %5059 = vmatprep.subr.bf16.mxu0 0
              %5060 = vmatpush2.bf16.msra.mxu0 0
              %5061 = vmatprep.subr.bf16.mxu0 0
              %5062 = vmatpush2.bf16.msra.mxu0 0
              %5063 = vmatprep.subr.bf16.mxu0 0
              %5064 = vmatpush2.bf16.msra.mxu0 0
              %5065 = vmatprep.subr.bf16.mxu0 0
              %5066 = vmatpush2.bf16.msra.mxu0 0
              %5067 = vmatprep.mubr.bf16.mxu0 0
              %5068 = vmatmul.mubr.bf16.gmra.mxu0 %v4356
              %v5069 = vpop.f32.mrf.mxu0
              %v5070 = vadd.f32 %v4740, %v5069
              %v5071 = vpop.f32.mrf.mxu0
              %v5072 = vadd.f32 %v4742, %v5071
              %v5073 = vpop.f32.mrf.mxu0
              %v5074 = vpop.f32.mrf.mxu0
              %5075 = vdwg.mxu0
              %5076 = vmatprep.subr.bf16.mxu0 0
              %5077 = vmatpush1.bf16.msra.mxu0 %v4953
              %5078 = vmatprep.subr.bf16.mxu0 0
              %5079 = vmatpush1.bf16.msra.mxu0 %v4948
              %5080 = vmatprep.subr.bf16.mxu0 0
              %5081 = vmatpush1.bf16.msra.mxu0 %v4943
              %5082 = vmatprep.subr.bf16.mxu0 0
              %5083 = vmatpush1.bf16.msra.mxu0 %v4938
              %5084 = vmatprep.subr.bf16.mxu0 0
              %5085 = vmatpush1.bf16.msra.mxu0 %v4933
              %5086 = vmatprep.subr.bf16.mxu0 0
              %5087 = vmatpush1.bf16.msra.mxu0 %v4928
              %5088 = vmatprep.subr.bf16.mxu0 0
              %5089 = vmatpush1.bf16.msra.mxu0 %v4923
              %5090 = vmatprep.subr.bf16.mxu0 0
              %5091 = vmatpush1.bf16.msra.mxu0 %v4918
              %5092 = vmatprep.subr.bf16.mxu0 0
              %5093 = vmatpush2.bf16.msra.mxu0 0
              %5094 = vmatprep.subr.bf16.mxu0 0
              %5095 = vmatpush2.bf16.msra.mxu0 0
              %5096 = vmatprep.subr.bf16.mxu0 0
              %5097 = vmatpush2.bf16.msra.mxu0 0
              %5098 = vmatprep.subr.bf16.mxu0 0
              %5099 = vmatpush2.bf16.msra.mxu0 0
              %5100 = vmatprep.subr.bf16.mxu0 0
              %5101 = vmatpush2.bf16.msra.mxu0 0
              %5102 = vmatprep.subr.bf16.mxu0 0
              %5103 = vmatpush2.bf16.msra.mxu0 0
              %5104 = vmatprep.subr.bf16.mxu0 0
              %5105 = vmatpush2.bf16.msra.mxu0 0
              %5106 = vmatprep.subr.bf16.mxu0 0
              %5107 = vmatpush2.bf16.msra.mxu0 0
              %5108 = vmatprep.mubr.bf16.mxu0 0
              %5109 = vmatmul.mubr.bf16.gmra.mxu0 %v4356
              %v5110 = vpop.f32.mrf.mxu0
              %v5111 = vadd.f32 %v4781, %v5110
              %v5112 = vpop.f32.mrf.mxu0
              %v5113 = vpop.f32.mrf.mxu0
              %v5114 = vpop.f32.mrf.mxu0
              %5115 = vdwg.mxu0
              %v5116 = vadd.f32 %v5029, %v284
              %v5117 = vadd.f32 %v5031, %v288
              %v5118 = vadd.f32 %v5070, %v292
              %v5119 = vadd.f32 %v5072, %v296
              %v5120 = vadd.f32 %v5111, %v300
              %v5121 = vmul.f32 %v5116, 0.5
              %v5122 = vtanh.pop %v5121
              %v5123 = vadd.f32 %v5122, 1.0
              %v5124 = vmul.f32 %v5123, 0.5
              %v5125 = vmul.f32 %v5117, 0.5
              %v5126 = vtanh.pop %v5125
              %v5127 = vadd.f32 %v5126, 1.0
              %v5128 = vmul.f32 %v5127, 0.5
              %v5129 = vtanh.pop %v5118
              %v5130 = vmul.f32 %v5119, 0.5
              %v5131 = vtanh.pop %v5130
              %v5132 = vadd.f32 %v5131, 1.0
              %v5133 = vmul.f32 %v5132, 0.5
              %v5134 = vmul.f32 %v5120, 0.5
              %v5135 = vtanh.pop %v5134
              %v5136 = vadd.f32 %v5135, 1.0
              %v5137 = vmul.f32 %v5136, 0.5
              %v5138 = vmul.f32 %v5124, %v5129
              %v5139 = vmul.f32 %v5133, %v4355
              %v5140 = vadd.f32 %v5138, %v5139
              %v5141 = vmul.f32 %v5137, %v4353
              %v5142 = vadd.f32 %v5140, %v5141
              %v5143 = vtanh.pop %v5142
              %v5144 = vmul.f32 %v5128, %v5143
              %5145 = vst [vmem:[#allocation3] sm:$0xff] %v5144
              %5146 = vst [vmem:[#allocation3 + $0x8] sm:$0xff] %v5142
            $region94: #{_fenwick_forward_stream.1} parent=69 // pred_fallthru
              _
            %p5147 = scmp.lt.s32.totalorder %s337, 1
            %s5148 = sshra.s32 %s314, 1
            %s5149 = sand.u32 %s5148, 1
            %p5150 = scmp.eq.s32.totalorder %s5149, 1
            %p5151 = pnand %p5147, %p5150
            %p5152 = pneg %p5151
            // Predicated region
            $region95: #{_fenwick_forward_stream.1} parent=69 // pred_check
              _
            $region96: #{_fenwick_forward_stream.1} parent=69 // pred_check_branch
              %5154 = sbr.rel (%p5151) target = $region98
            $region97: #{_fenwick_forward_stream.1} parent=69 // pred_region
              %s5155 = scalar_lea.vmem [#allocation2], 16
              %v5156 = vld [vmem:[%s5155] sm:$0xff]
              %v5157 = vld [vmem:[%s5155 + $0x8] sm:$0xff]
              %v5158 = vld [vmem:[#allocation3] sm:$0xff]
              %v5159 = vld [vmem:[#allocation3 + $0x8] sm:$0xff]
              %v5160 = vpack.c.bf16 %v5158, %v5158
              %s5161 = scalar_lea.vmem %s0, 640
              %v5162 = vld [vmem:[%s5161] sm:$0xff]
              %v5163 = vld [vmem:[%s5161 + $0x8] sm:$0xff]
              %v5164 = vld [vmem:[%s5161 + $0x10] sm:$0xf]
              %v5165 = vld [vmem:[%s5161 + $0x14] sm:$0xff]
              %v5166 = vld [vmem:[%s5161 + $0x1c] sm:$0xff]
              %v5167 = vld [vmem:[%s5161 + $0x24] sm:$0xf]
              %v5168 = vld [vmem:[%s5161 + $0x28] sm:$0xff]
              %v5169 = vld [vmem:[%s5161 + $0x30] sm:$0xff]
              %v5170 = vld [vmem:[%s5161 + $0x38] sm:$0xf]
              %v5171 = vld [vmem:[%s5161 + $0x3c] sm:$0xff]
              %v5172 = vld [vmem:[%s5161 + $0x44] sm:$0xff]
              %v5173 = vld [vmem:[%s5161 + $0x4c] sm:$0xf]
              %v5174 = vld [vmem:[%s5161 + $0x50] sm:$0xff]
              %v5175 = vld [vmem:[%s5161 + $0x58] sm:$0xff]
              %v5176 = vld [vmem:[%s5161 + $0x60] sm:$0xf]
              %v5177 = vld [vmem:[%s5161 + $0x64] sm:$0xff]
              %v5178 = vld [vmem:[%s5161 + $0x6c] sm:$0xff]
              %v5179 = vld [vmem:[%s5161 + $0x74] sm:$0xf]
              %v5180 = vld [vmem:[%s5161 + $0x78] sm:$0xff]
              %v5181 = vld [vmem:[%s5161 + $0x80] sm:$0xff]
              %v5182 = vld [vmem:[%s5161 + $0x88] sm:$0xf]
              %v5183 = vld [vmem:[%s5161 + $0x8c] sm:$0xff]
              %v5184 = vld [vmem:[%s5161 + $0x94] sm:$0xff]
              %v5185 = vld [vmem:[%s5161 + $0x9c] sm:$0xf]
              %v5186 = vld [vmem:[%s5161 + $0xa0] sm:$0xff]
              %v5187 = vld [vmem:[%s5161 + $0xa8] sm:$0xff]
              %v5188 = vld [vmem:[%s5161 + $0xb0] sm:$0xf]
              %v5189 = vld [vmem:[%s5161 + $0xb4] sm:$0xff]
              %v5190 = vld [vmem:[%s5161 + $0xbc] sm:$0xff]
              %v5191 = vld [vmem:[%s5161 + $0xc4] sm:$0xf]
              %v5192 = vld [vmem:[%s5161 + $0xc8] sm:$0xff]
              %v5193 = vld [vmem:[%s5161 + $0xd0] sm:$0xff]
              %v5194 = vld [vmem:[%s5161 + $0xd8] sm:$0xf]
              %v5195 = vld [vmem:[%s5161 + $0xdc] sm:$0xff]
              %v5196 = vld [vmem:[%s5161 + $0xe4] sm:$0xff]
              %v5197 = vld [vmem:[%s5161 + $0xec] sm:$0xf]
              %v5198 = vld [vmem:[%s5161 + $0xf0] sm:$0xff]
              %v5199 = vld [vmem:[%s5161 + $0xf8] sm:$0xff]
              %v5200 = vld [vmem:[%s5161 + $0x100] sm:$0xf]
              %v5201 = vld [vmem:[%s5161 + $0x104] sm:$0xff]
              %v5202 = vld [vmem:[%s5161 + $0x10c] sm:$0xff]
              %v5203 = vld [vmem:[%s5161 + $0x114] sm:$0xf]
              %v5204 = vld [vmem:[%s5161 + $0x118] sm:$0xff]
              %v5205 = vld [vmem:[%s5161 + $0x120] sm:$0xff]
              %v5206 = vld [vmem:[%s5161 + $0x128] sm:$0xf]
              %v5207 = vld [vmem:[%s5161 + $0x12c] sm:$0xff]
              %v5208 = vld [vmem:[%s5161 + $0x134] sm:$0xff]
              %v5209 = vld [vmem:[%s5161 + $0x13c] sm:$0xf]
              %v5210 = vpack.c.bf16 %v5156, %v5156
              %s5211 = scalar_lea.vmem %s0, 960
              %v5212 = vld [vmem:[%s5211] sm:$0xff]
              %v5213 = vld [vmem:[%s5211 + $0x8] sm:$0xff]
              %v5214 = vld [vmem:[%s5211 + $0x10] sm:$0xf]
              %v5215 = vld [vmem:[%s5211 + $0x14] sm:$0xff]
              %v5216 = vld [vmem:[%s5211 + $0x1c] sm:$0xff]
              %v5217 = vld [vmem:[%s5211 + $0x24] sm:$0xf]
              %v5218 = vld [vmem:[%s5211 + $0x28] sm:$0xff]
              %v5219 = vld [vmem:[%s5211 + $0x30] sm:$0xff]
              %v5220 = vld [vmem:[%s5211 + $0x38] sm:$0xf]
              %v5221 = vld [vmem:[%s5211 + $0x3c] sm:$0xff]
              %v5222 = vld [vmem:[%s5211 + $0x44] sm:$0xff]
              %v5223 = vld [vmem:[%s5211 + $0x4c] sm:$0xf]
              %v5224 = vld [vmem:[%s5211 + $0x50] sm:$0xff]
              %v5225 = vld [vmem:[%s5211 + $0x58] sm:$0xff]
              %v5226 = vld [vmem:[%s5211 + $0x60] sm:$0xf]
              %v5227 = vld [vmem:[%s5211 + $0x64] sm:$0xff]
              %v5228 = vld [vmem:[%s5211 + $0x6c] sm:$0xff]
              %v5229 = vld [vmem:[%s5211 + $0x74] sm:$0xf]
              %v5230 = vld [vmem:[%s5211 + $0x78] sm:$0xff]
              %v5231 = vld [vmem:[%s5211 + $0x80] sm:$0xff]
              %v5232 = vld [vmem:[%s5211 + $0x88] sm:$0xf]
              %v5233 = vld [vmem:[%s5211 + $0x8c] sm:$0xff]
              %v5234 = vld [vmem:[%s5211 + $0x94] sm:$0xff]
              %v5235 = vld [vmem:[%s5211 + $0x9c] sm:$0xf]
              %v5236 = vld [vmem:[%s5211 + $0xa0] sm:$0xff]
              %v5237 = vld [vmem:[%s5211 + $0xa8] sm:$0xff]
              %v5238 = vld [vmem:[%s5211 + $0xb0] sm:$0xf]
              %v5239 = vld [vmem:[%s5211 + $0xb4] sm:$0xff]
              %v5240 = vld [vmem:[%s5211 + $0xbc] sm:$0xff]
              %v5241 = vld [vmem:[%s5211 + $0xc4] sm:$0xf]
              %v5242 = vld [vmem:[%s5211 + $0xc8] sm:$0xff]
              %v5243 = vld [vmem:[%s5211 + $0xd0] sm:$0xff]
              %v5244 = vld [vmem:[%s5211 + $0xd8] sm:$0xf]
              %v5245 = vld [vmem:[%s5211 + $0xdc] sm:$0xff]
              %v5246 = vld [vmem:[%s5211 + $0xe4] sm:$0xff]
              %v5247 = vld [vmem:[%s5211 + $0xec] sm:$0xf]
              %v5248 = vld [vmem:[%s5211 + $0xf0] sm:$0xff]
              %v5249 = vld [vmem:[%s5211 + $0xf8] sm:$0xff]
              %v5250 = vld [vmem:[%s5211 + $0x100] sm:$0xf]
              %v5251 = vld [vmem:[%s5211 + $0x104] sm:$0xff]
              %v5252 = vld [vmem:[%s5211 + $0x10c] sm:$0xff]
              %v5253 = vld [vmem:[%s5211 + $0x114] sm:$0xf]
              %v5254 = vld [vmem:[%s5211 + $0x118] sm:$0xff]
              %v5255 = vld [vmem:[%s5211 + $0x120] sm:$0xff]
              %v5256 = vld [vmem:[%s5211 + $0x128] sm:$0xf]
              %v5257 = vld [vmem:[%s5211 + $0x12c] sm:$0xff]
              %v5258 = vld [vmem:[%s5211 + $0x134] sm:$0xff]
              %v5259 = vld [vmem:[%s5211 + $0x13c] sm:$0xf]
              %v5308 = vunpack.c.l.b16 %v5212
              %v5309 = vunpack.c.h.b16 %v5212
              %v5310 = vunpack.c.l.b16 %v5213
              %v5311 = vunpack.c.h.b16 %v5213
              %v5312 = vunpack.c.l.b16 %v5214
              %v5313 = vunpack.c.l.b16 %v5215
              %v5314 = vunpack.c.h.b16 %v5215
              %v5315 = vunpack.c.l.b16 %v5216
              %v5316 = vunpack.c.h.b16 %v5216
              %v5317 = vunpack.c.l.b16 %v5217
              %v5318 = vunpack.c.l.b16 %v5218
              %v5319 = vunpack.c.h.b16 %v5218
              %v5320 = vunpack.c.l.b16 %v5219
              %v5321 = vunpack.c.h.b16 %v5219
              %v5322 = vunpack.c.l.b16 %v5220
              %v5323 = vunpack.c.l.b16 %v5221
              %v5324 = vunpack.c.h.b16 %v5221
              %v5325 = vunpack.c.l.b16 %v5222
              %v5326 = vunpack.c.h.b16 %v5222
              %v5327 = vunpack.c.l.b16 %v5223
              %v5328 = vunpack.c.l.b16 %v5224
              %v5329 = vunpack.c.h.b16 %v5224
              %v5330 = vunpack.c.l.b16 %v5225
              %v5331 = vunpack.c.h.b16 %v5225
              %v5332 = vunpack.c.l.b16 %v5226
              %v5333 = vunpack.c.l.b16 %v5227
              %v5334 = vunpack.c.h.b16 %v5227
              %v5335 = vunpack.c.l.b16 %v5228
              %v5336 = vunpack.c.h.b16 %v5228
              %v5337 = vunpack.c.l.b16 %v5229
              %v5338 = vunpack.c.l.b16 %v5230
              %v5339 = vunpack.c.h.b16 %v5230
              %v5340 = vunpack.c.l.b16 %v5231
              %v5341 = vunpack.c.h.b16 %v5231
              %v5342 = vunpack.c.l.b16 %v5232
              %v5343 = vunpack.c.l.b16 %v5233
              %v5344 = vunpack.c.h.b16 %v5233
              %v5345 = vunpack.c.l.b16 %v5234
              %v5346 = vunpack.c.h.b16 %v5234
              %v5347 = vunpack.c.l.b16 %v5235
              %v5348 = vunpack.c.l.b16 %v5236
              %v5349 = vunpack.c.h.b16 %v5236
              %v5350 = vunpack.c.l.b16 %v5237
              %v5351 = vunpack.c.h.b16 %v5237
              %v5352 = vunpack.c.l.b16 %v5238
              %v5353 = vunpack.c.l.b16 %v5239
              %v5354 = vunpack.c.h.b16 %v5239
              %v5355 = vunpack.c.l.b16 %v5240
              %v5356 = vunpack.c.h.b16 %v5240
              %v5357 = vunpack.c.l.b16 %v5241
              %v5358 = vunpack.c.l.b16 %v5242
              %v5359 = vunpack.c.h.b16 %v5242
              %v5360 = vunpack.c.l.b16 %v5243
              %v5361 = vunpack.c.h.b16 %v5243
              %v5362 = vunpack.c.l.b16 %v5244
              %v5363 = vunpack.c.l.b16 %v5245
              %v5364 = vunpack.c.h.b16 %v5245
              %v5365 = vunpack.c.l.b16 %v5246
              %v5366 = vunpack.c.h.b16 %v5246
              %v5367 = vunpack.c.l.b16 %v5247
              %v5368 = vunpack.c.l.b16 %v5248
              %v5369 = vunpack.c.h.b16 %v5248
              %v5370 = vunpack.c.l.b16 %v5249
              %v5371 = vunpack.c.h.b16 %v5249
              %v5372 = vunpack.c.l.b16 %v5250
              %v5373 = vunpack.c.l.b16 %v5251
              %v5374 = vunpack.c.h.b16 %v5251
              %v5375 = vunpack.c.l.b16 %v5252
              %v5376 = vunpack.c.h.b16 %v5252
              %v5377 = vunpack.c.l.b16 %v5253
              %v5378 = vunpack.c.l.b16 %v5254
              %v5379 = vunpack.c.h.b16 %v5254
              %v5380 = vunpack.c.l.b16 %v5255
              %v5381 = vunpack.c.h.b16 %v5255
              %v5382 = vunpack.c.l.b16 %v5256
              %v5383 = vunpack.c.l.b16 %v5257
              %v5384 = vunpack.c.h.b16 %v5257
              %v5385 = vunpack.c.l.b16 %v5258
              %v5386 = vunpack.c.h.b16 %v5258
              %v5387 = vunpack.c.l.b16 %v5259
              %v5388 = vpack.c.b16 %v5313, %v5308
              %v5389 = vpack.c.b16 %v5314, %v5309
              %v5390 = vpack.c.b16 %v5315, %v5310
              %v5391 = vpack.c.b16 %v5316, %v5311
              %v5392 = vpack.c.b16 %v5317, %v5312
              %v5393 = vpack.c.b16 %v5323, %v5318
              %v5394 = vpack.c.b16 %v5324, %v5319
              %v5395 = vpack.c.b16 %v5325, %v5320
              %v5396 = vpack.c.b16 %v5326, %v5321
              %v5397 = vpack.c.b16 %v5327, %v5322
              %v5398 = vpack.c.b16 %v5333, %v5328
              %v5399 = vpack.c.b16 %v5334, %v5329
              %v5400 = vpack.c.b16 %v5335, %v5330
              %v5401 = vpack.c.b16 %v5336, %v5331
              %v5402 = vpack.c.b16 %v5337, %v5332
              %v5403 = vpack.c.b16 %v5343, %v5338
              %v5404 = vpack.c.b16 %v5344, %v5339
              %v5405 = vpack.c.b16 %v5345, %v5340
              %v5406 = vpack.c.b16 %v5346, %v5341
              %v5407 = vpack.c.b16 %v5347, %v5342
              %v5408 = vpack.c.b16 %v5353, %v5348
              %v5409 = vpack.c.b16 %v5354, %v5349
              %v5410 = vpack.c.b16 %v5355, %v5350
              %v5411 = vpack.c.b16 %v5356, %v5351
              %v5412 = vpack.c.b16 %v5357, %v5352
              %v5413 = vpack.c.b16 %v5363, %v5358
              %v5414 = vpack.c.b16 %v5364, %v5359
              %v5415 = vpack.c.b16 %v5365, %v5360
              %v5416 = vpack.c.b16 %v5366, %v5361
              %v5417 = vpack.c.b16 %v5367, %v5362
              %v5418 = vpack.c.b16 %v5373, %v5368
              %v5419 = vpack.c.b16 %v5374, %v5369
              %v5420 = vpack.c.b16 %v5375, %v5370
              %v5421 = vpack.c.b16 %v5376, %v5371
              %v5422 = vpack.c.b16 %v5377, %v5372
              %v5423 = vpack.c.b16 %v5383, %v5378
              %v5424 = vpack.c.b16 %v5384, %v5379
              %v5425 = vpack.c.b16 %v5385, %v5380
              %v5426 = vpack.c.b16 %v5386, %v5381
              %v5427 = vpack.c.b16 %v5387, %v5382
              %5468 = vmatprep.subr.bf16.mxu0 %v5424
              %5469 = vmatpush1.bf16.msra.mxu0 %v5423
              %5470 = vmatprep.subr.bf16.mxu0 %v5419
              %5471 = vmatpush1.bf16.msra.mxu0 %v5418
              %5472 = vmatprep.subr.bf16.mxu0 %v5414
              %5473 = vmatpush1.bf16.msra.mxu0 %v5413
              %5474 = vmatprep.subr.bf16.mxu0 %v5409
              %5475 = vmatpush1.bf16.msra.mxu0 %v5408
              %5476 = vmatprep.subr.bf16.mxu0 %v5404
              %5477 = vmatpush1.bf16.msra.mxu0 %v5403
              %5478 = vmatprep.subr.bf16.mxu0 %v5399
              %5479 = vmatpush1.bf16.msra.mxu0 %v5398
              %5480 = vmatprep.subr.bf16.mxu0 %v5394
              %5481 = vmatpush1.bf16.msra.mxu0 %v5393
              %5482 = vmatprep.subr.bf16.mxu0 %v5389
              %5483 = vmatpush1.bf16.msra.mxu0 %v5388
              %5484 = vmatprep.subr.bf16.mxu0 0
              %5485 = vmatpush2.bf16.msra.mxu0 0
              %5486 = vmatprep.subr.bf16.mxu0 0
              %5487 = vmatpush2.bf16.msra.mxu0 0
              %5488 = vmatprep.subr.bf16.mxu0 0
              %5489 = vmatpush2.bf16.msra.mxu0 0
              %5490 = vmatprep.subr.bf16.mxu0 0
              %5491 = vmatpush2.bf16.msra.mxu0 0
              %5492 = vmatprep.subr.bf16.mxu0 0
              %5493 = vmatpush2.bf16.msra.mxu0 0
              %5494 = vmatprep.subr.bf16.mxu0 0
              %5495 = vmatpush2.bf16.msra.mxu0 0
              %5496 = vmatprep.subr.bf16.mxu0 0
              %5497 = vmatpush2.bf16.msra.mxu0 0
              %5498 = vmatprep.subr.bf16.mxu0 0
              %5499 = vmatpush2.bf16.msra.mxu0 0
              %5500 = vmatprep.mubr.bf16.mxu0 0
              %5501 = vmatmul.mubr.bf16.gmra.mxu0 %v5210
              %v5502 = vpop.f32.mrf.mxu0
              %v5503 = vadd.f32 0.0, %v5502
              %v5504 = vpop.f32.mrf.mxu0
              %v5505 = vadd.f32 0.0, %v5504
              %v5506 = vpop.f32.mrf.mxu0
              %v5507 = vpop.f32.mrf.mxu0
              %5508 = vdwg.mxu0
              %5509 = vmatprep.subr.bf16.mxu0 %v5426
              %5510 = vmatpush1.bf16.msra.mxu0 %v5425
              %5511 = vmatprep.subr.bf16.mxu0 %v5421
              %5512 = vmatpush1.bf16.msra.mxu0 %v5420
              %5513 = vmatprep.subr.bf16.mxu0 %v5416
              %5514 = vmatpush1.bf16.msra.mxu0 %v5415
              %5515 = vmatprep.subr.bf16.mxu0 %v5411
              %5516 = vmatpush1.bf16.msra.mxu0 %v5410
              %5517 = vmatprep.subr.bf16.mxu0 %v5406
              %5518 = vmatpush1.bf16.msra.mxu0 %v5405
              %5519 = vmatprep.subr.bf16.mxu0 %v5401
              %5520 = vmatpush1.bf16.msra.mxu0 %v5400
              %5521 = vmatprep.subr.bf16.mxu0 %v5396
              %5522 = vmatpush1.bf16.msra.mxu0 %v5395
              %5523 = vmatprep.subr.bf16.mxu0 %v5391
              %5524 = vmatpush1.bf16.msra.mxu0 %v5390
              %5525 = vmatprep.subr.bf16.mxu0 0
              %5526 = vmatpush2.bf16.msra.mxu0 0
              %5527 = vmatprep.subr.bf16.mxu0 0
              %5528 = vmatpush2.bf16.msra.mxu0 0
              %5529 = vmatprep.subr.bf16.mxu0 0
              %5530 = vmatpush2.bf16.msra.mxu0 0
              %5531 = vmatprep.subr.bf16.mxu0 0
              %5532 = vmatpush2.bf16.msra.mxu0 0
              %5533 = vmatprep.subr.bf16.mxu0 0
              %5534 = vmatpush2.bf16.msra.mxu0 0
              %5535 = vmatprep.subr.bf16.mxu0 0
              %5536 = vmatpush2.bf16.msra.mxu0 0
              %5537 = vmatprep.subr.bf16.mxu0 0
              %5538 = vmatpush2.bf16.msra.mxu0 0
              %5539 = vmatprep.subr.bf16.mxu0 0
              %5540 = vmatpush2.bf16.msra.mxu0 0
              %5541 = vmatprep.mubr.bf16.mxu0 0
              %5542 = vmatmul.mubr.bf16.gmra.mxu0 %v5210
              %v5543 = vpop.f32.mrf.mxu0
              %v5544 = vadd.f32 0.0, %v5543
              %v5545 = vpop.f32.mrf.mxu0
              %v5546 = vadd.f32 0.0, %v5545
              %v5547 = vpop.f32.mrf.mxu0
              %v5548 = vpop.f32.mrf.mxu0
              %5549 = vdwg.mxu0
              %5550 = vmatprep.subr.bf16.mxu0 0
              %5551 = vmatpush1.bf16.msra.mxu0 %v5427
              %5552 = vmatprep.subr.bf16.mxu0 0
              %5553 = vmatpush1.bf16.msra.mxu0 %v5422
              %5554 = vmatprep.subr.bf16.mxu0 0
              %5555 = vmatpush1.bf16.msra.mxu0 %v5417
              %5556 = vmatprep.subr.bf16.mxu0 0
              %5557 = vmatpush1.bf16.msra.mxu0 %v5412
              %5558 = vmatprep.subr.bf16.mxu0 0
              %5559 = vmatpush1.bf16.msra.mxu0 %v5407
              %5560 = vmatprep.subr.bf16.mxu0 0
              %5561 = vmatpush1.bf16.msra.mxu0 %v5402
              %5562 = vmatprep.subr.bf16.mxu0 0
              %5563 = vmatpush1.bf16.msra.mxu0 %v5397
              %5564 = vmatprep.subr.bf16.mxu0 0
              %5565 = vmatpush1.bf16.msra.mxu0 %v5392
              %5566 = vmatprep.subr.bf16.mxu0 0
              %5567 = vmatpush2.bf16.msra.mxu0 0
              %5568 = vmatprep.subr.bf16.mxu0 0
              %5569 = vmatpush2.bf16.msra.mxu0 0
              %5570 = vmatprep.subr.bf16.mxu0 0
              %5571 = vmatpush2.bf16.msra.mxu0 0
              %5572 = vmatprep.subr.bf16.mxu0 0
              %5573 = vmatpush2.bf16.msra.mxu0 0
              %5574 = vmatprep.subr.bf16.mxu0 0
              %5575 = vmatpush2.bf16.msra.mxu0 0
              %5576 = vmatprep.subr.bf16.mxu0 0
              %5577 = vmatpush2.bf16.msra.mxu0 0
              %5578 = vmatprep.subr.bf16.mxu0 0
              %5579 = vmatpush2.bf16.msra.mxu0 0
              %5580 = vmatprep.subr.bf16.mxu0 0
              %5581 = vmatpush2.bf16.msra.mxu0 0
              %5582 = vmatprep.mubr.bf16.mxu0 0
              %5583 = vmatmul.mubr.bf16.gmra.mxu0 %v5210
              %v5584 = vpop.f32.mrf.mxu0
              %v5585 = vadd.f32 0.0, %v5584
              %v5586 = vpop.f32.mrf.mxu0
              %v5587 = vpop.f32.mrf.mxu0
              %v5588 = vpop.f32.mrf.mxu0
              %5589 = vdwg.mxu0
              %v5638 = vunpack.c.l.b16 %v5162
              %v5639 = vunpack.c.h.b16 %v5162
              %v5640 = vunpack.c.l.b16 %v5163
              %v5641 = vunpack.c.h.b16 %v5163
              %v5642 = vunpack.c.l.b16 %v5164
              %v5643 = vunpack.c.l.b16 %v5165
              %v5644 = vunpack.c.h.b16 %v5165
              %v5645 = vunpack.c.l.b16 %v5166
              %v5646 = vunpack.c.h.b16 %v5166
              %v5647 = vunpack.c.l.b16 %v5167
              %v5648 = vunpack.c.l.b16 %v5168
              %v5649 = vunpack.c.h.b16 %v5168
              %v5650 = vunpack.c.l.b16 %v5169
              %v5651 = vunpack.c.h.b16 %v5169
              %v5652 = vunpack.c.l.b16 %v5170
              %v5653 = vunpack.c.l.b16 %v5171
              %v5654 = vunpack.c.h.b16 %v5171
              %v5655 = vunpack.c.l.b16 %v5172
              %v5656 = vunpack.c.h.b16 %v5172
              %v5657 = vunpack.c.l.b16 %v5173
              %v5658 = vunpack.c.l.b16 %v5174
              %v5659 = vunpack.c.h.b16 %v5174
              %v5660 = vunpack.c.l.b16 %v5175
              %v5661 = vunpack.c.h.b16 %v5175
              %v5662 = vunpack.c.l.b16 %v5176
              %v5663 = vunpack.c.l.b16 %v5177
              %v5664 = vunpack.c.h.b16 %v5177
              %v5665 = vunpack.c.l.b16 %v5178
              %v5666 = vunpack.c.h.b16 %v5178
              %v5667 = vunpack.c.l.b16 %v5179
              %v5668 = vunpack.c.l.b16 %v5180
              %v5669 = vunpack.c.h.b16 %v5180
              %v5670 = vunpack.c.l.b16 %v5181
              %v5671 = vunpack.c.h.b16 %v5181
              %v5672 = vunpack.c.l.b16 %v5182
              %v5673 = vunpack.c.l.b16 %v5183
              %v5674 = vunpack.c.h.b16 %v5183
              %v5675 = vunpack.c.l.b16 %v5184
              %v5676 = vunpack.c.h.b16 %v5184
              %v5677 = vunpack.c.l.b16 %v5185
              %v5678 = vunpack.c.l.b16 %v5186
              %v5679 = vunpack.c.h.b16 %v5186
              %v5680 = vunpack.c.l.b16 %v5187
              %v5681 = vunpack.c.h.b16 %v5187
              %v5682 = vunpack.c.l.b16 %v5188
              %v5683 = vunpack.c.l.b16 %v5189
              %v5684 = vunpack.c.h.b16 %v5189
              %v5685 = vunpack.c.l.b16 %v5190
              %v5686 = vunpack.c.h.b16 %v5190
              %v5687 = vunpack.c.l.b16 %v5191
              %v5688 = vunpack.c.l.b16 %v5192
              %v5689 = vunpack.c.h.b16 %v5192
              %v5690 = vunpack.c.l.b16 %v5193
              %v5691 = vunpack.c.h.b16 %v5193
              %v5692 = vunpack.c.l.b16 %v5194
              %v5693 = vunpack.c.l.b16 %v5195
              %v5694 = vunpack.c.h.b16 %v5195
              %v5695 = vunpack.c.l.b16 %v5196
              %v5696 = vunpack.c.h.b16 %v5196
              %v5697 = vunpack.c.l.b16 %v5197
              %v5698 = vunpack.c.l.b16 %v5198
              %v5699 = vunpack.c.h.b16 %v5198
              %v5700 = vunpack.c.l.b16 %v5199
              %v5701 = vunpack.c.h.b16 %v5199
              %v5702 = vunpack.c.l.b16 %v5200
              %v5703 = vunpack.c.l.b16 %v5201
              %v5704 = vunpack.c.h.b16 %v5201
              %v5705 = vunpack.c.l.b16 %v5202
              %v5706 = vunpack.c.h.b16 %v5202
              %v5707 = vunpack.c.l.b16 %v5203
              %v5708 = vunpack.c.l.b16 %v5204
              %v5709 = vunpack.c.h.b16 %v5204
              %v5710 = vunpack.c.l.b16 %v5205
              %v5711 = vunpack.c.h.b16 %v5205
              %v5712 = vunpack.c.l.b16 %v5206
              %v5713 = vunpack.c.l.b16 %v5207
              %v5714 = vunpack.c.h.b16 %v5207
              %v5715 = vunpack.c.l.b16 %v5208
              %v5716 = vunpack.c.h.b16 %v5208
              %v5717 = vunpack.c.l.b16 %v5209
              %v5718 = vpack.c.b16 %v5643, %v5638
              %v5719 = vpack.c.b16 %v5644, %v5639
              %v5720 = vpack.c.b16 %v5645, %v5640
              %v5721 = vpack.c.b16 %v5646, %v5641
              %v5722 = vpack.c.b16 %v5647, %v5642
              %v5723 = vpack.c.b16 %v5653, %v5648
              %v5724 = vpack.c.b16 %v5654, %v5649
              %v5725 = vpack.c.b16 %v5655, %v5650
              %v5726 = vpack.c.b16 %v5656, %v5651
              %v5727 = vpack.c.b16 %v5657, %v5652
              %v5728 = vpack.c.b16 %v5663, %v5658
              %v5729 = vpack.c.b16 %v5664, %v5659
              %v5730 = vpack.c.b16 %v5665, %v5660
              %v5731 = vpack.c.b16 %v5666, %v5661
              %v5732 = vpack.c.b16 %v5667, %v5662
              %v5733 = vpack.c.b16 %v5673, %v5668
              %v5734 = vpack.c.b16 %v5674, %v5669
              %v5735 = vpack.c.b16 %v5675, %v5670
              %v5736 = vpack.c.b16 %v5676, %v5671
              %v5737 = vpack.c.b16 %v5677, %v5672
              %v5738 = vpack.c.b16 %v5683, %v5678
              %v5739 = vpack.c.b16 %v5684, %v5679
              %v5740 = vpack.c.b16 %v5685, %v5680
              %v5741 = vpack.c.b16 %v5686, %v5681
              %v5742 = vpack.c.b16 %v5687, %v5682
              %v5743 = vpack.c.b16 %v5693, %v5688
              %v5744 = vpack.c.b16 %v5694, %v5689
              %v5745 = vpack.c.b16 %v5695, %v5690
              %v5746 = vpack.c.b16 %v5696, %v5691
              %v5747 = vpack.c.b16 %v5697, %v5692
              %v5748 = vpack.c.b16 %v5703, %v5698
              %v5749 = vpack.c.b16 %v5704, %v5699
              %v5750 = vpack.c.b16 %v5705, %v5700
              %v5751 = vpack.c.b16 %v5706, %v5701
              %v5752 = vpack.c.b16 %v5707, %v5702
              %v5753 = vpack.c.b16 %v5713, %v5708
              %v5754 = vpack.c.b16 %v5714, %v5709
              %v5755 = vpack.c.b16 %v5715, %v5710
              %v5756 = vpack.c.b16 %v5716, %v5711
              %v5757 = vpack.c.b16 %v5717, %v5712
              %5798 = vmatprep.subr.bf16.mxu0 %v5754
              %5799 = vmatpush1.bf16.msra.mxu0 %v5753
              %5800 = vmatprep.subr.bf16.mxu0 %v5749
              %5801 = vmatpush1.bf16.msra.mxu0 %v5748
              %5802 = vmatprep.subr.bf16.mxu0 %v5744
              %5803 = vmatpush1.bf16.msra.mxu0 %v5743
              %5804 = vmatprep.subr.bf16.mxu0 %v5739
              %5805 = vmatpush1.bf16.msra.mxu0 %v5738
              %5806 = vmatprep.subr.bf16.mxu0 %v5734
              %5807 = vmatpush1.bf16.msra.mxu0 %v5733
              %5808 = vmatprep.subr.bf16.mxu0 %v5729
              %5809 = vmatpush1.bf16.msra.mxu0 %v5728
              %5810 = vmatprep.subr.bf16.mxu0 %v5724
              %5811 = vmatpush1.bf16.msra.mxu0 %v5723
              %5812 = vmatprep.subr.bf16.mxu0 %v5719
              %5813 = vmatpush1.bf16.msra.mxu0 %v5718
              %5814 = vmatprep.subr.bf16.mxu0 0
              %5815 = vmatpush2.bf16.msra.mxu0 0
              %5816 = vmatprep.subr.bf16.mxu0 0
              %5817 = vmatpush2.bf16.msra.mxu0 0
              %5818 = vmatprep.subr.bf16.mxu0 0
              %5819 = vmatpush2.bf16.msra.mxu0 0
              %5820 = vmatprep.subr.bf16.mxu0 0
              %5821 = vmatpush2.bf16.msra.mxu0 0
              %5822 = vmatprep.subr.bf16.mxu0 0
              %5823 = vmatpush2.bf16.msra.mxu0 0
              %5824 = vmatprep.subr.bf16.mxu0 0
              %5825 = vmatpush2.bf16.msra.mxu0 0
              %5826 = vmatprep.subr.bf16.mxu0 0
              %5827 = vmatpush2.bf16.msra.mxu0 0
              %5828 = vmatprep.subr.bf16.mxu0 0
              %5829 = vmatpush2.bf16.msra.mxu0 0
              %5830 = vmatprep.mubr.bf16.mxu0 0
              %5831 = vmatmul.mubr.bf16.gmra.mxu0 %v5160
              %v5832 = vpop.f32.mrf.mxu0
              %v5833 = vadd.f32 %v5503, %v5832
              %v5834 = vpop.f32.mrf.mxu0
              %v5835 = vadd.f32 %v5505, %v5834
              %v5836 = vpop.f32.mrf.mxu0
              %v5837 = vpop.f32.mrf.mxu0
              %5838 = vdwg.mxu0
              %5839 = vmatprep.subr.bf16.mxu0 %v5756
              %5840 = vmatpush1.bf16.msra.mxu0 %v5755
              %5841 = vmatprep.subr.bf16.mxu0 %v5751
              %5842 = vmatpush1.bf16.msra.mxu0 %v5750
              %5843 = vmatprep.subr.bf16.mxu0 %v5746
              %5844 = vmatpush1.bf16.msra.mxu0 %v5745
              %5845 = vmatprep.subr.bf16.mxu0 %v5741
              %5846 = vmatpush1.bf16.msra.mxu0 %v5740
              %5847 = vmatprep.subr.bf16.mxu0 %v5736
              %5848 = vmatpush1.bf16.msra.mxu0 %v5735
              %5849 = vmatprep.subr.bf16.mxu0 %v5731
              %5850 = vmatpush1.bf16.msra.mxu0 %v5730
              %5851 = vmatprep.subr.bf16.mxu0 %v5726
              %5852 = vmatpush1.bf16.msra.mxu0 %v5725
              %5853 = vmatprep.subr.bf16.mxu0 %v5721
              %5854 = vmatpush1.bf16.msra.mxu0 %v5720
              %5855 = vmatprep.subr.bf16.mxu0 0
              %5856 = vmatpush2.bf16.msra.mxu0 0
              %5857 = vmatprep.subr.bf16.mxu0 0
              %5858 = vmatpush2.bf16.msra.mxu0 0
              %5859 = vmatprep.subr.bf16.mxu0 0
              %5860 = vmatpush2.bf16.msra.mxu0 0
              %5861 = vmatprep.subr.bf16.mxu0 0
              %5862 = vmatpush2.bf16.msra.mxu0 0
              %5863 = vmatprep.subr.bf16.mxu0 0
              %5864 = vmatpush2.bf16.msra.mxu0 0
              %5865 = vmatprep.subr.bf16.mxu0 0
              %5866 = vmatpush2.bf16.msra.mxu0 0
              %5867 = vmatprep.subr.bf16.mxu0 0
              %5868 = vmatpush2.bf16.msra.mxu0 0
              %5869 = vmatprep.subr.bf16.mxu0 0
              %5870 = vmatpush2.bf16.msra.mxu0 0
              %5871 = vmatprep.mubr.bf16.mxu0 0
              %5872 = vmatmul.mubr.bf16.gmra.mxu0 %v5160
              %v5873 = vpop.f32.mrf.mxu0
              %v5874 = vadd.f32 %v5544, %v5873
              %v5875 = vpop.f32.mrf.mxu0
              %v5876 = vadd.f32 %v5546, %v5875
              %v5877 = vpop.f32.mrf.mxu0
              %v5878 = vpop.f32.mrf.mxu0
              %5879 = vdwg.mxu0
              %5880 = vmatprep.subr.bf16.mxu0 0
              %5881 = vmatpush1.bf16.msra.mxu0 %v5757
              %5882 = vmatprep.subr.bf16.mxu0 0
              %5883 = vmatpush1.bf16.msra.mxu0 %v5752
              %5884 = vmatprep.subr.bf16.mxu0 0
              %5885 = vmatpush1.bf16.msra.mxu0 %v5747
              %5886 = vmatprep.subr.bf16.mxu0 0
              %5887 = vmatpush1.bf16.msra.mxu0 %v5742
              %5888 = vmatprep.subr.bf16.mxu0 0
              %5889 = vmatpush1.bf16.msra.mxu0 %v5737
              %5890 = vmatprep.subr.bf16.mxu0 0
              %5891 = vmatpush1.bf16.msra.mxu0 %v5732
              %5892 = vmatprep.subr.bf16.mxu0 0
              %5893 = vmatpush1.bf16.msra.mxu0 %v5727
              %5894 = vmatprep.subr.bf16.mxu0 0
              %5895 = vmatpush1.bf16.msra.mxu0 %v5722
              %5896 = vmatprep.subr.bf16.mxu0 0
              %5897 = vmatpush2.bf16.msra.mxu0 0
              %5898 = vmatprep.subr.bf16.mxu0 0
              %5899 = vmatpush2.bf16.msra.mxu0 0
              %5900 = vmatprep.subr.bf16.mxu0 0
              %5901 = vmatpush2.bf16.msra.mxu0 0
              %5902 = vmatprep.subr.bf16.mxu0 0
              %5903 = vmatpush2.bf16.msra.mxu0 0
              %5904 = vmatprep.subr.bf16.mxu0 0
              %5905 = vmatpush2.bf16.msra.mxu0 0
              %5906 = vmatprep.subr.bf16.mxu0 0
              %5907 = vmatpush2.bf16.msra.mxu0 0
              %5908 = vmatprep.subr.bf16.mxu0 0
              %5909 = vmatpush2.bf16.msra.mxu0 0
              %5910 = vmatprep.subr.bf16.mxu0 0
              %5911 = vmatpush2.bf16.msra.mxu0 0
              %5912 = vmatprep.mubr.bf16.mxu0 0
              %5913 = vmatmul.mubr.bf16.gmra.mxu0 %v5160
              %v5914 = vpop.f32.mrf.mxu0
              %v5915 = vadd.f32 %v5585, %v5914
              %v5916 = vpop.f32.mrf.mxu0
              %v5917 = vpop.f32.mrf.mxu0
              %v5918 = vpop.f32.mrf.mxu0
              %5919 = vdwg.mxu0
              %v5920 = vadd.f32 %v5833, %v284
              %v5921 = vadd.f32 %v5835, %v288
              %v5922 = vadd.f32 %v5874, %v292
              %v5923 = vadd.f32 %v5876, %v296
              %v5924 = vadd.f32 %v5915, %v300
              %v5925 = vmul.f32 %v5920, 0.5
              %v5926 = vtanh.pop %v5925
              %v5927 = vadd.f32 %v5926, 1.0
              %v5928 = vmul.f32 %v5927, 0.5
              %v5929 = vmul.f32 %v5921, 0.5
              %v5930 = vtanh.pop %v5929
              %v5931 = vadd.f32 %v5930, 1.0
              %v5932 = vmul.f32 %v5931, 0.5
              %v5933 = vtanh.pop %v5922
              %v5934 = vmul.f32 %v5923, 0.5
              %v5935 = vtanh.pop %v5934
              %v5936 = vadd.f32 %v5935, 1.0
              %v5937 = vmul.f32 %v5936, 0.5
              %v5938 = vmul.f32 %v5924, 0.5
              %v5939 = vtanh.pop %v5938
              %v5940 = vadd.f32 %v5939, 1.0
              %v5941 = vmul.f32 %v5940, 0.5
              %v5942 = vmul.f32 %v5928, %v5933
              %v5943 = vmul.f32 %v5937, %v5159
              %v5944 = vadd.f32 %v5942, %v5943
              %v5945 = vmul.f32 %v5941, %v5157
              %v5946 = vadd.f32 %v5944, %v5945
              %v5947 = vtanh.pop %v5946
              %v5948 = vmul.f32 %v5932, %v5947
              %5949 = vst [vmem:[#allocation3] sm:$0xff] %v5948
              %5950 = vst [vmem:[#allocation3 + $0x8] sm:$0xff] %v5946
            $region98: #{_fenwick_forward_stream.1} parent=69 // pred_fallthru
              _
            %p5951 = scmp.lt.s32.totalorder %s337, 2
            %s5952 = sshra.s32 %s314, 2
            %s5953 = sand.u32 %s5952, 1
            %p5954 = scmp.eq.s32.totalorder %s5953, 1
            %p5955 = pnand %p5951, %p5954
            %p5956 = pneg %p5955
            // Predicated region
            $region99: #{_fenwick_forward_stream.1} parent=69 // pred_check
              _
            $region100: #{_fenwick_forward_stream.1} parent=69 // pred_check_branch
              %5958 = sbr.rel (%p5955) target = $region102
            $region101: #{_fenwick_forward_stream.1} parent=69 // pred_region
              %s5959 = scalar_lea.vmem [#allocation2], 32
              %v5960 = vld [vmem:[%s5959] sm:$0xff]
              %v5961 = vld [vmem:[%s5959 + $0x8] sm:$0xff]
              %v5962 = vld [vmem:[#allocation3] sm:$0xff]
              %v5963 = vld [vmem:[#allocation3 + $0x8] sm:$0xff]
              %v5964 = vpack.c.bf16 %v5962, %v5962
              %s5965 = scalar_lea.vmem %s0, 640
              %v5966 = vld [vmem:[%s5965] sm:$0xff]
              %v5967 = vld [vmem:[%s5965 + $0x8] sm:$0xff]
              %v5968 = vld [vmem:[%s5965 + $0x10] sm:$0xf]
              %v5969 = vld [vmem:[%s5965 + $0x14] sm:$0xff]
              %v5970 = vld [vmem:[%s5965 + $0x1c] sm:$0xff]
              %v5971 = vld [vmem:[%s5965 + $0x24] sm:$0xf]
              %v5972 = vld [vmem:[%s5965 + $0x28] sm:$0xff]
              %v5973 = vld [vmem:[%s5965 + $0x30] sm:$0xff]
              %v5974 = vld [vmem:[%s5965 + $0x38] sm:$0xf]
              %v5975 = vld [vmem:[%s5965 + $0x3c] sm:$0xff]
              %v5976 = vld [vmem:[%s5965 + $0x44] sm:$0xff]
              %v5977 = vld [vmem:[%s5965 + $0x4c] sm:$0xf]
              %v5978 = vld [vmem:[%s5965 + $0x50] sm:$0xff]
              %v5979 = vld [vmem:[%s5965 + $0x58] sm:$0xff]
              %v5980 = vld [vmem:[%s5965 + $0x60] sm:$0xf]
              %v5981 = vld [vmem:[%s5965 + $0x64] sm:$0xff]
              %v5982 = vld [vmem:[%s5965 + $0x6c] sm:$0xff]
              %v5983 = vld [vmem:[%s5965 + $0x74] sm:$0xf]
              %v5984 = vld [vmem:[%s5965 + $0x78] sm:$0xff]
              %v5985 = vld [vmem:[%s5965 + $0x80] sm:$0xff]
              %v5986 = vld [vmem:[%s5965 + $0x88] sm:$0xf]
              %v5987 = vld [vmem:[%s5965 + $0x8c] sm:$0xff]
              %v5988 = vld [vmem:[%s5965 + $0x94] sm:$0xff]
              %v5989 = vld [vmem:[%s5965 + $0x9c] sm:$0xf]
              %v5990 = vld [vmem:[%s5965 + $0xa0] sm:$0xff]
              %v5991 = vld [vmem:[%s5965 + $0xa8] sm:$0xff]
              %v5992 = vld [vmem:[%s5965 + $0xb0] sm:$0xf]
              %v5993 = vld [vmem:[%s5965 + $0xb4] sm:$0xff]
              %v5994 = vld [vmem:[%s5965 + $0xbc] sm:$0xff]
              %v5995 = vld [vmem:[%s5965 + $0xc4] sm:$0xf]
              %v5996 = vld [vmem:[%s5965 + $0xc8] sm:$0xff]
              %v5997 = vld [vmem:[%s5965 + $0xd0] sm:$0xff]
              %v5998 = vld [vmem:[%s5965 + $0xd8] sm:$0xf]
              %v5999 = vld [vmem:[%s5965 + $0xdc] sm:$0xff]
              %v6000 = vld [vmem:[%s5965 + $0xe4] sm:$0xff]
              %v6001 = vld [vmem:[%s5965 + $0xec] sm:$0xf]
              %v6002 = vld [vmem:[%s5965 + $0xf0] sm:$0xff]
              %v6003 = vld [vmem:[%s5965 + $0xf8] sm:$0xff]
              %v6004 = vld [vmem:[%s5965 + $0x100] sm:$0xf]
              %v6005 = vld [vmem:[%s5965 + $0x104] sm:$0xff]
              %v6006 = vld [vmem:[%s5965 + $0x10c] sm:$0xff]
              %v6007 = vld [vmem:[%s5965 + $0x114] sm:$0xf]
              %v6008 = vld [vmem:[%s5965 + $0x118] sm:$0xff]
              %v6009 = vld [vmem:[%s5965 + $0x120] sm:$0xff]
              %v6010 = vld [vmem:[%s5965 + $0x128] sm:$0xf]
              %v6011 = vld [vmem:[%s5965 + $0x12c] sm:$0xff]
              %v6012 = vld [vmem:[%s5965 + $0x134] sm:$0xff]
              %v6013 = vld [vmem:[%s5965 + $0x13c] sm:$0xf]
              %v6014 = vpack.c.bf16 %v5960, %v5960
              %s6015 = scalar_lea.vmem %s0, 960
              %v6016 = vld [vmem:[%s6015] sm:$0xff]
              %v6017 = vld [vmem:[%s6015 + $0x8] sm:$0xff]
              %v6018 = vld [vmem:[%s6015 + $0x10] sm:$0xf]
              %v6019 = vld [vmem:[%s6015 + $0x14] sm:$0xff]
              %v6020 = vld [vmem:[%s6015 + $0x1c] sm:$0xff]
              %v6021 = vld [vmem:[%s6015 + $0x24] sm:$0xf]
              %v6022 = vld [vmem:[%s6015 + $0x28] sm:$0xff]
              %v6023 = vld [vmem:[%s6015 + $0x30] sm:$0xff]
              %v6024 = vld [vmem:[%s6015 + $0x38] sm:$0xf]
              %v6025 = vld [vmem:[%s6015 + $0x3c] sm:$0xff]
              %v6026 = vld [vmem:[%s6015 + $0x44] sm:$0xff]
              %v6027 = vld [vmem:[%s6015 + $0x4c] sm:$0xf]
              %v6028 = vld [vmem:[%s6015 + $0x50] sm:$0xff]
              %v6029 = vld [vmem:[%s6015 + $0x58] sm:$0xff]
              %v6030 = vld [vmem:[%s6015 + $0x60] sm:$0xf]
              %v6031 = vld [vmem:[%s6015 + $0x64] sm:$0xff]
              %v6032 = vld [vmem:[%s6015 + $0x6c] sm:$0xff]
              %v6033 = vld [vmem:[%s6015 + $0x74] sm:$0xf]
              %v6034 = vld [vmem:[%s6015 + $0x78] sm:$0xff]
              %v6035 = vld [vmem:[%s6015 + $0x80] sm:$0xff]
              %v6036 = vld [vmem:[%s6015 + $0x88] sm:$0xf]
              %v6037 = vld [vmem:[%s6015 + $0x8c] sm:$0xff]
              %v6038 = vld [vmem:[%s6015 + $0x94] sm:$0xff]
              %v6039 = vld [vmem:[%s6015 + $0x9c] sm:$0xf]
              %v6040 = vld [vmem:[%s6015 + $0xa0] sm:$0xff]
              %v6041 = vld [vmem:[%s6015 + $0xa8] sm:$0xff]
              %v6042 = vld [vmem:[%s6015 + $0xb0] sm:$0xf]
              %v6043 = vld [vmem:[%s6015 + $0xb4] sm:$0xff]
              %v6044 = vld [vmem:[%s6015 + $0xbc] sm:$0xff]
              %v6045 = vld [vmem:[%s6015 + $0xc4] sm:$0xf]
              %v6046 = vld [vmem:[%s6015 + $0xc8] sm:$0xff]
              %v6047 = vld [vmem:[%s6015 + $0xd0] sm:$0xff]
              %v6048 = vld [vmem:[%s6015 + $0xd8] sm:$0xf]
              %v6049 = vld [vmem:[%s6015 + $0xdc] sm:$0xff]
              %v6050 = vld [vmem:[%s6015 + $0xe4] sm:$0xff]
              %v6051 = vld [vmem:[%s6015 + $0xec] sm:$0xf]
              %v6052 = vld [vmem:[%s6015 + $0xf0] sm:$0xff]
              %v6053 = vld [vmem:[%s6015 + $0xf8] sm:$0xff]
              %v6054 = vld [vmem:[%s6015 + $0x100] sm:$0xf]
              %v6055 = vld [vmem:[%s6015 + $0x104] sm:$0xff]
              %v6056 = vld [vmem:[%s6015 + $0x10c] sm:$0xff]
              %v6057 = vld [vmem:[%s6015 + $0x114] sm:$0xf]
              %v6058 = vld [vmem:[%s6015 + $0x118] sm:$0xff]
              %v6059 = vld [vmem:[%s6015 + $0x120] sm:$0xff]
              %v6060 = vld [vmem:[%s6015 + $0x128] sm:$0xf]
              %v6061 = vld [vmem:[%s6015 + $0x12c] sm:$0xff]
              %v6062 = vld [vmem:[%s6015 + $0x134] sm:$0xff]
              %v6063 = vld [vmem:[%s6015 + $0x13c] sm:$0xf]
              %v6112 = vunpack.c.l.b16 %v6016
              %v6113 = vunpack.c.h.b16 %v6016
              %v6114 = vunpack.c.l.b16 %v6017
              %v6115 = vunpack.c.h.b16 %v6017
              %v6116 = vunpack.c.l.b16 %v6018
              %v6117 = vunpack.c.l.b16 %v6019
              %v6118 = vunpack.c.h.b16 %v6019
              %v6119 = vunpack.c.l.b16 %v6020
              %v6120 = vunpack.c.h.b16 %v6020
              %v6121 = vunpack.c.l.b16 %v6021
              %v6122 = vunpack.c.l.b16 %v6022
              %v6123 = vunpack.c.h.b16 %v6022
              %v6124 = vunpack.c.l.b16 %v6023
              %v6125 = vunpack.c.h.b16 %v6023
              %v6126 = vunpack.c.l.b16 %v6024
              %v6127 = vunpack.c.l.b16 %v6025
              %v6128 = vunpack.c.h.b16 %v6025
              %v6129 = vunpack.c.l.b16 %v6026
              %v6130 = vunpack.c.h.b16 %v6026
              %v6131 = vunpack.c.l.b16 %v6027
              %v6132 = vunpack.c.l.b16 %v6028
              %v6133 = vunpack.c.h.b16 %v6028
              %v6134 = vunpack.c.l.b16 %v6029
              %v6135 = vunpack.c.h.b16 %v6029
              %v6136 = vunpack.c.l.b16 %v6030
              %v6137 = vunpack.c.l.b16 %v6031
              %v6138 = vunpack.c.h.b16 %v6031
              %v6139 = vunpack.c.l.b16 %v6032
              %v6140 = vunpack.c.h.b16 %v6032
              %v6141 = vunpack.c.l.b16 %v6033
              %v6142 = vunpack.c.l.b16 %v6034
              %v6143 = vunpack.c.h.b16 %v6034
              %v6144 = vunpack.c.l.b16 %v6035
              %v6145 = vunpack.c.h.b16 %v6035
              %v6146 = vunpack.c.l.b16 %v6036
              %v6147 = vunpack.c.l.b16 %v6037
              %v6148 = vunpack.c.h.b16 %v6037
              %v6149 = vunpack.c.l.b16 %v6038
              %v6150 = vunpack.c.h.b16 %v6038
              %v6151 = vunpack.c.l.b16 %v6039
              %v6152 = vunpack.c.l.b16 %v6040
              %v6153 = vunpack.c.h.b16 %v6040
              %v6154 = vunpack.c.l.b16 %v6041
              %v6155 = vunpack.c.h.b16 %v6041
              %v6156 = vunpack.c.l.b16 %v6042
              %v6157 = vunpack.c.l.b16 %v6043
              %v6158 = vunpack.c.h.b16 %v6043
              %v6159 = vunpack.c.l.b16 %v6044
              %v6160 = vunpack.c.h.b16 %v6044
              %v6161 = vunpack.c.l.b16 %v6045
              %v6162 = vunpack.c.l.b16 %v6046
              %v6163 = vunpack.c.h.b16 %v6046
              %v6164 = vunpack.c.l.b16 %v6047
              %v6165 = vunpack.c.h.b16 %v6047
              %v6166 = vunpack.c.l.b16 %v6048
              %v6167 = vunpack.c.l.b16 %v6049
              %v6168 = vunpack.c.h.b16 %v6049
              %v6169 = vunpack.c.l.b16 %v6050
              %v6170 = vunpack.c.h.b16 %v6050
              %v6171 = vunpack.c.l.b16 %v6051
              %v6172 = vunpack.c.l.b16 %v6052
              %v6173 = vunpack.c.h.b16 %v6052
              %v6174 = vunpack.c.l.b16 %v6053
              %v6175 = vunpack.c.h.b16 %v6053
              %v6176 = vunpack.c.l.b16 %v6054
              %v6177 = vunpack.c.l.b16 %v6055
              %v6178 = vunpack.c.h.b16 %v6055
              %v6179 = vunpack.c.l.b16 %v6056
              %v6180 = vunpack.c.h.b16 %v6056
              %v6181 = vunpack.c.l.b16 %v6057
              %v6182 = vunpack.c.l.b16 %v6058
              %v6183 = vunpack.c.h.b16 %v6058
              %v6184 = vunpack.c.l.b16 %v6059
              %v6185 = vunpack.c.h.b16 %v6059
              %v6186 = vunpack.c.l.b16 %v6060
              %v6187 = vunpack.c.l.b16 %v6061
              %v6188 = vunpack.c.h.b16 %v6061
              %v6189 = vunpack.c.l.b16 %v6062
              %v6190 = vunpack.c.h.b16 %v6062
              %v6191 = vunpack.c.l.b16 %v6063
              %v6192 = vpack.c.b16 %v6117, %v6112
              %v6193 = vpack.c.b16 %v6118, %v6113
              %v6194 = vpack.c.b16 %v6119, %v6114
              %v6195 = vpack.c.b16 %v6120, %v6115
              %v6196 = vpack.c.b16 %v6121, %v6116
              %v6197 = vpack.c.b16 %v6127, %v6122
              %v6198 = vpack.c.b16 %v6128, %v6123
              %v6199 = vpack.c.b16 %v6129, %v6124
              %v6200 = vpack.c.b16 %v6130, %v6125
              %v6201 = vpack.c.b16 %v6131, %v6126
              %v6202 = vpack.c.b16 %v6137, %v6132
              %v6203 = vpack.c.b16 %v6138, %v6133
              %v6204 = vpack.c.b16 %v6139, %v6134
              %v6205 = vpack.c.b16 %v6140, %v6135
              %v6206 = vpack.c.b16 %v6141, %v6136
              %v6207 = vpack.c.b16 %v6147, %v6142
              %v6208 = vpack.c.b16 %v6148, %v6143
              %v6209 = vpack.c.b16 %v6149, %v6144
              %v6210 = vpack.c.b16 %v6150, %v6145
              %v6211 = vpack.c.b16 %v6151, %v6146
              %v6212 = vpack.c.b16 %v6157, %v6152
              %v6213 = vpack.c.b16 %v6158, %v6153
              %v6214 = vpack.c.b16 %v6159, %v6154
              %v6215 = vpack.c.b16 %v6160, %v6155
              %v6216 = vpack.c.b16 %v6161, %v6156
              %v6217 = vpack.c.b16 %v6167, %v6162
              %v6218 = vpack.c.b16 %v6168, %v6163
              %v6219 = vpack.c.b16 %v6169, %v6164
              %v6220 = vpack.c.b16 %v6170, %v6165
              %v6221 = vpack.c.b16 %v6171, %v6166
              %v6222 = vpack.c.b16 %v6177, %v6172
              %v6223 = vpack.c.b16 %v6178, %v6173
              %v6224 = vpack.c.b16 %v6179, %v6174
              %v6225 = vpack.c.b16 %v6180, %v6175
              %v6226 = vpack.c.b16 %v6181, %v6176
              %v6227 = vpack.c.b16 %v6187, %v6182
              %v6228 = vpack.c.b16 %v6188, %v6183
              %v6229 = vpack.c.b16 %v6189, %v6184
              %v6230 = vpack.c.b16 %v6190, %v6185
              %v6231 = vpack.c.b16 %v6191, %v6186
              %6272 = vmatprep.subr.bf16.mxu0 %v6228
              %6273 = vmatpush1.bf16.msra.mxu0 %v6227
              %6274 = vmatprep.subr.bf16.mxu0 %v6223
              %6275 = vmatpush1.bf16.msra.mxu0 %v6222
              %6276 = vmatprep.subr.bf16.mxu0 %v6218
              %6277 = vmatpush1.bf16.msra.mxu0 %v6217
              %6278 = vmatprep.subr.bf16.mxu0 %v6213
              %6279 = vmatpush1.bf16.msra.mxu0 %v6212
              %6280 = vmatprep.subr.bf16.mxu0 %v6208
              %6281 = vmatpush1.bf16.msra.mxu0 %v6207
              %6282 = vmatprep.subr.bf16.mxu0 %v6203
              %6283 = vmatpush1.bf16.msra.mxu0 %v6202
              %6284 = vmatprep.subr.bf16.mxu0 %v6198
              %6285 = vmatpush1.bf16.msra.mxu0 %v6197
              %6286 = vmatprep.subr.bf16.mxu0 %v6193
              %6287 = vmatpush1.bf16.msra.mxu0 %v6192
              %6288 = vmatprep.subr.bf16.mxu0 0
              %6289 = vmatpush2.bf16.msra.mxu0 0
              %6290 = vmatprep.subr.bf16.mxu0 0
              %6291 = vmatpush2.bf16.msra.mxu0 0
              %6292 = vmatprep.subr.bf16.mxu0 0
              %6293 = vmatpush2.bf16.msra.mxu0 0
              %6294 = vmatprep.subr.bf16.mxu0 0
              %6295 = vmatpush2.bf16.msra.mxu0 0
              %6296 = vmatprep.subr.bf16.mxu0 0
              %6297 = vmatpush2.bf16.msra.mxu0 0
              %6298 = vmatprep.subr.bf16.mxu0 0
              %6299 = vmatpush2.bf16.msra.mxu0 0
              %6300 = vmatprep.subr.bf16.mxu0 0
              %6301 = vmatpush2.bf16.msra.mxu0 0
              %6302 = vmatprep.subr.bf16.mxu0 0
              %6303 = vmatpush2.bf16.msra.mxu0 0
              %6304 = vmatprep.mubr.bf16.mxu0 0
              %6305 = vmatmul.mubr.bf16.gmra.mxu0 %v6014
              %v6306 = vpop.f32.mrf.mxu0
              %v6307 = vadd.f32 0.0, %v6306
              %v6308 = vpop.f32.mrf.mxu0
              %v6309 = vadd.f32 0.0, %v6308
              %v6310 = vpop.f32.mrf.mxu0
              %v6311 = vpop.f32.mrf.mxu0
              %6312 = vdwg.mxu0
              %6313 = vmatprep.subr.bf16.mxu0 %v6230
              %6314 = vmatpush1.bf16.msra.mxu0 %v6229
              %6315 = vmatprep.subr.bf16.mxu0 %v6225
              %6316 = vmatpush1.bf16.msra.mxu0 %v6224
              %6317 = vmatprep.subr.bf16.mxu0 %v6220
              %6318 = vmatpush1.bf16.msra.mxu0 %v6219
              %6319 = vmatprep.subr.bf16.mxu0 %v6215
              %6320 = vmatpush1.bf16.msra.mxu0 %v6214
              %6321 = vmatprep.subr.bf16.mxu0 %v6210
              %6322 = vmatpush1.bf16.msra.mxu0 %v6209
              %6323 = vmatprep.subr.bf16.mxu0 %v6205
              %6324 = vmatpush1.bf16.msra.mxu0 %v6204
              %6325 = vmatprep.subr.bf16.mxu0 %v6200
              %6326 = vmatpush1.bf16.msra.mxu0 %v6199
              %6327 = vmatprep.subr.bf16.mxu0 %v6195
              %6328 = vmatpush1.bf16.msra.mxu0 %v6194
              %6329 = vmatprep.subr.bf16.mxu0 0
              %6330 = vmatpush2.bf16.msra.mxu0 0
              %6331 = vmatprep.subr.bf16.mxu0 0
              %6332 = vmatpush2.bf16.msra.mxu0 0
              %6333 = vmatprep.subr.bf16.mxu0 0
              %6334 = vmatpush2.bf16.msra.mxu0 0
              %6335 = vmatprep.subr.bf16.mxu0 0
              %6336 = vmatpush2.bf16.msra.mxu0 0
              %6337 = vmatprep.subr.bf16.mxu0 0
              %6338 = vmatpush2.bf16.msra.mxu0 0
              %6339 = vmatprep.subr.bf16.mxu0 0
              %6340 = vmatpush2.bf16.msra.mxu0 0
              %6341 = vmatprep.subr.bf16.mxu0 0
              %6342 = vmatpush2.bf16.msra.mxu0 0
              %6343 = vmatprep.subr.bf16.mxu0 0
              %6344 = vmatpush2.bf16.msra.mxu0 0
              %6345 = vmatprep.mubr.bf16.mxu0 0
              %6346 = vmatmul.mubr.bf16.gmra.mxu0 %v6014
              %v6347 = vpop.f32.mrf.mxu0
              %v6348 = vadd.f32 0.0, %v6347
              %v6349 = vpop.f32.mrf.mxu0
              %v6350 = vadd.f32 0.0, %v6349
              %v6351 = vpop.f32.mrf.mxu0
              %v6352 = vpop.f32.mrf.mxu0
              %6353 = vdwg.mxu0
              %6354 = vmatprep.subr.bf16.mxu0 0
              %6355 = vmatpush1.bf16.msra.mxu0 %v6231
              %6356 = vmatprep.subr.bf16.mxu0 0
              %6357 = vmatpush1.bf16.msra.mxu0 %v6226
              %6358 = vmatprep.subr.bf16.mxu0 0
              %6359 = vmatpush1.bf16.msra.mxu0 %v6221
              %6360 = vmatprep.subr.bf16.mxu0 0
              %6361 = vmatpush1.bf16.msra.mxu0 %v6216
              %6362 = vmatprep.subr.bf16.mxu0 0
              %6363 = vmatpush1.bf16.msra.mxu0 %v6211
              %6364 = vmatprep.subr.bf16.mxu0 0
              %6365 = vmatpush1.bf16.msra.mxu0 %v6206
              %6366 = vmatprep.subr.bf16.mxu0 0
              %6367 = vmatpush1.bf16.msra.mxu0 %v6201
              %6368 = vmatprep.subr.bf16.mxu0 0
              %6369 = vmatpush1.bf16.msra.mxu0 %v6196
              %6370 = vmatprep.subr.bf16.mxu0 0
              %6371 = vmatpush2.bf16.msra.mxu0 0
              %6372 = vmatprep.subr.bf16.mxu0 0
              %6373 = vmatpush2.bf16.msra.mxu0 0
              %6374 = vmatprep.subr.bf16.mxu0 0
              %6375 = vmatpush2.bf16.msra.mxu0 0
              %6376 = vmatprep.subr.bf16.mxu0 0
              %6377 = vmatpush2.bf16.msra.mxu0 0
              %6378 = vmatprep.subr.bf16.mxu0 0
              %6379 = vmatpush2.bf16.msra.mxu0 0
              %6380 = vmatprep.subr.bf16.mxu0 0
              %6381 = vmatpush2.bf16.msra.mxu0 0
              %6382 = vmatprep.subr.bf16.mxu0 0
              %6383 = vmatpush2.bf16.msra.mxu0 0
              %6384 = vmatprep.subr.bf16.mxu0 0
              %6385 = vmatpush2.bf16.msra.mxu0 0
              %6386 = vmatprep.mubr.bf16.mxu0 0
              %6387 = vmatmul.mubr.bf16.gmra.mxu0 %v6014
              %v6388 = vpop.f32.mrf.mxu0
              %v6389 = vadd.f32 0.0, %v6388
              %v6390 = vpop.f32.mrf.mxu0
              %v6391 = vpop.f32.mrf.mxu0
              %v6392 = vpop.f32.mrf.mxu0
              %6393 = vdwg.mxu0
              %v6442 = vunpack.c.l.b16 %v5966
              %v6443 = vunpack.c.h.b16 %v5966
              %v6444 = vunpack.c.l.b16 %v5967
              %v6445 = vunpack.c.h.b16 %v5967
              %v6446 = vunpack.c.l.b16 %v5968
              %v6447 = vunpack.c.l.b16 %v5969
              %v6448 = vunpack.c.h.b16 %v5969
              %v6449 = vunpack.c.l.b16 %v5970
              %v6450 = vunpack.c.h.b16 %v5970
              %v6451 = vunpack.c.l.b16 %v5971
              %v6452 = vunpack.c.l.b16 %v5972
              %v6453 = vunpack.c.h.b16 %v5972
              %v6454 = vunpack.c.l.b16 %v5973
              %v6455 = vunpack.c.h.b16 %v5973
              %v6456 = vunpack.c.l.b16 %v5974
              %v6457 = vunpack.c.l.b16 %v5975
              %v6458 = vunpack.c.h.b16 %v5975
              %v6459 = vunpack.c.l.b16 %v5976
              %v6460 = vunpack.c.h.b16 %v5976
              %v6461 = vunpack.c.l.b16 %v5977
              %v6462 = vunpack.c.l.b16 %v5978
              %v6463 = vunpack.c.h.b16 %v5978
              %v6464 = vunpack.c.l.b16 %v5979
              %v6465 = vunpack.c.h.b16 %v5979
              %v6466 = vunpack.c.l.b16 %v5980
              %v6467 = vunpack.c.l.b16 %v5981
              %v6468 = vunpack.c.h.b16 %v5981
              %v6469 = vunpack.c.l.b16 %v5982
              %v6470 = vunpack.c.h.b16 %v5982
              %v6471 = vunpack.c.l.b16 %v5983
              %v6472 = vunpack.c.l.b16 %v5984
              %v6473 = vunpack.c.h.b16 %v5984
              %v6474 = vunpack.c.l.b16 %v5985
              %v6475 = vunpack.c.h.b16 %v5985
              %v6476 = vunpack.c.l.b16 %v5986
              %v6477 = vunpack.c.l.b16 %v5987
              %v6478 = vunpack.c.h.b16 %v5987
              %v6479 = vunpack.c.l.b16 %v5988
              %v6480 = vunpack.c.h.b16 %v5988
              %v6481 = vunpack.c.l.b16 %v5989
              %v6482 = vunpack.c.l.b16 %v5990
              %v6483 = vunpack.c.h.b16 %v5990
              %v6484 = vunpack.c.l.b16 %v5991
              %v6485 = vunpack.c.h.b16 %v5991
              %v6486 = vunpack.c.l.b16 %v5992
              %v6487 = vunpack.c.l.b16 %v5993
              %v6488 = vunpack.c.h.b16 %v5993
              %v6489 = vunpack.c.l.b16 %v5994
              %v6490 = vunpack.c.h.b16 %v5994
              %v6491 = vunpack.c.l.b16 %v5995
              %v6492 = vunpack.c.l.b16 %v5996
              %v6493 = vunpack.c.h.b16 %v5996
              %v6494 = vunpack.c.l.b16 %v5997
              %v6495 = vunpack.c.h.b16 %v5997
              %v6496 = vunpack.c.l.b16 %v5998
              %v6497 = vunpack.c.l.b16 %v5999
              %v6498 = vunpack.c.h.b16 %v5999
              %v6499 = vunpack.c.l.b16 %v6000
              %v6500 = vunpack.c.h.b16 %v6000
              %v6501 = vunpack.c.l.b16 %v6001
              %v6502 = vunpack.c.l.b16 %v6002
              %v6503 = vunpack.c.h.b16 %v6002
              %v6504 = vunpack.c.l.b16 %v6003
              %v6505 = vunpack.c.h.b16 %v6003
              %v6506 = vunpack.c.l.b16 %v6004
              %v6507 = vunpack.c.l.b16 %v6005
              %v6508 = vunpack.c.h.b16 %v6005
              %v6509 = vunpack.c.l.b16 %v6006
              %v6510 = vunpack.c.h.b16 %v6006
              %v6511 = vunpack.c.l.b16 %v6007
              %v6512 = vunpack.c.l.b16 %v6008
              %v6513 = vunpack.c.h.b16 %v6008
              %v6514 = vunpack.c.l.b16 %v6009
              %v6515 = vunpack.c.h.b16 %v6009
              %v6516 = vunpack.c.l.b16 %v6010
              %v6517 = vunpack.c.l.b16 %v6011
              %v6518 = vunpack.c.h.b16 %v6011
              %v6519 = vunpack.c.l.b16 %v6012
              %v6520 = vunpack.c.h.b16 %v6012
              %v6521 = vunpack.c.l.b16 %v6013
              %v6522 = vpack.c.b16 %v6447, %v6442
              %v6523 = vpack.c.b16 %v6448, %v6443
              %v6524 = vpack.c.b16 %v6449, %v6444
              %v6525 = vpack.c.b16 %v6450, %v6445
              %v6526 = vpack.c.b16 %v6451, %v6446
              %v6527 = vpack.c.b16 %v6457, %v6452
              %v6528 = vpack.c.b16 %v6458, %v6453
              %v6529 = vpack.c.b16 %v6459, %v6454
              %v6530 = vpack.c.b16 %v6460, %v6455
              %v6531 = vpack.c.b16 %v6461, %v6456
              %v6532 = vpack.c.b16 %v6467, %v6462
              %v6533 = vpack.c.b16 %v6468, %v6463
              %v6534 = vpack.c.b16 %v6469, %v6464
              %v6535 = vpack.c.b16 %v6470, %v6465
              %v6536 = vpack.c.b16 %v6471, %v6466
              %v6537 = vpack.c.b16 %v6477, %v6472
              %v6538 = vpack.c.b16 %v6478, %v6473
              %v6539 = vpack.c.b16 %v6479, %v6474
              %v6540 = vpack.c.b16 %v6480, %v6475
              %v6541 = vpack.c.b16 %v6481, %v6476
              %v6542 = vpack.c.b16 %v6487, %v6482
              %v6543 = vpack.c.b16 %v6488, %v6483
              %v6544 = vpack.c.b16 %v6489, %v6484
              %v6545 = vpack.c.b16 %v6490, %v6485
              %v6546 = vpack.c.b16 %v6491, %v6486
              %v6547 = vpack.c.b16 %v6497, %v6492
              %v6548 = vpack.c.b16 %v6498, %v6493
              %v6549 = vpack.c.b16 %v6499, %v6494
              %v6550 = vpack.c.b16 %v6500, %v6495
              %v6551 = vpack.c.b16 %v6501, %v6496
              %v6552 = vpack.c.b16 %v6507, %v6502
              %v6553 = vpack.c.b16 %v6508, %v6503
              %v6554 = vpack.c.b16 %v6509, %v6504
              %v6555 = vpack.c.b16 %v6510, %v6505
              %v6556 = vpack.c.b16 %v6511, %v6506
              %v6557 = vpack.c.b16 %v6517, %v6512
              %v6558 = vpack.c.b16 %v6518, %v6513
              %v6559 = vpack.c.b16 %v6519, %v6514
              %v6560 = vpack.c.b16 %v6520, %v6515
              %v6561 = vpack.c.b16 %v6521, %v6516
              %6602 = vmatprep.subr.bf16.mxu0 %v6558
              %6603 = vmatpush1.bf16.msra.mxu0 %v6557
              %6604 = vmatprep.subr.bf16.mxu0 %v6553
              %6605 = vmatpush1.bf16.msra.mxu0 %v6552
              %6606 = vmatprep.subr.bf16.mxu0 %v6548
              %6607 = vmatpush1.bf16.msra.mxu0 %v6547
              %6608 = vmatprep.subr.bf16.mxu0 %v6543
              %6609 = vmatpush1.bf16.msra.mxu0 %v6542
              %6610 = vmatprep.subr.bf16.mxu0 %v6538
              %6611 = vmatpush1.bf16.msra.mxu0 %v6537
              %6612 = vmatprep.subr.bf16.mxu0 %v6533
              %6613 = vmatpush1.bf16.msra.mxu0 %v6532
              %6614 = vmatprep.subr.bf16.mxu0 %v6528
              %6615 = vmatpush1.bf16.msra.mxu0 %v6527
              %6616 = vmatprep.subr.bf16.mxu0 %v6523
              %6617 = vmatpush1.bf16.msra.mxu0 %v6522
              %6618 = vmatprep.subr.bf16.mxu0 0
              %6619 = vmatpush2.bf16.msra.mxu0 0
              %6620 = vmatprep.subr.bf16.mxu0 0
              %6621 = vmatpush2.bf16.msra.mxu0 0
              %6622 = vmatprep.subr.bf16.mxu0 0
              %6623 = vmatpush2.bf16.msra.mxu0 0
              %6624 = vmatprep.subr.bf16.mxu0 0
              %6625 = vmatpush2.bf16.msra.mxu0 0
              %6626 = vmatprep.subr.bf16.mxu0 0
              %6627 = vmatpush2.bf16.msra.mxu0 0
              %6628 = vmatprep.subr.bf16.mxu0 0
              %6629 = vmatpush2.bf16.msra.mxu0 0
              %6630 = vmatprep.subr.bf16.mxu0 0
              %6631 = vmatpush2.bf16.msra.mxu0 0
              %6632 = vmatprep.subr.bf16.mxu0 0
              %6633 = vmatpush2.bf16.msra.mxu0 0
              %6634 = vmatprep.mubr.bf16.mxu0 0
              %6635 = vmatmul.mubr.bf16.gmra.mxu0 %v5964
              %v6636 = vpop.f32.mrf.mxu0
              %v6637 = vadd.f32 %v6307, %v6636
              %v6638 = vpop.f32.mrf.mxu0
              %v6639 = vadd.f32 %v6309, %v6638
              %v6640 = vpop.f32.mrf.mxu0
              %v6641 = vpop.f32.mrf.mxu0
              %6642 = vdwg.mxu0
              %6643 = vmatprep.subr.bf16.mxu0 %v6560
              %6644 = vmatpush1.bf16.msra.mxu0 %v6559
              %6645 = vmatprep.subr.bf16.mxu0 %v6555
              %6646 = vmatpush1.bf16.msra.mxu0 %v6554
              %6647 = vmatprep.subr.bf16.mxu0 %v6550
              %6648 = vmatpush1.bf16.msra.mxu0 %v6549
              %6649 = vmatprep.subr.bf16.mxu0 %v6545
              %6650 = vmatpush1.bf16.msra.mxu0 %v6544
              %6651 = vmatprep.subr.bf16.mxu0 %v6540
              %6652 = vmatpush1.bf16.msra.mxu0 %v6539
              %6653 = vmatprep.subr.bf16.mxu0 %v6535
              %6654 = vmatpush1.bf16.msra.mxu0 %v6534
              %6655 = vmatprep.subr.bf16.mxu0 %v6530
              %6656 = vmatpush1.bf16.msra.mxu0 %v6529
              %6657 = vmatprep.subr.bf16.mxu0 %v6525
              %6658 = vmatpush1.bf16.msra.mxu0 %v6524
              %6659 = vmatprep.subr.bf16.mxu0 0
              %6660 = vmatpush2.bf16.msra.mxu0 0
              %6661 = vmatprep.subr.bf16.mxu0 0
              %6662 = vmatpush2.bf16.msra.mxu0 0
              %6663 = vmatprep.subr.bf16.mxu0 0
              %6664 = vmatpush2.bf16.msra.mxu0 0
              %6665 = vmatprep.subr.bf16.mxu0 0
              %6666 = vmatpush2.bf16.msra.mxu0 0
              %6667 = vmatprep.subr.bf16.mxu0 0
              %6668 = vmatpush2.bf16.msra.mxu0 0
              %6669 = vmatprep.subr.bf16.mxu0 0
              %6670 = vmatpush2.bf16.msra.mxu0 0
              %6671 = vmatprep.subr.bf16.mxu0 0
              %6672 = vmatpush2.bf16.msra.mxu0 0
              %6673 = vmatprep.subr.bf16.mxu0 0
              %6674 = vmatpush2.bf16.msra.mxu0 0
              %6675 = vmatprep.mubr.bf16.mxu0 0
              %6676 = vmatmul.mubr.bf16.gmra.mxu0 %v5964
              %v6677 = vpop.f32.mrf.mxu0
              %v6678 = vadd.f32 %v6348, %v6677
              %v6679 = vpop.f32.mrf.mxu0
              %v6680 = vadd.f32 %v6350, %v6679
              %v6681 = vpop.f32.mrf.mxu0
              %v6682 = vpop.f32.mrf.mxu0
              %6683 = vdwg.mxu0
              %6684 = vmatprep.subr.bf16.mxu0 0
              %6685 = vmatpush1.bf16.msra.mxu0 %v6561
              %6686 = vmatprep.subr.bf16.mxu0 0
              %6687 = vmatpush1.bf16.msra.mxu0 %v6556
              %6688 = vmatprep.subr.bf16.mxu0 0
              %6689 = vmatpush1.bf16.msra.mxu0 %v6551
              %6690 = vmatprep.subr.bf16.mxu0 0
              %6691 = vmatpush1.bf16.msra.mxu0 %v6546
              %6692 = vmatprep.subr.bf16.mxu0 0
              %6693 = vmatpush1.bf16.msra.mxu0 %v6541
              %6694 = vmatprep.subr.bf16.mxu0 0
              %6695 = vmatpush1.bf16.msra.mxu0 %v6536
              %6696 = vmatprep.subr.bf16.mxu0 0
              %6697 = vmatpush1.bf16.msra.mxu0 %v6531
              %6698 = vmatprep.subr.bf16.mxu0 0
              %6699 = vmatpush1.bf16.msra.mxu0 %v6526
              %6700 = vmatprep.subr.bf16.mxu0 0
              %6701 = vmatpush2.bf16.msra.mxu0 0
              %6702 = vmatprep.subr.bf16.mxu0 0
              %6703 = vmatpush2.bf16.msra.mxu0 0
              %6704 = vmatprep.subr.bf16.mxu0 0
              %6705 = vmatpush2.bf16.msra.mxu0 0
              %6706 = vmatprep.subr.bf16.mxu0 0
              %6707 = vmatpush2.bf16.msra.mxu0 0
              %6708 = vmatprep.subr.bf16.mxu0 0
              %6709 = vmatpush2.bf16.msra.mxu0 0
              %6710 = vmatprep.subr.bf16.mxu0 0
              %6711 = vmatpush2.bf16.msra.mxu0 0
              %6712 = vmatprep.subr.bf16.mxu0 0
              %6713 = vmatpush2.bf16.msra.mxu0 0
              %6714 = vmatprep.subr.bf16.mxu0 0
              %6715 = vmatpush2.bf16.msra.mxu0 0
              %6716 = vmatprep.mubr.bf16.mxu0 0
              %6717 = vmatmul.mubr.bf16.gmra.mxu0 %v5964
              %v6718 = vpop.f32.mrf.mxu0
              %v6719 = vadd.f32 %v6389, %v6718
              %v6720 = vpop.f32.mrf.mxu0
              %v6721 = vpop.f32.mrf.mxu0
              %v6722 = vpop.f32.mrf.mxu0
              %6723 = vdwg.mxu0
              %v6724 = vadd.f32 %v6637, %v284
              %v6725 = vadd.f32 %v6639, %v288
              %v6726 = vadd.f32 %v6678, %v292
              %v6727 = vadd.f32 %v6680, %v296
              %v6728 = vadd.f32 %v6719, %v300
              %v6729 = vmul.f32 %v6724, 0.5
              %v6730 = vtanh.pop %v6729
              %v6731 = vadd.f32 %v6730, 1.0
              %v6732 = vmul.f32 %v6731, 0.5
              %v6733 = vmul.f32 %v6725, 0.5
              %v6734 = vtanh.pop %v6733
              %v6735 = vadd.f32 %v6734, 1.0
              %v6736 = vmul.f32 %v6735, 0.5
              %v6737 = vtanh.pop %v6726
              %v6738 = vmul.f32 %v6727, 0.5
              %v6739 = vtanh.pop %v6738
              %v6740 = vadd.f32 %v6739, 1.0
              %v6741 = vmul.f32 %v6740, 0.5
              %v6742 = vmul.f32 %v6728, 0.5
              %v6743 = vtanh.pop %v6742
              %v6744 = vadd.f32 %v6743, 1.0
              %v6745 = vmul.f32 %v6744, 0.5
              %v6746 = vmul.f32 %v6732, %v6737
              %v6747 = vmul.f32 %v6741, %v5963
              %v6748 = vadd.f32 %v6746, %v6747
              %v6749 = vmul.f32 %v6745, %v5961
              %v6750 = vadd.f32 %v6748, %v6749
              %v6751 = vtanh.pop %v6750
              %v6752 = vmul.f32 %v6736, %v6751
              %6753 = vst [vmem:[#allocation3] sm:$0xff] %v6752
              %6754 = vst [vmem:[#allocation3 + $0x8] sm:$0xff] %v6750
            $region102: #{_fenwick_forward_stream.1} parent=69 // pred_fallthru
              _
            %p6755 = scmp.lt.s32.totalorder %s337, 3
            %s6756 = sshra.s32 %s314, 3
            %s6757 = sand.u32 %s6756, 1
            %p6758 = scmp.eq.s32.totalorder %s6757, 1
            %p6759 = pnand %p6755, %p6758
            %p6760 = pneg %p6759
            // Predicated region
            $region103: #{_fenwick_forward_stream.1} parent=69 // pred_check
              _
            $region104: #{_fenwick_forward_stream.1} parent=69 // pred_check_branch
              %6762 = sbr.rel (%p6759) target = $region106
            $region105: #{_fenwick_forward_stream.1} parent=69 // pred_region
              %s6763 = scalar_lea.vmem [#allocation2], 48
              %v6764 = vld [vmem:[%s6763] sm:$0xff]
              %v6765 = vld [vmem:[%s6763 + $0x8] sm:$0xff]
              %v6766 = vld [vmem:[#allocation3] sm:$0xff]
              %v6767 = vld [vmem:[#allocation3 + $0x8] sm:$0xff]
              %v6768 = vpack.c.bf16 %v6766, %v6766
              %s6769 = scalar_lea.vmem %s0, 640
              %v6770 = vld [vmem:[%s6769] sm:$0xff]
              %v6771 = vld [vmem:[%s6769 + $0x8] sm:$0xff]
              %v6772 = vld [vmem:[%s6769 + $0x10] sm:$0xf]
              %v6773 = vld [vmem:[%s6769 + $0x14] sm:$0xff]
              %v6774 = vld [vmem:[%s6769 + $0x1c] sm:$0xff]
              %v6775 = vld [vmem:[%s6769 + $0x24] sm:$0xf]
              %v6776 = vld [vmem:[%s6769 + $0x28] sm:$0xff]
              %v6777 = vld [vmem:[%s6769 + $0x30] sm:$0xff]
              %v6778 = vld [vmem:[%s6769 + $0x38] sm:$0xf]
              %v6779 = vld [vmem:[%s6769 + $0x3c] sm:$0xff]
              %v6780 = vld [vmem:[%s6769 + $0x44] sm:$0xff]
              %v6781 = vld [vmem:[%s6769 + $0x4c] sm:$0xf]
              %v6782 = vld [vmem:[%s6769 + $0x50] sm:$0xff]
              %v6783 = vld [vmem:[%s6769 + $0x58] sm:$0xff]
              %v6784 = vld [vmem:[%s6769 + $0x60] sm:$0xf]
              %v6785 = vld [vmem:[%s6769 + $0x64] sm:$0xff]
              %v6786 = vld [vmem:[%s6769 + $0x6c] sm:$0xff]
              %v6787 = vld [vmem:[%s6769 + $0x74] sm:$0xf]
              %v6788 = vld [vmem:[%s6769 + $0x78] sm:$0xff]
              %v6789 = vld [vmem:[%s6769 + $0x80] sm:$0xff]
              %v6790 = vld [vmem:[%s6769 + $0x88] sm:$0xf]
              %v6791 = vld [vmem:[%s6769 + $0x8c] sm:$0xff]
              %v6792 = vld [vmem:[%s6769 + $0x94] sm:$0xff]
              %v6793 = vld [vmem:[%s6769 + $0x9c] sm:$0xf]
              %v6794 = vld [vmem:[%s6769 + $0xa0] sm:$0xff]
              %v6795 = vld [vmem:[%s6769 + $0xa8] sm:$0xff]
              %v6796 = vld [vmem:[%s6769 + $0xb0] sm:$0xf]
              %v6797 = vld [vmem:[%s6769 + $0xb4] sm:$0xff]
              %v6798 = vld [vmem:[%s6769 + $0xbc] sm:$0xff]
              %v6799 = vld [vmem:[%s6769 + $0xc4] sm:$0xf]
              %v6800 = vld [vmem:[%s6769 + $0xc8] sm:$0xff]
              %v6801 = vld [vmem:[%s6769 + $0xd0] sm:$0xff]
              %v6802 = vld [vmem:[%s6769 + $0xd8] sm:$0xf]
              %v6803 = vld [vmem:[%s6769 + $0xdc] sm:$0xff]
              %v6804 = vld [vmem:[%s6769 + $0xe4] sm:$0xff]
              %v6805 = vld [vmem:[%s6769 + $0xec] sm:$0xf]
              %v6806 = vld [vmem:[%s6769 + $0xf0] sm:$0xff]
              %v6807 = vld [vmem:[%s6769 + $0xf8] sm:$0xff]
              %v6808 = vld [vmem:[%s6769 + $0x100] sm:$0xf]
              %v6809 = vld [vmem:[%s6769 + $0x104] sm:$0xff]
              %v6810 = vld [vmem:[%s6769 + $0x10c] sm:$0xff]
              %v6811 = vld [vmem:[%s6769 + $0x114] sm:$0xf]
              %v6812 = vld [vmem:[%s6769 + $0x118] sm:$0xff]
              %v6813 = vld [vmem:[%s6769 + $0x120] sm:$0xff]
              %v6814 = vld [vmem:[%s6769 + $0x128] sm:$0xf]
              %v6815 = vld [vmem:[%s6769 + $0x12c] sm:$0xff]
              %v6816 = vld [vmem:[%s6769 + $0x134] sm:$0xff]
              %v6817 = vld [vmem:[%s6769 + $0x13c] sm:$0xf]
              %v6818 = vpack.c.bf16 %v6764, %v6764
              %s6819 = scalar_lea.vmem %s0, 960
              %v6820 = vld [vmem:[%s6819] sm:$0xff]
              %v6821 = vld [vmem:[%s6819 + $0x8] sm:$0xff]
              %v6822 = vld [vmem:[%s6819 + $0x10] sm:$0xf]
              %v6823 = vld [vmem:[%s6819 + $0x14] sm:$0xff]
              %v6824 = vld [vmem:[%s6819 + $0x1c] sm:$0xff]
              %v6825 = vld [vmem:[%s6819 + $0x24] sm:$0xf]
              %v6826 = vld [vmem:[%s6819 + $0x28] sm:$0xff]
              %v6827 = vld [vmem:[%s6819 + $0x30] sm:$0xff]
              %v6828 = vld [vmem:[%s6819 + $0x38] sm:$0xf]
              %v6829 = vld [vmem:[%s6819 + $0x3c] sm:$0xff]
              %v6830 = vld [vmem:[%s6819 + $0x44] sm:$0xff]
              %v6831 = vld [vmem:[%s6819 + $0x4c] sm:$0xf]
              %v6832 = vld [vmem:[%s6819 + $0x50] sm:$0xff]
              %v6833 = vld [vmem:[%s6819 + $0x58] sm:$0xff]
              %v6834 = vld [vmem:[%s6819 + $0x60] sm:$0xf]
              %v6835 = vld [vmem:[%s6819 + $0x64] sm:$0xff]
              %v6836 = vld [vmem:[%s6819 + $0x6c] sm:$0xff]
              %v6837 = vld [vmem:[%s6819 + $0x74] sm:$0xf]
              %v6838 = vld [vmem:[%s6819 + $0x78] sm:$0xff]
              %v6839 = vld [vmem:[%s6819 + $0x80] sm:$0xff]
              %v6840 = vld [vmem:[%s6819 + $0x88] sm:$0xf]
              %v6841 = vld [vmem:[%s6819 + $0x8c] sm:$0xff]
              %v6842 = vld [vmem:[%s6819 + $0x94] sm:$0xff]
              %v6843 = vld [vmem:[%s6819 + $0x9c] sm:$0xf]
              %v6844 = vld [vmem:[%s6819 + $0xa0] sm:$0xff]
              %v6845 = vld [vmem:[%s6819 + $0xa8] sm:$0xff]
              %v6846 = vld [vmem:[%s6819 + $0xb0] sm:$0xf]
              %v6847 = vld [vmem:[%s6819 + $0xb4] sm:$0xff]
              %v6848 = vld [vmem:[%s6819 + $0xbc] sm:$0xff]
              %v6849 = vld [vmem:[%s6819 + $0xc4] sm:$0xf]
              %v6850 = vld [vmem:[%s6819 + $0xc8] sm:$0xff]
              %v6851 = vld [vmem:[%s6819 + $0xd0] sm:$0xff]
              %v6852 = vld [vmem:[%s6819 + $0xd8] sm:$0xf]
              %v6853 = vld [vmem:[%s6819 + $0xdc] sm:$0xff]
              %v6854 = vld [vmem:[%s6819 + $0xe4] sm:$0xff]
              %v6855 = vld [vmem:[%s6819 + $0xec] sm:$0xf]
              %v6856 = vld [vmem:[%s6819 + $0xf0] sm:$0xff]
              %v6857 = vld [vmem:[%s6819 + $0xf8] sm:$0xff]
              %v6858 = vld [vmem:[%s6819 + $0x100] sm:$0xf]
              %v6859 = vld [vmem:[%s6819 + $0x104] sm:$0xff]
              %v6860 = vld [vmem:[%s6819 + $0x10c] sm:$0xff]
              %v6861 = vld [vmem:[%s6819 + $0x114] sm:$0xf]
              %v6862 = vld [vmem:[%s6819 + $0x118] sm:$0xff]
              %v6863 = vld [vmem:[%s6819 + $0x120] sm:$0xff]
              %v6864 = vld [vmem:[%s6819 + $0x128] sm:$0xf]
              %v6865 = vld [vmem:[%s6819 + $0x12c] sm:$0xff]
              %v6866 = vld [vmem:[%s6819 + $0x134] sm:$0xff]
              %v6867 = vld [vmem:[%s6819 + $0x13c] sm:$0xf]
              %v6916 = vunpack.c.l.b16 %v6820
              %v6917 = vunpack.c.h.b16 %v6820
              %v6918 = vunpack.c.l.b16 %v6821
              %v6919 = vunpack.c.h.b16 %v6821
              %v6920 = vunpack.c.l.b16 %v6822
              %v6921 = vunpack.c.l.b16 %v6823
              %v6922 = vunpack.c.h.b16 %v6823
              %v6923 = vunpack.c.l.b16 %v6824
              %v6924 = vunpack.c.h.b16 %v6824
              %v6925 = vunpack.c.l.b16 %v6825
              %v6926 = vunpack.c.l.b16 %v6826
              %v6927 = vunpack.c.h.b16 %v6826
              %v6928 = vunpack.c.l.b16 %v6827
              %v6929 = vunpack.c.h.b16 %v6827
              %v6930 = vunpack.c.l.b16 %v6828
              %v6931 = vunpack.c.l.b16 %v6829
              %v6932 = vunpack.c.h.b16 %v6829
              %v6933 = vunpack.c.l.b16 %v6830
              %v6934 = vunpack.c.h.b16 %v6830
              %v6935 = vunpack.c.l.b16 %v6831
              %v6936 = vunpack.c.l.b16 %v6832
              %v6937 = vunpack.c.h.b16 %v6832
              %v6938 = vunpack.c.l.b16 %v6833
              %v6939 = vunpack.c.h.b16 %v6833
              %v6940 = vunpack.c.l.b16 %v6834
              %v6941 = vunpack.c.l.b16 %v6835
              %v6942 = vunpack.c.h.b16 %v6835
              %v6943 = vunpack.c.l.b16 %v6836
              %v6944 = vunpack.c.h.b16 %v6836
              %v6945 = vunpack.c.l.b16 %v6837
              %v6946 = vunpack.c.l.b16 %v6838
              %v6947 = vunpack.c.h.b16 %v6838
              %v6948 = vunpack.c.l.b16 %v6839
              %v6949 = vunpack.c.h.b16 %v6839
              %v6950 = vunpack.c.l.b16 %v6840
              %v6951 = vunpack.c.l.b16 %v6841
              %v6952 = vunpack.c.h.b16 %v6841
              %v6953 = vunpack.c.l.b16 %v6842
              %v6954 = vunpack.c.h.b16 %v6842
              %v6955 = vunpack.c.l.b16 %v6843
              %v6956 = vunpack.c.l.b16 %v6844
              %v6957 = vunpack.c.h.b16 %v6844
              %v6958 = vunpack.c.l.b16 %v6845
              %v6959 = vunpack.c.h.b16 %v6845
              %v6960 = vunpack.c.l.b16 %v6846
              %v6961 = vunpack.c.l.b16 %v6847
              %v6962 = vunpack.c.h.b16 %v6847
              %v6963 = vunpack.c.l.b16 %v6848
              %v6964 = vunpack.c.h.b16 %v6848
              %v6965 = vunpack.c.l.b16 %v6849
              %v6966 = vunpack.c.l.b16 %v6850
              %v6967 = vunpack.c.h.b16 %v6850
              %v6968 = vunpack.c.l.b16 %v6851
              %v6969 = vunpack.c.h.b16 %v6851
              %v6970 = vunpack.c.l.b16 %v6852
              %v6971 = vunpack.c.l.b16 %v6853
              %v6972 = vunpack.c.h.b16 %v6853
              %v6973 = vunpack.c.l.b16 %v6854
              %v6974 = vunpack.c.h.b16 %v6854
              %v6975 = vunpack.c.l.b16 %v6855
              %v6976 = vunpack.c.l.b16 %v6856
              %v6977 = vunpack.c.h.b16 %v6856
              %v6978 = vunpack.c.l.b16 %v6857
              %v6979 = vunpack.c.h.b16 %v6857
              %v6980 = vunpack.c.l.b16 %v6858
              %v6981 = vunpack.c.l.b16 %v6859
              %v6982 = vunpack.c.h.b16 %v6859
              %v6983 = vunpack.c.l.b16 %v6860
              %v6984 = vunpack.c.h.b16 %v6860
              %v6985 = vunpack.c.l.b16 %v6861
              %v6986 = vunpack.c.l.b16 %v6862
              %v6987 = vunpack.c.h.b16 %v6862
              %v6988 = vunpack.c.l.b16 %v6863
              %v6989 = vunpack.c.h.b16 %v6863
              %v6990 = vunpack.c.l.b16 %v6864
              %v6991 = vunpack.c.l.b16 %v6865
              %v6992 = vunpack.c.h.b16 %v6865
              %v6993 = vunpack.c.l.b16 %v6866
              %v6994 = vunpack.c.h.b16 %v6866
              %v6995 = vunpack.c.l.b16 %v6867
              %v6996 = vpack.c.b16 %v6921, %v6916
              %v6997 = vpack.c.b16 %v6922, %v6917
              %v6998 = vpack.c.b16 %v6923, %v6918
              %v6999 = vpack.c.b16 %v6924, %v6919
              %v7000 = vpack.c.b16 %v6925, %v6920
              %v7001 = vpack.c.b16 %v6931, %v6926
              %v7002 = vpack.c.b16 %v6932, %v6927
              %v7003 = vpack.c.b16 %v6933, %v6928
              %v7004 = vpack.c.b16 %v6934, %v6929
              %v7005 = vpack.c.b16 %v6935, %v6930
              %v7006 = vpack.c.b16 %v6941, %v6936
              %v7007 = vpack.c.b16 %v6942, %v6937
              %v7008 = vpack.c.b16 %v6943, %v6938
              %v7009 = vpack.c.b16 %v6944, %v6939
              %v7010 = vpack.c.b16 %v6945, %v6940
              %v7011 = vpack.c.b16 %v6951, %v6946
              %v7012 = vpack.c.b16 %v6952, %v6947
              %v7013 = vpack.c.b16 %v6953, %v6948
              %v7014 = vpack.c.b16 %v6954, %v6949
              %v7015 = vpack.c.b16 %v6955, %v6950
              %v7016 = vpack.c.b16 %v6961, %v6956
              %v7017 = vpack.c.b16 %v6962, %v6957
              %v7018 = vpack.c.b16 %v6963, %v6958
              %v7019 = vpack.c.b16 %v6964, %v6959
              %v7020 = vpack.c.b16 %v6965, %v6960
              %v7021 = vpack.c.b16 %v6971, %v6966
              %v7022 = vpack.c.b16 %v6972, %v6967
              %v7023 = vpack.c.b16 %v6973, %v6968
              %v7024 = vpack.c.b16 %v6974, %v6969
              %v7025 = vpack.c.b16 %v6975, %v6970
              %v7026 = vpack.c.b16 %v6981, %v6976
              %v7027 = vpack.c.b16 %v6982, %v6977
              %v7028 = vpack.c.b16 %v6983, %v6978
              %v7029 = vpack.c.b16 %v6984, %v6979
              %v7030 = vpack.c.b16 %v6985, %v6980
              %v7031 = vpack.c.b16 %v6991, %v6986
              %v7032 = vpack.c.b16 %v6992, %v6987
              %v7033 = vpack.c.b16 %v6993, %v6988
              %v7034 = vpack.c.b16 %v6994, %v6989
              %v7035 = vpack.c.b16 %v6995, %v6990
              %7076 = vmatprep.subr.bf16.mxu0 %v7032
              %7077 = vmatpush1.bf16.msra.mxu0 %v7031
              %7078 = vmatprep.subr.bf16.mxu0 %v7027
              %7079 = vmatpush1.bf16.msra.mxu0 %v7026
              %7080 = vmatprep.subr.bf16.mxu0 %v7022
              %7081 = vmatpush1.bf16.msra.mxu0 %v7021
              %7082 = vmatprep.subr.bf16.mxu0 %v7017
              %7083 = vmatpush1.bf16.msra.mxu0 %v7016
              %7084 = vmatprep.subr.bf16.mxu0 %v7012
              %7085 = vmatpush1.bf16.msra.mxu0 %v7011
              %7086 = vmatprep.subr.bf16.mxu0 %v7007
              %7087 = vmatpush1.bf16.msra.mxu0 %v7006
              %7088 = vmatprep.subr.bf16.mxu0 %v7002
              %7089 = vmatpush1.bf16.msra.mxu0 %v7001
              %7090 = vmatprep.subr.bf16.mxu0 %v6997
              %7091 = vmatpush1.bf16.msra.mxu0 %v6996
              %7092 = vmatprep.subr.bf16.mxu0 0
              %7093 = vmatpush2.bf16.msra.mxu0 0
              %7094 = vmatprep.subr.bf16.mxu0 0
              %7095 = vmatpush2.bf16.msra.mxu0 0
              %7096 = vmatprep.subr.bf16.mxu0 0
              %7097 = vmatpush2.bf16.msra.mxu0 0
              %7098 = vmatprep.subr.bf16.mxu0 0
              %7099 = vmatpush2.bf16.msra.mxu0 0
              %7100 = vmatprep.subr.bf16.mxu0 0
              %7101 = vmatpush2.bf16.msra.mxu0 0
              %7102 = vmatprep.subr.bf16.mxu0 0
              %7103 = vmatpush2.bf16.msra.mxu0 0
              %7104 = vmatprep.subr.bf16.mxu0 0
              %7105 = vmatpush2.bf16.msra.mxu0 0
              %7106 = vmatprep.subr.bf16.mxu0 0
              %7107 = vmatpush2.bf16.msra.mxu0 0
              %7108 = vmatprep.mubr.bf16.mxu0 0
              %7109 = vmatmul.mubr.bf16.gmra.mxu0 %v6818
              %v7110 = vpop.f32.mrf.mxu0
              %v7111 = vadd.f32 0.0, %v7110
              %v7112 = vpop.f32.mrf.mxu0
              %v7113 = vadd.f32 0.0, %v7112
              %v7114 = vpop.f32.mrf.mxu0
              %v7115 = vpop.f32.mrf.mxu0
              %7116 = vdwg.mxu0
              %7117 = vmatprep.subr.bf16.mxu0 %v7034
              %7118 = vmatpush1.bf16.msra.mxu0 %v7033
              %7119 = vmatprep.subr.bf16.mxu0 %v7029
              %7120 = vmatpush1.bf16.msra.mxu0 %v7028
              %7121 = vmatprep.subr.bf16.mxu0 %v7024
              %7122 = vmatpush1.bf16.msra.mxu0 %v7023
              %7123 = vmatprep.subr.bf16.mxu0 %v7019
              %7124 = vmatpush1.bf16.msra.mxu0 %v7018
              %7125 = vmatprep.subr.bf16.mxu0 %v7014
              %7126 = vmatpush1.bf16.msra.mxu0 %v7013
              %7127 = vmatprep.subr.bf16.mxu0 %v7009
              %7128 = vmatpush1.bf16.msra.mxu0 %v7008
              %7129 = vmatprep.subr.bf16.mxu0 %v7004
              %7130 = vmatpush1.bf16.msra.mxu0 %v7003
              %7131 = vmatprep.subr.bf16.mxu0 %v6999
              %7132 = vmatpush1.bf16.msra.mxu0 %v6998
              %7133 = vmatprep.subr.bf16.mxu0 0
              %7134 = vmatpush2.bf16.msra.mxu0 0
              %7135 = vmatprep.subr.bf16.mxu0 0
              %7136 = vmatpush2.bf16.msra.mxu0 0
              %7137 = vmatprep.subr.bf16.mxu0 0
              %7138 = vmatpush2.bf16.msra.mxu0 0
              %7139 = vmatprep.subr.bf16.mxu0 0
              %7140 = vmatpush2.bf16.msra.mxu0 0
              %7141 = vmatprep.subr.bf16.mxu0 0
              %7142 = vmatpush2.bf16.msra.mxu0 0
              %7143 = vmatprep.subr.bf16.mxu0 0
              %7144 = vmatpush2.bf16.msra.mxu0 0
              %7145 = vmatprep.subr.bf16.mxu0 0
              %7146 = vmatpush2.bf16.msra.mxu0 0
              %7147 = vmatprep.subr.bf16.mxu0 0
              %7148 = vmatpush2.bf16.msra.mxu0 0
              %7149 = vmatprep.mubr.bf16.mxu0 0
              %7150 = vmatmul.mubr.bf16.gmra.mxu0 %v6818
              %v7151 = vpop.f32.mrf.mxu0
              %v7152 = vadd.f32 0.0, %v7151
              %v7153 = vpop.f32.mrf.mxu0
              %v7154 = vadd.f32 0.0, %v7153
              %v7155 = vpop.f32.mrf.mxu0
              %v7156 = vpop.f32.mrf.mxu0
              %7157 = vdwg.mxu0
              %7158 = vmatprep.subr.bf16.mxu0 0
              %7159 = vmatpush1.bf16.msra.mxu0 %v7035
              %7160 = vmatprep.subr.bf16.mxu0 0
              %7161 = vmatpush1.bf16.msra.mxu0 %v7030
              %7162 = vmatprep.subr.bf16.mxu0 0
              %7163 = vmatpush1.bf16.msra.mxu0 %v7025
              %7164 = vmatprep.subr.bf16.mxu0 0
              %7165 = vmatpush1.bf16.msra.mxu0 %v7020
              %7166 = vmatprep.subr.bf16.mxu0 0
              %7167 = vmatpush1.bf16.msra.mxu0 %v7015
              %7168 = vmatprep.subr.bf16.mxu0 0
              %7169 = vmatpush1.bf16.msra.mxu0 %v7010
              %7170 = vmatprep.subr.bf16.mxu0 0
              %7171 = vmatpush1.bf16.msra.mxu0 %v7005
              %7172 = vmatprep.subr.bf16.mxu0 0
              %7173 = vmatpush1.bf16.msra.mxu0 %v7000
              %7174 = vmatprep.subr.bf16.mxu0 0
              %7175 = vmatpush2.bf16.msra.mxu0 0
              %7176 = vmatprep.subr.bf16.mxu0 0
              %7177 = vmatpush2.bf16.msra.mxu0 0
              %7178 = vmatprep.subr.bf16.mxu0 0
              %7179 = vmatpush2.bf16.msra.mxu0 0
              %7180 = vmatprep.subr.bf16.mxu0 0
              %7181 = vmatpush2.bf16.msra.mxu0 0
              %7182 = vmatprep.subr.bf16.mxu0 0
              %7183 = vmatpush2.bf16.msra.mxu0 0
              %7184 = vmatprep.subr.bf16.mxu0 0
              %7185 = vmatpush2.bf16.msra.mxu0 0
              %7186 = vmatprep.subr.bf16.mxu0 0
              %7187 = vmatpush2.bf16.msra.mxu0 0
              %7188 = vmatprep.subr.bf16.mxu0 0
              %7189 = vmatpush2.bf16.msra.mxu0 0
              %7190 = vmatprep.mubr.bf16.mxu0 0
              %7191 = vmatmul.mubr.bf16.gmra.mxu0 %v6818
              %v7192 = vpop.f32.mrf.mxu0
              %v7193 = vadd.f32 0.0, %v7192
              %v7194 = vpop.f32.mrf.mxu0
              %v7195 = vpop.f32.mrf.mxu0
              %v7196 = vpop.f32.mrf.mxu0
              %7197 = vdwg.mxu0
              %v7246 = vunpack.c.l.b16 %v6770
              %v7247 = vunpack.c.h.b16 %v6770
              %v7248 = vunpack.c.l.b16 %v6771
              %v7249 = vunpack.c.h.b16 %v6771
              %v7250 = vunpack.c.l.b16 %v6772
              %v7251 = vunpack.c.l.b16 %v6773
              %v7252 = vunpack.c.h.b16 %v6773
              %v7253 = vunpack.c.l.b16 %v6774
              %v7254 = vunpack.c.h.b16 %v6774
              %v7255 = vunpack.c.l.b16 %v6775
              %v7256 = vunpack.c.l.b16 %v6776
              %v7257 = vunpack.c.h.b16 %v6776
              %v7258 = vunpack.c.l.b16 %v6777
              %v7259 = vunpack.c.h.b16 %v6777
              %v7260 = vunpack.c.l.b16 %v6778
              %v7261 = vunpack.c.l.b16 %v6779
              %v7262 = vunpack.c.h.b16 %v6779
              %v7263 = vunpack.c.l.b16 %v6780
              %v7264 = vunpack.c.h.b16 %v6780
              %v7265 = vunpack.c.l.b16 %v6781
              %v7266 = vunpack.c.l.b16 %v6782
              %v7267 = vunpack.c.h.b16 %v6782
              %v7268 = vunpack.c.l.b16 %v6783
              %v7269 = vunpack.c.h.b16 %v6783
              %v7270 = vunpack.c.l.b16 %v6784
              %v7271 = vunpack.c.l.b16 %v6785
              %v7272 = vunpack.c.h.b16 %v6785
              %v7273 = vunpack.c.l.b16 %v6786
              %v7274 = vunpack.c.h.b16 %v6786
              %v7275 = vunpack.c.l.b16 %v6787
              %v7276 = vunpack.c.l.b16 %v6788
              %v7277 = vunpack.c.h.b16 %v6788
              %v7278 = vunpack.c.l.b16 %v6789
              %v7279 = vunpack.c.h.b16 %v6789
              %v7280 = vunpack.c.l.b16 %v6790
              %v7281 = vunpack.c.l.b16 %v6791
              %v7282 = vunpack.c.h.b16 %v6791
              %v7283 = vunpack.c.l.b16 %v6792
              %v7284 = vunpack.c.h.b16 %v6792
              %v7285 = vunpack.c.l.b16 %v6793
              %v7286 = vunpack.c.l.b16 %v6794
              %v7287 = vunpack.c.h.b16 %v6794
              %v7288 = vunpack.c.l.b16 %v6795
              %v7289 = vunpack.c.h.b16 %v6795
              %v7290 = vunpack.c.l.b16 %v6796
              %v7291 = vunpack.c.l.b16 %v6797
              %v7292 = vunpack.c.h.b16 %v6797
              %v7293 = vunpack.c.l.b16 %v6798
              %v7294 = vunpack.c.h.b16 %v6798
              %v7295 = vunpack.c.l.b16 %v6799
              %v7296 = vunpack.c.l.b16 %v6800
              %v7297 = vunpack.c.h.b16 %v6800
              %v7298 = vunpack.c.l.b16 %v6801
              %v7299 = vunpack.c.h.b16 %v6801
              %v7300 = vunpack.c.l.b16 %v6802
              %v7301 = vunpack.c.l.b16 %v6803
              %v7302 = vunpack.c.h.b16 %v6803
              %v7303 = vunpack.c.l.b16 %v6804
              %v7304 = vunpack.c.h.b16 %v6804
              %v7305 = vunpack.c.l.b16 %v6805
              %v7306 = vunpack.c.l.b16 %v6806
              %v7307 = vunpack.c.h.b16 %v6806
              %v7308 = vunpack.c.l.b16 %v6807
              %v7309 = vunpack.c.h.b16 %v6807
              %v7310 = vunpack.c.l.b16 %v6808
              %v7311 = vunpack.c.l.b16 %v6809
              %v7312 = vunpack.c.h.b16 %v6809
              %v7313 = vunpack.c.l.b16 %v6810
              %v7314 = vunpack.c.h.b16 %v6810
              %v7315 = vunpack.c.l.b16 %v6811
              %v7316 = vunpack.c.l.b16 %v6812
              %v7317 = vunpack.c.h.b16 %v6812
              %v7318 = vunpack.c.l.b16 %v6813
              %v7319 = vunpack.c.h.b16 %v6813
              %v7320 = vunpack.c.l.b16 %v6814
              %v7321 = vunpack.c.l.b16 %v6815
              %v7322 = vunpack.c.h.b16 %v6815
              %v7323 = vunpack.c.l.b16 %v6816
              %v7324 = vunpack.c.h.b16 %v6816
              %v7325 = vunpack.c.l.b16 %v6817
              %v7326 = vpack.c.b16 %v7251, %v7246
              %v7327 = vpack.c.b16 %v7252, %v7247
              %v7328 = vpack.c.b16 %v7253, %v7248
              %v7329 = vpack.c.b16 %v7254, %v7249
              %v7330 = vpack.c.b16 %v7255, %v7250
              %v7331 = vpack.c.b16 %v7261, %v7256
              %v7332 = vpack.c.b16 %v7262, %v7257
              %v7333 = vpack.c.b16 %v7263, %v7258
              %v7334 = vpack.c.b16 %v7264, %v7259
              %v7335 = vpack.c.b16 %v7265, %v7260
              %v7336 = vpack.c.b16 %v7271, %v7266
              %v7337 = vpack.c.b16 %v7272, %v7267
              %v7338 = vpack.c.b16 %v7273, %v7268
              %v7339 = vpack.c.b16 %v7274, %v7269
              %v7340 = vpack.c.b16 %v7275, %v7270
              %v7341 = vpack.c.b16 %v7281, %v7276
              %v7342 = vpack.c.b16 %v7282, %v7277
              %v7343 = vpack.c.b16 %v7283, %v7278
              %v7344 = vpack.c.b16 %v7284, %v7279
              %v7345 = vpack.c.b16 %v7285, %v7280
              %v7346 = vpack.c.b16 %v7291, %v7286
              %v7347 = vpack.c.b16 %v7292, %v7287
              %v7348 = vpack.c.b16 %v7293, %v7288
              %v7349 = vpack.c.b16 %v7294, %v7289
              %v7350 = vpack.c.b16 %v7295, %v7290
              %v7351 = vpack.c.b16 %v7301, %v7296
              %v7352 = vpack.c.b16 %v7302, %v7297
              %v7353 = vpack.c.b16 %v7303, %v7298
              %v7354 = vpack.c.b16 %v7304, %v7299
              %v7355 = vpack.c.b16 %v7305, %v7300
              %v7356 = vpack.c.b16 %v7311, %v7306
              %v7357 = vpack.c.b16 %v7312, %v7307
              %v7358 = vpack.c.b16 %v7313, %v7308
              %v7359 = vpack.c.b16 %v7314, %v7309
              %v7360 = vpack.c.b16 %v7315, %v7310
              %v7361 = vpack.c.b16 %v7321, %v7316
              %v7362 = vpack.c.b16 %v7322, %v7317
              %v7363 = vpack.c.b16 %v7323, %v7318
              %v7364 = vpack.c.b16 %v7324, %v7319
              %v7365 = vpack.c.b16 %v7325, %v7320
              %7406 = vmatprep.subr.bf16.mxu0 %v7362
              %7407 = vmatpush1.bf16.msra.mxu0 %v7361
              %7408 = vmatprep.subr.bf16.mxu0 %v7357
              %7409 = vmatpush1.bf16.msra.mxu0 %v7356
              %7410 = vmatprep.subr.bf16.mxu0 %v7352
              %7411 = vmatpush1.bf16.msra.mxu0 %v7351
              %7412 = vmatprep.subr.bf16.mxu0 %v7347
              %7413 = vmatpush1.bf16.msra.mxu0 %v7346
              %7414 = vmatprep.subr.bf16.mxu0 %v7342
              %7415 = vmatpush1.bf16.msra.mxu0 %v7341
              %7416 = vmatprep.subr.bf16.mxu0 %v7337
              %7417 = vmatpush1.bf16.msra.mxu0 %v7336
              %7418 = vmatprep.subr.bf16.mxu0 %v7332
              %7419 = vmatpush1.bf16.msra.mxu0 %v7331
              %7420 = vmatprep.subr.bf16.mxu0 %v7327
              %7421 = vmatpush1.bf16.msra.mxu0 %v7326
              %7422 = vmatprep.subr.bf16.mxu0 0
              %7423 = vmatpush2.bf16.msra.mxu0 0
              %7424 = vmatprep.subr.bf16.mxu0 0
              %7425 = vmatpush2.bf16.msra.mxu0 0
              %7426 = vmatprep.subr.bf16.mxu0 0
              %7427 = vmatpush2.bf16.msra.mxu0 0
              %7428 = vmatprep.subr.bf16.mxu0 0
              %7429 = vmatpush2.bf16.msra.mxu0 0
              %7430 = vmatprep.subr.bf16.mxu0 0
              %7431 = vmatpush2.bf16.msra.mxu0 0
              %7432 = vmatprep.subr.bf16.mxu0 0
              %7433 = vmatpush2.bf16.msra.mxu0 0
              %7434 = vmatprep.subr.bf16.mxu0 0
              %7435 = vmatpush2.bf16.msra.mxu0 0
              %7436 = vmatprep.subr.bf16.mxu0 0
              %7437 = vmatpush2.bf16.msra.mxu0 0
              %7438 = vmatprep.mubr.bf16.mxu0 0
              %7439 = vmatmul.mubr.bf16.gmra.mxu0 %v6768
              %v7440 = vpop.f32.mrf.mxu0
              %v7441 = vadd.f32 %v7111, %v7440
              %v7442 = vpop.f32.mrf.mxu0
              %v7443 = vadd.f32 %v7113, %v7442
              %v7444 = vpop.f32.mrf.mxu0
              %v7445 = vpop.f32.mrf.mxu0
              %7446 = vdwg.mxu0
              %7447 = vmatprep.subr.bf16.mxu0 %v7364
              %7448 = vmatpush1.bf16.msra.mxu0 %v7363
              %7449 = vmatprep.subr.bf16.mxu0 %v7359
              %7450 = vmatpush1.bf16.msra.mxu0 %v7358
              %7451 = vmatprep.subr.bf16.mxu0 %v7354
              %7452 = vmatpush1.bf16.msra.mxu0 %v7353
              %7453 = vmatprep.subr.bf16.mxu0 %v7349
              %7454 = vmatpush1.bf16.msra.mxu0 %v7348
              %7455 = vmatprep.subr.bf16.mxu0 %v7344
              %7456 = vmatpush1.bf16.msra.mxu0 %v7343
              %7457 = vmatprep.subr.bf16.mxu0 %v7339
              %7458 = vmatpush1.bf16.msra.mxu0 %v7338
              %7459 = vmatprep.subr.bf16.mxu0 %v7334
              %7460 = vmatpush1.bf16.msra.mxu0 %v7333
              %7461 = vmatprep.subr.bf16.mxu0 %v7329
              %7462 = vmatpush1.bf16.msra.mxu0 %v7328
              %7463 = vmatprep.subr.bf16.mxu0 0
              %7464 = vmatpush2.bf16.msra.mxu0 0
              %7465 = vmatprep.subr.bf16.mxu0 0
              %7466 = vmatpush2.bf16.msra.mxu0 0
              %7467 = vmatprep.subr.bf16.mxu0 0
              %7468 = vmatpush2.bf16.msra.mxu0 0
              %7469 = vmatprep.subr.bf16.mxu0 0
              %7470 = vmatpush2.bf16.msra.mxu0 0
              %7471 = vmatprep.subr.bf16.mxu0 0
              %7472 = vmatpush2.bf16.msra.mxu0 0
              %7473 = vmatprep.subr.bf16.mxu0 0
              %7474 = vmatpush2.bf16.msra.mxu0 0
              %7475 = vmatprep.subr.bf16.mxu0 0
              %7476 = vmatpush2.bf16.msra.mxu0 0
              %7477 = vmatprep.subr.bf16.mxu0 0
              %7478 = vmatpush2.bf16.msra.mxu0 0
              %7479 = vmatprep.mubr.bf16.mxu0 0
              %7480 = vmatmul.mubr.bf16.gmra.mxu0 %v6768
              %v7481 = vpop.f32.mrf.mxu0
              %v7482 = vadd.f32 %v7152, %v7481
              %v7483 = vpop.f32.mrf.mxu0
              %v7484 = vadd.f32 %v7154, %v7483
              %v7485 = vpop.f32.mrf.mxu0
              %v7486 = vpop.f32.mrf.mxu0
              %7487 = vdwg.mxu0
              %7488 = vmatprep.subr.bf16.mxu0 0
              %7489 = vmatpush1.bf16.msra.mxu0 %v7365
              %7490 = vmatprep.subr.bf16.mxu0 0
              %7491 = vmatpush1.bf16.msra.mxu0 %v7360
              %7492 = vmatprep.subr.bf16.mxu0 0
              %7493 = vmatpush1.bf16.msra.mxu0 %v7355
              %7494 = vmatprep.subr.bf16.mxu0 0
              %7495 = vmatpush1.bf16.msra.mxu0 %v7350
              %7496 = vmatprep.subr.bf16.mxu0 0
              %7497 = vmatpush1.bf16.msra.mxu0 %v7345
              %7498 = vmatprep.subr.bf16.mxu0 0
              %7499 = vmatpush1.bf16.msra.mxu0 %v7340
              %7500 = vmatprep.subr.bf16.mxu0 0
              %7501 = vmatpush1.bf16.msra.mxu0 %v7335
              %7502 = vmatprep.subr.bf16.mxu0 0
              %7503 = vmatpush1.bf16.msra.mxu0 %v7330
              %7504 = vmatprep.subr.bf16.mxu0 0
              %7505 = vmatpush2.bf16.msra.mxu0 0
              %7506 = vmatprep.subr.bf16.mxu0 0
              %7507 = vmatpush2.bf16.msra.mxu0 0
              %7508 = vmatprep.subr.bf16.mxu0 0
              %7509 = vmatpush2.bf16.msra.mxu0 0
              %7510 = vmatprep.subr.bf16.mxu0 0
              %7511 = vmatpush2.bf16.msra.mxu0 0
              %7512 = vmatprep.subr.bf16.mxu0 0
              %7513 = vmatpush2.bf16.msra.mxu0 0
              %7514 = vmatprep.subr.bf16.mxu0 0
              %7515 = vmatpush2.bf16.msra.mxu0 0
              %7516 = vmatprep.subr.bf16.mxu0 0
              %7517 = vmatpush2.bf16.msra.mxu0 0
              %7518 = vmatprep.subr.bf16.mxu0 0
              %7519 = vmatpush2.bf16.msra.mxu0 0
              %7520 = vmatprep.mubr.bf16.mxu0 0
              %7521 = vmatmul.mubr.bf16.gmra.mxu0 %v6768
              %v7522 = vpop.f32.mrf.mxu0
              %v7523 = vadd.f32 %v7193, %v7522
              %v7524 = vpop.f32.mrf.mxu0
              %v7525 = vpop.f32.mrf.mxu0
              %v7526 = vpop.f32.mrf.mxu0
              %7527 = vdwg.mxu0
              %v7528 = vadd.f32 %v7441, %v284
              %v7529 = vadd.f32 %v7443, %v288
              %v7530 = vadd.f32 %v7482, %v292
              %v7531 = vadd.f32 %v7484, %v296
              %v7532 = vadd.f32 %v7523, %v300
              %v7533 = vmul.f32 %v7528, 0.5
              %v7534 = vtanh.pop %v7533
              %v7535 = vadd.f32 %v7534, 1.0
              %v7536 = vmul.f32 %v7535, 0.5
              %v7537 = vmul.f32 %v7529, 0.5
              %v7538 = vtanh.pop %v7537
              %v7539 = vadd.f32 %v7538, 1.0
              %v7540 = vmul.f32 %v7539, 0.5
              %v7541 = vtanh.pop %v7530
              %v7542 = vmul.f32 %v7531, 0.5
              %v7543 = vtanh.pop %v7542
              %v7544 = vadd.f32 %v7543, 1.0
              %v7545 = vmul.f32 %v7544, 0.5
              %v7546 = vmul.f32 %v7532, 0.5
              %v7547 = vtanh.pop %v7546
              %v7548 = vadd.f32 %v7547, 1.0
              %v7549 = vmul.f32 %v7548, 0.5
              %v7550 = vmul.f32 %v7536, %v7541
              %v7551 = vmul.f32 %v7545, %v6767
              %v7552 = vadd.f32 %v7550, %v7551
              %v7553 = vmul.f32 %v7549, %v6765
              %v7554 = vadd.f32 %v7552, %v7553
              %v7555 = vtanh.pop %v7554
              %v7556 = vmul.f32 %v7540, %v7555
              %7557 = vst [vmem:[#allocation3] sm:$0xff] %v7556
              %7558 = vst [vmem:[#allocation3 + $0x8] sm:$0xff] %v7554
            $region106: #{_fenwick_forward_stream.1} parent=69 // pred_fallthru
              _
            %p7559 = scmp.lt.s32.totalorder %s337, 4
            %s7560 = sshra.s32 %s314, 4
            %s7561 = sand.u32 %s7560, 1
            %p7562 = scmp.eq.s32.totalorder %s7561, 1
            %p7563 = pnand %p7559, %p7562
            %p7564 = pneg %p7563
            // Predicated region
            $region107: #{_fenwick_forward_stream.1} parent=69 // pred_check
              _
            $region108: #{_fenwick_forward_stream.1} parent=69 // pred_check_branch
              %7566 = sbr.rel (%p7563) target = $region110
            $region109: #{_fenwick_forward_stream.1} parent=69 // pred_region
              %s7567 = scalar_lea.vmem [#allocation2], 64
              %v7568 = vld [vmem:[%s7567] sm:$0xff]
              %v7569 = vld [vmem:[%s7567 + $0x8] sm:$0xff]
              %v7570 = vld [vmem:[#allocation3] sm:$0xff]
              %v7571 = vld [vmem:[#allocation3 + $0x8] sm:$0xff]
              %v7572 = vpack.c.bf16 %v7570, %v7570
              %s7573 = scalar_lea.vmem %s0, 640
              %v7574 = vld [vmem:[%s7573] sm:$0xff]
              %v7575 = vld [vmem:[%s7573 + $0x8] sm:$0xff]
              %v7576 = vld [vmem:[%s7573 + $0x10] sm:$0xf]
              %v7577 = vld [vmem:[%s7573 + $0x14] sm:$0xff]
              %v7578 = vld [vmem:[%s7573 + $0x1c] sm:$0xff]
              %v7579 = vld [vmem:[%s7573 + $0x24] sm:$0xf]
              %v7580 = vld [vmem:[%s7573 + $0x28] sm:$0xff]
              %v7581 = vld [vmem:[%s7573 + $0x30] sm:$0xff]
              %v7582 = vld [vmem:[%s7573 + $0x38] sm:$0xf]
              %v7583 = vld [vmem:[%s7573 + $0x3c] sm:$0xff]
              %v7584 = vld [vmem:[%s7573 + $0x44] sm:$0xff]
              %v7585 = vld [vmem:[%s7573 + $0x4c] sm:$0xf]
              %v7586 = vld [vmem:[%s7573 + $0x50] sm:$0xff]
              %v7587 = vld [vmem:[%s7573 + $0x58] sm:$0xff]
              %v7588 = vld [vmem:[%s7573 + $0x60] sm:$0xf]
              %v7589 = vld [vmem:[%s7573 + $0x64] sm:$0xff]
              %v7590 = vld [vmem:[%s7573 + $0x6c] sm:$0xff]
              %v7591 = vld [vmem:[%s7573 + $0x74] sm:$0xf]
              %v7592 = vld [vmem:[%s7573 + $0x78] sm:$0xff]
              %v7593 = vld [vmem:[%s7573 + $0x80] sm:$0xff]
              %v7594 = vld [vmem:[%s7573 + $0x88] sm:$0xf]
              %v7595 = vld [vmem:[%s7573 + $0x8c] sm:$0xff]
              %v7596 = vld [vmem:[%s7573 + $0x94] sm:$0xff]
              %v7597 = vld [vmem:[%s7573 + $0x9c] sm:$0xf]
              %v7598 = vld [vmem:[%s7573 + $0xa0] sm:$0xff]
              %v7599 = vld [vmem:[%s7573 + $0xa8] sm:$0xff]
              %v7600 = vld [vmem:[%s7573 + $0xb0] sm:$0xf]
              %v7601 = vld [vmem:[%s7573 + $0xb4] sm:$0xff]
              %v7602 = vld [vmem:[%s7573 + $0xbc] sm:$0xff]
              %v7603 = vld [vmem:[%s7573 + $0xc4] sm:$0xf]
              %v7604 = vld [vmem:[%s7573 + $0xc8] sm:$0xff]
              %v7605 = vld [vmem:[%s7573 + $0xd0] sm:$0xff]
              %v7606 = vld [vmem:[%s7573 + $0xd8] sm:$0xf]
              %v7607 = vld [vmem:[%s7573 + $0xdc] sm:$0xff]
              %v7608 = vld [vmem:[%s7573 + $0xe4] sm:$0xff]
              %v7609 = vld [vmem:[%s7573 + $0xec] sm:$0xf]
              %v7610 = vld [vmem:[%s7573 + $0xf0] sm:$0xff]
              %v7611 = vld [vmem:[%s7573 + $0xf8] sm:$0xff]
              %v7612 = vld [vmem:[%s7573 + $0x100] sm:$0xf]
              %v7613 = vld [vmem:[%s7573 + $0x104] sm:$0xff]
              %v7614 = vld [vmem:[%s7573 + $0x10c] sm:$0xff]
              %v7615 = vld [vmem:[%s7573 + $0x114] sm:$0xf]
              %v7616 = vld [vmem:[%s7573 + $0x118] sm:$0xff]
              %v7617 = vld [vmem:[%s7573 + $0x120] sm:$0xff]
              %v7618 = vld [vmem:[%s7573 + $0x128] sm:$0xf]
              %v7619 = vld [vmem:[%s7573 + $0x12c] sm:$0xff]
              %v7620 = vld [vmem:[%s7573 + $0x134] sm:$0xff]
              %v7621 = vld [vmem:[%s7573 + $0x13c] sm:$0xf]
              %v7622 = vpack.c.bf16 %v7568, %v7568
              %s7623 = scalar_lea.vmem %s0, 960
              %v7624 = vld [vmem:[%s7623] sm:$0xff]
              %v7625 = vld [vmem:[%s7623 + $0x8] sm:$0xff]
              %v7626 = vld [vmem:[%s7623 + $0x10] sm:$0xf]
              %v7627 = vld [vmem:[%s7623 + $0x14] sm:$0xff]
              %v7628 = vld [vmem:[%s7623 + $0x1c] sm:$0xff]
              %v7629 = vld [vmem:[%s7623 + $0x24] sm:$0xf]
              %v7630 = vld [vmem:[%s7623 + $0x28] sm:$0xff]
              %v7631 = vld [vmem:[%s7623 + $0x30] sm:$0xff]
              %v7632 = vld [vmem:[%s7623 + $0x38] sm:$0xf]
              %v7633 = vld [vmem:[%s7623 + $0x3c] sm:$0xff]
              %v7634 = vld [vmem:[%s7623 + $0x44] sm:$0xff]
              %v7635 = vld [vmem:[%s7623 + $0x4c] sm:$0xf]
              %v7636 = vld [vmem:[%s7623 + $0x50] sm:$0xff]
              %v7637 = vld [vmem:[%s7623 + $0x58] sm:$0xff]
              %v7638 = vld [vmem:[%s7623 + $0x60] sm:$0xf]
              %v7639 = vld [vmem:[%s7623 + $0x64] sm:$0xff]
              %v7640 = vld [vmem:[%s7623 + $0x6c] sm:$0xff]
              %v7641 = vld [vmem:[%s7623 + $0x74] sm:$0xf]
              %v7642 = vld [vmem:[%s7623 + $0x78] sm:$0xff]
              %v7643 = vld [vmem:[%s7623 + $0x80] sm:$0xff]
              %v7644 = vld [vmem:[%s7623 + $0x88] sm:$0xf]
              %v7645 = vld [vmem:[%s7623 + $0x8c] sm:$0xff]
              %v7646 = vld [vmem:[%s7623 + $0x94] sm:$0xff]
              %v7647 = vld [vmem:[%s7623 + $0x9c] sm:$0xf]
              %v7648 = vld [vmem:[%s7623 + $0xa0] sm:$0xff]
              %v7649 = vld [vmem:[%s7623 + $0xa8] sm:$0xff]
              %v7650 = vld [vmem:[%s7623 + $0xb0] sm:$0xf]
              %v7651 = vld [vmem:[%s7623 + $0xb4] sm:$0xff]
              %v7652 = vld [vmem:[%s7623 + $0xbc] sm:$0xff]
              %v7653 = vld [vmem:[%s7623 + $0xc4] sm:$0xf]
              %v7654 = vld [vmem:[%s7623 + $0xc8] sm:$0xff]
              %v7655 = vld [vmem:[%s7623 + $0xd0] sm:$0xff]
              %v7656 = vld [vmem:[%s7623 + $0xd8] sm:$0xf]
              %v7657 = vld [vmem:[%s7623 + $0xdc] sm:$0xff]
              %v7658 = vld [vmem:[%s7623 + $0xe4] sm:$0xff]
              %v7659 = vld [vmem:[%s7623 + $0xec] sm:$0xf]
              %v7660 = vld [vmem:[%s7623 + $0xf0] sm:$0xff]
              %v7661 = vld [vmem:[%s7623 + $0xf8] sm:$0xff]
              %v7662 = vld [vmem:[%s7623 + $0x100] sm:$0xf]
              %v7663 = vld [vmem:[%s7623 + $0x104] sm:$0xff]
              %v7664 = vld [vmem:[%s7623 + $0x10c] sm:$0xff]
              %v7665 = vld [vmem:[%s7623 + $0x114] sm:$0xf]
              %v7666 = vld [vmem:[%s7623 + $0x118] sm:$0xff]
              %v7667 = vld [vmem:[%s7623 + $0x120] sm:$0xff]
              %v7668 = vld [vmem:[%s7623 + $0x128] sm:$0xf]
              %v7669 = vld [vmem:[%s7623 + $0x12c] sm:$0xff]
              %v7670 = vld [vmem:[%s7623 + $0x134] sm:$0xff]
              %v7671 = vld [vmem:[%s7623 + $0x13c] sm:$0xf]
              %v7720 = vunpack.c.l.b16 %v7624
              %v7721 = vunpack.c.h.b16 %v7624
              %v7722 = vunpack.c.l.b16 %v7625
              %v7723 = vunpack.c.h.b16 %v7625
              %v7724 = vunpack.c.l.b16 %v7626
              %v7725 = vunpack.c.l.b16 %v7627
              %v7726 = vunpack.c.h.b16 %v7627
              %v7727 = vunpack.c.l.b16 %v7628
              %v7728 = vunpack.c.h.b16 %v7628
              %v7729 = vunpack.c.l.b16 %v7629
              %v7730 = vunpack.c.l.b16 %v7630
              %v7731 = vunpack.c.h.b16 %v7630
              %v7732 = vunpack.c.l.b16 %v7631
              %v7733 = vunpack.c.h.b16 %v7631
              %v7734 = vunpack.c.l.b16 %v7632
              %v7735 = vunpack.c.l.b16 %v7633
              %v7736 = vunpack.c.h.b16 %v7633
              %v7737 = vunpack.c.l.b16 %v7634
              %v7738 = vunpack.c.h.b16 %v7634
              %v7739 = vunpack.c.l.b16 %v7635
              %v7740 = vunpack.c.l.b16 %v7636
              %v7741 = vunpack.c.h.b16 %v7636
              %v7742 = vunpack.c.l.b16 %v7637
              %v7743 = vunpack.c.h.b16 %v7637
              %v7744 = vunpack.c.l.b16 %v7638
              %v7745 = vunpack.c.l.b16 %v7639
              %v7746 = vunpack.c.h.b16 %v7639
              %v7747 = vunpack.c.l.b16 %v7640
              %v7748 = vunpack.c.h.b16 %v7640
              %v7749 = vunpack.c.l.b16 %v7641
              %v7750 = vunpack.c.l.b16 %v7642
              %v7751 = vunpack.c.h.b16 %v7642
              %v7752 = vunpack.c.l.b16 %v7643
              %v7753 = vunpack.c.h.b16 %v7643
              %v7754 = vunpack.c.l.b16 %v7644
              %v7755 = vunpack.c.l.b16 %v7645
              %v7756 = vunpack.c.h.b16 %v7645
              %v7757 = vunpack.c.l.b16 %v7646
              %v7758 = vunpack.c.h.b16 %v7646
              %v7759 = vunpack.c.l.b16 %v7647
              %v7760 = vunpack.c.l.b16 %v7648
              %v7761 = vunpack.c.h.b16 %v7648
              %v7762 = vunpack.c.l.b16 %v7649
              %v7763 = vunpack.c.h.b16 %v7649
              %v7764 = vunpack.c.l.b16 %v7650
              %v7765 = vunpack.c.l.b16 %v7651
              %v7766 = vunpack.c.h.b16 %v7651
              %v7767 = vunpack.c.l.b16 %v7652
              %v7768 = vunpack.c.h.b16 %v7652
              %v7769 = vunpack.c.l.b16 %v7653
              %v7770 = vunpack.c.l.b16 %v7654
              %v7771 = vunpack.c.h.b16 %v7654
              %v7772 = vunpack.c.l.b16 %v7655
              %v7773 = vunpack.c.h.b16 %v7655
              %v7774 = vunpack.c.l.b16 %v7656
              %v7775 = vunpack.c.l.b16 %v7657
              %v7776 = vunpack.c.h.b16 %v7657
              %v7777 = vunpack.c.l.b16 %v7658
              %v7778 = vunpack.c.h.b16 %v7658
              %v7779 = vunpack.c.l.b16 %v7659
              %v7780 = vunpack.c.l.b16 %v7660
              %v7781 = vunpack.c.h.b16 %v7660
              %v7782 = vunpack.c.l.b16 %v7661
              %v7783 = vunpack.c.h.b16 %v7661
              %v7784 = vunpack.c.l.b16 %v7662
              %v7785 = vunpack.c.l.b16 %v7663
              %v7786 = vunpack.c.h.b16 %v7663
              %v7787 = vunpack.c.l.b16 %v7664
              %v7788 = vunpack.c.h.b16 %v7664
              %v7789 = vunpack.c.l.b16 %v7665
              %v7790 = vunpack.c.l.b16 %v7666
              %v7791 = vunpack.c.h.b16 %v7666
              %v7792 = vunpack.c.l.b16 %v7667
              %v7793 = vunpack.c.h.b16 %v7667
              %v7794 = vunpack.c.l.b16 %v7668
              %v7795 = vunpack.c.l.b16 %v7669
              %v7796 = vunpack.c.h.b16 %v7669
              %v7797 = vunpack.c.l.b16 %v7670
              %v7798 = vunpack.c.h.b16 %v7670
              %v7799 = vunpack.c.l.b16 %v7671
              %v7800 = vpack.c.b16 %v7725, %v7720
              %v7801 = vpack.c.b16 %v7726, %v7721
              %v7802 = vpack.c.b16 %v7727, %v7722
              %v7803 = vpack.c.b16 %v7728, %v7723
              %v7804 = vpack.c.b16 %v7729, %v7724
              %v7805 = vpack.c.b16 %v7735, %v7730
              %v7806 = vpack.c.b16 %v7736, %v7731
              %v7807 = vpack.c.b16 %v7737, %v7732
              %v7808 = vpack.c.b16 %v7738, %v7733
              %v7809 = vpack.c.b16 %v7739, %v7734
              %v7810 = vpack.c.b16 %v7745, %v7740
              %v7811 = vpack.c.b16 %v7746, %v7741
              %v7812 = vpack.c.b16 %v7747, %v7742
              %v7813 = vpack.c.b16 %v7748, %v7743
              %v7814 = vpack.c.b16 %v7749, %v7744
              %v7815 = vpack.c.b16 %v7755, %v7750
              %v7816 = vpack.c.b16 %v7756, %v7751
              %v7817 = vpack.c.b16 %v7757, %v7752
              %v7818 = vpack.c.b16 %v7758, %v7753
              %v7819 = vpack.c.b16 %v7759, %v7754
              %v7820 = vpack.c.b16 %v7765, %v7760
              %v7821 = vpack.c.b16 %v7766, %v7761
              %v7822 = vpack.c.b16 %v7767, %v7762
              %v7823 = vpack.c.b16 %v7768, %v7763
              %v7824 = vpack.c.b16 %v7769, %v7764
              %v7825 = vpack.c.b16 %v7775, %v7770
              %v7826 = vpack.c.b16 %v7776, %v7771
              %v7827 = vpack.c.b16 %v7777, %v7772
              %v7828 = vpack.c.b16 %v7778, %v7773
              %v7829 = vpack.c.b16 %v7779, %v7774
              %v7830 = vpack.c.b16 %v7785, %v7780
              %v7831 = vpack.c.b16 %v7786, %v7781
              %v7832 = vpack.c.b16 %v7787, %v7782
              %v7833 = vpack.c.b16 %v7788, %v7783
              %v7834 = vpack.c.b16 %v7789, %v7784
              %v7835 = vpack.c.b16 %v7795, %v7790
              %v7836 = vpack.c.b16 %v7796, %v7791
              %v7837 = vpack.c.b16 %v7797, %v7792
              %v7838 = vpack.c.b16 %v7798, %v7793
              %v7839 = vpack.c.b16 %v7799, %v7794
              %7880 = vmatprep.subr.bf16.mxu0 %v7836
              %7881 = vmatpush1.bf16.msra.mxu0 %v7835
              %7882 = vmatprep.subr.bf16.mxu0 %v7831
              %7883 = vmatpush1.bf16.msra.mxu0 %v7830
              %7884 = vmatprep.subr.bf16.mxu0 %v7826
              %7885 = vmatpush1.bf16.msra.mxu0 %v7825
              %7886 = vmatprep.subr.bf16.mxu0 %v7821
              %7887 = vmatpush1.bf16.msra.mxu0 %v7820
              %7888 = vmatprep.subr.bf16.mxu0 %v7816
              %7889 = vmatpush1.bf16.msra.mxu0 %v7815
              %7890 = vmatprep.subr.bf16.mxu0 %v7811
              %7891 = vmatpush1.bf16.msra.mxu0 %v7810
              %7892 = vmatprep.subr.bf16.mxu0 %v7806
              %7893 = vmatpush1.bf16.msra.mxu0 %v7805
              %7894 = vmatprep.subr.bf16.mxu0 %v7801
              %7895 = vmatpush1.bf16.msra.mxu0 %v7800
              %7896 = vmatprep.subr.bf16.mxu0 0
              %7897 = vmatpush2.bf16.msra.mxu0 0
              %7898 = vmatprep.subr.bf16.mxu0 0
              %7899 = vmatpush2.bf16.msra.mxu0 0
              %7900 = vmatprep.subr.bf16.mxu0 0
              %7901 = vmatpush2.bf16.msra.mxu0 0
              %7902 = vmatprep.subr.bf16.mxu0 0
              %7903 = vmatpush2.bf16.msra.mxu0 0
              %7904 = vmatprep.subr.bf16.mxu0 0
              %7905 = vmatpush2.bf16.msra.mxu0 0
              %7906 = vmatprep.subr.bf16.mxu0 0
              %7907 = vmatpush2.bf16.msra.mxu0 0
              %7908 = vmatprep.subr.bf16.mxu0 0
              %7909 = vmatpush2.bf16.msra.mxu0 0
              %7910 = vmatprep.subr.bf16.mxu0 0
              %7911 = vmatpush2.bf16.msra.mxu0 0
              %7912 = vmatprep.mubr.bf16.mxu0 0
              %7913 = vmatmul.mubr.bf16.gmra.mxu0 %v7622
              %v7914 = vpop.f32.mrf.mxu0
              %v7915 = vadd.f32 0.0, %v7914
              %v7916 = vpop.f32.mrf.mxu0
              %v7917 = vadd.f32 0.0, %v7916
              %v7918 = vpop.f32.mrf.mxu0
              %v7919 = vpop.f32.mrf.mxu0
              %7920 = vdwg.mxu0
              %7921 = vmatprep.subr.bf16.mxu0 %v7838
              %7922 = vmatpush1.bf16.msra.mxu0 %v7837
              %7923 = vmatprep.subr.bf16.mxu0 %v7833
              %7924 = vmatpush1.bf16.msra.mxu0 %v7832
              %7925 = vmatprep.subr.bf16.mxu0 %v7828
              %7926 = vmatpush1.bf16.msra.mxu0 %v7827
              %7927 = vmatprep.subr.bf16.mxu0 %v7823
              %7928 = vmatpush1.bf16.msra.mxu0 %v7822
              %7929 = vmatprep.subr.bf16.mxu0 %v7818
              %7930 = vmatpush1.bf16.msra.mxu0 %v7817
              %7931 = vmatprep.subr.bf16.mxu0 %v7813
              %7932 = vmatpush1.bf16.msra.mxu0 %v7812
              %7933 = vmatprep.subr.bf16.mxu0 %v7808
              %7934 = vmatpush1.bf16.msra.mxu0 %v7807
              %7935 = vmatprep.subr.bf16.mxu0 %v7803
              %7936 = vmatpush1.bf16.msra.mxu0 %v7802
              %7937 = vmatprep.subr.bf16.mxu0 0
              %7938 = vmatpush2.bf16.msra.mxu0 0
              %7939 = vmatprep.subr.bf16.mxu0 0
              %7940 = vmatpush2.bf16.msra.mxu0 0
              %7941 = vmatprep.subr.bf16.mxu0 0
              %7942 = vmatpush2.bf16.msra.mxu0 0
              %7943 = vmatprep.subr.bf16.mxu0 0
              %7944 = vmatpush2.bf16.msra.mxu0 0
              %7945 = vmatprep.subr.bf16.mxu0 0
              %7946 = vmatpush2.bf16.msra.mxu0 0
              %7947 = vmatprep.subr.bf16.mxu0 0
              %7948 = vmatpush2.bf16.msra.mxu0 0
              %7949 = vmatprep.subr.bf16.mxu0 0
              %7950 = vmatpush2.bf16.msra.mxu0 0
              %7951 = vmatprep.subr.bf16.mxu0 0
              %7952 = vmatpush2.bf16.msra.mxu0 0
              %7953 = vmatprep.mubr.bf16.mxu0 0
              %7954 = vmatmul.mubr.bf16.gmra.mxu0 %v7622
              %v7955 = vpop.f32.mrf.mxu0
              %v7956 = vadd.f32 0.0, %v7955
              %v7957 = vpop.f32.mrf.mxu0
              %v7958 = vadd.f32 0.0, %v7957
              %v7959 = vpop.f32.mrf.mxu0
              %v7960 = vpop.f32.mrf.mxu0
              %7961 = vdwg.mxu0
              %7962 = vmatprep.subr.bf16.mxu0 0
              %7963 = vmatpush1.bf16.msra.mxu0 %v7839
              %7964 = vmatprep.subr.bf16.mxu0 0
              %7965 = vmatpush1.bf16.msra.mxu0 %v7834
              %7966 = vmatprep.subr.bf16.mxu0 0
              %7967 = vmatpush1.bf16.msra.mxu0 %v7829
              %7968 = vmatprep.subr.bf16.mxu0 0
              %7969 = vmatpush1.bf16.msra.mxu0 %v7824
              %7970 = vmatprep.subr.bf16.mxu0 0
              %7971 = vmatpush1.bf16.msra.mxu0 %v7819
              %7972 = vmatprep.subr.bf16.mxu0 0
              %7973 = vmatpush1.bf16.msra.mxu0 %v7814
              %7974 = vmatprep.subr.bf16.mxu0 0
              %7975 = vmatpush1.bf16.msra.mxu0 %v7809
              %7976 = vmatprep.subr.bf16.mxu0 0
              %7977 = vmatpush1.bf16.msra.mxu0 %v7804
              %7978 = vmatprep.subr.bf16.mxu0 0
              %7979 = vmatpush2.bf16.msra.mxu0 0
              %7980 = vmatprep.subr.bf16.mxu0 0
              %7981 = vmatpush2.bf16.msra.mxu0 0
              %7982 = vmatprep.subr.bf16.mxu0 0
              %7983 = vmatpush2.bf16.msra.mxu0 0
              %7984 = vmatprep.subr.bf16.mxu0 0
              %7985 = vmatpush2.bf16.msra.mxu0 0
              %7986 = vmatprep.subr.bf16.mxu0 0
              %7987 = vmatpush2.bf16.msra.mxu0 0
              %7988 = vmatprep.subr.bf16.mxu0 0
              %7989 = vmatpush2.bf16.msra.mxu0 0
              %7990 = vmatprep.subr.bf16.mxu0 0
              %7991 = vmatpush2.bf16.msra.mxu0 0
              %7992 = vmatprep.subr.bf16.mxu0 0
              %7993 = vmatpush2.bf16.msra.mxu0 0
              %7994 = vmatprep.mubr.bf16.mxu0 0
              %7995 = vmatmul.mubr.bf16.gmra.mxu0 %v7622
              %v7996 = vpop.f32.mrf.mxu0
              %v7997 = vadd.f32 0.0, %v7996
              %v7998 = vpop.f32.mrf.mxu0
              %v7999 = vpop.f32.mrf.mxu0
              %v8000 = vpop.f32.mrf.mxu0
              %8001 = vdwg.mxu0
              %v8050 = vunpack.c.l.b16 %v7574
              %v8051 = vunpack.c.h.b16 %v7574
              %v8052 = vunpack.c.l.b16 %v7575
              %v8053 = vunpack.c.h.b16 %v7575
              %v8054 = vunpack.c.l.b16 %v7576
              %v8055 = vunpack.c.l.b16 %v7577
              %v8056 = vunpack.c.h.b16 %v7577
              %v8057 = vunpack.c.l.b16 %v7578
              %v8058 = vunpack.c.h.b16 %v7578
              %v8059 = vunpack.c.l.b16 %v7579
              %v8060 = vunpack.c.l.b16 %v7580
              %v8061 = vunpack.c.h.b16 %v7580
              %v8062 = vunpack.c.l.b16 %v7581
              %v8063 = vunpack.c.h.b16 %v7581
              %v8064 = vunpack.c.l.b16 %v7582
              %v8065 = vunpack.c.l.b16 %v7583
              %v8066 = vunpack.c.h.b16 %v7583
              %v8067 = vunpack.c.l.b16 %v7584
              %v8068 = vunpack.c.h.b16 %v7584
              %v8069 = vunpack.c.l.b16 %v7585
              %v8070 = vunpack.c.l.b16 %v7586
              %v8071 = vunpack.c.h.b16 %v7586
              %v8072 = vunpack.c.l.b16 %v7587
              %v8073 = vunpack.c.h.b16 %v7587
              %v8074 = vunpack.c.l.b16 %v7588
              %v8075 = vunpack.c.l.b16 %v7589
              %v8076 = vunpack.c.h.b16 %v7589
              %v8077 = vunpack.c.l.b16 %v7590
              %v8078 = vunpack.c.h.b16 %v7590
              %v8079 = vunpack.c.l.b16 %v7591
              %v8080 = vunpack.c.l.b16 %v7592
              %v8081 = vunpack.c.h.b16 %v7592
              %v8082 = vunpack.c.l.b16 %v7593
              %v8083 = vunpack.c.h.b16 %v7593
              %v8084 = vunpack.c.l.b16 %v7594
              %v8085 = vunpack.c.l.b16 %v7595
              %v8086 = vunpack.c.h.b16 %v7595
              %v8087 = vunpack.c.l.b16 %v7596
              %v8088 = vunpack.c.h.b16 %v7596
              %v8089 = vunpack.c.l.b16 %v7597
              %v8090 = vunpack.c.l.b16 %v7598
              %v8091 = vunpack.c.h.b16 %v7598
              %v8092 = vunpack.c.l.b16 %v7599
              %v8093 = vunpack.c.h.b16 %v7599
              %v8094 = vunpack.c.l.b16 %v7600
              %v8095 = vunpack.c.l.b16 %v7601
              %v8096 = vunpack.c.h.b16 %v7601
              %v8097 = vunpack.c.l.b16 %v7602
              %v8098 = vunpack.c.h.b16 %v7602
              %v8099 = vunpack.c.l.b16 %v7603
              %v8100 = vunpack.c.l.b16 %v7604
              %v8101 = vunpack.c.h.b16 %v7604
              %v8102 = vunpack.c.l.b16 %v7605
              %v8103 = vunpack.c.h.b16 %v7605
              %v8104 = vunpack.c.l.b16 %v7606
              %v8105 = vunpack.c.l.b16 %v7607
              %v8106 = vunpack.c.h.b16 %v7607
              %v8107 = vunpack.c.l.b16 %v7608
              %v8108 = vunpack.c.h.b16 %v7608
              %v8109 = vunpack.c.l.b16 %v7609
              %v8110 = vunpack.c.l.b16 %v7610
              %v8111 = vunpack.c.h.b16 %v7610
              %v8112 = vunpack.c.l.b16 %v7611
              %v8113 = vunpack.c.h.b16 %v7611
              %v8114 = vunpack.c.l.b16 %v7612
              %v8115 = vunpack.c.l.b16 %v7613
              %v8116 = vunpack.c.h.b16 %v7613
              %v8117 = vunpack.c.l.b16 %v7614
              %v8118 = vunpack.c.h.b16 %v7614
              %v8119 = vunpack.c.l.b16 %v7615
              %v8120 = vunpack.c.l.b16 %v7616
              %v8121 = vunpack.c.h.b16 %v7616
              %v8122 = vunpack.c.l.b16 %v7617
              %v8123 = vunpack.c.h.b16 %v7617
              %v8124 = vunpack.c.l.b16 %v7618
              %v8125 = vunpack.c.l.b16 %v7619
              %v8126 = vunpack.c.h.b16 %v7619
              %v8127 = vunpack.c.l.b16 %v7620
              %v8128 = vunpack.c.h.b16 %v7620
              %v8129 = vunpack.c.l.b16 %v7621
              %v8130 = vpack.c.b16 %v8055, %v8050
              %v8131 = vpack.c.b16 %v8056, %v8051
              %v8132 = vpack.c.b16 %v8057, %v8052
              %v8133 = vpack.c.b16 %v8058, %v8053
              %v8134 = vpack.c.b16 %v8059, %v8054
              %v8135 = vpack.c.b16 %v8065, %v8060
              %v8136 = vpack.c.b16 %v8066, %v8061
              %v8137 = vpack.c.b16 %v8067, %v8062
              %v8138 = vpack.c.b16 %v8068, %v8063
              %v8139 = vpack.c.b16 %v8069, %v8064
              %v8140 = vpack.c.b16 %v8075, %v8070
              %v8141 = vpack.c.b16 %v8076, %v8071
              %v8142 = vpack.c.b16 %v8077, %v8072
              %v8143 = vpack.c.b16 %v8078, %v8073
              %v8144 = vpack.c.b16 %v8079, %v8074
              %v8145 = vpack.c.b16 %v8085, %v8080
              %v8146 = vpack.c.b16 %v8086, %v8081
              %v8147 = vpack.c.b16 %v8087, %v8082
              %v8148 = vpack.c.b16 %v8088, %v8083
              %v8149 = vpack.c.b16 %v8089, %v8084
              %v8150 = vpack.c.b16 %v8095, %v8090
              %v8151 = vpack.c.b16 %v8096, %v8091
              %v8152 = vpack.c.b16 %v8097, %v8092
              %v8153 = vpack.c.b16 %v8098, %v8093
              %v8154 = vpack.c.b16 %v8099, %v8094
              %v8155 = vpack.c.b16 %v8105, %v8100
              %v8156 = vpack.c.b16 %v8106, %v8101
              %v8157 = vpack.c.b16 %v8107, %v8102
              %v8158 = vpack.c.b16 %v8108, %v8103
              %v8159 = vpack.c.b16 %v8109, %v8104
              %v8160 = vpack.c.b16 %v8115, %v8110
              %v8161 = vpack.c.b16 %v8116, %v8111
              %v8162 = vpack.c.b16 %v8117, %v8112
              %v8163 = vpack.c.b16 %v8118, %v8113
              %v8164 = vpack.c.b16 %v8119, %v8114
              %v8165 = vpack.c.b16 %v8125, %v8120
              %v8166 = vpack.c.b16 %v8126, %v8121
              %v8167 = vpack.c.b16 %v8127, %v8122
              %v8168 = vpack.c.b16 %v8128, %v8123
              %v8169 = vpack.c.b16 %v8129, %v8124
              %8210 = vmatprep.subr.bf16.mxu0 %v8166
              %8211 = vmatpush1.bf16.msra.mxu0 %v8165
              %8212 = vmatprep.subr.bf16.mxu0 %v8161
              %8213 = vmatpush1.bf16.msra.mxu0 %v8160
              %8214 = vmatprep.subr.bf16.mxu0 %v8156
              %8215 = vmatpush1.bf16.msra.mxu0 %v8155
              %8216 = vmatprep.subr.bf16.mxu0 %v8151
              %8217 = vmatpush1.bf16.msra.mxu0 %v8150
              %8218 = vmatprep.subr.bf16.mxu0 %v8146
              %8219 = vmatpush1.bf16.msra.mxu0 %v8145
              %8220 = vmatprep.subr.bf16.mxu0 %v8141
              %8221 = vmatpush1.bf16.msra.mxu0 %v8140
              %8222 = vmatprep.subr.bf16.mxu0 %v8136
              %8223 = vmatpush1.bf16.msra.mxu0 %v8135
              %8224 = vmatprep.subr.bf16.mxu0 %v8131
              %8225 = vmatpush1.bf16.msra.mxu0 %v8130
              %8226 = vmatprep.subr.bf16.mxu0 0
              %8227 = vmatpush2.bf16.msra.mxu0 0
              %8228 = vmatprep.subr.bf16.mxu0 0
              %8229 = vmatpush2.bf16.msra.mxu0 0
              %8230 = vmatprep.subr.bf16.mxu0 0
              %8231 = vmatpush2.bf16.msra.mxu0 0
              %8232 = vmatprep.subr.bf16.mxu0 0
              %8233 = vmatpush2.bf16.msra.mxu0 0
              %8234 = vmatprep.subr.bf16.mxu0 0
              %8235 = vmatpush2.bf16.msra.mxu0 0
              %8236 = vmatprep.subr.bf16.mxu0 0
              %8237 = vmatpush2.bf16.msra.mxu0 0
              %8238 = vmatprep.subr.bf16.mxu0 0
              %8239 = vmatpush2.bf16.msra.mxu0 0
              %8240 = vmatprep.subr.bf16.mxu0 0
              %8241 = vmatpush2.bf16.msra.mxu0 0
              %8242 = vmatprep.mubr.bf16.mxu0 0
              %8243 = vmatmul.mubr.bf16.gmra.mxu0 %v7572
              %v8244 = vpop.f32.mrf.mxu0
              %v8245 = vadd.f32 %v7915, %v8244
              %v8246 = vpop.f32.mrf.mxu0
              %v8247 = vadd.f32 %v7917, %v8246
              %v8248 = vpop.f32.mrf.mxu0
              %v8249 = vpop.f32.mrf.mxu0
              %8250 = vdwg.mxu0
              %8251 = vmatprep.subr.bf16.mxu0 %v8168
              %8252 = vmatpush1.bf16.msra.mxu0 %v8167
              %8253 = vmatprep.subr.bf16.mxu0 %v8163
              %8254 = vmatpush1.bf16.msra.mxu0 %v8162
              %8255 = vmatprep.subr.bf16.mxu0 %v8158
              %8256 = vmatpush1.bf16.msra.mxu0 %v8157
              %8257 = vmatprep.subr.bf16.mxu0 %v8153
              %8258 = vmatpush1.bf16.msra.mxu0 %v8152
              %8259 = vmatprep.subr.bf16.mxu0 %v8148
              %8260 = vmatpush1.bf16.msra.mxu0 %v8147
              %8261 = vmatprep.subr.bf16.mxu0 %v8143
              %8262 = vmatpush1.bf16.msra.mxu0 %v8142
              %8263 = vmatprep.subr.bf16.mxu0 %v8138
              %8264 = vmatpush1.bf16.msra.mxu0 %v8137
              %8265 = vmatprep.subr.bf16.mxu0 %v8133
              %8266 = vmatpush1.bf16.msra.mxu0 %v8132
              %8267 = vmatprep.subr.bf16.mxu0 0
              %8268 = vmatpush2.bf16.msra.mxu0 0
              %8269 = vmatprep.subr.bf16.mxu0 0
              %8270 = vmatpush2.bf16.msra.mxu0 0
              %8271 = vmatprep.subr.bf16.mxu0 0
              %8272 = vmatpush2.bf16.msra.mxu0 0
              %8273 = vmatprep.subr.bf16.mxu0 0
              %8274 = vmatpush2.bf16.msra.mxu0 0
              %8275 = vmatprep.subr.bf16.mxu0 0
              %8276 = vmatpush2.bf16.msra.mxu0 0
              %8277 = vmatprep.subr.bf16.mxu0 0
              %8278 = vmatpush2.bf16.msra.mxu0 0
              %8279 = vmatprep.subr.bf16.mxu0 0
              %8280 = vmatpush2.bf16.msra.mxu0 0
              %8281 = vmatprep.subr.bf16.mxu0 0
              %8282 = vmatpush2.bf16.msra.mxu0 0
              %8283 = vmatprep.mubr.bf16.mxu0 0
              %8284 = vmatmul.mubr.bf16.gmra.mxu0 %v7572
              %v8285 = vpop.f32.mrf.mxu0
              %v8286 = vadd.f32 %v7956, %v8285
              %v8287 = vpop.f32.mrf.mxu0
              %v8288 = vadd.f32 %v7958, %v8287
              %v8289 = vpop.f32.mrf.mxu0
              %v8290 = vpop.f32.mrf.mxu0
              %8291 = vdwg.mxu0
              %8292 = vmatprep.subr.bf16.mxu0 0
              %8293 = vmatpush1.bf16.msra.mxu0 %v8169
              %8294 = vmatprep.subr.bf16.mxu0 0
              %8295 = vmatpush1.bf16.msra.mxu0 %v8164
              %8296 = vmatprep.subr.bf16.mxu0 0
              %8297 = vmatpush1.bf16.msra.mxu0 %v8159
              %8298 = vmatprep.subr.bf16.mxu0 0
              %8299 = vmatpush1.bf16.msra.mxu0 %v8154
              %8300 = vmatprep.subr.bf16.mxu0 0
              %8301 = vmatpush1.bf16.msra.mxu0 %v8149
              %8302 = vmatprep.subr.bf16.mxu0 0
              %8303 = vmatpush1.bf16.msra.mxu0 %v8144
              %8304 = vmatprep.subr.bf16.mxu0 0
              %8305 = vmatpush1.bf16.msra.mxu0 %v8139
              %8306 = vmatprep.subr.bf16.mxu0 0
              %8307 = vmatpush1.bf16.msra.mxu0 %v8134
              %8308 = vmatprep.subr.bf16.mxu0 0
              %8309 = vmatpush2.bf16.msra.mxu0 0
              %8310 = vmatprep.subr.bf16.mxu0 0
              %8311 = vmatpush2.bf16.msra.mxu0 0
              %8312 = vmatprep.subr.bf16.mxu0 0
              %8313 = vmatpush2.bf16.msra.mxu0 0
              %8314 = vmatprep.subr.bf16.mxu0 0
              %8315 = vmatpush2.bf16.msra.mxu0 0
              %8316 = vmatprep.subr.bf16.mxu0 0
              %8317 = vmatpush2.bf16.msra.mxu0 0
              %8318 = vmatprep.subr.bf16.mxu0 0
              %8319 = vmatpush2.bf16.msra.mxu0 0
              %8320 = vmatprep.subr.bf16.mxu0 0
              %8321 = vmatpush2.bf16.msra.mxu0 0
              %8322 = vmatprep.subr.bf16.mxu0 0
              %8323 = vmatpush2.bf16.msra.mxu0 0
              %8324 = vmatprep.mubr.bf16.mxu0 0
              %8325 = vmatmul.mubr.bf16.gmra.mxu0 %v7572
              %v8326 = vpop.f32.mrf.mxu0
              %v8327 = vadd.f32 %v7997, %v8326
              %v8328 = vpop.f32.mrf.mxu0
              %v8329 = vpop.f32.mrf.mxu0
              %v8330 = vpop.f32.mrf.mxu0
              %8331 = vdwg.mxu0
              %v8332 = vadd.f32 %v8245, %v284
              %v8333 = vadd.f32 %v8247, %v288
              %v8334 = vadd.f32 %v8286, %v292
              %v8335 = vadd.f32 %v8288, %v296
              %v8336 = vadd.f32 %v8327, %v300
              %v8337 = vmul.f32 %v8332, 0.5
              %v8338 = vtanh.pop %v8337
              %v8339 = vadd.f32 %v8338, 1.0
              %v8340 = vmul.f32 %v8339, 0.5
              %v8341 = vmul.f32 %v8333, 0.5
              %v8342 = vtanh.pop %v8341
              %v8343 = vadd.f32 %v8342, 1.0
              %v8344 = vmul.f32 %v8343, 0.5
              %v8345 = vtanh.pop %v8334
              %v8346 = vmul.f32 %v8335, 0.5
              %v8347 = vtanh.pop %v8346
              %v8348 = vadd.f32 %v8347, 1.0
              %v8349 = vmul.f32 %v8348, 0.5
              %v8350 = vmul.f32 %v8336, 0.5
              %v8351 = vtanh.pop %v8350
              %v8352 = vadd.f32 %v8351, 1.0
              %v8353 = vmul.f32 %v8352, 0.5
              %v8354 = vmul.f32 %v8340, %v8345
              %v8355 = vmul.f32 %v8349, %v7571
              %v8356 = vadd.f32 %v8354, %v8355
              %v8357 = vmul.f32 %v8353, %v7569
              %v8358 = vadd.f32 %v8356, %v8357
              %v8359 = vtanh.pop %v8358
              %v8360 = vmul.f32 %v8344, %v8359
              %8361 = vst [vmem:[#allocation3] sm:$0xff] %v8360
              %8362 = vst [vmem:[#allocation3 + $0x8] sm:$0xff] %v8358
            $region110: #{_fenwick_forward_stream.1} parent=69 // pred_fallthru
              _
            %v8363 = vld [vmem:[#allocation3] sm:$0xff]
            %v8364 = vld [vmem:[#allocation3 + $0x8] sm:$0xff]
            %s8365 = smul.addr %s338, 8
            %s8366 = scalar_lea.vmem %s233, %s8365 [#allocation5]
            %8367 = vst [vmem:[%s8366] sm:$0xff] %v8363
            %8368 = vst [vmem:[%s8366 + $0x8] sm:$0xff] %v8364
          $region70: #{_fenwick_forward_stream.1} parent=63 // pred_fallthru
            _
        $region64: #{_fenwick_forward_stream.1} parent=50 // loop_footer
          %s311 = sadd.s32 1, %s307
        $region65: #{_fenwick_forward_stream.1} parent=50 // loop_footer_branch
          %306 = sbr.rel target = $region61
        $region66: #{_fenwick_forward_stream.1} parent=50 // loop_exit
          _
        %s8369 = sand.u32 %s106, 1
        %s8370 = sand.u32 %s106, 1
        %s8371 = smul.addr %s8370, 128
        %s8372 = scalar_lea.vmem [#allocation5], %s8371
        // Predicated region
        $region111: #{_fenwick_forward_stream.1} parent=50 // pred_check
          %p8373 = pneg %p116
        $region112: #{_fenwick_forward_stream.1} parent=50 // pred_check_branch
          %8375 = sbr.rel (%p8373) target = $region114
        $region113: #{_fenwick_forward_stream.1} parent=50 // pred_region
          %s8376 = smul.u32 8, %s19
          %s8377 = smul.addr %s18, 2
          %s8378 = smul.addr %s8376, 4
          %s8379 = sadd.s32 %s8377, %s8378
          %s8380 = smul.addr %s8379, 8
          %s8381 = scalar_lea.vmem %s3, %s8380
          // Predicated region
          $region115: #{_fenwick_forward_stream.1} parent=113 // pred_check
            _
          $region116: #{_fenwick_forward_stream.1} parent=113 // pred_check_branch
            %8383 = sbr.rel (0) target = $region118
          $region117: #{_fenwick_forward_stream.1} parent=113 // pred_region
            // Predicated region
            $region119: #{_fenwick_forward_stream.1} parent=117 // pred_check
              _
            $region120: #{_fenwick_forward_stream.1} parent=117 // pred_check_branch
              %8385 = sbr.rel (0) target = $region122
            $region121: #{_fenwick_forward_stream.1} parent=117 // pred_region
              loop: start=0, step=1, limit=1
              $region123: #{_fenwick_forward_stream.1} parent=121 // loop_pre_header
                _
              $region124: #{_fenwick_forward_stream.1} parent=121 // loop_header
                %s8387 = sphi 0, %s8391
                %p8388 = scmp.ge.s32.totalorder %s8387, 1
                %s8392 = sphi %s8372, %s8372
                %s8393 = sphi %s8381, %s8381
              $region125: #{_fenwick_forward_stream.1} parent=121 // loop_header_branch
                %8390 = sbr.rel (%p8388) target = $region129
              $region126: #{_fenwick_forward_stream.1} parent=121 // loop_body
                %v8394 = vld [vmem:[%s8392] sm:$0xff]
                %8395 = vst [vmem:[%s8393] sm:$0xff] %v8394
                %v8396 = vld [vmem:[%s8392 + $0x8] sm:$0xff]
                %8397 = vst [vmem:[%s8393 + $0x8] sm:$0xff] %v8396
                %v8398 = vld [vmem:[%s8392 + $0x10] sm:$0xff]
                %8399 = vst [vmem:[%s8393 + $0x20] sm:$0xff] %v8398
                %v8400 = vld [vmem:[%s8392 + $0x18] sm:$0xff]
                %8401 = vst [vmem:[%s8393 + $0x28] sm:$0xff] %v8400
                %v8402 = vld [vmem:[%s8392 + $0x20] sm:$0xff]
                %8403 = vst [vmem:[%s8393 + $0x40] sm:$0xff] %v8402
                %v8404 = vld [vmem:[%s8392 + $0x28] sm:$0xff]
                %8405 = vst [vmem:[%s8393 + $0x48] sm:$0xff] %v8404
                %v8406 = vld [vmem:[%s8392 + $0x30] sm:$0xff]
                %8407 = vst [vmem:[%s8393 + $0x60] sm:$0xff] %v8406
                %v8408 = vld [vmem:[%s8392 + $0x38] sm:$0xff]
                %8409 = vst [vmem:[%s8393 + $0x68] sm:$0xff] %v8408
                %v8410 = vld [vmem:[%s8392 + $0x40] sm:$0xff]
                %8411 = vst [vmem:[%s8393 + $0x80] sm:$0xff] %v8410
                %v8412 = vld [vmem:[%s8392 + $0x48] sm:$0xff]
                %8413 = vst [vmem:[%s8393 + $0x88] sm:$0xff] %v8412
                %v8414 = vld [vmem:[%s8392 + $0x50] sm:$0xff]
                %8415 = vst [vmem:[%s8393 + $0xa0] sm:$0xff] %v8414
                %v8416 = vld [vmem:[%s8392 + $0x58] sm:$0xff]
                %8417 = vst [vmem:[%s8393 + $0xa8] sm:$0xff] %v8416
                %v8418 = vld [vmem:[%s8392 + $0x60] sm:$0xff]
                %8419 = vst [vmem:[%s8393 + $0xc0] sm:$0xff] %v8418
                %v8420 = vld [vmem:[%s8392 + $0x68] sm:$0xff]
                %8421 = vst [vmem:[%s8393 + $0xc8] sm:$0xff] %v8420
                %v8422 = vld [vmem:[%s8392 + $0x70] sm:$0xff]
                %8423 = vst [vmem:[%s8393 + $0xe0] sm:$0xff] %v8422
                %v8424 = vld [vmem:[%s8392 + $0x78] sm:$0xff]
                %8425 = vst [vmem:[%s8393 + $0xe8] sm:$0xff] %v8424
              $region127: #{_fenwick_forward_stream.1} parent=121 // loop_footer
                %s8391 = sadd.s32 1, %s8387
              $region128: #{_fenwick_forward_stream.1} parent=121 // loop_footer_branch
                %8386 = sbr.rel target = $region124
              $region129: #{_fenwick_forward_stream.1} parent=121 // loop_exit
                _
            $region122: #{_fenwick_forward_stream.1} parent=117 // pred_fallthru
              _
            // Predicated region
            $region130: #{_fenwick_forward_stream.1} parent=117 // pred_check
              _
            $region131: #{_fenwick_forward_stream.1} parent=117 // pred_check_branch
              %8427 = sbr.rel target = $region133
            $region132: #{_fenwick_forward_stream.1} parent=117 // pred_region
              _
            $region133: #{_fenwick_forward_stream.1} parent=117 // pred_fallthru
              _
          $region118: #{_fenwick_forward_stream.1} parent=113 // pred_fallthru
            _
          %8428 = vnop
        $region114: #{_fenwick_forward_stream.1} parent=50 // pred_fallthru
          _
      $region51: #{_fenwick_forward_stream.1} parent=5 // pred_fallthru
        _
      %p8429 = scmp.le.s32.totalorder 2, %s9
      // Predicated region
      $region134: #{_fenwick_forward_stream.1} parent=5 // pred_check
        %p8430 = pneg %p8429
      $region135: #{_fenwick_forward_stream.1} parent=5 // pred_check_branch
        %8432 = sbr.rel (%p8430) target = $region137
      $region136: #{_fenwick_forward_stream.1} parent=5 // pred_region
        %s8433 = ssub.s32 %s9, 2
        // Predicated region
        $region138: #{_fenwick_forward_stream.1} parent=136 // pred_check
          %p8434 = pneg %p122
        $region139: #{_fenwick_forward_stream.1} parent=136 // pred_check_branch
          %8436 = sbr.rel (%p8434) target = $region141
        $region140: #{_fenwick_forward_stream.1} parent=136 // pred_region
          %s8437 = sand.u32 %s107, 1
          %s8438 = sand.u32 %s107, 1
          %s8439 = smul.addr %s8438, 128
          %s8440 = scalar_lea.vmem [#allocation5], %s8439
        $region141: #{_fenwick_forward_stream.1} parent=136 // pred_fallthru
          _
      $region137: #{_fenwick_forward_stream.1} parent=5 // pred_fallthru
        _
    $region6: #{_fenwick_forward_stream.1} parent=1 // loop_footer
      %s13 = sadd.s32 1, %s9
    $region7: #{_fenwick_forward_stream.1} parent=1 // loop_footer_branch
      %8 = sbr.rel target = $region3
    $region8: #{_fenwick_forward_stream.1} parent=1 // loop_exit
      _

</llo_original>
